<compile_context>
chip_gen: v7x
topology: tpu7x:2x2x1
jax: 0.10.0
libtpu: 0.0.40
codegen_flags: <defaults>
</compile_context>

<pallas_src>
import jax
import jax.numpy as jnp
import numpy as np
from jax import lax
from jax.experimental import pallas as pl
from jax.experimental.pallas import tpu as pltpu


def _round_up(n, m):
    return ((n + m - 1) // m) * m


# ----------------------------------------------------------------------------
# Fused kernel: conv3x3 -> shift -> ReLU -> conv3x3 -> shift -> ReLU -> pool2x2
# Grid iterates over batch; each step processes one full (H, W, C) image.
# ----------------------------------------------------------------------------
def _make_encoder_kernel(H, W, CINP, COUT):
    H2, W2 = H // 2, W // 2
    HW = H * W

    def _shift2d(v, oy, ox):
        # v: (H, W, C) -> u with u[h, w] = v[h+oy, w+ox], zero-filled at edges.
        Hh, Ww, C = v.shape
        if ox != 0:
            zc = jnp.zeros((Hh, 1, C), v.dtype)
            v = (jnp.concatenate([v[:, 1:, :], zc], axis=1) if ox == 1
                 else jnp.concatenate([zc, v[:, :-1, :]], axis=1))
        if oy != 0:
            zr = jnp.zeros((1, Ww, C), v.dtype)
            v = (jnp.concatenate([v[1:, :, :], zr], axis=0) if oy == 1
                 else jnp.concatenate([zr, v[:-1, :, :]], axis=0))
        return v

    def _conv3x3(v3, w_ref):
        # v3: (H, W, C) f32; w_ref: (9, Kc, COUT) bf16  ->  (HW, COUT) f32.
        # 9 shift-and-accumulate matmuls; MXU has huge slack at these shapes.
        c = v3.shape[-1]
        kc = w_ref.shape[1]
        acc = jnp.zeros((HW, COUT), jnp.float32)
        t = 0
        for oy in (-1, 0, 1):
            for ox in (-1, 0, 1):
                slab = _shift2d(v3, oy, ox).reshape(HW, c).astype(jnp.bfloat16)
                if kc > c:  # static branch; only when channels not 8-aligned
                    slab = jnp.concatenate(
                        [slab, jnp.zeros((HW, kc - c), slab.dtype)], axis=-1)
                acc = acc + jnp.dot(slab, w_ref[t],
                                    preferred_element_type=jnp.float32)
                t += 1
        return acc

    def _lane_pack(v):
        # (R, S, C) -> (R, S*C): lane-dense packing for unmasked stores.
        S = v.shape[1]
        return jnp.concatenate([v[:, s, :] for s in range(S)], axis=-1)

    def kernel(x_ref, w1_ref, t1_ref, w2_ref, t2_ref, x_out_ref, p_out_ref):
        # ---- conv1 -> shift -> ReLU ----
        x3 = x_ref[0].astype(jnp.float32)                          # (H, W, CINP)
        y1 = jnp.maximum(_conv3x3(x3, w1_ref) + t1_ref[...], 0.0)  # (HW, COUT)

        # ---- conv2 -> shift -> ReLU ----
        y2 = jnp.maximum(_conv3x3(y1.reshape(H, W, COUT), w2_ref)
                         + t2_ref[...], 0.0)                       # (HW, COUT)

        # ---- skip output: lane-dense (H, W*COUT), bf16 ----
        x_out_ref[0] = _lane_pack(y2.reshape(H, W, COUT)).astype(x_out_ref.dtype)

        # ---- fused 2x2 max pool, all in registers (leading-dim reshapes) ----
        z = y2.reshape(HW // 2, 2, COUT)                           # W pairs
        wm = jnp.maximum(z[:, 0, :], z[:, 1, :])                   # (H*W2, COUT)
        z2 = wm.reshape(H2, 2, W2, COUT)                           # H pairs
        p = jnp.maximum(z2[:, 0, :, :], z2[:, 1, :, :])            # (H2, W2, COUT)
        p_out_ref[0] = _lane_pack(p).astype(p_out_ref.dtype)

    return kernel


def _vmem_limit_bytes(H, W, CINP, COUT):
    H2, W2 = H // 2, W // 2
    blk = H * W * CINP * 2 + H * W * COUT * 2 + H2 * W2 * COUT * 4
    wgt = 9 * CINP * COUT * 2 + 9 * COUT * COUT * 2 + 2 * COUT * 4
    need = 2 * blk + wgt                      # double-buffered I/O blocks
    # headroom for in-kernel f32 intermediates / relayout scratch, clamped so
    # it stays safe on every chip (v7x has only 64 MiB VMEM per TensorCore).
    return int(min(48 * 2**20, max(16 * 2**20, 16 * need)))


def encoder_block_pallas(x_nhwc, w1, t1, w2, t2):
    # x_nhwc: (B, H, W, CINP) bf16, channels pre-padded to a multiple of 8.
    B, H, W, CINP = x_nhwc.shape
    COUT = w1.shape[-1]
    H2, W2 = H // 2, W // 2
    kern = _make_encoder_kernel(H, W, CINP, COUT)
    return pl.pallas_call(
        kern,
        out_shape=(jax.ShapeDtypeStruct((B, H, W * COUT), jnp.bfloat16),
                   jax.ShapeDtypeStruct((B, H2, W2 * COUT), jnp.float32)),
        grid_spec=pltpu.PrefetchScalarGridSpec(
            num_scalar_prefetch=0,
            grid=(B,),
            in_specs=[
                pl.BlockSpec((1, H, W, CINP), lambda b: (b, 0, 0, 0)),
                pl.BlockSpec((9, CINP, COUT), lambda b: (0, 0, 0)),
                pl.BlockSpec((1, COUT), lambda b: (0, 0)),
                pl.BlockSpec((9, COUT, COUT), lambda b: (0, 0, 0)),
                pl.BlockSpec((1, COUT), lambda b: (0, 0)),
            ],
            out_specs=[
                pl.BlockSpec((1, H, W * COUT), lambda b: (b, 0, 0)),
                pl.BlockSpec((1, H2, W2 * COUT), lambda b: (b, 0, 0)),
            ],
        ),
        compiler_params=pltpu.CompilerParams(
            dimension_semantics=("parallel",),
            vmem_limit_bytes=_vmem_limit_bytes(H, W, CINP, COUT),
        ),
    )(x_nhwc, w1, t1, w2, t2)


# ----------------------------------------------------------------------------
# EncoderBlock forward (NCHW in / NCHW out, like the PyTorch module)
# ----------------------------------------------------------------------------
def encoder_block_forward(x_nchw, params):
    w1, t1, w2, t2 = params['w1'], params['t1'], params['w2'], params['t2']
    B, CIN, H, W = x_nchw.shape
    CINP = w1.shape[1]
    COUT = w1.shape[-1]
    x = jnp.transpose(x_nchw, (0, 2, 3, 1))                        # NCHW -> NHWC
    if CINP > CIN:
        x = jnp.pad(x, ((0, 0), (0, 0), (0, 0), (0, CINP - CIN)))
    x = x.astype(jnp.bfloat16)
    x_d, p_d = encoder_block_pallas(x, w1, t1, w2, t2)
    x_out = x_d.reshape(B, H, W, COUT).astype(jnp.float32)         # un-pack lanes
    p_out = p_d.reshape(B, H // 2, W // 2, COUT)
    return (jnp.transpose(x_out, (0, 3, 1, 2)),                    # NHWC -> NCHW
            jnp.transpose(p_out, (0, 3, 1, 2)))


def fold_params(w_pt, b_pt, gamma, beta, mean, var, eps=1e-5):
    """Fold conv bias + eval-mode BatchNorm into per-tap (Cin_pad, Cout) bf16
    weights (BN scale folded in) and a per-channel f32 shift.  Cin is
    zero-padded to a multiple of 8 so the MXU contraction dim is aligned."""
    cout, cin = w_pt.shape[0], w_pt.shape[1]
    cinp = _round_up(cin, 8)
    scale = gamma / jnp.sqrt(var + eps)                            # (COUT,)
    shift = beta + (b_pt - mean) * scale                           # (COUT,)
    w = jnp.transpose(w_pt, (2, 3, 1, 0)) * scale[None, None, None, :]  # (3,3,cin,cout)
    if cinp > cin:
        w = jnp.pad(w, ((0, 0), (0, 0), (0, cinp - cin), (0, 0)))
    w_taps = w.reshape(9, cinp, cout).astype(jnp.bfloat16)         # tap t = dy*3+dx
    return w_taps, shift.reshape(1, cout).astype(jnp.float32)


# ----------------------------------------------------------------------------
# Pure-JAX reference (for correctness checking)
# ----------------------------------------------------------------------------
def reference_forward(x, w1, b1, g1, be1, m1, v1, w2, b2, g2, be2, m2, v2,
                      eps=1e-5):
    def conv(z, w, b):
        y = lax.conv_general_dilated(z, w, window_strides=(1, 1),
                                     padding=((1, 1), (1, 1)),
                                     dimension_numbers=('NCHW', 'OIHW', 'NCHW'))
        return y + b[None, :, None, None]

    def bn(z, g, be, m, v):
        s = g / jnp.sqrt(v + eps)
        return (z - m[None, :, None, None]) * s[None, :, None, None] \
            + be[None, :, None, None]

    z = jax.nn.relu(bn(conv(x, w1, b1), g1, be1, m1, v1))
    z = jax.nn.relu(bn(conv(z, w2, b2), g2, be2, m2, v2))
    B, C, H, W = z.shape
    p = z.reshape(B, C, H // 2, 2, W // 2, 2).max(axis=(3, 5))
    return z, p


if __name__ == "__main__":
    B, CIN, COUT, H, W = 2, 4, 8, 16, 16

    key = jax.random.PRNGKey(0)
    keys = jax.random.split(key, 13)
    x = jax.random.normal(keys[0], (B, CIN, H, W), jnp.float32)

    # deterministic parameter init (PyTorch shapes)
    w1_pt = 0.1 * jax.random.normal(keys[1], (COUT, CIN, 3, 3), jnp.float32)
    b1_pt = 0.1 * jax.random.normal(keys[2], (COUT,), jnp.float32)
    g1 = 1.0 + 0.1 * jax.random.normal(keys[3], (COUT,), jnp.float32)
    be1 = 0.1 * jax.random.normal(keys[4], (COUT,), jnp.float32)
    m1 = 0.1 * jax.random.normal(keys[5], (COUT,), jnp.float32)
    v1 = jax.random.uniform(keys[6], (COUT,), jnp.float32, 0.5, 1.5)

    w2_pt = 0.1 * jax.random.normal(keys[7], (COUT, COUT, 3, 3), jnp.float32)
    b2_pt = 0.1 * jax.random.normal(keys[8], (COUT,), jnp.float32)
    g2 = 1.0 + 0.1 * jax.random.normal(keys[9], (COUT,), jnp.float32)
    be2 = 0.1 * jax.random.normal(keys[10], (COUT,), jnp.float32)
    m2 = 0.1 * jax.random.normal(keys[11], (COUT,), jnp.float32)
    v2 = jax.random.uniform(keys[12], (COUT,), jnp.float32, 0.5, 1.5)

    w1k, t1 = fold_params(w1_pt, b1_pt, g1, be1, m1, v1)
    w2k, t2 = fold_params(w2_pt, b2_pt, g2, be2, m2, v2)
    params = dict(w1=w1k, t1=t1, w2=w2k, t2=t2)

    fwd = jax.jit(lambda a: encoder_block_forward(a, params))
    x_out, p_out = fwd(x)
    jax.block_until_ready((x_out, p_out))

    # correctness check against a pure-JAX reference (bf16 matmul + bf16
    # skip-output tolerance)
    x_ref, p_ref = reference_forward(x, w1_pt, b1_pt, g1, be1, m1, v1,
                                     w2_pt, b2_pt, g2, be2, m2, v2)
    assert x_out.shape == (B, COUT, H, W)
    assert p_out.shape == (B, COUT, H // 2, W // 2)
    np.testing.assert_allclose(np.asarray(x_out), np.asarray(x_ref),
                               rtol=3e-2, atol=3e-2)
    np.testing.assert_allclose(np.asarray(p_out), np.asarray(p_ref),
                               rtol=3e-2, atol=3e-2)
    print("KERNEL_OK")
</pallas_src>

<mosaic_0001>
module attributes {stable_mosaic.version = 11 : i64} {
  func.func @kernel(%arg0: i32, %arg1: memref<1x16x16x8xbf16, #tpu.memory_space<vmem>>, %arg2: memref<9x8x8xbf16, #tpu.memory_space<vmem>>, %arg3: memref<1x8xf32, #tpu.memory_space<vmem>>, %arg4: memref<9x8x8xbf16, #tpu.memory_space<vmem>>, %arg5: memref<1x8xf32, #tpu.memory_space<vmem>>, %arg6: memref<1x16x128xbf16, #tpu.memory_space<vmem>>, %arg7: memref<1x8x64xf32, #tpu.memory_space<vmem>>) attributes {dimension_semantics = [#tpu.dimension_semantics<parallel>], iteration_bounds = array<i64: 2>, scalar_prefetch = 0 : i64, scratch_operands = 0 : i64, tpu.core_type = #tpu.core_type<tc>, window_params = [{transform_indices = @transform_0, window_bounds = array<i64: 1, 16, 16, 8>}, {pipeline_mode = #tpu.pipeline_mode<synchronous>, transform_indices = @transform_1, window_bounds = array<i64: 9, 8, 8>}, {pipeline_mode = #tpu.pipeline_mode<synchronous>, transform_indices = @transform_2, window_bounds = array<i64: 1, 8>}, {pipeline_mode = #tpu.pipeline_mode<synchronous>, transform_indices = @transform_3, window_bounds = array<i64: 9, 8, 8>}, {pipeline_mode = #tpu.pipeline_mode<synchronous>, transform_indices = @transform_4, window_bounds = array<i64: 1, 8>}, {transform_indices = @transform_5, window_bounds = array<i64: 1, 16, 128>}, {transform_indices = @transform_6, window_bounds = array<i64: 1, 8, 64>}]} {
    %c0 = arith.constant 0 : index
    %c0_0 = arith.constant 0 : index
    %c0_1 = arith.constant 0 : index
    %c0_2 = arith.constant 0 : index
    %0 = vector.load %arg1[%c0, %c0_0, %c0_1, %c0_2] : memref<1x16x16x8xbf16, #tpu.memory_space<vmem>>, vector<1x16x16x8xbf16>
    %1 = vector.shape_cast %0 : vector<1x16x16x8xbf16> to vector<16x16x8xbf16>
    %2 = arith.extf %1 : vector<16x16x8xbf16> to vector<16x16x8xf32>
    %cst = arith.constant 0.000000e+00 : f32
    %3 = vector.broadcast %cst : f32 to vector<256x8xf32>
    %cst_3 = arith.constant 0.000000e+00 : f32
    %4 = vector.broadcast %cst_3 : f32 to vector<16x1x8xf32>
    %5 = vector.extract_strided_slice %2 {offsets = [0, 0, 0], sizes = [16, 15, 8], strides = [1, 1, 1]} : vector<16x16x8xf32> to vector<16x15x8xf32>
    %6 = tpu.concatenate %4, %5 in 1 : vector<16x1x8xf32>, vector<16x15x8xf32> -> vector<16x16x8xf32>
    %cst_4 = arith.constant 0.000000e+00 : f32
    %7 = vector.broadcast %cst_4 : f32 to vector<1x16x8xf32>
    %8 = vector.extract_strided_slice %6 {offsets = [0, 0, 0], sizes = [15, 16, 8], strides = [1, 1, 1]} : vector<16x16x8xf32> to vector<15x16x8xf32>
    %9 = tpu.concatenate %7, %8 in 0 : vector<1x16x8xf32>, vector<15x16x8xf32> -> vector<16x16x8xf32>
    %10 = vector.shape_cast %9 : vector<16x16x8xf32> to vector<256x8xf32>
    %11 = arith.truncf %10 : vector<256x8xf32> to vector<256x8xbf16>
    %c0_5 = arith.constant 0 : index
    %c0_6 = arith.constant 0 : index
    %c0_7 = arith.constant 0 : index
    %12 = vector.load %arg2[%c0_5, %c0_6, %c0_7] : memref<9x8x8xbf16, #tpu.memory_space<vmem>>, vector<1x8x8xbf16>
    %13 = vector.shape_cast %12 : vector<1x8x8xbf16> to vector<8x8xbf16>
    %cst_8 = arith.constant dense<0.000000e+00> : vector<256x8xf32>
    %14 = tpu.matmul %11, %13, %cst_8 {dimension_numbers = #tpu.dot_dimension_numbers<[1], [0], [0], [1], [0, 0, 1, 1], [], []>} : vector<256x8xbf16>, vector<8x8xbf16>, vector<256x8xf32> -> vector<256x8xf32>
    %15 = arith.addf %3, %14 : vector<256x8xf32>
    %cst_9 = arith.constant 0.000000e+00 : f32
    %16 = vector.broadcast %cst_9 : f32 to vector<1x16x8xf32>
    %17 = vector.extract_strided_slice %2 {offsets = [0, 0, 0], sizes = [15, 16, 8], strides = [1, 1, 1]} : vector<16x16x8xf32> to vector<15x16x8xf32>
    %18 = tpu.concatenate %16, %17 in 0 : vector<1x16x8xf32>, vector<15x16x8xf32> -> vector<16x16x8xf32>
    %19 = vector.shape_cast %18 : vector<16x16x8xf32> to vector<256x8xf32>
    %20 = arith.truncf %19 : vector<256x8xf32> to vector<256x8xbf16>
    %c1 = arith.constant 1 : index
    %c0_10 = arith.constant 0 : index
    %c0_11 = arith.constant 0 : index
    %21 = vector.load %arg2[%c1, %c0_10, %c0_11] : memref<9x8x8xbf16, #tpu.memory_space<vmem>>, vector<1x8x8xbf16>
    %22 = vector.shape_cast %21 : vector<1x8x8xbf16> to vector<8x8xbf16>
    %cst_12 = arith.constant dense<0.000000e+00> : vector<256x8xf32>
    %23 = tpu.matmul %20, %22, %cst_12 {dimension_numbers = #tpu.dot_dimension_numbers<[1], [0], [0], [1], [0, 0, 1, 1], [], []>} : vector<256x8xbf16>, vector<8x8xbf16>, vector<256x8xf32> -> vector<256x8xf32>
    %24 = arith.addf %15, %23 : vector<256x8xf32>
    %cst_13 = arith.constant 0.000000e+00 : f32
    %25 = vector.broadcast %cst_13 : f32 to vector<16x1x8xf32>
    %26 = vector.extract_strided_slice %2 {offsets = [0, 1, 0], sizes = [16, 15, 8], strides = [1, 1, 1]} : vector<16x16x8xf32> to vector<16x15x8xf32>
    %27 = tpu.concatenate %26, %25 in 1 : vector<16x15x8xf32>, vector<16x1x8xf32> -> vector<16x16x8xf32>
    %cst_14 = arith.constant 0.000000e+00 : f32
    %28 = vector.broadcast %cst_14 : f32 to vector<1x16x8xf32>
    %29 = vector.extract_strided_slice %27 {offsets = [0, 0, 0], sizes = [15, 16, 8], strides = [1, 1, 1]} : vector<16x16x8xf32> to vector<15x16x8xf32>
    %30 = tpu.concatenate %28, %29 in 0 : vector<1x16x8xf32>, vector<15x16x8xf32> -> vector<16x16x8xf32>
    %31 = vector.shape_cast %30 : vector<16x16x8xf32> to vector<256x8xf32>
    %32 = arith.truncf %31 : vector<256x8xf32> to vector<256x8xbf16>
    %c2 = arith.constant 2 : index
    %c0_15 = arith.constant 0 : index
    %c0_16 = arith.constant 0 : index
    %33 = vector.load %arg2[%c2, %c0_15, %c0_16] : memref<9x8x8xbf16, #tpu.memory_space<vmem>>, vector<1x8x8xbf16>
    %34 = vector.shape_cast %33 : vector<1x8x8xbf16> to vector<8x8xbf16>
    %cst_17 = arith.constant dense<0.000000e+00> : vector<256x8xf32>
    %35 = tpu.matmul %32, %34, %cst_17 {dimension_numbers = #tpu.dot_dimension_numbers<[1], [0], [0], [1], [0, 0, 1, 1], [], []>} : vector<256x8xbf16>, vector<8x8xbf16>, vector<256x8xf32> -> vector<256x8xf32>
    %36 = arith.addf %24, %35 : vector<256x8xf32>
    %cst_18 = arith.constant 0.000000e+00 : f32
    %37 = vector.broadcast %cst_18 : f32 to vector<16x1x8xf32>
    %38 = vector.extract_strided_slice %2 {offsets = [0, 0, 0], sizes = [16, 15, 8], strides = [1, 1, 1]} : vector<16x16x8xf32> to vector<16x15x8xf32>
    %39 = tpu.concatenate %37, %38 in 1 : vector<16x1x8xf32>, vector<16x15x8xf32> -> vector<16x16x8xf32>
    %40 = vector.shape_cast %39 : vector<16x16x8xf32> to vector<256x8xf32>
    %41 = arith.truncf %40 : vector<256x8xf32> to vector<256x8xbf16>
    %c3 = arith.constant 3 : index
    %c0_19 = arith.constant 0 : index
    %c0_20 = arith.constant 0 : index
    %42 = vector.load %arg2[%c3, %c0_19, %c0_20] : memref<9x8x8xbf16, #tpu.memory_space<vmem>>, vector<1x8x8xbf16>
    %43 = vector.shape_cast %42 : vector<1x8x8xbf16> to vector<8x8xbf16>
    %cst_21 = arith.constant dense<0.000000e+00> : vector<256x8xf32>
    %44 = tpu.matmul %41, %43, %cst_21 {dimension_numbers = #tpu.dot_dimension_numbers<[1], [0], [0], [1], [0, 0, 1, 1], [], []>} : vector<256x8xbf16>, vector<8x8xbf16>, vector<256x8xf32> -> vector<256x8xf32>
    %45 = arith.addf %36, %44 : vector<256x8xf32>
    %46 = vector.shape_cast %2 : vector<16x16x8xf32> to vector<256x8xf32>
    %47 = arith.truncf %46 : vector<256x8xf32> to vector<256x8xbf16>
    %c4 = arith.constant 4 : index
    %c0_22 = arith.constant 0 : index
    %c0_23 = arith.constant 0 : index
    %48 = vector.load %arg2[%c4, %c0_22, %c0_23] : memref<9x8x8xbf16, #tpu.memory_space<vmem>>, vector<1x8x8xbf16>
    %49 = vector.shape_cast %48 : vector<1x8x8xbf16> to vector<8x8xbf16>
    %cst_24 = arith.constant dense<0.000000e+00> : vector<256x8xf32>
    %50 = tpu.matmul %47, %49, %cst_24 {dimension_numbers = #tpu.dot_dimension_numbers<[1], [0], [0], [1], [0, 0, 1, 1], [], []>} : vector<256x8xbf16>, vector<8x8xbf16>, vector<256x8xf32> -> vector<256x8xf32>
    %51 = arith.addf %45, %50 : vector<256x8xf32>
    %cst_25 = arith.constant 0.000000e+00 : f32
    %52 = vector.broadcast %cst_25 : f32 to vector<16x1x8xf32>
    %53 = vector.extract_strided_slice %2 {offsets = [0, 1, 0], sizes = [16, 15, 8], strides = [1, 1, 1]} : vector<16x16x8xf32> to vector<16x15x8xf32>
    %54 = tpu.concatenate %53, %52 in 1 : vector<16x15x8xf32>, vector<16x1x8xf32> -> vector<16x16x8xf32>
    %55 = vector.shape_cast %54 : vector<16x16x8xf32> to vector<256x8xf32>
    %56 = arith.truncf %55 : vector<256x8xf32> to vector<256x8xbf16>
    %c5 = arith.constant 5 : index
    %c0_26 = arith.constant 0 : index
    %c0_27 = arith.constant 0 : index
    %57 = vector.load %arg2[%c5, %c0_26, %c0_27] : memref<9x8x8xbf16, #tpu.memory_space<vmem>>, vector<1x8x8xbf16>
    %58 = vector.shape_cast %57 : vector<1x8x8xbf16> to vector<8x8xbf16>
    %cst_28 = arith.constant dense<0.000000e+00> : vector<256x8xf32>
    %59 = tpu.matmul %56, %58, %cst_28 {dimension_numbers = #tpu.dot_dimension_numbers<[1], [0], [0], [1], [0, 0, 1, 1], [], []>} : vector<256x8xbf16>, vector<8x8xbf16>, vector<256x8xf32> -> vector<256x8xf32>
    %60 = arith.addf %51, %59 : vector<256x8xf32>
    %cst_29 = arith.constant 0.000000e+00 : f32
    %61 = vector.broadcast %cst_29 : f32 to vector<16x1x8xf32>
    %62 = vector.extract_strided_slice %2 {offsets = [0, 0, 0], sizes = [16, 15, 8], strides = [1, 1, 1]} : vector<16x16x8xf32> to vector<16x15x8xf32>
    %63 = tpu.concatenate %61, %62 in 1 : vector<16x1x8xf32>, vector<16x15x8xf32> -> vector<16x16x8xf32>
    %cst_30 = arith.constant 0.000000e+00 : f32
    %64 = vector.broadcast %cst_30 : f32 to vector<1x16x8xf32>
    %65 = vector.extract_strided_slice %63 {offsets = [1, 0, 0], sizes = [15, 16, 8], strides = [1, 1, 1]} : vector<16x16x8xf32> to vector<15x16x8xf32>
    %66 = tpu.concatenate %65, %64 in 0 : vector<15x16x8xf32>, vector<1x16x8xf32> -> vector<16x16x8xf32>
    %67 = vector.shape_cast %66 : vector<16x16x8xf32> to vector<256x8xf32>
    %68 = arith.truncf %67 : vector<256x8xf32> to vector<256x8xbf16>
    %c6 = arith.constant 6 : index
    %c0_31 = arith.constant 0 : index
    %c0_32 = arith.constant 0 : index
    %69 = vector.load %arg2[%c6, %c0_31, %c0_32] : memref<9x8x8xbf16, #tpu.memory_space<vmem>>, vector<1x8x8xbf16>
    %70 = vector.shape_cast %69 : vector<1x8x8xbf16> to vector<8x8xbf16>
    %cst_33 = arith.constant dense<0.000000e+00> : vector<256x8xf32>
    %71 = tpu.matmul %68, %70, %cst_33 {dimension_numbers = #tpu.dot_dimension_numbers<[1], [0], [0], [1], [0, 0, 1, 1], [], []>} : vector<256x8xbf16>, vector<8x8xbf16>, vector<256x8xf32> -> vector<256x8xf32>
    %72 = arith.addf %60, %71 : vector<256x8xf32>
    %cst_34 = arith.constant 0.000000e+00 : f32
    %73 = vector.broadcast %cst_34 : f32 to vector<1x16x8xf32>
    %74 = vector.extract_strided_slice %2 {offsets = [1, 0, 0], sizes = [15, 16, 8], strides = [1, 1, 1]} : vector<16x16x8xf32> to vector<15x16x8xf32>
    %75 = tpu.concatenate %74, %73 in 0 : vector<15x16x8xf32>, vector<1x16x8xf32> -> vector<16x16x8xf32>
    %76 = vector.shape_cast %75 : vector<16x16x8xf32> to vector<256x8xf32>
    %77 = arith.truncf %76 : vector<256x8xf32> to vector<256x8xbf16>
    %c7 = arith.constant 7 : index
    %c0_35 = arith.constant 0 : index
    %c0_36 = arith.constant 0 : index
    %78 = vector.load %arg2[%c7, %c0_35, %c0_36] : memref<9x8x8xbf16, #tpu.memory_space<vmem>>, vector<1x8x8xbf16>
    %79 = vector.shape_cast %78 : vector<1x8x8xbf16> to vector<8x8xbf16>
    %cst_37 = arith.constant dense<0.000000e+00> : vector<256x8xf32>
    %80 = tpu.matmul %77, %79, %cst_37 {dimension_numbers = #tpu.dot_dimension_numbers<[1], [0], [0], [1], [0, 0, 1, 1], [], []>} : vector<256x8xbf16>, vector<8x8xbf16>, vector<256x8xf32> -> vector<256x8xf32>
    %81 = arith.addf %72, %80 : vector<256x8xf32>
    %cst_38 = arith.constant 0.000000e+00 : f32
    %82 = vector.broadcast %cst_38 : f32 to vector<16x1x8xf32>
    %83 = vector.extract_strided_slice %2 {offsets = [0, 1, 0], sizes = [16, 15, 8], strides = [1, 1, 1]} : vector<16x16x8xf32> to vector<16x15x8xf32>
    %84 = tpu.concatenate %83, %82 in 1 : vector<16x15x8xf32>, vector<16x1x8xf32> -> vector<16x16x8xf32>
    %cst_39 = arith.constant 0.000000e+00 : f32
    %85 = vector.broadcast %cst_39 : f32 to vector<1x16x8xf32>
    %86 = vector.extract_strided_slice %84 {offsets = [1, 0, 0], sizes = [15, 16, 8], strides = [1, 1, 1]} : vector<16x16x8xf32> to vector<15x16x8xf32>
    %87 = tpu.concatenate %86, %85 in 0 : vector<15x16x8xf32>, vector<1x16x8xf32> -> vector<16x16x8xf32>
    %88 = vector.shape_cast %87 : vector<16x16x8xf32> to vector<256x8xf32>
    %89 = arith.truncf %88 : vector<256x8xf32> to vector<256x8xbf16>
    %c8 = arith.constant 8 : index
    %c0_40 = arith.constant 0 : index
    %c0_41 = arith.constant 0 : index
    %90 = vector.load %arg2[%c8, %c0_40, %c0_41] : memref<9x8x8xbf16, #tpu.memory_space<vmem>>, vector<1x8x8xbf16>
    %91 = vector.shape_cast %90 : vector<1x8x8xbf16> to vector<8x8xbf16>
    %cst_42 = arith.constant dense<0.000000e+00> : vector<256x8xf32>
    %92 = tpu.matmul %89, %91, %cst_42 {dimension_numbers = #tpu.dot_dimension_numbers<[1], [0], [0], [1], [0, 0, 1, 1], [], []>} : vector<256x8xbf16>, vector<8x8xbf16>, vector<256x8xf32> -> vector<256x8xf32>
    %93 = arith.addf %81, %92 : vector<256x8xf32>
    %c0_43 = arith.constant 0 : index
    %c0_44 = arith.constant 0 : index
    %94 = vector.load %arg3[%c0_43, %c0_44] : memref<1x8xf32, #tpu.memory_space<vmem>>, vector<1x8xf32>
    %95 = vector.broadcast %94 : vector<1x8xf32> to vector<256x8xf32>
    %96 = arith.addf %93, %95 : vector<256x8xf32>
    %cst_45 = arith.constant 0.000000e+00 : f32
    %97 = vector.broadcast %cst_45 : f32 to vector<256x8xf32>
    %98 = arith.maximumf %96, %97 : vector<256x8xf32>
    %99 = vector.shape_cast %98 : vector<256x8xf32> to vector<16x16x8xf32>
    %cst_46 = arith.constant 0.000000e+00 : f32
    %100 = vector.broadcast %cst_46 : f32 to vector<256x8xf32>
    %cst_47 = arith.constant 0.000000e+00 : f32
    %101 = vector.broadcast %cst_47 : f32 to vector<16x1x8xf32>
    %102 = vector.extract_strided_slice %99 {offsets = [0, 0, 0], sizes = [16, 15, 8], strides = [1, 1, 1]} : vector<16x16x8xf32> to vector<16x15x8xf32>
    %103 = tpu.concatenate %101, %102 in 1 : vector<16x1x8xf32>, vector<16x15x8xf32> -> vector<16x16x8xf32>
    %cst_48 = arith.constant 0.000000e+00 : f32
    %104 = vector.broadcast %cst_48 : f32 to vector<1x16x8xf32>
    %105 = vector.extract_strided_slice %103 {offsets = [0, 0, 0], sizes = [15, 16, 8], strides = [1, 1, 1]} : vector<16x16x8xf32> to vector<15x16x8xf32>
    %106 = tpu.concatenate %104, %105 in 0 : vector<1x16x8xf32>, vector<15x16x8xf32> -> vector<16x16x8xf32>
    %107 = vector.shape_cast %106 : vector<16x16x8xf32> to vector<256x8xf32>
    %108 = arith.truncf %107 : vector<256x8xf32> to vector<256x8xbf16>
    %c0_49 = arith.constant 0 : index
    %c0_50 = arith.constant 0 : index
    %c0_51 = arith.constant 0 : index
    %109 = vector.load %arg4[%c0_49, %c0_50, %c0_51] : memref<9x8x8xbf16, #tpu.memory_space<vmem>>, vector<1x8x8xbf16>
    %110 = vector.shape_cast %109 : vector<1x8x8xbf16> to vector<8x8xbf16>
    %cst_52 = arith.constant dense<0.000000e+00> : vector<256x8xf32>
    %111 = tpu.matmul %108, %110, %cst_52 {dimension_numbers = #tpu.dot_dimension_numbers<[1], [0], [0], [1], [0, 0, 1, 1], [], []>} : vector<256x8xbf16>, vector<8x8xbf16>, vector<256x8xf32> -> vector<256x8xf32>
    %112 = arith.addf %100, %111 : vector<256x8xf32>
    %cst_53 = arith.constant 0.000000e+00 : f32
    %113 = vector.broadcast %cst_53 : f32 to vector<1x16x8xf32>
    %114 = vector.extract_strided_slice %99 {offsets = [0, 0, 0], sizes = [15, 16, 8], strides = [1, 1, 1]} : vector<16x16x8xf32> to vector<15x16x8xf32>
    %115 = tpu.concatenate %113, %114 in 0 : vector<1x16x8xf32>, vector<15x16x8xf32> -> vector<16x16x8xf32>
    %116 = vector.shape_cast %115 : vector<16x16x8xf32> to vector<256x8xf32>
    %117 = arith.truncf %116 : vector<256x8xf32> to vector<256x8xbf16>
    %c1_54 = arith.constant 1 : index
    %c0_55 = arith.constant 0 : index
    %c0_56 = arith.constant 0 : index
    %118 = vector.load %arg4[%c1_54, %c0_55, %c0_56] : memref<9x8x8xbf16, #tpu.memory_space<vmem>>, vector<1x8x8xbf16>
    %119 = vector.shape_cast %118 : vector<1x8x8xbf16> to vector<8x8xbf16>
    %cst_57 = arith.constant dense<0.000000e+00> : vector<256x8xf32>
    %120 = tpu.matmul %117, %119, %cst_57 {dimension_numbers = #tpu.dot_dimension_numbers<[1], [0], [0], [1], [0, 0, 1, 1], [], []>} : vector<256x8xbf16>, vector<8x8xbf16>, vector<256x8xf32> -> vector<256x8xf32>
    %121 = arith.addf %112, %120 : vector<256x8xf32>
    %cst_58 = arith.constant 0.000000e+00 : f32
    %122 = vector.broadcast %cst_58 : f32 to vector<16x1x8xf32>
    %123 = vector.extract_strided_slice %99 {offsets = [0, 1, 0], sizes = [16, 15, 8], strides = [1, 1, 1]} : vector<16x16x8xf32> to vector<16x15x8xf32>
    %124 = tpu.concatenate %123, %122 in 1 : vector<16x15x8xf32>, vector<16x1x8xf32> -> vector<16x16x8xf32>
    %cst_59 = arith.constant 0.000000e+00 : f32
    %125 = vector.broadcast %cst_59 : f32 to vector<1x16x8xf32>
    %126 = vector.extract_strided_slice %124 {offsets = [0, 0, 0], sizes = [15, 16, 8], strides = [1, 1, 1]} : vector<16x16x8xf32> to vector<15x16x8xf32>
    %127 = tpu.concatenate %125, %126 in 0 : vector<1x16x8xf32>, vector<15x16x8xf32> -> vector<16x16x8xf32>
    %128 = vector.shape_cast %127 : vector<16x16x8xf32> to vector<256x8xf32>
    %129 = arith.truncf %128 : vector<256x8xf32> to vector<256x8xbf16>
    %c2_60 = arith.constant 2 : index
    %c0_61 = arith.constant 0 : index
    %c0_62 = arith.constant 0 : index
    %130 = vector.load %arg4[%c2_60, %c0_61, %c0_62] : memref<9x8x8xbf16, #tpu.memory_space<vmem>>, vector<1x8x8xbf16>
    %131 = vector.shape_cast %130 : vector<1x8x8xbf16> to vector<8x8xbf16>
    %cst_63 = arith.constant dense<0.000000e+00> : vector<256x8xf32>
    %132 = tpu.matmul %129, %131, %cst_63 {dimension_numbers = #tpu.dot_dimension_numbers<[1], [0], [0], [1], [0, 0, 1, 1], [], []>} : vector<256x8xbf16>, vector<8x8xbf16>, vector<256x8xf32> -> vector<256x8xf32>
    %133 = arith.addf %121, %132 : vector<256x8xf32>
    %cst_64 = arith.constant 0.000000e+00 : f32
    %134 = vector.broadcast %cst_64 : f32 to vector<16x1x8xf32>
    %135 = vector.extract_strided_slice %99 {offsets = [0, 0, 0], sizes = [16, 15, 8], strides = [1, 1, 1]} : vector<16x16x8xf32> to vector<16x15x8xf32>
    %136 = tpu.concatenate %134, %135 in 1 : vector<16x1x8xf32>, vector<16x15x8xf32> -> vector<16x16x8xf32>
    %137 = vector.shape_cast %136 : vector<16x16x8xf32> to vector<256x8xf32>
    %138 = arith.truncf %137 : vector<256x8xf32> to vector<256x8xbf16>
    %c3_65 = arith.constant 3 : index
    %c0_66 = arith.constant 0 : index
    %c0_67 = arith.constant 0 : index
    %139 = vector.load %arg4[%c3_65, %c0_66, %c0_67] : memref<9x8x8xbf16, #tpu.memory_space<vmem>>, vector<1x8x8xbf16>
    %140 = vector.shape_cast %139 : vector<1x8x8xbf16> to vector<8x8xbf16>
    %cst_68 = arith.constant dense<0.000000e+00> : vector<256x8xf32>
    %141 = tpu.matmul %138, %140, %cst_68 {dimension_numbers = #tpu.dot_dimension_numbers<[1], [0], [0], [1], [0, 0, 1, 1], [], []>} : vector<256x8xbf16>, vector<8x8xbf16>, vector<256x8xf32> -> vector<256x8xf32>
    %142 = arith.addf %133, %141 : vector<256x8xf32>
    %143 = vector.shape_cast %99 : vector<16x16x8xf32> to vector<256x8xf32>
    %144 = arith.truncf %143 : vector<256x8xf32> to vector<256x8xbf16>
    %c4_69 = arith.constant 4 : index
    %c0_70 = arith.constant 0 : index
    %c0_71 = arith.constant 0 : index
    %145 = vector.load %arg4[%c4_69, %c0_70, %c0_71] : memref<9x8x8xbf16, #tpu.memory_space<vmem>>, vector<1x8x8xbf16>
    %146 = vector.shape_cast %145 : vector<1x8x8xbf16> to vector<8x8xbf16>
    %cst_72 = arith.constant dense<0.000000e+00> : vector<256x8xf32>
    %147 = tpu.matmul %144, %146, %cst_72 {dimension_numbers = #tpu.dot_dimension_numbers<[1], [0], [0], [1], [0, 0, 1, 1], [], []>} : vector<256x8xbf16>, vector<8x8xbf16>, vector<256x8xf32> -> vector<256x8xf32>
    %148 = arith.addf %142, %147 : vector<256x8xf32>
    %cst_73 = arith.constant 0.000000e+00 : f32
    %149 = vector.broadcast %cst_73 : f32 to vector<16x1x8xf32>
    %150 = vector.extract_strided_slice %99 {offsets = [0, 1, 0], sizes = [16, 15, 8], strides = [1, 1, 1]} : vector<16x16x8xf32> to vector<16x15x8xf32>
    %151 = tpu.concatenate %150, %149 in 1 : vector<16x15x8xf32>, vector<16x1x8xf32> -> vector<16x16x8xf32>
    %152 = vector.shape_cast %151 : vector<16x16x8xf32> to vector<256x8xf32>
    %153 = arith.truncf %152 : vector<256x8xf32> to vector<256x8xbf16>
    %c5_74 = arith.constant 5 : index
    %c0_75 = arith.constant 0 : index
    %c0_76 = arith.constant 0 : index
    %154 = vector.load %arg4[%c5_74, %c0_75, %c0_76] : memref<9x8x8xbf16, #tpu.memory_space<vmem>>, vector<1x8x8xbf16>
    %155 = vector.shape_cast %154 : vector<1x8x8xbf16> to vector<8x8xbf16>
    %cst_77 = arith.constant dense<0.000000e+00> : vector<256x8xf32>
    %156 = tpu.matmul %153, %155, %cst_77 {dimension_numbers = #tpu.dot_dimension_numbers<[1], [0], [0], [1], [0, 0, 1, 1], [], []>} : vector<256x8xbf16>, vector<8x8xbf16>, vector<256x8xf32> -> vector<256x8xf32>
    %157 = arith.addf %148, %156 : vector<256x8xf32>
    %cst_78 = arith.constant 0.000000e+00 : f32
    %158 = vector.broadcast %cst_78 : f32 to vector<16x1x8xf32>
    %159 = vector.extract_strided_slice %99 {offsets = [0, 0, 0], sizes = [16, 15, 8], strides = [1, 1, 1]} : vector<16x16x8xf32> to vector<16x15x8xf32>
    %160 = tpu.concatenate %158, %159 in 1 : vector<16x1x8xf32>, vector<16x15x8xf32> -> vector<16x16x8xf32>
    %cst_79 = arith.constant 0.000000e+00 : f32
    %161 = vector.broadcast %cst_79 : f32 to vector<1x16x8xf32>
    %162 = vector.extract_strided_slice %160 {offsets = [1, 0, 0], sizes = [15, 16, 8], strides = [1, 1, 1]} : vector<16x16x8xf32> to vector<15x16x8xf32>
    %163 = tpu.concatenate %162, %161 in 0 : vector<15x16x8xf32>, vector<1x16x8xf32> -> vector<16x16x8xf32>
    %164 = vector.shape_cast %163 : vector<16x16x8xf32> to vector<256x8xf32>
    %165 = arith.truncf %164 : vector<256x8xf32> to vector<256x8xbf16>
    %c6_80 = arith.constant 6 : index
    %c0_81 = arith.constant 0 : index
    %c0_82 = arith.constant 0 : index
    %166 = vector.load %arg4[%c6_80, %c0_81, %c0_82] : memref<9x8x8xbf16, #tpu.memory_space<vmem>>, vector<1x8x8xbf16>
    %167 = vector.shape_cast %166 : vector<1x8x8xbf16> to vector<8x8xbf16>
    %cst_83 = arith.constant dense<0.000000e+00> : vector<256x8xf32>
    %168 = tpu.matmul %165, %167, %cst_83 {dimension_numbers = #tpu.dot_dimension_numbers<[1], [0], [0], [1], [0, 0, 1, 1], [], []>} : vector<256x8xbf16>, vector<8x8xbf16>, vector<256x8xf32> -> vector<256x8xf32>
    %169 = arith.addf %157, %168 : vector<256x8xf32>
    %cst_84 = arith.constant 0.000000e+00 : f32
    %170 = vector.broadcast %cst_84 : f32 to vector<1x16x8xf32>
    %171 = vector.extract_strided_slice %99 {offsets = [1, 0, 0], sizes = [15, 16, 8], strides = [1, 1, 1]} : vector<16x16x8xf32> to vector<15x16x8xf32>
    %172 = tpu.concatenate %171, %170 in 0 : vector<15x16x8xf32>, vector<1x16x8xf32> -> vector<16x16x8xf32>
    %173 = vector.shape_cast %172 : vector<16x16x8xf32> to vector<256x8xf32>
    %174 = arith.truncf %173 : vector<256x8xf32> to vector<256x8xbf16>
    %c7_85 = arith.constant 7 : index
    %c0_86 = arith.constant 0 : index
    %c0_87 = arith.constant 0 : index
    %175 = vector.load %arg4[%c7_85, %c0_86, %c0_87] : memref<9x8x8xbf16, #tpu.memory_space<vmem>>, vector<1x8x8xbf16>
    %176 = vector.shape_cast %175 : vector<1x8x8xbf16> to vector<8x8xbf16>
    %cst_88 = arith.constant dense<0.000000e+00> : vector<256x8xf32>
    %177 = tpu.matmul %174, %176, %cst_88 {dimension_numbers = #tpu.dot_dimension_numbers<[1], [0], [0], [1], [0, 0, 1, 1], [], []>} : vector<256x8xbf16>, vector<8x8xbf16>, vector<256x8xf32> -> vector<256x8xf32>
    %178 = arith.addf %169, %177 : vector<256x8xf32>
    %cst_89 = arith.constant 0.000000e+00 : f32
    %179 = vector.broadcast %cst_89 : f32 to vector<16x1x8xf32>
    %180 = vector.extract_strided_slice %99 {offsets = [0, 1, 0], sizes = [16, 15, 8], strides = [1, 1, 1]} : vector<16x16x8xf32> to vector<16x15x8xf32>
    %181 = tpu.concatenate %180, %179 in 1 : vector<16x15x8xf32>, vector<16x1x8xf32> -> vector<16x16x8xf32>
    %cst_90 = arith.constant 0.000000e+00 : f32
    %182 = vector.broadcast %cst_90 : f32 to vector<1x16x8xf32>
    %183 = vector.extract_strided_slice %181 {offsets = [1, 0, 0], sizes = [15, 16, 8], strides = [1, 1, 1]} : vector<16x16x8xf32> to vector<15x16x8xf32>
    %184 = tpu.concatenate %183, %182 in 0 : vector<15x16x8xf32>, vector<1x16x8xf32> -> vector<16x16x8xf32>
    %185 = vector.shape_cast %184 : vector<16x16x8xf32> to vector<256x8xf32>
    %186 = arith.truncf %185 : vector<256x8xf32> to vector<256x8xbf16>
    %c8_91 = arith.constant 8 : index
    %c0_92 = arith.constant 0 : index
    %c0_93 = arith.constant 0 : index
    %187 = vector.load %arg4[%c8_91, %c0_92, %c0_93] : memref<9x8x8xbf16, #tpu.memory_space<vmem>>, vector<1x8x8xbf16>
    %188 = vector.shape_cast %187 : vector<1x8x8xbf16> to vector<8x8xbf16>
    %cst_94 = arith.constant dense<0.000000e+00> : vector<256x8xf32>
    %189 = tpu.matmul %186, %188, %cst_94 {dimension_numbers = #tpu.dot_dimension_numbers<[1], [0], [0], [1], [0, 0, 1, 1], [], []>} : vector<256x8xbf16>, vector<8x8xbf16>, vector<256x8xf32> -> vector<256x8xf32>
    %190 = arith.addf %178, %189 : vector<256x8xf32>
    %c0_95 = arith.constant 0 : index
    %c0_96 = arith.constant 0 : index
    %191 = vector.load %arg5[%c0_95, %c0_96] : memref<1x8xf32, #tpu.memory_space<vmem>>, vector<1x8xf32>
    %192 = vector.broadcast %191 : vector<1x8xf32> to vector<256x8xf32>
    %193 = arith.addf %190, %192 : vector<256x8xf32>
    %cst_97 = arith.constant 0.000000e+00 : f32
    %194 = vector.broadcast %cst_97 : f32 to vector<256x8xf32>
    %195 = arith.maximumf %193, %194 : vector<256x8xf32>
    %196 = vector.shape_cast %195 : vector<256x8xf32> to vector<16x16x8xf32>
    %197 = vector.extract_strided_slice %196 {offsets = [0, 0, 0], sizes = [16, 1, 8], strides = [1, 1, 1]} : vector<16x16x8xf32> to vector<16x1x8xf32>
    %198 = vector.shape_cast %197 : vector<16x1x8xf32> to vector<16x8xf32>
    %199 = vector.extract_strided_slice %196 {offsets = [0, 1, 0], sizes = [16, 1, 8], strides = [1, 1, 1]} : vector<16x16x8xf32> to vector<16x1x8xf32>
    %200 = vector.shape_cast %199 : vector<16x1x8xf32> to vector<16x8xf32>
    %201 = vector.extract_strided_slice %196 {offsets = [0, 2, 0], sizes = [16, 1, 8], strides = [1, 1, 1]} : vector<16x16x8xf32> to vector<16x1x8xf32>
    %202 = vector.shape_cast %201 : vector<16x1x8xf32> to vector<16x8xf32>
    %203 = vector.extract_strided_slice %196 {offsets = [0, 3, 0], sizes = [16, 1, 8], strides = [1, 1, 1]} : vector<16x16x8xf32> to vector<16x1x8xf32>
    %204 = vector.shape_cast %203 : vector<16x1x8xf32> to vector<16x8xf32>
    %205 = vector.extract_strided_slice %196 {offsets = [0, 4, 0], sizes = [16, 1, 8], strides = [1, 1, 1]} : vector<16x16x8xf32> to vector<16x1x8xf32>
    %206 = vector.shape_cast %205 : vector<16x1x8xf32> to vector<16x8xf32>
    %207 = vector.extract_strided_slice %196 {offsets = [0, 5, 0], sizes = [16, 1, 8], strides = [1, 1, 1]} : vector<16x16x8xf32> to vector<16x1x8xf32>
    %208 = vector.shape_cast %207 : vector<16x1x8xf32> to vector<16x8xf32>
    %209 = vector.extract_strided_slice %196 {offsets = [0, 6, 0], sizes = [16, 1, 8], strides = [1, 1, 1]} : vector<16x16x8xf32> to vector<16x1x8xf32>
    %210 = vector.shape_cast %209 : vector<16x1x8xf32> to vector<16x8xf32>
    %211 = vector.extract_strided_slice %196 {offsets = [0, 7, 0], sizes = [16, 1, 8], strides = [1, 1, 1]} : vector<16x16x8xf32> to vector<16x1x8xf32>
    %212 = vector.shape_cast %211 : vector<16x1x8xf32> to vector<16x8xf32>
    %213 = vector.extract_strided_slice %196 {offsets = [0, 8, 0], sizes = [16, 1, 8], strides = [1, 1, 1]} : vector<16x16x8xf32> to vector<16x1x8xf32>
    %214 = vector.shape_cast %213 : vector<16x1x8xf32> to vector<16x8xf32>
    %215 = vector.extract_strided_slice %196 {offsets = [0, 9, 0], sizes = [16, 1, 8], strides = [1, 1, 1]} : vector<16x16x8xf32> to vector<16x1x8xf32>
    %216 = vector.shape_cast %215 : vector<16x1x8xf32> to vector<16x8xf32>
    %217 = vector.extract_strided_slice %196 {offsets = [0, 10, 0], sizes = [16, 1, 8], strides = [1, 1, 1]} : vector<16x16x8xf32> to vector<16x1x8xf32>
    %218 = vector.shape_cast %217 : vector<16x1x8xf32> to vector<16x8xf32>
    %219 = vector.extract_strided_slice %196 {offsets = [0, 11, 0], sizes = [16, 1, 8], strides = [1, 1, 1]} : vector<16x16x8xf32> to vector<16x1x8xf32>
    %220 = vector.shape_cast %219 : vector<16x1x8xf32> to vector<16x8xf32>
    %221 = vector.extract_strided_slice %196 {offsets = [0, 12, 0], sizes = [16, 1, 8], strides = [1, 1, 1]} : vector<16x16x8xf32> to vector<16x1x8xf32>
    %222 = vector.shape_cast %221 : vector<16x1x8xf32> to vector<16x8xf32>
    %223 = vector.extract_strided_slice %196 {offsets = [0, 13, 0], sizes = [16, 1, 8], strides = [1, 1, 1]} : vector<16x16x8xf32> to vector<16x1x8xf32>
    %224 = vector.shape_cast %223 : vector<16x1x8xf32> to vector<16x8xf32>
    %225 = vector.extract_strided_slice %196 {offsets = [0, 14, 0], sizes = [16, 1, 8], strides = [1, 1, 1]} : vector<16x16x8xf32> to vector<16x1x8xf32>
    %226 = vector.shape_cast %225 : vector<16x1x8xf32> to vector<16x8xf32>
    %227 = vector.extract_strided_slice %196 {offsets = [0, 15, 0], sizes = [16, 1, 8], strides = [1, 1, 1]} : vector<16x16x8xf32> to vector<16x1x8xf32>
    %228 = vector.shape_cast %227 : vector<16x1x8xf32> to vector<16x8xf32>
    %229 = tpu.concatenate %198, %200, %202, %204, %206, %208, %210, %212, %214, %216, %218, %220, %222, %224, %226, %228 in 1 : vector<16x8xf32>, vector<16x8xf32>, vector<16x8xf32>, vector<16x8xf32>, vector<16x8xf32>, vector<16x8xf32>, vector<16x8xf32>, vector<16x8xf32>, vector<16x8xf32>, vector<16x8xf32>, vector<16x8xf32>, vector<16x8xf32>, vector<16x8xf32>, vector<16x8xf32>, vector<16x8xf32>, vector<16x8xf32> -> vector<16x128xf32>
    %230 = arith.truncf %229 : vector<16x128xf32> to vector<16x128xbf16>
    %c0_98 = arith.constant 0 : index
    %c0_99 = arith.constant 0 : index
    %c0_100 = arith.constant 0 : index
    %231 = vector.load %arg6[%c0_98, %c0_99, %c0_100] : memref<1x16x128xbf16, #tpu.memory_space<vmem>>, vector<1x16x128xbf16>
    %232 = vector.shape_cast %231 : vector<1x16x128xbf16> to vector<16x128xbf16>
    %233 = vector.shape_cast %230 : vector<16x128xbf16> to vector<1x16x128xbf16>
    tpu.vector_store %arg6[%c0_98, %c0_99, %c0_100], %233 {strides = array<i32>} : memref<1x16x128xbf16, #tpu.memory_space<vmem>>, vector<1x16x128xbf16>,
    %234 = vector.shape_cast %195 : vector<256x8xf32> to vector<128x2x8xf32>
    %235 = vector.extract_strided_slice %234 {offsets = [0, 0, 0], sizes = [128, 1, 8], strides = [1, 1, 1]} : vector<128x2x8xf32> to vector<128x1x8xf32>
    %236 = vector.shape_cast %235 : vector<128x1x8xf32> to vector<128x8xf32>
    %237 = vector.extract_strided_slice %234 {offsets = [0, 1, 0], sizes = [128, 1, 8], strides = [1, 1, 1]} : vector<128x2x8xf32> to vector<128x1x8xf32>
    %238 = vector.shape_cast %237 : vector<128x1x8xf32> to vector<128x8xf32>
    %239 = arith.maximumf %236, %238 : vector<128x8xf32>
    %240 = vector.shape_cast %239 : vector<128x8xf32> to vector<8x2x8x8xf32>
    %241 = vector.extract_strided_slice %240 {offsets = [0, 0, 0, 0], sizes = [8, 1, 8, 8], strides = [1, 1, 1, 1]} : vector<8x2x8x8xf32> to vector<8x1x8x8xf32>
    %242 = vector.shape_cast %241 : vector<8x1x8x8xf32> to vector<8x8x8xf32>
    %243 = vector.extract_strided_slice %240 {offsets = [0, 1, 0, 0], sizes = [8, 1, 8, 8], strides = [1, 1, 1, 1]} : vector<8x2x8x8xf32> to vector<8x1x8x8xf32>
    %244 = vector.shape_cast %243 : vector<8x1x8x8xf32> to vector<8x8x8xf32>
    %245 = arith.maximumf %242, %244 : vector<8x8x8xf32>
    %246 = vector.extract_strided_slice %245 {offsets = [0, 0, 0], sizes = [8, 1, 8], strides = [1, 1, 1]} : vector<8x8x8xf32> to vector<8x1x8xf32>
    %247 = vector.shape_cast %246 : vector<8x1x8xf32> to vector<8x8xf32>
    %248 = vector.extract_strided_slice %245 {offsets = [0, 1, 0], sizes = [8, 1, 8], strides = [1, 1, 1]} : vector<8x8x8xf32> to vector<8x1x8xf32>
    %249 = vector.shape_cast %248 : vector<8x1x8xf32> to vector<8x8xf32>
    %250 = vector.extract_strided_slice %245 {offsets = [0, 2, 0], sizes = [8, 1, 8], strides = [1, 1, 1]} : vector<8x8x8xf32> to vector<8x1x8xf32>
    %251 = vector.shape_cast %250 : vector<8x1x8xf32> to vector<8x8xf32>
    %252 = vector.extract_strided_slice %245 {offsets = [0, 3, 0], sizes = [8, 1, 8], strides = [1, 1, 1]} : vector<8x8x8xf32> to vector<8x1x8xf32>
    %253 = vector.shape_cast %252 : vector<8x1x8xf32> to vector<8x8xf32>
    %254 = vector.extract_strided_slice %245 {offsets = [0, 4, 0], sizes = [8, 1, 8], strides = [1, 1, 1]} : vector<8x8x8xf32> to vector<8x1x8xf32>
    %255 = vector.shape_cast %254 : vector<8x1x8xf32> to vector<8x8xf32>
    %256 = vector.extract_strided_slice %245 {offsets = [0, 5, 0], sizes = [8, 1, 8], strides = [1, 1, 1]} : vector<8x8x8xf32> to vector<8x1x8xf32>
    %257 = vector.shape_cast %256 : vector<8x1x8xf32> to vector<8x8xf32>
    %258 = vector.extract_strided_slice %245 {offsets = [0, 6, 0], sizes = [8, 1, 8], strides = [1, 1, 1]} : vector<8x8x8xf32> to vector<8x1x8xf32>
    %259 = vector.shape_cast %258 : vector<8x1x8xf32> to vector<8x8xf32>
    %260 = vector.extract_strided_slice %245 {offsets = [0, 7, 0], sizes = [8, 1, 8], strides = [1, 1, 1]} : vector<8x8x8xf32> to vector<8x1x8xf32>
    %261 = vector.shape_cast %260 : vector<8x1x8xf32> to vector<8x8xf32>
    %262 = tpu.concatenate %247, %249, %251, %253, %255, %257, %259, %261 in 1 : vector<8x8xf32>, vector<8x8xf32>, vector<8x8xf32>, vector<8x8xf32>, vector<8x8xf32>, vector<8x8xf32>, vector<8x8xf32>, vector<8x8xf32> -> vector<8x64xf32>
    %c0_101 = arith.constant 0 : index
    %c0_102 = arith.constant 0 : index
    %c0_103 = arith.constant 0 : index
    %263 = vector.load %arg7[%c0_101, %c0_102, %c0_103] : memref<1x8x64xf32, #tpu.memory_space<vmem>>, vector<1x8x64xf32>
    %264 = vector.shape_cast %263 : vector<1x8x64xf32> to vector<8x64xf32>
    %265 = vector.shape_cast %262 : vector<8x64xf32> to vector<1x8x64xf32>
    tpu.vector_store %arg7[%c0_101, %c0_102, %c0_103], %265 {strides = array<i32>} : memref<1x8x64xf32, #tpu.memory_space<vmem>>, vector<1x8x64xf32>,
    return
  }
  func.func @transform_0(%arg0: i32) -> (i32, i32, i32, i32) {
    %c0_i32 = arith.constant 0 : i32
    %c0_i32_0 = arith.constant 0 : i32
    %c0_i32_1 = arith.constant 0 : i32
    %c0_i32_2 = arith.constant 0 : i32
    return %arg0, %c0_i32, %c0_i32_0, %c0_i32_1 : i32, i32, i32, i32
  }
  func.func @transform_1(%arg0: i32) -> (i32, i32, i32) {
    %c0_i32 = arith.constant 0 : i32
    %c0_i32_0 = arith.constant 0 : i32
    %c0_i32_1 = arith.constant 0 : i32
    %c0_i32_2 = arith.constant 0 : i32
    return %c0_i32, %c0_i32_0, %c0_i32_1 : i32, i32, i32
  }
  func.func @transform_2(%arg0: i32) -> (i32, i32) {
    %c0_i32 = arith.constant 0 : i32
    %c0_i32_0 = arith.constant 0 : i32
    %c0_i32_1 = arith.constant 0 : i32
    return %c0_i32, %c0_i32_0 : i32, i32
  }
  func.func @transform_3(%arg0: i32) -> (i32, i32, i32) {
    %c0_i32 = arith.constant 0 : i32
    %c0_i32_0 = arith.constant 0 : i32
    %c0_i32_1 = arith.constant 0 : i32
    %c0_i32_2 = arith.constant 0 : i32
    return %c0_i32, %c0_i32_0, %c0_i32_1 : i32, i32, i32
  }
  func.func @transform_4(%arg0: i32) -> (i32, i32) {
    %c0_i32 = arith.constant 0 : i32
    %c0_i32_0 = arith.constant 0 : i32
    %c0_i32_1 = arith.constant 0 : i32
    return %c0_i32, %c0_i32_0 : i32, i32
  }
  func.func @transform_5(%arg0: i32) -> (i32, i32, i32) {
    %c0_i32 = arith.constant 0 : i32
    %c0_i32_0 = arith.constant 0 : i32
    %c0_i32_1 = arith.constant 0 : i32
    return %arg0, %c0_i32, %c0_i32_0 : i32, i32, i32
  }
  func.func @transform_6(%arg0: i32) -> (i32, i32, i32) {
    %c0_i32 = arith.constant 0 : i32
    %c0_i32_0 = arith.constant 0 : i32
    %c0_i32_1 = arith.constant 0 : i32
    return %arg0, %c0_i32, %c0_i32_0 : i32, i32, i32
  }
}

</mosaic_0001>

<llo_original>
// kernel: _lambda_.1
$region0: #{_lambda_.1}
  #allocation0 [shape = 'u32[]', space=smem, size = 0x4, offset = 0x4, fixed_abs, tag = 'smem constant byte address 0x4 - core index']
  #allocation1 [shape = 'u32[144,128]{1,0:T(1,128)}', space=vmem, size = 0x12000, scoped, tag = 'internal scratch']
  %s0 = inlined_call_operand.vmem [shape: bf16[2,16,16,8], index: 0, kind: input, shape index: {}]
  %s1 = inlined_call_operand.vmem [shape: bf16[9,8,8], index: 1, kind: input, shape index: {}]
  %s2 = inlined_call_operand.vmem [shape: f32[1,8], index: 2, kind: input, shape index: {}]
  %s3 = inlined_call_operand.vmem [shape: bf16[9,8,8], index: 3, kind: input, shape index: {}]
  %s4 = inlined_call_operand.vmem [shape: f32[1,8], index: 4, kind: input, shape index: {}]
  %s5 = inlined_call_operand.vmem [shape: bf16[2,16,128], index: 5, kind: output, shape index: {0}]
  %s6 = inlined_call_operand.vmem [shape: f32[2,8,64], index: 6, kind: output, shape index: {1}]
  %7 = xla_tuple %s5, %s6
  %s8 = sld [smem:[#allocation0]]
  $region61: #{_lambda_.1} parent=0
    _
  %s10 = ssub.s32 1, %s8
  %s11 = scalar_select 0, %s10, %s8
  loop: start=0, step=1, limit=4
  $region2: #{_lambda_.1} parent=0 // loop_pre_header
    _
  $region3: #{_lambda_.1} parent=0 // loop_header
    %s13 = sphi 0, %s17
    %p14 = scmp.ge.s32.totalorder %s13, 4
    %s23 = sphi 0, %s25
    %s26 = sphi 0, %s23
    %s27 = sphi 0, %s26
    %s43 = sphi 0, %s27
    %s47 = sphi 0, %s47
    %s49 = sphi 0, %s47
    %s50 = sphi 0, %s49
    %s64 = sphi 0, %s50
    %s68 = sphi 0, %s68
    %s70 = sphi 0, %s68
    %s71 = sphi 0, %s70
    %s85 = sphi 0, %s71
    %s89 = sphi 0, %s89
    %s91 = sphi 0, %s89
    %s92 = sphi 0, %s91
    %s106 = sphi 0, %s92
    %s110 = sphi 0, %s110
    %s112 = sphi 0, %s110
    %s113 = sphi 0, %s112
    %s127 = sphi 0, %s113
    %s133 = sphi 0, %s135
    %s136 = sphi 0, %s133
    %s137 = sphi 0, %s136
    %s153 = sphi 0, %s137
    %s159 = sphi 0, %s161
    %s162 = sphi 0, %s159
    %s163 = sphi 0, %s162
    %s179 = sphi 0, %s163
  $region4: #{_lambda_.1} parent=0 // loop_header_branch
    %16 = sbr.rel (%p14) target = $region8
  $region5: #{_lambda_.1} parent=0 // loop_body
    %s18 = ssub.s32 %s13, 1
    %s19 = ssub.s32 %s13, 2
    %s20 = sadd.s32 %s13, 1
    %s21 = ssub.s32 %s13, %s20
    %p22 = scmp.eq.s32.totalorder %s21, 0
    %s24 = sadd.s32 %s23, 1
    %s25 = scalar_select %p22, %s23, %s24
    %p28 = pneg %p22
    %p29 = scmp.eq.s32.totalorder %s13, 1
    %p30 = por %p28, %p29
    %p31 = scmp.ne.s32.totalorder %s23, %s26
    %p32 = scmp.eq.s32.totalorder %s13, 0
    %p33 = por %p31, %p32
    %p34 = scmp.ne.s32.totalorder %s23, %s26
    %p35 = scmp.eq.s32.totalorder %s18, 1
    %p36 = por %p34, %p35
    %p37 = scmp.ne.s32.totalorder %s26, %s27
    %p38 = scmp.eq.s32.totalorder %s18, 0
    %p39 = por %p37, %p38
    %p40 = scmp.ne.s32.totalorder %s26, %s27
    %p41 = scmp.eq.s32.totalorder %s19, 1
    %p42 = por %p40, %p41
    %p44 = scmp.ne.s32.totalorder %s27, %s43
    %p45 = scmp.eq.s32.totalorder %s19, 0
    %p46 = por %p44, %p45
    %s48 = sadd.s32 %s47, 1
    %p51 = scmp.eq.s32.totalorder %s13, 1
    %p52 = scmp.ne.s32.totalorder %s47, %s49
    %p53 = scmp.eq.s32.totalorder %s13, 0
    %p54 = por %p52, %p53
    %p55 = scmp.ne.s32.totalorder %s47, %s49
    %p56 = scmp.eq.s32.totalorder %s18, 1
    %p57 = por %p55, %p56
    %p58 = scmp.ne.s32.totalorder %s49, %s50
    %p59 = scmp.eq.s32.totalorder %s18, 0
    %p60 = por %p58, %p59
    %p61 = scmp.ne.s32.totalorder %s49, %s50
    %p62 = scmp.eq.s32.totalorder %s19, 1
    %p63 = por %p61, %p62
    %p65 = scmp.ne.s32.totalorder %s50, %s64
    %p66 = scmp.eq.s32.totalorder %s19, 0
    %p67 = por %p65, %p66
    %s69 = sadd.s32 %s68, 1
    %p72 = scmp.eq.s32.totalorder %s13, 1
    %p73 = scmp.ne.s32.totalorder %s68, %s70
    %p74 = scmp.eq.s32.totalorder %s13, 0
    %p75 = por %p73, %p74
    %p76 = scmp.ne.s32.totalorder %s68, %s70
    %p77 = scmp.eq.s32.totalorder %s18, 1
    %p78 = por %p76, %p77
    %p79 = scmp.ne.s32.totalorder %s70, %s71
    %p80 = scmp.eq.s32.totalorder %s18, 0
    %p81 = por %p79, %p80
    %p82 = scmp.ne.s32.totalorder %s70, %s71
    %p83 = scmp.eq.s32.totalorder %s19, 1
    %p84 = por %p82, %p83
    %p86 = scmp.ne.s32.totalorder %s71, %s85
    %p87 = scmp.eq.s32.totalorder %s19, 0
    %p88 = por %p86, %p87
    %s90 = sadd.s32 %s89, 1
    %p93 = scmp.eq.s32.totalorder %s13, 1
    %p94 = scmp.ne.s32.totalorder %s89, %s91
    %p95 = scmp.eq.s32.totalorder %s13, 0
    %p96 = por %p94, %p95
    %p97 = scmp.ne.s32.totalorder %s89, %s91
    %p98 = scmp.eq.s32.totalorder %s18, 1
    %p99 = por %p97, %p98
    %p100 = scmp.ne.s32.totalorder %s91, %s92
    %p101 = scmp.eq.s32.totalorder %s18, 0
    %p102 = por %p100, %p101
    %p103 = scmp.ne.s32.totalorder %s91, %s92
    %p104 = scmp.eq.s32.totalorder %s19, 1
    %p105 = por %p103, %p104
    %p107 = scmp.ne.s32.totalorder %s92, %s106
    %p108 = scmp.eq.s32.totalorder %s19, 0
    %p109 = por %p107, %p108
    %s111 = sadd.s32 %s110, 1
    %p114 = scmp.eq.s32.totalorder %s13, 1
    %p115 = scmp.ne.s32.totalorder %s110, %s112
    %p116 = scmp.eq.s32.totalorder %s13, 0
    %p117 = por %p115, %p116
    %p118 = scmp.ne.s32.totalorder %s110, %s112
    %p119 = scmp.eq.s32.totalorder %s18, 1
    %p120 = por %p118, %p119
    %p121 = scmp.ne.s32.totalorder %s112, %s113
    %p122 = scmp.eq.s32.totalorder %s18, 0
    %p123 = por %p121, %p122
    %p124 = scmp.ne.s32.totalorder %s112, %s113
    %p125 = scmp.eq.s32.totalorder %s19, 1
    %p126 = por %p124, %p125
    %p128 = scmp.ne.s32.totalorder %s113, %s127
    %p129 = scmp.eq.s32.totalorder %s19, 0
    %p130 = por %p128, %p129
    %s131 = ssub.s32 %s13, %s20
    %p132 = scmp.eq.s32.totalorder %s131, 0
    %s134 = sadd.s32 %s133, 1
    %s135 = scalar_select %p132, %s133, %s134
    %p138 = pneg %p132
    %p139 = scmp.eq.s32.totalorder %s13, 1
    %p140 = por %p138, %p139
    %p141 = scmp.ne.s32.totalorder %s133, %s136
    %p142 = scmp.eq.s32.totalorder %s13, 0
    %p143 = por %p141, %p142
    %p144 = scmp.ne.s32.totalorder %s133, %s136
    %p145 = scmp.eq.s32.totalorder %s18, 1
    %p146 = por %p144, %p145
    %p147 = scmp.ne.s32.totalorder %s136, %s137
    %p148 = scmp.eq.s32.totalorder %s18, 0
    %p149 = por %p147, %p148
    %p150 = scmp.ne.s32.totalorder %s136, %s137
    %p151 = scmp.eq.s32.totalorder %s19, 1
    %p152 = por %p150, %p151
    %p154 = scmp.ne.s32.totalorder %s137, %s153
    %p155 = scmp.eq.s32.totalorder %s19, 0
    %p156 = por %p154, %p155
    %s157 = ssub.s32 %s13, %s20
    %p158 = scmp.eq.s32.totalorder %s157, 0
    %s160 = sadd.s32 %s159, 1
    %s161 = scalar_select %p158, %s159, %s160
    %p164 = pneg %p158
    %p165 = scmp.eq.s32.totalorder %s13, 1
    %p166 = por %p164, %p165
    %p167 = scmp.ne.s32.totalorder %s159, %s162
    %p168 = scmp.eq.s32.totalorder %s13, 0
    %p169 = por %p167, %p168
    %p170 = scmp.ne.s32.totalorder %s159, %s162
    %p171 = scmp.eq.s32.totalorder %s18, 1
    %p172 = por %p170, %p171
    %p173 = scmp.ne.s32.totalorder %s162, %s163
    %p174 = scmp.eq.s32.totalorder %s18, 0
    %p175 = por %p173, %p174
    %p176 = scmp.ne.s32.totalorder %s162, %s163
    %p177 = scmp.eq.s32.totalorder %s19, 1
    %p178 = por %p176, %p177
    %p180 = scmp.ne.s32.totalorder %s163, %s179
    %p181 = scmp.eq.s32.totalorder %s19, 0
    %p182 = por %p180, %p181
    %p183 = scmp.le.s32.totalorder 1, %s13
    %p184 = scmp.lt.s32.totalorder %s13, 3
    %p185 = pnand %p183, %p184
    %p186 = pneg %p185
    // Predicated region
    $region9: #{_lambda_.1} parent=5 // pred_check
      _
    $region10: #{_lambda_.1} parent=5 // pred_check_branch
      %188 = sbr.rel (%p185) target = $region12
    $region11: #{_lambda_.1} parent=5 // pred_region
      %s189 = ssub.s32 %s13, 1
      // Predicated region
      $region13: #{_lambda_.1} parent=11 // pred_check
        %p190 = pneg %p60
      $region14: #{_lambda_.1} parent=11 // pred_check_branch
        %192 = sbr.rel (%p190) target = $region16
      $region15: #{_lambda_.1} parent=11 // pred_region
        _
      $region16: #{_lambda_.1} parent=11 // pred_fallthru
        _
      // Predicated region
      $region17: #{_lambda_.1} parent=11 // pred_check
        %p193 = pneg %p81
      $region18: #{_lambda_.1} parent=11 // pred_check_branch
        %195 = sbr.rel (%p193) target = $region20
      $region19: #{_lambda_.1} parent=11 // pred_region
        _
      $region20: #{_lambda_.1} parent=11 // pred_fallthru
        _
      // Predicated region
      $region21: #{_lambda_.1} parent=11 // pred_check
        %p196 = pneg %p102
      $region22: #{_lambda_.1} parent=11 // pred_check_branch
        %198 = sbr.rel (%p196) target = $region24
      $region23: #{_lambda_.1} parent=11 // pred_region
        _
      $region24: #{_lambda_.1} parent=11 // pred_fallthru
        _
      // Predicated region
      $region25: #{_lambda_.1} parent=11 // pred_check
        %p199 = pneg %p123
      $region26: #{_lambda_.1} parent=11 // pred_check_branch
        %201 = sbr.rel (%p199) target = $region28
      $region27: #{_lambda_.1} parent=11 // pred_region
        _
      $region28: #{_lambda_.1} parent=11 // pred_fallthru
        _
    $region12: #{_lambda_.1} parent=5 // pred_fallthru
      _
    %p202 = scmp.lt.s32.totalorder %s13, 2
    // Predicated region
    $region29: #{_lambda_.1} parent=5 // pred_check
      %p203 = pneg %p202
    $region30: #{_lambda_.1} parent=5 // pred_check_branch
      %205 = sbr.rel (%p203) target = $region32
    $region31: #{_lambda_.1} parent=5 // pred_region
      // Predicated region
      $region33: #{_lambda_.1} parent=31 // pred_check
        %p206 = pneg %p33
      $region34: #{_lambda_.1} parent=31 // pred_check_branch
        %208 = sbr.rel (%p206) target = $region36
      $region35: #{_lambda_.1} parent=31 // pred_region
        %p209 = scmp.lt.s32.totalorder %s13, 1
        %s210 = scalar_select %p209, %s13, 1
        %s211 = smul.addr %s210, 32
        %s212 = smul.addr %s211, 4
        %s213 = scalar_lea.vmem %s0, %s212
      $region36: #{_lambda_.1} parent=31 // pred_fallthru
        _
    $region32: #{_lambda_.1} parent=5 // pred_fallthru
      _
    %p214 = scmp.le.s32.totalorder 1, %s13
    %p215 = scmp.lt.s32.totalorder %s13, 3
    %p216 = pnand %p214, %p215
    %p217 = pneg %p216
    // Predicated region
    $region37: #{_lambda_.1} parent=5 // pred_check
      _
    $region38: #{_lambda_.1} parent=5 // pred_check_branch
      %219 = sbr.rel (%p216) target = $region40
    $region39: #{_lambda_.1} parent=5 // pred_region
      %s220 = ssub.s32 %s13, 1
      %p221 = scmp.lt.s32.totalorder %s18, 1
      %s222 = scalar_select %p221, %s18, 1
      %s223 = smul.addr %s222, 32
      %s224 = smul.addr %s223, 4
      %s225 = scalar_lea.vmem %s0, %s224
      %p226 = pneg %p39
      %p227 = pneg %p36
      %p228 = pneg %p60
      %p229 = pneg %p57
      %p230 = pneg %p81
      %p231 = pneg %p78
      %p232 = pneg %p102
      %p233 = pneg %p99
      %p234 = pneg %p123
      %p235 = pneg %p120
      %p236 = pneg %p149
      %p237 = pneg %p146
      %p238 = scmp.lt.s32.totalorder %s18, 1
      %s239 = scalar_select %p238, %s18, 1
      %s240 = smul.addr %s239, 2
      %s241 = smul.addr %s240, 4
      %s242 = scalar_lea.vmem %s5, %s241
      %p243 = pneg %p175
      %p244 = pneg %p172
      %p245 = scmp.lt.s32.totalorder %s18, 1
      %s246 = scalar_select %p245, %s18, 1
      %s247 = smul.addr %s246, 8
      %s248 = scalar_lea.vmem %s6, %s247
      %p249 = scmp.lt.s32.totalorder %s18, 1
      %s250 = scalar_select %p249, %s18, 1
      %s251 = smul.addr %s250, 32
      %s252 = smul.addr %s251, 4
      %s253 = scalar_lea.vmem %s0, %s252
      %p254 = scmp.lt.s32.totalorder %s18, 1
      %s255 = scalar_select %p254, %s18, 1
      %s256 = smul.addr %s255, 2
      %s257 = smul.addr %s256, 4
      %s258 = scalar_lea.vmem %s5, %s257
      %p259 = scmp.lt.s32.totalorder %s18, 1
      %s260 = scalar_select %p259, %s18, 1
      %s261 = smul.addr %s260, 8
      %s262 = scalar_lea.vmem %s6, %s261
      %v264 = vld [vmem:[%s253] sm:$0xf]
      %v265 = vld [vmem:[%s253 + $0x4] sm:$0xf]
      %v266 = vld [vmem:[%s253 + $0x8] sm:$0xf]
      %v267 = vld [vmem:[%s253 + $0xc] sm:$0xf]
      %v268 = vld [vmem:[%s253 + $0x10] sm:$0xf]
      %v269 = vld [vmem:[%s253 + $0x14] sm:$0xf]
      %v270 = vld [vmem:[%s253 + $0x18] sm:$0xf]
      %v271 = vld [vmem:[%s253 + $0x1c] sm:$0xf]
      %v272 = vld [vmem:[%s253 + $0x20] sm:$0xf]
      %v273 = vld [vmem:[%s253 + $0x24] sm:$0xf]
      %v274 = vld [vmem:[%s253 + $0x28] sm:$0xf]
      %v275 = vld [vmem:[%s253 + $0x2c] sm:$0xf]
      %v276 = vld [vmem:[%s253 + $0x30] sm:$0xf]
      %v277 = vld [vmem:[%s253 + $0x34] sm:$0xf]
      %v278 = vld [vmem:[%s253 + $0x38] sm:$0xf]
      %v279 = vld [vmem:[%s253 + $0x3c] sm:$0xf]
      %v280 = vld [vmem:[%s253 + $0x40] sm:$0xf]
      %v281 = vld [vmem:[%s253 + $0x44] sm:$0xf]
      %v282 = vld [vmem:[%s253 + $0x48] sm:$0xf]
      %v283 = vld [vmem:[%s253 + $0x4c] sm:$0xf]
      %v284 = vld [vmem:[%s253 + $0x50] sm:$0xf]
      %v285 = vld [vmem:[%s253 + $0x54] sm:$0xf]
      %v286 = vld [vmem:[%s253 + $0x58] sm:$0xf]
      %v287 = vld [vmem:[%s253 + $0x5c] sm:$0xf]
      %v288 = vld [vmem:[%s253 + $0x60] sm:$0xf]
      %v289 = vld [vmem:[%s253 + $0x64] sm:$0xf]
      %v290 = vld [vmem:[%s253 + $0x68] sm:$0xf]
      %v291 = vld [vmem:[%s253 + $0x6c] sm:$0xf]
      %v292 = vld [vmem:[%s253 + $0x70] sm:$0xf]
      %v293 = vld [vmem:[%s253 + $0x74] sm:$0xf]
      %v294 = vld [vmem:[%s253 + $0x78] sm:$0xf]
      %v295 = vld [vmem:[%s253 + $0x7c] sm:$0xf]
      %v296 = vunpack.c.l.bf16 %v264
      %v297 = vunpack.c.l.bf16 %v265
      %v298 = vunpack.c.l.bf16 %v266
      %v299 = vunpack.c.l.bf16 %v267
      %v300 = vunpack.c.l.bf16 %v268
      %v301 = vunpack.c.l.bf16 %v269
      %v302 = vunpack.c.l.bf16 %v270
      %v303 = vunpack.c.l.bf16 %v271
      %v304 = vunpack.c.l.bf16 %v272
      %v305 = vunpack.c.l.bf16 %v273
      %v306 = vunpack.c.l.bf16 %v274
      %v307 = vunpack.c.l.bf16 %v275
      %v308 = vunpack.c.l.bf16 %v276
      %v309 = vunpack.c.l.bf16 %v277
      %v310 = vunpack.c.l.bf16 %v278
      %v311 = vunpack.c.l.bf16 %v279
      %v312 = vunpack.c.l.bf16 %v280
      %v313 = vunpack.c.l.bf16 %v281
      %v314 = vunpack.c.l.bf16 %v282
      %v315 = vunpack.c.l.bf16 %v283
      %v316 = vunpack.c.l.bf16 %v284
      %v317 = vunpack.c.l.bf16 %v285
      %v318 = vunpack.c.l.bf16 %v286
      %v319 = vunpack.c.l.bf16 %v287
      %v320 = vunpack.c.l.bf16 %v288
      %v321 = vunpack.c.l.bf16 %v289
      %v322 = vunpack.c.l.bf16 %v290
      %v323 = vunpack.c.l.bf16 %v291
      %v324 = vunpack.c.l.bf16 %v292
      %v325 = vunpack.c.l.bf16 %v293
      %v326 = vunpack.c.l.bf16 %v294
      %v327 = vunpack.c.l.bf16 %v295
      %vm360 = vcmask 1040384
      %v361 = vrot.slane %v296, 7
      %v362 = vrot.slane %v297, 7
      %v363 = vsel %vm360, %v361, %v362
      %v364 = vrot.slane %v298, 7
      %v365 = vrot.slane %v299, 7
      %v366 = vsel %vm360, %v364, %v365
      %v367 = vrot.slane %v300, 7
      %v368 = vrot.slane %v301, 7
      %v369 = vsel %vm360, %v367, %v368
      %v370 = vrot.slane %v302, 7
      %v371 = vrot.slane %v303, 7
      %v372 = vsel %vm360, %v370, %v371
      %v373 = vrot.slane %v304, 7
      %v374 = vrot.slane %v305, 7
      %v375 = vsel %vm360, %v373, %v374
      %v376 = vrot.slane %v306, 7
      %v377 = vrot.slane %v307, 7
      %v378 = vsel %vm360, %v376, %v377
      %v379 = vrot.slane %v308, 7
      %v380 = vrot.slane %v309, 7
      %v381 = vsel %vm360, %v379, %v380
      %v382 = vrot.slane %v310, 7
      %v383 = vrot.slane %v311, 7
      %v384 = vsel %vm360, %v382, %v383
      %v385 = vrot.slane %v312, 7
      %v386 = vrot.slane %v313, 7
      %v387 = vsel %vm360, %v385, %v386
      %v388 = vrot.slane %v314, 7
      %v389 = vrot.slane %v315, 7
      %v390 = vsel %vm360, %v388, %v389
      %v391 = vrot.slane %v316, 7
      %v392 = vrot.slane %v317, 7
      %v393 = vsel %vm360, %v391, %v392
      %v394 = vrot.slane %v318, 7
      %v395 = vrot.slane %v319, 7
      %v396 = vsel %vm360, %v394, %v395
      %v397 = vrot.slane %v320, 7
      %v398 = vrot.slane %v321, 7
      %v399 = vsel %vm360, %v397, %v398
      %v400 = vrot.slane %v322, 7
      %v401 = vrot.slane %v323, 7
      %v402 = vsel %vm360, %v400, %v401
      %v403 = vrot.slane %v324, 7
      %v404 = vrot.slane %v325, 7
      %v405 = vsel %vm360, %v403, %v404
      %v406 = vrot.slane %v326, 7
      %v407 = vrot.slane %v327, 7
      %v408 = vsel %vm360, %v406, %v407
      %v441 = vsel %vm360, 0.0, %v361
      %v442 = vsel %vm360, 0.0, %v364
      %v443 = vsel %vm360, 0.0, %v367
      %v444 = vsel %vm360, 0.0, %v370
      %v445 = vsel %vm360, 0.0, %v373
      %v446 = vsel %vm360, 0.0, %v376
      %v447 = vsel %vm360, 0.0, %v379
      %v448 = vsel %vm360, 0.0, %v382
      %v449 = vsel %vm360, 0.0, %v385
      %v450 = vsel %vm360, 0.0, %v388
      %v451 = vsel %vm360, 0.0, %v391
      %v452 = vsel %vm360, 0.0, %v394
      %v453 = vsel %vm360, 0.0, %v397
      %v454 = vsel %vm360, 0.0, %v400
      %v455 = vsel %vm360, 0.0, %v403
      %v456 = vsel %vm360, 0.0, %v406
      %v457 = vpack.c.bf16 0.0, 0.0
      %v458 = vpack.c.bf16 %v363, %v441
      %v459 = vpack.c.bf16 %v366, %v442
      %v460 = vpack.c.bf16 %v369, %v443
      %v461 = vpack.c.bf16 %v372, %v444
      %v462 = vpack.c.bf16 %v375, %v445
      %v463 = vpack.c.bf16 %v378, %v446
      %v464 = vpack.c.bf16 %v381, %v447
      %v465 = vpack.c.bf16 %v384, %v448
      %v466 = vpack.c.bf16 %v387, %v449
      %v467 = vpack.c.bf16 %v390, %v450
      %v468 = vpack.c.bf16 %v393, %v451
      %v469 = vpack.c.bf16 %v396, %v452
      %v470 = vpack.c.bf16 %v399, %v453
      %v471 = vpack.c.bf16 %v402, %v454
      %v472 = vpack.c.bf16 %v405, %v455
      %v473 = vld [vmem:[%s1] sm:$0xf]
      %v474 = vpack.c.bf16 %v297, %v296
      %v475 = vpack.c.bf16 %v299, %v298
      %v476 = vpack.c.bf16 %v301, %v300
      %v477 = vpack.c.bf16 %v303, %v302
      %v478 = vpack.c.bf16 %v305, %v304
      %v479 = vpack.c.bf16 %v307, %v306
      %v480 = vpack.c.bf16 %v309, %v308
      %v481 = vpack.c.bf16 %v311, %v310
      %v482 = vpack.c.bf16 %v313, %v312
      %v483 = vpack.c.bf16 %v315, %v314
      %v484 = vpack.c.bf16 %v317, %v316
      %v485 = vpack.c.bf16 %v319, %v318
      %v486 = vpack.c.bf16 %v321, %v320
      %v487 = vpack.c.bf16 %v323, %v322
      %v488 = vpack.c.bf16 %v325, %v324
      %s489 = scalar_lea.vmem %s1, 4
      %v490 = vld [vmem:[%s489] sm:$0xf]
      %vm491 = vcmask 64512
      %v493 = vsel %vm491, %v457, 0
      %v496 = vsel %vm491, %v474, 0
      %v499 = vsel %vm491, %v475, 0
      %v502 = vsel %vm491, %v476, 0
      %v505 = vsel %vm491, %v477, 0
      %v508 = vsel %vm491, %v478, 0
      %v511 = vsel %vm491, %v479, 0
      %v514 = vsel %vm491, %v480, 0
      %v517 = vsel %vm491, %v481, 0
      %v520 = vsel %vm491, %v482, 0
      %v523 = vsel %vm491, %v483, 0
      %v526 = vsel %vm491, %v484, 0
      %v529 = vsel %vm491, %v485, 0
      %v532 = vsel %vm491, %v486, 0
      %v535 = vsel %vm491, %v487, 0
      %v538 = vsel %vm491, %v488, 0
      %vm540 = vcmask 1043456
      %v542 = vsel %vm540, %v490, 0
      %544 = vmatprep.subr.bf16.mxu0 0
      %545 = vmatpush1.bf16.msra.mxu0 %v542
      %546 = vmatprep.subr.bf16.mxu0 0
      %547 = vmatpush1.bf16.msra.mxu0 0
      %548 = vmatprep.subr.bf16.mxu0 0
      %549 = vmatpush1.bf16.msra.mxu0 0
      %550 = vmatprep.subr.bf16.mxu0 0
      %551 = vmatpush1.bf16.msra.mxu0 0
      %552 = vmatprep.subr.bf16.mxu0 0
      %553 = vmatpush1.bf16.msra.mxu0 0
      %554 = vmatprep.subr.bf16.mxu0 0
      %555 = vmatpush1.bf16.msra.mxu0 0
      %556 = vmatprep.subr.bf16.mxu0 0
      %557 = vmatpush1.bf16.msra.mxu0 0
      %558 = vmatprep.subr.bf16.mxu0 0
      %559 = vmatpush1.bf16.msra.mxu0 0
      %560 = vmatprep.subr.bf16.mxu0 0
      %561 = vmatpush1.bf16.msra.mxu0 0
      %562 = vmatprep.subr.bf16.mxu0 0
      %563 = vmatpush1.bf16.msra.mxu0 0
      %564 = vmatprep.subr.bf16.mxu0 0
      %565 = vmatpush1.bf16.msra.mxu0 0
      %566 = vmatprep.subr.bf16.mxu0 0
      %567 = vmatpush1.bf16.msra.mxu0 0
      %568 = vmatprep.subr.bf16.mxu0 0
      %569 = vmatpush1.bf16.msra.mxu0 0
      %570 = vmatprep.subr.bf16.mxu0 0
      %571 = vmatpush1.bf16.msra.mxu0 0
      %572 = vmatprep.subr.bf16.mxu0 0
      %573 = vmatpush1.bf16.msra.mxu0 0
      %574 = vmatprep.subr.bf16.mxu0 0
      %575 = vmatpush1.bf16.msra.mxu0 0
      %576 = vmatprep.mubr.bf16.mxu0 0
      %577 = vmatmul.mubr.bf16.gmra.mrb[0].mxu0 %v493
      %v578 = vpop.f32.mrb[0].mxu0
      %v579 = vadd.f32 0.0, %v578
      %v580 = vpop.f32.mrb[0].mxu0
      %v581 = vpop.f32.mrb[0].mxu0
      %v582 = vadd.f32 0.0, %v581
      %v583 = vpop.f32.mrb[0].mxu0
      %584 = vmatprep.mubr.bf16.mxu0 0
      %585 = vmatmul.mubr.bf16.gmra.mrb[0].mxu0 %v496
      %v586 = vpop.f32.mrb[0].mxu0
      %v587 = vadd.f32 0.0, %v586
      %v588 = vpop.f32.mrb[0].mxu0
      %v589 = vpop.f32.mrb[0].mxu0
      %v590 = vadd.f32 0.0, %v589
      %v591 = vpop.f32.mrb[0].mxu0
      %592 = vmatprep.mubr.bf16.mxu0 0
      %593 = vmatmul.mubr.bf16.gmra.mrb[0].mxu0 %v499
      %v594 = vpop.f32.mrb[0].mxu0
      %v595 = vadd.f32 0.0, %v594
      %v596 = vpop.f32.mrb[0].mxu0
      %v597 = vpop.f32.mrb[0].mxu0
      %v598 = vadd.f32 0.0, %v597
      %v599 = vpop.f32.mrb[0].mxu0
      %600 = vmatprep.mubr.bf16.mxu0 0
      %601 = vmatmul.mubr.bf16.gmra.mrb[0].mxu0 %v502
      %v602 = vpop.f32.mrb[0].mxu0
      %v603 = vadd.f32 0.0, %v602
      %v604 = vpop.f32.mrb[0].mxu0
      %v605 = vpop.f32.mrb[0].mxu0
      %v606 = vadd.f32 0.0, %v605
      %v607 = vpop.f32.mrb[0].mxu0
      %608 = vmatprep.mubr.bf16.mxu0 0
      %609 = vmatmul.mubr.bf16.gmra.mrb[0].mxu0 %v505
      %v610 = vpop.f32.mrb[0].mxu0
      %v611 = vadd.f32 0.0, %v610
      %v612 = vpop.f32.mrb[0].mxu0
      %v613 = vpop.f32.mrb[0].mxu0
      %v614 = vadd.f32 0.0, %v613
      %v615 = vpop.f32.mrb[0].mxu0
      %616 = vmatprep.mubr.bf16.mxu0 0
      %617 = vmatmul.mubr.bf16.gmra.mrb[0].mxu0 %v508
      %v618 = vpop.f32.mrb[0].mxu0
      %v619 = vadd.f32 0.0, %v618
      %v620 = vpop.f32.mrb[0].mxu0
      %v621 = vpop.f32.mrb[0].mxu0
      %v622 = vadd.f32 0.0, %v621
      %v623 = vpop.f32.mrb[0].mxu0
      %624 = vmatprep.mubr.bf16.mxu0 0
      %625 = vmatmul.mubr.bf16.gmra.mrb[0].mxu0 %v511
      %v626 = vpop.f32.mrb[0].mxu0
      %v627 = vadd.f32 0.0, %v626
      %v628 = vpop.f32.mrb[0].mxu0
      %v629 = vpop.f32.mrb[0].mxu0
      %v630 = vadd.f32 0.0, %v629
      %v631 = vpop.f32.mrb[0].mxu0
      %632 = vmatprep.mubr.bf16.mxu0 0
      %633 = vmatmul.mubr.bf16.gmra.mrb[0].mxu0 %v514
      %v634 = vpop.f32.mrb[0].mxu0
      %v635 = vadd.f32 0.0, %v634
      %v636 = vpop.f32.mrb[0].mxu0
      %v637 = vpop.f32.mrb[0].mxu0
      %v638 = vadd.f32 0.0, %v637
      %v639 = vpop.f32.mrb[0].mxu0
      %640 = vmatprep.mubr.bf16.mxu0 0
      %641 = vmatmul.mubr.bf16.gmra.mrb[0].mxu0 %v517
      %v642 = vpop.f32.mrb[0].mxu0
      %v643 = vadd.f32 0.0, %v642
      %v644 = vpop.f32.mrb[0].mxu0
      %v645 = vpop.f32.mrb[0].mxu0
      %v646 = vadd.f32 0.0, %v645
      %v647 = vpop.f32.mrb[0].mxu0
      %648 = vmatprep.mubr.bf16.mxu0 0
      %649 = vmatmul.mubr.bf16.gmra.mrb[0].mxu0 %v520
      %v650 = vpop.f32.mrb[0].mxu0
      %v651 = vadd.f32 0.0, %v650
      %v652 = vpop.f32.mrb[0].mxu0
      %v653 = vpop.f32.mrb[0].mxu0
      %v654 = vadd.f32 0.0, %v653
      %v655 = vpop.f32.mrb[0].mxu0
      %656 = vmatprep.mubr.bf16.mxu0 0
      %657 = vmatmul.mubr.bf16.gmra.mrb[0].mxu0 %v523
      %v658 = vpop.f32.mrb[0].mxu0
      %v659 = vadd.f32 0.0, %v658
      %v660 = vpop.f32.mrb[0].mxu0
      %v661 = vpop.f32.mrb[0].mxu0
      %v662 = vadd.f32 0.0, %v661
      %v663 = vpop.f32.mrb[0].mxu0
      %664 = vmatprep.mubr.bf16.mxu0 0
      %665 = vmatmul.mubr.bf16.gmra.mrb[0].mxu0 %v526
      %v666 = vpop.f32.mrb[0].mxu0
      %v667 = vadd.f32 0.0, %v666
      %v668 = vpop.f32.mrb[0].mxu0
      %v669 = vpop.f32.mrb[0].mxu0
      %v670 = vadd.f32 0.0, %v669
      %v671 = vpop.f32.mrb[0].mxu0
      %672 = vmatprep.mubr.bf16.mxu0 0
      %673 = vmatmul.mubr.bf16.gmra.mrb[0].mxu0 %v529
      %v674 = vpop.f32.mrb[0].mxu0
      %v675 = vadd.f32 0.0, %v674
      %v676 = vpop.f32.mrb[0].mxu0
      %v677 = vpop.f32.mrb[0].mxu0
      %v678 = vadd.f32 0.0, %v677
      %v679 = vpop.f32.mrb[0].mxu0
      %680 = vmatprep.mubr.bf16.mxu0 0
      %681 = vmatmul.mubr.bf16.gmra.mrb[0].mxu0 %v532
      %v682 = vpop.f32.mrb[0].mxu0
      %v683 = vadd.f32 0.0, %v682
      %v684 = vpop.f32.mrb[0].mxu0
      %v685 = vpop.f32.mrb[0].mxu0
      %v686 = vadd.f32 0.0, %v685
      %v687 = vpop.f32.mrb[0].mxu0
      %688 = vmatprep.mubr.bf16.mxu0 0
      %689 = vmatmul.mubr.bf16.gmra.mrb[0].mxu0 %v535
      %v690 = vpop.f32.mrb[0].mxu0
      %v691 = vadd.f32 0.0, %v690
      %v692 = vpop.f32.mrb[0].mxu0
      %v693 = vpop.f32.mrb[0].mxu0
      %v694 = vadd.f32 0.0, %v693
      %v695 = vpop.f32.mrb[0].mxu0
      %696 = vmatprep.mubr.bf16.mxu0 0
      %697 = vmatmul.mubr.bf16.gmra.mrb[0].mxu0 %v538
      %v698 = vpop.f32.mrb[0].mxu0
      %v699 = vadd.f32 0.0, %v698
      %v700 = vpop.f32.mrb[0].mxu0
      %v701 = vpop.f32.mrb[0].mxu0
      %v702 = vadd.f32 0.0, %v701
      %v703 = vpop.f32.mrb[0].mxu0
      %704 = vdwg.mxu0
      %v706 = vsel %vm491, %v458, 0
      %v709 = vsel %vm491, %v459, 0
      %v712 = vsel %vm491, %v460, 0
      %v715 = vsel %vm491, %v461, 0
      %v718 = vsel %vm491, %v462, 0
      %v721 = vsel %vm491, %v463, 0
      %v724 = vsel %vm491, %v464, 0
      %v727 = vsel %vm491, %v465, 0
      %v730 = vsel %vm491, %v466, 0
      %v733 = vsel %vm491, %v467, 0
      %v736 = vsel %vm491, %v468, 0
      %v739 = vsel %vm491, %v469, 0
      %v742 = vsel %vm491, %v470, 0
      %v745 = vsel %vm491, %v471, 0
      %v748 = vsel %vm491, %v472, 0
      %v751 = vsel %vm540, %v473, 0
      %753 = vmatprep.subr.bf16.mxu0 0
      %754 = vmatpush1.bf16.msra.mxu0 %v751
      %755 = vmatprep.subr.bf16.mxu0 0
      %756 = vmatpush1.bf16.msra.mxu0 0
      %757 = vmatprep.subr.bf16.mxu0 0
      %758 = vmatpush1.bf16.msra.mxu0 0
      %759 = vmatprep.subr.bf16.mxu0 0
      %760 = vmatpush1.bf16.msra.mxu0 0
      %761 = vmatprep.subr.bf16.mxu0 0
      %762 = vmatpush1.bf16.msra.mxu0 0
      %763 = vmatprep.subr.bf16.mxu0 0
      %764 = vmatpush1.bf16.msra.mxu0 0
      %765 = vmatprep.subr.bf16.mxu0 0
      %766 = vmatpush1.bf16.msra.mxu0 0
      %767 = vmatprep.subr.bf16.mxu0 0
      %768 = vmatpush1.bf16.msra.mxu0 0
      %769 = vmatprep.subr.bf16.mxu0 0
      %770 = vmatpush1.bf16.msra.mxu0 0
      %771 = vmatprep.subr.bf16.mxu0 0
      %772 = vmatpush1.bf16.msra.mxu0 0
      %773 = vmatprep.subr.bf16.mxu0 0
      %774 = vmatpush1.bf16.msra.mxu0 0
      %775 = vmatprep.subr.bf16.mxu0 0
      %776 = vmatpush1.bf16.msra.mxu0 0
      %777 = vmatprep.subr.bf16.mxu0 0
      %778 = vmatpush1.bf16.msra.mxu0 0
      %779 = vmatprep.subr.bf16.mxu0 0
      %780 = vmatpush1.bf16.msra.mxu0 0
      %781 = vmatprep.subr.bf16.mxu0 0
      %782 = vmatpush1.bf16.msra.mxu0 0
      %783 = vmatprep.subr.bf16.mxu0 0
      %784 = vmatpush1.bf16.msra.mxu0 0
      %785 = vmatprep.mubr.bf16.mxu0 0
      %786 = vmatmul.mubr.bf16.gmra.mrb[0].mxu0 %v493
      %v787 = vpop.f32.mrb[0].mxu0
      %v788 = vadd.f32 %v579, %v787
      %v789 = vpop.f32.mrb[0].mxu0
      %v790 = vpop.f32.mrb[0].mxu0
      %v791 = vadd.f32 %v582, %v790
      %v792 = vpop.f32.mrb[0].mxu0
      %793 = vmatprep.mubr.bf16.mxu0 0
      %794 = vmatmul.mubr.bf16.gmra.mrb[0].mxu0 %v706
      %v795 = vpop.f32.mrb[0].mxu0
      %v796 = vadd.f32 %v587, %v795
      %v797 = vpop.f32.mrb[0].mxu0
      %v798 = vpop.f32.mrb[0].mxu0
      %v799 = vadd.f32 %v590, %v798
      %v800 = vpop.f32.mrb[0].mxu0
      %801 = vmatprep.mubr.bf16.mxu0 0
      %802 = vmatmul.mubr.bf16.gmra.mrb[0].mxu0 %v709
      %v803 = vpop.f32.mrb[0].mxu0
      %v804 = vadd.f32 %v595, %v803
      %v805 = vpop.f32.mrb[0].mxu0
      %v806 = vpop.f32.mrb[0].mxu0
      %v807 = vadd.f32 %v598, %v806
      %v808 = vpop.f32.mrb[0].mxu0
      %809 = vmatprep.mubr.bf16.mxu0 0
      %810 = vmatmul.mubr.bf16.gmra.mrb[0].mxu0 %v712
      %v811 = vpop.f32.mrb[0].mxu0
      %v812 = vadd.f32 %v603, %v811
      %v813 = vpop.f32.mrb[0].mxu0
      %v814 = vpop.f32.mrb[0].mxu0
      %v815 = vadd.f32 %v606, %v814
      %v816 = vpop.f32.mrb[0].mxu0
      %817 = vmatprep.mubr.bf16.mxu0 0
      %818 = vmatmul.mubr.bf16.gmra.mrb[0].mxu0 %v715
      %v819 = vpop.f32.mrb[0].mxu0
      %v820 = vadd.f32 %v611, %v819
      %v821 = vpop.f32.mrb[0].mxu0
      %v822 = vpop.f32.mrb[0].mxu0
      %v823 = vadd.f32 %v614, %v822
      %v824 = vpop.f32.mrb[0].mxu0
      %825 = vmatprep.mubr.bf16.mxu0 0
      %826 = vmatmul.mubr.bf16.gmra.mrb[0].mxu0 %v718
      %v827 = vpop.f32.mrb[0].mxu0
      %v828 = vadd.f32 %v619, %v827
      %v829 = vpop.f32.mrb[0].mxu0
      %v830 = vpop.f32.mrb[0].mxu0
      %v831 = vadd.f32 %v622, %v830
      %v832 = vpop.f32.mrb[0].mxu0
      %833 = vmatprep.mubr.bf16.mxu0 0
      %834 = vmatmul.mubr.bf16.gmra.mrb[0].mxu0 %v721
      %v835 = vpop.f32.mrb[0].mxu0
      %v836 = vadd.f32 %v627, %v835
      %v837 = vpop.f32.mrb[0].mxu0
      %v838 = vpop.f32.mrb[0].mxu0
      %v839 = vadd.f32 %v630, %v838
      %v840 = vpop.f32.mrb[0].mxu0
      %841 = vmatprep.mubr.bf16.mxu0 0
      %842 = vmatmul.mubr.bf16.gmra.mrb[0].mxu0 %v724
      %v843 = vpop.f32.mrb[0].mxu0
      %v844 = vadd.f32 %v635, %v843
      %v845 = vpop.f32.mrb[0].mxu0
      %v846 = vpop.f32.mrb[0].mxu0
      %v847 = vadd.f32 %v638, %v846
      %v848 = vpop.f32.mrb[0].mxu0
      %849 = vmatprep.mubr.bf16.mxu0 0
      %850 = vmatmul.mubr.bf16.gmra.mrb[0].mxu0 %v727
      %v851 = vpop.f32.mrb[0].mxu0
      %v852 = vadd.f32 %v643, %v851
      %v853 = vpop.f32.mrb[0].mxu0
      %v854 = vpop.f32.mrb[0].mxu0
      %v855 = vadd.f32 %v646, %v854
      %v856 = vpop.f32.mrb[0].mxu0
      %857 = vmatprep.mubr.bf16.mxu0 0
      %858 = vmatmul.mubr.bf16.gmra.mrb[0].mxu0 %v730
      %v859 = vpop.f32.mrb[0].mxu0
      %v860 = vadd.f32 %v651, %v859
      %v861 = vpop.f32.mrb[0].mxu0
      %v862 = vpop.f32.mrb[0].mxu0
      %v863 = vadd.f32 %v654, %v862
      %v864 = vpop.f32.mrb[0].mxu0
      %865 = vmatprep.mubr.bf16.mxu0 0
      %866 = vmatmul.mubr.bf16.gmra.mrb[0].mxu0 %v733
      %v867 = vpop.f32.mrb[0].mxu0
      %v868 = vadd.f32 %v659, %v867
      %v869 = vpop.f32.mrb[0].mxu0
      %v870 = vpop.f32.mrb[0].mxu0
      %v871 = vadd.f32 %v662, %v870
      %v872 = vpop.f32.mrb[0].mxu0
      %873 = vmatprep.mubr.bf16.mxu0 0
      %874 = vmatmul.mubr.bf16.gmra.mrb[0].mxu0 %v736
      %v875 = vpop.f32.mrb[0].mxu0
      %v876 = vadd.f32 %v667, %v875
      %v877 = vpop.f32.mrb[0].mxu0
      %v878 = vpop.f32.mrb[0].mxu0
      %v879 = vadd.f32 %v670, %v878
      %v880 = vpop.f32.mrb[0].mxu0
      %881 = vmatprep.mubr.bf16.mxu0 0
      %882 = vmatmul.mubr.bf16.gmra.mrb[0].mxu0 %v739
      %v883 = vpop.f32.mrb[0].mxu0
      %v884 = vadd.f32 %v675, %v883
      %v885 = vpop.f32.mrb[0].mxu0
      %v886 = vpop.f32.mrb[0].mxu0
      %v887 = vadd.f32 %v678, %v886
      %v888 = vpop.f32.mrb[0].mxu0
      %889 = vmatprep.mubr.bf16.mxu0 0
      %890 = vmatmul.mubr.bf16.gmra.mrb[0].mxu0 %v742
      %v891 = vpop.f32.mrb[0].mxu0
      %v892 = vadd.f32 %v683, %v891
      %v893 = vpop.f32.mrb[0].mxu0
      %v894 = vpop.f32.mrb[0].mxu0
      %v895 = vadd.f32 %v686, %v894
      %v896 = vpop.f32.mrb[0].mxu0
      %897 = vmatprep.mubr.bf16.mxu0 0
      %898 = vmatmul.mubr.bf16.gmra.mrb[0].mxu0 %v745
      %v899 = vpop.f32.mrb[0].mxu0
      %v900 = vadd.f32 %v691, %v899
      %v901 = vpop.f32.mrb[0].mxu0
      %v902 = vpop.f32.mrb[0].mxu0
      %v903 = vadd.f32 %v694, %v902
      %v904 = vpop.f32.mrb[0].mxu0
      %905 = vmatprep.mubr.bf16.mxu0 0
      %906 = vmatmul.mubr.bf16.gmra.mrb[0].mxu0 %v748
      %v907 = vpop.f32.mrb[0].mxu0
      %v908 = vadd.f32 %v699, %v907
      %v909 = vpop.f32.mrb[0].mxu0
      %v910 = vpop.f32.mrb[0].mxu0
      %v911 = vadd.f32 %v702, %v910
      %v912 = vpop.f32.mrb[0].mxu0
      %913 = vdwg.mxu0
      %vm914 = vcmask 1046528
      %v915 = vrot.slane %v296, 1
      %v916 = vrot.slane %v297, 1
      %v917 = vsel %vm914, %v915, %v916
      %v918 = vrot.slane %v298, 1
      %v919 = vrot.slane %v299, 1
      %v920 = vsel %vm914, %v918, %v919
      %v921 = vrot.slane %v300, 1
      %v922 = vrot.slane %v301, 1
      %v923 = vsel %vm914, %v921, %v922
      %v924 = vrot.slane %v302, 1
      %v925 = vrot.slane %v303, 1
      %v926 = vsel %vm914, %v924, %v925
      %v927 = vrot.slane %v304, 1
      %v928 = vrot.slane %v305, 1
      %v929 = vsel %vm914, %v927, %v928
      %v930 = vrot.slane %v306, 1
      %v931 = vrot.slane %v307, 1
      %v932 = vsel %vm914, %v930, %v931
      %v933 = vrot.slane %v308, 1
      %v934 = vrot.slane %v309, 1
      %v935 = vsel %vm914, %v933, %v934
      %v936 = vrot.slane %v310, 1
      %v937 = vrot.slane %v311, 1
      %v938 = vsel %vm914, %v936, %v937
      %v939 = vrot.slane %v312, 1
      %v940 = vrot.slane %v313, 1
      %v941 = vsel %vm914, %v939, %v940
      %v942 = vrot.slane %v314, 1
      %v943 = vrot.slane %v315, 1
      %v944 = vsel %vm914, %v942, %v943
      %v945 = vrot.slane %v316, 1
      %v946 = vrot.slane %v317, 1
      %v947 = vsel %vm914, %v945, %v946
      %v948 = vrot.slane %v318, 1
      %v949 = vrot.slane %v319, 1
      %v950 = vsel %vm914, %v948, %v949
      %v951 = vrot.slane %v320, 1
      %v952 = vrot.slane %v321, 1
      %v953 = vsel %vm914, %v951, %v952
      %v954 = vrot.slane %v322, 1
      %v955 = vrot.slane %v323, 1
      %v956 = vsel %vm914, %v954, %v955
      %v957 = vrot.slane %v324, 1
      %v958 = vrot.slane %v325, 1
      %v959 = vsel %vm914, %v957, %v958
      %v960 = vrot.slane %v326, 1
      %v961 = vrot.slane %v327, 1
      %v962 = vsel %vm914, %v960, %v961
      %v995 = vsel %vm914, %v916, 0.0
      %v996 = vsel %vm914, %v919, 0.0
      %v997 = vsel %vm914, %v922, 0.0
      %v998 = vsel %vm914, %v925, 0.0
      %v999 = vsel %vm914, %v928, 0.0
      %v1000 = vsel %vm914, %v931, 0.0
      %v1001 = vsel %vm914, %v934, 0.0
      %v1002 = vsel %vm914, %v937, 0.0
      %v1003 = vsel %vm914, %v940, 0.0
      %v1004 = vsel %vm914, %v943, 0.0
      %v1005 = vsel %vm914, %v946, 0.0
      %v1006 = vsel %vm914, %v949, 0.0
      %v1007 = vsel %vm914, %v952, 0.0
      %v1008 = vsel %vm914, %v955, 0.0
      %v1009 = vsel %vm914, %v958, 0.0
      %v1010 = vsel %vm914, %v961, 0.0
      %v1011 = vpack.c.bf16 %v995, %v917
      %v1012 = vpack.c.bf16 %v996, %v920
      %v1013 = vpack.c.bf16 %v997, %v923
      %v1014 = vpack.c.bf16 %v998, %v926
      %v1015 = vpack.c.bf16 %v999, %v929
      %v1016 = vpack.c.bf16 %v1000, %v932
      %v1017 = vpack.c.bf16 %v1001, %v935
      %v1018 = vpack.c.bf16 %v1002, %v938
      %v1019 = vpack.c.bf16 %v1003, %v941
      %v1020 = vpack.c.bf16 %v1004, %v944
      %v1021 = vpack.c.bf16 %v1005, %v947
      %v1022 = vpack.c.bf16 %v1006, %v950
      %v1023 = vpack.c.bf16 %v1007, %v953
      %v1024 = vpack.c.bf16 %v1008, %v956
      %v1025 = vpack.c.bf16 %v1009, %v959
      %s1026 = scalar_lea.vmem %s1, 8
      %v1027 = vld [vmem:[%s1026] sm:$0xf]
      %v1029 = vsel %vm491, %v1011, 0
      %v1032 = vsel %vm491, %v1012, 0
      %v1035 = vsel %vm491, %v1013, 0
      %v1038 = vsel %vm491, %v1014, 0
      %v1041 = vsel %vm491, %v1015, 0
      %v1044 = vsel %vm491, %v1016, 0
      %v1047 = vsel %vm491, %v1017, 0
      %v1050 = vsel %vm491, %v1018, 0
      %v1053 = vsel %vm491, %v1019, 0
      %v1056 = vsel %vm491, %v1020, 0
      %v1059 = vsel %vm491, %v1021, 0
      %v1062 = vsel %vm491, %v1022, 0
      %v1065 = vsel %vm491, %v1023, 0
      %v1068 = vsel %vm491, %v1024, 0
      %v1071 = vsel %vm491, %v1025, 0
      %v1074 = vsel %vm540, %v1027, 0
      %1076 = vmatprep.subr.bf16.mxu0 0
      %1077 = vmatpush1.bf16.msra.mxu0 %v1074
      %1078 = vmatprep.subr.bf16.mxu0 0
      %1079 = vmatpush1.bf16.msra.mxu0 0
      %1080 = vmatprep.subr.bf16.mxu0 0
      %1081 = vmatpush1.bf16.msra.mxu0 0
      %1082 = vmatprep.subr.bf16.mxu0 0
      %1083 = vmatpush1.bf16.msra.mxu0 0
      %1084 = vmatprep.subr.bf16.mxu0 0
      %1085 = vmatpush1.bf16.msra.mxu0 0
      %1086 = vmatprep.subr.bf16.mxu0 0
      %1087 = vmatpush1.bf16.msra.mxu0 0
      %1088 = vmatprep.subr.bf16.mxu0 0
      %1089 = vmatpush1.bf16.msra.mxu0 0
      %1090 = vmatprep.subr.bf16.mxu0 0
      %1091 = vmatpush1.bf16.msra.mxu0 0
      %1092 = vmatprep.subr.bf16.mxu0 0
      %1093 = vmatpush1.bf16.msra.mxu0 0
      %1094 = vmatprep.subr.bf16.mxu0 0
      %1095 = vmatpush1.bf16.msra.mxu0 0
      %1096 = vmatprep.subr.bf16.mxu0 0
      %1097 = vmatpush1.bf16.msra.mxu0 0
      %1098 = vmatprep.subr.bf16.mxu0 0
      %1099 = vmatpush1.bf16.msra.mxu0 0
      %1100 = vmatprep.subr.bf16.mxu0 0
      %1101 = vmatpush1.bf16.msra.mxu0 0
      %1102 = vmatprep.subr.bf16.mxu0 0
      %1103 = vmatpush1.bf16.msra.mxu0 0
      %1104 = vmatprep.subr.bf16.mxu0 0
      %1105 = vmatpush1.bf16.msra.mxu0 0
      %1106 = vmatprep.subr.bf16.mxu0 0
      %1107 = vmatpush1.bf16.msra.mxu0 0
      %1108 = vmatprep.mubr.bf16.mxu0 0
      %1109 = vmatmul.mubr.bf16.gmra.mrb[0].mxu0 %v493
      %v1110 = vpop.f32.mrb[0].mxu0
      %v1111 = vadd.f32 0.0, %v1110
      %v1112 = vpop.f32.mrb[0].mxu0
      %v1113 = vpop.f32.mrb[0].mxu0
      %v1114 = vadd.f32 0.0, %v1113
      %v1115 = vpop.f32.mrb[0].mxu0
      %1116 = vmatprep.mubr.bf16.mxu0 0
      %1117 = vmatmul.mubr.bf16.gmra.mrb[0].mxu0 %v1029
      %v1118 = vpop.f32.mrb[0].mxu0
      %v1119 = vadd.f32 0.0, %v1118
      %v1120 = vpop.f32.mrb[0].mxu0
      %v1121 = vpop.f32.mrb[0].mxu0
      %v1122 = vadd.f32 0.0, %v1121
      %v1123 = vpop.f32.mrb[0].mxu0
      %1124 = vmatprep.mubr.bf16.mxu0 0
      %1125 = vmatmul.mubr.bf16.gmra.mrb[0].mxu0 %v1032
      %v1126 = vpop.f32.mrb[0].mxu0
      %v1127 = vadd.f32 0.0, %v1126
      %v1128 = vpop.f32.mrb[0].mxu0
      %v1129 = vpop.f32.mrb[0].mxu0
      %v1130 = vadd.f32 0.0, %v1129
      %v1131 = vpop.f32.mrb[0].mxu0
      %1132 = vmatprep.mubr.bf16.mxu0 0
      %1133 = vmatmul.mubr.bf16.gmra.mrb[0].mxu0 %v1035
      %v1134 = vpop.f32.mrb[0].mxu0
      %v1135 = vadd.f32 0.0, %v1134
      %v1136 = vpop.f32.mrb[0].mxu0
      %v1137 = vpop.f32.mrb[0].mxu0
      %v1138 = vadd.f32 0.0, %v1137
      %v1139 = vpop.f32.mrb[0].mxu0
      %1140 = vmatprep.mubr.bf16.mxu0 0
      %1141 = vmatmul.mubr.bf16.gmra.mrb[0].mxu0 %v1038
      %v1142 = vpop.f32.mrb[0].mxu0
      %v1143 = vadd.f32 0.0, %v1142
      %v1144 = vpop.f32.mrb[0].mxu0
      %v1145 = vpop.f32.mrb[0].mxu0
      %v1146 = vadd.f32 0.0, %v1145
      %v1147 = vpop.f32.mrb[0].mxu0
      %1148 = vmatprep.mubr.bf16.mxu0 0
      %1149 = vmatmul.mubr.bf16.gmra.mrb[0].mxu0 %v1041
      %v1150 = vpop.f32.mrb[0].mxu0
      %v1151 = vadd.f32 0.0, %v1150
      %v1152 = vpop.f32.mrb[0].mxu0
      %v1153 = vpop.f32.mrb[0].mxu0
      %v1154 = vadd.f32 0.0, %v1153
      %v1155 = vpop.f32.mrb[0].mxu0
      %1156 = vmatprep.mubr.bf16.mxu0 0
      %1157 = vmatmul.mubr.bf16.gmra.mrb[0].mxu0 %v1044
      %v1158 = vpop.f32.mrb[0].mxu0
      %v1159 = vadd.f32 0.0, %v1158
      %v1160 = vpop.f32.mrb[0].mxu0
      %v1161 = vpop.f32.mrb[0].mxu0
      %v1162 = vadd.f32 0.0, %v1161
      %v1163 = vpop.f32.mrb[0].mxu0
      %1164 = vmatprep.mubr.bf16.mxu0 0
      %1165 = vmatmul.mubr.bf16.gmra.mrb[0].mxu0 %v1047
      %v1166 = vpop.f32.mrb[0].mxu0
      %v1167 = vadd.f32 0.0, %v1166
      %v1168 = vpop.f32.mrb[0].mxu0
      %v1169 = vpop.f32.mrb[0].mxu0
      %v1170 = vadd.f32 0.0, %v1169
      %v1171 = vpop.f32.mrb[0].mxu0
      %1172 = vmatprep.mubr.bf16.mxu0 0
      %1173 = vmatmul.mubr.bf16.gmra.mrb[0].mxu0 %v1050
      %v1174 = vpop.f32.mrb[0].mxu0
      %v1175 = vadd.f32 0.0, %v1174
      %v1176 = vpop.f32.mrb[0].mxu0
      %v1177 = vpop.f32.mrb[0].mxu0
      %v1178 = vadd.f32 0.0, %v1177
      %v1179 = vpop.f32.mrb[0].mxu0
      %1180 = vmatprep.mubr.bf16.mxu0 0
      %1181 = vmatmul.mubr.bf16.gmra.mrb[0].mxu0 %v1053
      %v1182 = vpop.f32.mrb[0].mxu0
      %v1183 = vadd.f32 0.0, %v1182
      %v1184 = vpop.f32.mrb[0].mxu0
      %v1185 = vpop.f32.mrb[0].mxu0
      %v1186 = vadd.f32 0.0, %v1185
      %v1187 = vpop.f32.mrb[0].mxu0
      %1188 = vmatprep.mubr.bf16.mxu0 0
      %1189 = vmatmul.mubr.bf16.gmra.mrb[0].mxu0 %v1056
      %v1190 = vpop.f32.mrb[0].mxu0
      %v1191 = vadd.f32 0.0, %v1190
      %v1192 = vpop.f32.mrb[0].mxu0
      %v1193 = vpop.f32.mrb[0].mxu0
      %v1194 = vadd.f32 0.0, %v1193
      %v1195 = vpop.f32.mrb[0].mxu0
      %1196 = vmatprep.mubr.bf16.mxu0 0
      %1197 = vmatmul.mubr.bf16.gmra.mrb[0].mxu0 %v1059
      %v1198 = vpop.f32.mrb[0].mxu0
      %v1199 = vadd.f32 0.0, %v1198
      %v1200 = vpop.f32.mrb[0].mxu0
      %v1201 = vpop.f32.mrb[0].mxu0
      %v1202 = vadd.f32 0.0, %v1201
      %v1203 = vpop.f32.mrb[0].mxu0
      %1204 = vmatprep.mubr.bf16.mxu0 0
      %1205 = vmatmul.mubr.bf16.gmra.mrb[0].mxu0 %v1062
      %v1206 = vpop.f32.mrb[0].mxu0
      %v1207 = vadd.f32 0.0, %v1206
      %v1208 = vpop.f32.mrb[0].mxu0
      %v1209 = vpop.f32.mrb[0].mxu0
      %v1210 = vadd.f32 0.0, %v1209
      %v1211 = vpop.f32.mrb[0].mxu0
      %1212 = vmatprep.mubr.bf16.mxu0 0
      %1213 = vmatmul.mubr.bf16.gmra.mrb[0].mxu0 %v1065
      %v1214 = vpop.f32.mrb[0].mxu0
      %v1215 = vadd.f32 0.0, %v1214
      %v1216 = vpop.f32.mrb[0].mxu0
      %v1217 = vpop.f32.mrb[0].mxu0
      %v1218 = vadd.f32 0.0, %v1217
      %v1219 = vpop.f32.mrb[0].mxu0
      %1220 = vmatprep.mubr.bf16.mxu0 0
      %1221 = vmatmul.mubr.bf16.gmra.mrb[0].mxu0 %v1068
      %v1222 = vpop.f32.mrb[0].mxu0
      %v1223 = vadd.f32 0.0, %v1222
      %v1224 = vpop.f32.mrb[0].mxu0
      %v1225 = vpop.f32.mrb[0].mxu0
      %v1226 = vadd.f32 0.0, %v1225
      %v1227 = vpop.f32.mrb[0].mxu0
      %1228 = vmatprep.mubr.bf16.mxu0 0
      %1229 = vmatmul.mubr.bf16.gmra.mrb[0].mxu0 %v1071
      %v1230 = vpop.f32.mrb[0].mxu0
      %v1231 = vadd.f32 0.0, %v1230
      %v1232 = vpop.f32.mrb[0].mxu0
      %v1233 = vpop.f32.mrb[0].mxu0
      %v1234 = vadd.f32 0.0, %v1233
      %v1235 = vpop.f32.mrb[0].mxu0
      %1236 = vdwg.mxu0
      %v1237 = vadd.f32 %v788, %v1111
      %v1238 = vadd.f32 %v791, %v1114
      %v1239 = vadd.f32 %v796, %v1119
      %v1240 = vadd.f32 %v799, %v1122
      %v1241 = vadd.f32 %v804, %v1127
      %v1242 = vadd.f32 %v807, %v1130
      %v1243 = vadd.f32 %v812, %v1135
      %v1244 = vadd.f32 %v815, %v1138
      %v1245 = vadd.f32 %v820, %v1143
      %v1246 = vadd.f32 %v823, %v1146
      %v1247 = vadd.f32 %v828, %v1151
      %v1248 = vadd.f32 %v831, %v1154
      %v1249 = vadd.f32 %v836, %v1159
      %v1250 = vadd.f32 %v839, %v1162
      %v1251 = vadd.f32 %v844, %v1167
      %v1252 = vadd.f32 %v847, %v1170
      %v1253 = vadd.f32 %v852, %v1175
      %v1254 = vadd.f32 %v855, %v1178
      %v1255 = vadd.f32 %v860, %v1183
      %v1256 = vadd.f32 %v863, %v1186
      %v1257 = vadd.f32 %v868, %v1191
      %v1258 = vadd.f32 %v871, %v1194
      %v1259 = vadd.f32 %v876, %v1199
      %v1260 = vadd.f32 %v879, %v1202
      %v1261 = vadd.f32 %v884, %v1207
      %v1262 = vadd.f32 %v887, %v1210
      %v1263 = vadd.f32 %v892, %v1215
      %v1264 = vadd.f32 %v895, %v1218
      %v1265 = vadd.f32 %v900, %v1223
      %v1266 = vadd.f32 %v903, %v1226
      %v1267 = vadd.f32 %v908, %v1231
      %v1268 = vadd.f32 %v911, %v1234
      %v1269 = vpack.c.bf16 %v408, %v456
      %s1270 = scalar_lea.vmem %s1, 12
      %v1271 = vld [vmem:[%s1270] sm:$0xf]
      %v1273 = vsel %vm491, %v1269, 0
      %v1276 = vsel %vm540, %v1271, 0
      %1278 = vmatprep.subr.bf16.mxu0 0
      %1279 = vmatpush1.bf16.msra.mxu0 %v1276
      %1280 = vmatprep.subr.bf16.mxu0 0
      %1281 = vmatpush1.bf16.msra.mxu0 0
      %1282 = vmatprep.subr.bf16.mxu0 0
      %1283 = vmatpush1.bf16.msra.mxu0 0
      %1284 = vmatprep.subr.bf16.mxu0 0
      %1285 = vmatpush1.bf16.msra.mxu0 0
      %1286 = vmatprep.subr.bf16.mxu0 0
      %1287 = vmatpush1.bf16.msra.mxu0 0
      %1288 = vmatprep.subr.bf16.mxu0 0
      %1289 = vmatpush1.bf16.msra.mxu0 0
      %1290 = vmatprep.subr.bf16.mxu0 0
      %1291 = vmatpush1.bf16.msra.mxu0 0
      %1292 = vmatprep.subr.bf16.mxu0 0
      %1293 = vmatpush1.bf16.msra.mxu0 0
      %1294 = vmatprep.subr.bf16.mxu0 0
      %1295 = vmatpush1.bf16.msra.mxu0 0
      %1296 = vmatprep.subr.bf16.mxu0 0
      %1297 = vmatpush1.bf16.msra.mxu0 0
      %1298 = vmatprep.subr.bf16.mxu0 0
      %1299 = vmatpush1.bf16.msra.mxu0 0
      %1300 = vmatprep.subr.bf16.mxu0 0
      %1301 = vmatpush1.bf16.msra.mxu0 0
      %1302 = vmatprep.subr.bf16.mxu0 0
      %1303 = vmatpush1.bf16.msra.mxu0 0
      %1304 = vmatprep.subr.bf16.mxu0 0
      %1305 = vmatpush1.bf16.msra.mxu0 0
      %1306 = vmatprep.subr.bf16.mxu0 0
      %1307 = vmatpush1.bf16.msra.mxu0 0
      %1308 = vmatprep.subr.bf16.mxu0 0
      %1309 = vmatpush1.bf16.msra.mxu0 0
      %1310 = vmatprep.mubr.bf16.mxu0 0
      %1311 = vmatmul.mubr.bf16.gmra.mrb[0].mxu0 %v706
      %v1312 = vpop.f32.mrb[0].mxu0
      %v1313 = vadd.f32 0.0, %v1312
      %v1314 = vpop.f32.mrb[0].mxu0
      %v1315 = vpop.f32.mrb[0].mxu0
      %v1316 = vadd.f32 0.0, %v1315
      %v1317 = vpop.f32.mrb[0].mxu0
      %1318 = vmatprep.mubr.bf16.mxu0 0
      %1319 = vmatmul.mubr.bf16.gmra.mrb[0].mxu0 %v709
      %v1320 = vpop.f32.mrb[0].mxu0
      %v1321 = vadd.f32 0.0, %v1320
      %v1322 = vpop.f32.mrb[0].mxu0
      %v1323 = vpop.f32.mrb[0].mxu0
      %v1324 = vadd.f32 0.0, %v1323
      %v1325 = vpop.f32.mrb[0].mxu0
      %1326 = vmatprep.mubr.bf16.mxu0 0
      %1327 = vmatmul.mubr.bf16.gmra.mrb[0].mxu0 %v712
      %v1328 = vpop.f32.mrb[0].mxu0
      %v1329 = vadd.f32 0.0, %v1328
      %v1330 = vpop.f32.mrb[0].mxu0
      %v1331 = vpop.f32.mrb[0].mxu0
      %v1332 = vadd.f32 0.0, %v1331
      %v1333 = vpop.f32.mrb[0].mxu0
      %1334 = vmatprep.mubr.bf16.mxu0 0
      %1335 = vmatmul.mubr.bf16.gmra.mrb[0].mxu0 %v715
      %v1336 = vpop.f32.mrb[0].mxu0
      %v1337 = vadd.f32 0.0, %v1336
      %v1338 = vpop.f32.mrb[0].mxu0
      %v1339 = vpop.f32.mrb[0].mxu0
      %v1340 = vadd.f32 0.0, %v1339
      %v1341 = vpop.f32.mrb[0].mxu0
      %1342 = vmatprep.mubr.bf16.mxu0 0
      %1343 = vmatmul.mubr.bf16.gmra.mrb[0].mxu0 %v718
      %v1344 = vpop.f32.mrb[0].mxu0
      %v1345 = vadd.f32 0.0, %v1344
      %v1346 = vpop.f32.mrb[0].mxu0
      %v1347 = vpop.f32.mrb[0].mxu0
      %v1348 = vadd.f32 0.0, %v1347
      %v1349 = vpop.f32.mrb[0].mxu0
      %1350 = vmatprep.mubr.bf16.mxu0 0
      %1351 = vmatmul.mubr.bf16.gmra.mrb[0].mxu0 %v721
      %v1352 = vpop.f32.mrb[0].mxu0
      %v1353 = vadd.f32 0.0, %v1352
      %v1354 = vpop.f32.mrb[0].mxu0
      %v1355 = vpop.f32.mrb[0].mxu0
      %v1356 = vadd.f32 0.0, %v1355
      %v1357 = vpop.f32.mrb[0].mxu0
      %1358 = vmatprep.mubr.bf16.mxu0 0
      %1359 = vmatmul.mubr.bf16.gmra.mrb[0].mxu0 %v724
      %v1360 = vpop.f32.mrb[0].mxu0
      %v1361 = vadd.f32 0.0, %v1360
      %v1362 = vpop.f32.mrb[0].mxu0
      %v1363 = vpop.f32.mrb[0].mxu0
      %v1364 = vadd.f32 0.0, %v1363
      %v1365 = vpop.f32.mrb[0].mxu0
      %1366 = vmatprep.mubr.bf16.mxu0 0
      %1367 = vmatmul.mubr.bf16.gmra.mrb[0].mxu0 %v727
      %v1368 = vpop.f32.mrb[0].mxu0
      %v1369 = vadd.f32 0.0, %v1368
      %v1370 = vpop.f32.mrb[0].mxu0
      %v1371 = vpop.f32.mrb[0].mxu0
      %v1372 = vadd.f32 0.0, %v1371
      %v1373 = vpop.f32.mrb[0].mxu0
      %1374 = vmatprep.mubr.bf16.mxu0 0
      %1375 = vmatmul.mubr.bf16.gmra.mrb[0].mxu0 %v730
      %v1376 = vpop.f32.mrb[0].mxu0
      %v1377 = vadd.f32 0.0, %v1376
      %v1378 = vpop.f32.mrb[0].mxu0
      %v1379 = vpop.f32.mrb[0].mxu0
      %v1380 = vadd.f32 0.0, %v1379
      %v1381 = vpop.f32.mrb[0].mxu0
      %1382 = vmatprep.mubr.bf16.mxu0 0
      %1383 = vmatmul.mubr.bf16.gmra.mrb[0].mxu0 %v733
      %v1384 = vpop.f32.mrb[0].mxu0
      %v1385 = vadd.f32 0.0, %v1384
      %v1386 = vpop.f32.mrb[0].mxu0
      %v1387 = vpop.f32.mrb[0].mxu0
      %v1388 = vadd.f32 0.0, %v1387
      %v1389 = vpop.f32.mrb[0].mxu0
      %1390 = vmatprep.mubr.bf16.mxu0 0
      %1391 = vmatmul.mubr.bf16.gmra.mrb[0].mxu0 %v736
      %v1392 = vpop.f32.mrb[0].mxu0
      %v1393 = vadd.f32 0.0, %v1392
      %v1394 = vpop.f32.mrb[0].mxu0
      %v1395 = vpop.f32.mrb[0].mxu0
      %v1396 = vadd.f32 0.0, %v1395
      %v1397 = vpop.f32.mrb[0].mxu0
      %1398 = vmatprep.mubr.bf16.mxu0 0
      %1399 = vmatmul.mubr.bf16.gmra.mrb[0].mxu0 %v739
      %v1400 = vpop.f32.mrb[0].mxu0
      %v1401 = vadd.f32 0.0, %v1400
      %v1402 = vpop.f32.mrb[0].mxu0
      %v1403 = vpop.f32.mrb[0].mxu0
      %v1404 = vadd.f32 0.0, %v1403
      %v1405 = vpop.f32.mrb[0].mxu0
      %1406 = vmatprep.mubr.bf16.mxu0 0
      %1407 = vmatmul.mubr.bf16.gmra.mrb[0].mxu0 %v742
      %v1408 = vpop.f32.mrb[0].mxu0
      %v1409 = vadd.f32 0.0, %v1408
      %v1410 = vpop.f32.mrb[0].mxu0
      %v1411 = vpop.f32.mrb[0].mxu0
      %v1412 = vadd.f32 0.0, %v1411
      %v1413 = vpop.f32.mrb[0].mxu0
      %1414 = vmatprep.mubr.bf16.mxu0 0
      %1415 = vmatmul.mubr.bf16.gmra.mrb[0].mxu0 %v745
      %v1416 = vpop.f32.mrb[0].mxu0
      %v1417 = vadd.f32 0.0, %v1416
      %v1418 = vpop.f32.mrb[0].mxu0
      %v1419 = vpop.f32.mrb[0].mxu0
      %v1420 = vadd.f32 0.0, %v1419
      %v1421 = vpop.f32.mrb[0].mxu0
      %1422 = vmatprep.mubr.bf16.mxu0 0
      %1423 = vmatmul.mubr.bf16.gmra.mrb[0].mxu0 %v748
      %v1424 = vpop.f32.mrb[0].mxu0
      %v1425 = vadd.f32 0.0, %v1424
      %v1426 = vpop.f32.mrb[0].mxu0
      %v1427 = vpop.f32.mrb[0].mxu0
      %v1428 = vadd.f32 0.0, %v1427
      %v1429 = vpop.f32.mrb[0].mxu0
      %1430 = vmatprep.mubr.bf16.mxu0 0
      %1431 = vmatmul.mubr.bf16.gmra.mrb[0].mxu0 %v1273
      %v1432 = vpop.f32.mrb[0].mxu0
      %v1433 = vadd.f32 0.0, %v1432
      %v1434 = vpop.f32.mrb[0].mxu0
      %v1435 = vpop.f32.mrb[0].mxu0
      %v1436 = vadd.f32 0.0, %v1435
      %v1437 = vpop.f32.mrb[0].mxu0
      %1438 = vdwg.mxu0
      %v1439 = vadd.f32 %v1237, %v1313
      %v1440 = vadd.f32 %v1238, %v1316
      %v1441 = vadd.f32 %v1239, %v1321
      %v1442 = vadd.f32 %v1240, %v1324
      %v1443 = vadd.f32 %v1241, %v1329
      %v1444 = vadd.f32 %v1242, %v1332
      %v1445 = vadd.f32 %v1243, %v1337
      %v1446 = vadd.f32 %v1244, %v1340
      %v1447 = vadd.f32 %v1245, %v1345
      %v1448 = vadd.f32 %v1246, %v1348
      %v1449 = vadd.f32 %v1247, %v1353
      %v1450 = vadd.f32 %v1248, %v1356
      %v1451 = vadd.f32 %v1249, %v1361
      %v1452 = vadd.f32 %v1250, %v1364
      %v1453 = vadd.f32 %v1251, %v1369
      %v1454 = vadd.f32 %v1252, %v1372
      %v1455 = vadd.f32 %v1253, %v1377
      %v1456 = vadd.f32 %v1254, %v1380
      %v1457 = vadd.f32 %v1255, %v1385
      %v1458 = vadd.f32 %v1256, %v1388
      %v1459 = vadd.f32 %v1257, %v1393
      %v1460 = vadd.f32 %v1258, %v1396
      %v1461 = vadd.f32 %v1259, %v1401
      %v1462 = vadd.f32 %v1260, %v1404
      %v1463 = vadd.f32 %v1261, %v1409
      %v1464 = vadd.f32 %v1262, %v1412
      %v1465 = vadd.f32 %v1263, %v1417
      %v1466 = vadd.f32 %v1264, %v1420
      %v1467 = vadd.f32 %v1265, %v1425
      %v1468 = vadd.f32 %v1266, %v1428
      %v1469 = vadd.f32 %v1267, %v1433
      %v1470 = vadd.f32 %v1268, %v1436
      %v1471 = vpack.c.bf16 %v327, %v326
      %s1472 = scalar_lea.vmem %s1, 16
      %v1473 = vld [vmem:[%s1472] sm:$0xf]
      %v1475 = vsel %vm491, %v1471, 0
      %v1478 = vsel %vm540, %v1473, 0
      %1480 = vmatprep.subr.bf16.mxu0 0
      %1481 = vmatpush1.bf16.msra.mxu0 %v1478
      %1482 = vmatprep.subr.bf16.mxu0 0
      %1483 = vmatpush1.bf16.msra.mxu0 0
      %1484 = vmatprep.subr.bf16.mxu0 0
      %1485 = vmatpush1.bf16.msra.mxu0 0
      %1486 = vmatprep.subr.bf16.mxu0 0
      %1487 = vmatpush1.bf16.msra.mxu0 0
      %1488 = vmatprep.subr.bf16.mxu0 0
      %1489 = vmatpush1.bf16.msra.mxu0 0
      %1490 = vmatprep.subr.bf16.mxu0 0
      %1491 = vmatpush1.bf16.msra.mxu0 0
      %1492 = vmatprep.subr.bf16.mxu0 0
      %1493 = vmatpush1.bf16.msra.mxu0 0
      %1494 = vmatprep.subr.bf16.mxu0 0
      %1495 = vmatpush1.bf16.msra.mxu0 0
      %1496 = vmatprep.subr.bf16.mxu0 0
      %1497 = vmatpush1.bf16.msra.mxu0 0
      %1498 = vmatprep.subr.bf16.mxu0 0
      %1499 = vmatpush1.bf16.msra.mxu0 0
      %1500 = vmatprep.subr.bf16.mxu0 0
      %1501 = vmatpush1.bf16.msra.mxu0 0
      %1502 = vmatprep.subr.bf16.mxu0 0
      %1503 = vmatpush1.bf16.msra.mxu0 0
      %1504 = vmatprep.subr.bf16.mxu0 0
      %1505 = vmatpush1.bf16.msra.mxu0 0
      %1506 = vmatprep.subr.bf16.mxu0 0
      %1507 = vmatpush1.bf16.msra.mxu0 0
      %1508 = vmatprep.subr.bf16.mxu0 0
      %1509 = vmatpush1.bf16.msra.mxu0 0
      %1510 = vmatprep.subr.bf16.mxu0 0
      %1511 = vmatpush1.bf16.msra.mxu0 0
      %1512 = vmatprep.mubr.bf16.mxu0 0
      %1513 = vmatmul.mubr.bf16.gmra.mrb[0].mxu0 %v496
      %v1514 = vpop.f32.mrb[0].mxu0
      %v1515 = vadd.f32 0.0, %v1514
      %v1516 = vpop.f32.mrb[0].mxu0
      %v1517 = vpop.f32.mrb[0].mxu0
      %v1518 = vadd.f32 0.0, %v1517
      %v1519 = vpop.f32.mrb[0].mxu0
      %1520 = vmatprep.mubr.bf16.mxu0 0
      %1521 = vmatmul.mubr.bf16.gmra.mrb[0].mxu0 %v499
      %v1522 = vpop.f32.mrb[0].mxu0
      %v1523 = vadd.f32 0.0, %v1522
      %v1524 = vpop.f32.mrb[0].mxu0
      %v1525 = vpop.f32.mrb[0].mxu0
      %v1526 = vadd.f32 0.0, %v1525
      %v1527 = vpop.f32.mrb[0].mxu0
      %1528 = vmatprep.mubr.bf16.mxu0 0
      %1529 = vmatmul.mubr.bf16.gmra.mrb[0].mxu0 %v502
      %v1530 = vpop.f32.mrb[0].mxu0
      %v1531 = vadd.f32 0.0, %v1530
      %v1532 = vpop.f32.mrb[0].mxu0
      %v1533 = vpop.f32.mrb[0].mxu0
      %v1534 = vadd.f32 0.0, %v1533
      %v1535 = vpop.f32.mrb[0].mxu0
      %1536 = vmatprep.mubr.bf16.mxu0 0
      %1537 = vmatmul.mubr.bf16.gmra.mrb[0].mxu0 %v505
      %v1538 = vpop.f32.mrb[0].mxu0
      %v1539 = vadd.f32 0.0, %v1538
      %v1540 = vpop.f32.mrb[0].mxu0
      %v1541 = vpop.f32.mrb[0].mxu0
      %v1542 = vadd.f32 0.0, %v1541
      %v1543 = vpop.f32.mrb[0].mxu0
      %1544 = vmatprep.mubr.bf16.mxu0 0
      %1545 = vmatmul.mubr.bf16.gmra.mrb[0].mxu0 %v508
      %v1546 = vpop.f32.mrb[0].mxu0
      %v1547 = vadd.f32 0.0, %v1546
      %v1548 = vpop.f32.mrb[0].mxu0
      %v1549 = vpop.f32.mrb[0].mxu0
      %v1550 = vadd.f32 0.0, %v1549
      %v1551 = vpop.f32.mrb[0].mxu0
      %1552 = vmatprep.mubr.bf16.mxu0 0
      %1553 = vmatmul.mubr.bf16.gmra.mrb[0].mxu0 %v511
      %v1554 = vpop.f32.mrb[0].mxu0
      %v1555 = vadd.f32 0.0, %v1554
      %v1556 = vpop.f32.mrb[0].mxu0
      %v1557 = vpop.f32.mrb[0].mxu0
      %v1558 = vadd.f32 0.0, %v1557
      %v1559 = vpop.f32.mrb[0].mxu0
      %1560 = vmatprep.mubr.bf16.mxu0 0
      %1561 = vmatmul.mubr.bf16.gmra.mrb[0].mxu0 %v514
      %v1562 = vpop.f32.mrb[0].mxu0
      %v1563 = vadd.f32 0.0, %v1562
      %v1564 = vpop.f32.mrb[0].mxu0
      %v1565 = vpop.f32.mrb[0].mxu0
      %v1566 = vadd.f32 0.0, %v1565
      %v1567 = vpop.f32.mrb[0].mxu0
      %1568 = vmatprep.mubr.bf16.mxu0 0
      %1569 = vmatmul.mubr.bf16.gmra.mrb[0].mxu0 %v517
      %v1570 = vpop.f32.mrb[0].mxu0
      %v1571 = vadd.f32 0.0, %v1570
      %v1572 = vpop.f32.mrb[0].mxu0
      %v1573 = vpop.f32.mrb[0].mxu0
      %v1574 = vadd.f32 0.0, %v1573
      %v1575 = vpop.f32.mrb[0].mxu0
      %1576 = vmatprep.mubr.bf16.mxu0 0
      %1577 = vmatmul.mubr.bf16.gmra.mrb[0].mxu0 %v520
      %v1578 = vpop.f32.mrb[0].mxu0
      %v1579 = vadd.f32 0.0, %v1578
      %v1580 = vpop.f32.mrb[0].mxu0
      %v1581 = vpop.f32.mrb[0].mxu0
      %v1582 = vadd.f32 0.0, %v1581
      %v1583 = vpop.f32.mrb[0].mxu0
      %1584 = vmatprep.mubr.bf16.mxu0 0
      %1585 = vmatmul.mubr.bf16.gmra.mrb[0].mxu0 %v523
      %v1586 = vpop.f32.mrb[0].mxu0
      %v1587 = vadd.f32 0.0, %v1586
      %v1588 = vpop.f32.mrb[0].mxu0
      %v1589 = vpop.f32.mrb[0].mxu0
      %v1590 = vadd.f32 0.0, %v1589
      %v1591 = vpop.f32.mrb[0].mxu0
      %1592 = vmatprep.mubr.bf16.mxu0 0
      %1593 = vmatmul.mubr.bf16.gmra.mrb[0].mxu0 %v526
      %v1594 = vpop.f32.mrb[0].mxu0
      %v1595 = vadd.f32 0.0, %v1594
      %v1596 = vpop.f32.mrb[0].mxu0
      %v1597 = vpop.f32.mrb[0].mxu0
      %v1598 = vadd.f32 0.0, %v1597
      %v1599 = vpop.f32.mrb[0].mxu0
      %1600 = vmatprep.mubr.bf16.mxu0 0
      %1601 = vmatmul.mubr.bf16.gmra.mrb[0].mxu0 %v529
      %v1602 = vpop.f32.mrb[0].mxu0
      %v1603 = vadd.f32 0.0, %v1602
      %v1604 = vpop.f32.mrb[0].mxu0
      %v1605 = vpop.f32.mrb[0].mxu0
      %v1606 = vadd.f32 0.0, %v1605
      %v1607 = vpop.f32.mrb[0].mxu0
      %1608 = vmatprep.mubr.bf16.mxu0 0
      %1609 = vmatmul.mubr.bf16.gmra.mrb[0].mxu0 %v532
      %v1610 = vpop.f32.mrb[0].mxu0
      %v1611 = vadd.f32 0.0, %v1610
      %v1612 = vpop.f32.mrb[0].mxu0
      %v1613 = vpop.f32.mrb[0].mxu0
      %v1614 = vadd.f32 0.0, %v1613
      %v1615 = vpop.f32.mrb[0].mxu0
      %1616 = vmatprep.mubr.bf16.mxu0 0
      %1617 = vmatmul.mubr.bf16.gmra.mrb[0].mxu0 %v535
      %v1618 = vpop.f32.mrb[0].mxu0
      %v1619 = vadd.f32 0.0, %v1618
      %v1620 = vpop.f32.mrb[0].mxu0
      %v1621 = vpop.f32.mrb[0].mxu0
      %v1622 = vadd.f32 0.0, %v1621
      %v1623 = vpop.f32.mrb[0].mxu0
      %1624 = vmatprep.mubr.bf16.mxu0 0
      %1625 = vmatmul.mubr.bf16.gmra.mrb[0].mxu0 %v538
      %v1626 = vpop.f32.mrb[0].mxu0
      %v1627 = vadd.f32 0.0, %v1626
      %v1628 = vpop.f32.mrb[0].mxu0
      %v1629 = vpop.f32.mrb[0].mxu0
      %v1630 = vadd.f32 0.0, %v1629
      %v1631 = vpop.f32.mrb[0].mxu0
      %1632 = vmatprep.mubr.bf16.mxu0 0
      %1633 = vmatmul.mubr.bf16.gmra.mrb[0].mxu0 %v1475
      %v1634 = vpop.f32.mrb[0].mxu0
      %v1635 = vadd.f32 0.0, %v1634
      %v1636 = vpop.f32.mrb[0].mxu0
      %v1637 = vpop.f32.mrb[0].mxu0
      %v1638 = vadd.f32 0.0, %v1637
      %v1639 = vpop.f32.mrb[0].mxu0
      %1640 = vdwg.mxu0
      %v1641 = vadd.f32 %v1439, %v1515
      %v1642 = vadd.f32 %v1440, %v1518
      %v1643 = vadd.f32 %v1441, %v1523
      %v1644 = vadd.f32 %v1442, %v1526
      %v1645 = vadd.f32 %v1443, %v1531
      %v1646 = vadd.f32 %v1444, %v1534
      %v1647 = vadd.f32 %v1445, %v1539
      %v1648 = vadd.f32 %v1446, %v1542
      %v1649 = vadd.f32 %v1447, %v1547
      %v1650 = vadd.f32 %v1448, %v1550
      %v1651 = vadd.f32 %v1449, %v1555
      %v1652 = vadd.f32 %v1450, %v1558
      %v1653 = vadd.f32 %v1451, %v1563
      %v1654 = vadd.f32 %v1452, %v1566
      %v1655 = vadd.f32 %v1453, %v1571
      %v1656 = vadd.f32 %v1454, %v1574
      %v1657 = vadd.f32 %v1455, %v1579
      %v1658 = vadd.f32 %v1456, %v1582
      %v1659 = vadd.f32 %v1457, %v1587
      %v1660 = vadd.f32 %v1458, %v1590
      %v1661 = vadd.f32 %v1459, %v1595
      %v1662 = vadd.f32 %v1460, %v1598
      %v1663 = vadd.f32 %v1461, %v1603
      %v1664 = vadd.f32 %v1462, %v1606
      %v1665 = vadd.f32 %v1463, %v1611
      %v1666 = vadd.f32 %v1464, %v1614
      %v1667 = vadd.f32 %v1465, %v1619
      %v1668 = vadd.f32 %v1466, %v1622
      %v1669 = vadd.f32 %v1467, %v1627
      %v1670 = vadd.f32 %v1468, %v1630
      %v1671 = vadd.f32 %v1469, %v1635
      %v1672 = vadd.f32 %v1470, %v1638
      %v1673 = vpack.c.bf16 %v1010, %v962
      %s1674 = scalar_lea.vmem %s1, 20
      %v1675 = vld [vmem:[%s1674] sm:$0xf]
      %v1677 = vsel %vm491, %v1673, 0
      %v1680 = vsel %vm540, %v1675, 0
      %1682 = vmatprep.subr.bf16.mxu0 0
      %1683 = vmatpush1.bf16.msra.mxu0 %v1680
      %1684 = vmatprep.subr.bf16.mxu0 0
      %1685 = vmatpush1.bf16.msra.mxu0 0
      %1686 = vmatprep.subr.bf16.mxu0 0
      %1687 = vmatpush1.bf16.msra.mxu0 0
      %1688 = vmatprep.subr.bf16.mxu0 0
      %1689 = vmatpush1.bf16.msra.mxu0 0
      %1690 = vmatprep.subr.bf16.mxu0 0
      %1691 = vmatpush1.bf16.msra.mxu0 0
      %1692 = vmatprep.subr.bf16.mxu0 0
      %1693 = vmatpush1.bf16.msra.mxu0 0
      %1694 = vmatprep.subr.bf16.mxu0 0
      %1695 = vmatpush1.bf16.msra.mxu0 0
      %1696 = vmatprep.subr.bf16.mxu0 0
      %1697 = vmatpush1.bf16.msra.mxu0 0
      %1698 = vmatprep.subr.bf16.mxu0 0
      %1699 = vmatpush1.bf16.msra.mxu0 0
      %1700 = vmatprep.subr.bf16.mxu0 0
      %1701 = vmatpush1.bf16.msra.mxu0 0
      %1702 = vmatprep.subr.bf16.mxu0 0
      %1703 = vmatpush1.bf16.msra.mxu0 0
      %1704 = vmatprep.subr.bf16.mxu0 0
      %1705 = vmatpush1.bf16.msra.mxu0 0
      %1706 = vmatprep.subr.bf16.mxu0 0
      %1707 = vmatpush1.bf16.msra.mxu0 0
      %1708 = vmatprep.subr.bf16.mxu0 0
      %1709 = vmatpush1.bf16.msra.mxu0 0
      %1710 = vmatprep.subr.bf16.mxu0 0
      %1711 = vmatpush1.bf16.msra.mxu0 0
      %1712 = vmatprep.subr.bf16.mxu0 0
      %1713 = vmatpush1.bf16.msra.mxu0 0
      %1714 = vmatprep.mubr.bf16.mxu0 0
      %1715 = vmatmul.mubr.bf16.gmra.mrb[0].mxu0 %v1029
      %v1716 = vpop.f32.mrb[0].mxu0
      %v1717 = vadd.f32 0.0, %v1716
      %v1718 = vpop.f32.mrb[0].mxu0
      %v1719 = vpop.f32.mrb[0].mxu0
      %v1720 = vadd.f32 0.0, %v1719
      %v1721 = vpop.f32.mrb[0].mxu0
      %1722 = vmatprep.mubr.bf16.mxu0 0
      %1723 = vmatmul.mubr.bf16.gmra.mrb[0].mxu0 %v1032
      %v1724 = vpop.f32.mrb[0].mxu0
      %v1725 = vadd.f32 0.0, %v1724
      %v1726 = vpop.f32.mrb[0].mxu0
      %v1727 = vpop.f32.mrb[0].mxu0
      %v1728 = vadd.f32 0.0, %v1727
      %v1729 = vpop.f32.mrb[0].mxu0
      %1730 = vmatprep.mubr.bf16.mxu0 0
      %1731 = vmatmul.mubr.bf16.gmra.mrb[0].mxu0 %v1035
      %v1732 = vpop.f32.mrb[0].mxu0
      %v1733 = vadd.f32 0.0, %v1732
      %v1734 = vpop.f32.mrb[0].mxu0
      %v1735 = vpop.f32.mrb[0].mxu0
      %v1736 = vadd.f32 0.0, %v1735
      %v1737 = vpop.f32.mrb[0].mxu0
      %1738 = vmatprep.mubr.bf16.mxu0 0
      %1739 = vmatmul.mubr.bf16.gmra.mrb[0].mxu0 %v1038
      %v1740 = vpop.f32.mrb[0].mxu0
      %v1741 = vadd.f32 0.0, %v1740
      %v1742 = vpop.f32.mrb[0].mxu0
      %v1743 = vpop.f32.mrb[0].mxu0
      %v1744 = vadd.f32 0.0, %v1743
      %v1745 = vpop.f32.mrb[0].mxu0
      %1746 = vmatprep.mubr.bf16.mxu0 0
      %1747 = vmatmul.mubr.bf16.gmra.mrb[0].mxu0 %v1041
      %v1748 = vpop.f32.mrb[0].mxu0
      %v1749 = vadd.f32 0.0, %v1748
      %v1750 = vpop.f32.mrb[0].mxu0
      %v1751 = vpop.f32.mrb[0].mxu0
      %v1752 = vadd.f32 0.0, %v1751
      %v1753 = vpop.f32.mrb[0].mxu0
      %1754 = vmatprep.mubr.bf16.mxu0 0
      %1755 = vmatmul.mubr.bf16.gmra.mrb[0].mxu0 %v1044
      %v1756 = vpop.f32.mrb[0].mxu0
      %v1757 = vadd.f32 0.0, %v1756
      %v1758 = vpop.f32.mrb[0].mxu0
      %v1759 = vpop.f32.mrb[0].mxu0
      %v1760 = vadd.f32 0.0, %v1759
      %v1761 = vpop.f32.mrb[0].mxu0
      %1762 = vmatprep.mubr.bf16.mxu0 0
      %1763 = vmatmul.mubr.bf16.gmra.mrb[0].mxu0 %v1047
      %v1764 = vpop.f32.mrb[0].mxu0
      %v1765 = vadd.f32 0.0, %v1764
      %v1766 = vpop.f32.mrb[0].mxu0
      %v1767 = vpop.f32.mrb[0].mxu0
      %v1768 = vadd.f32 0.0, %v1767
      %v1769 = vpop.f32.mrb[0].mxu0
      %1770 = vmatprep.mubr.bf16.mxu0 0
      %1771 = vmatmul.mubr.bf16.gmra.mrb[0].mxu0 %v1050
      %v1772 = vpop.f32.mrb[0].mxu0
      %v1773 = vadd.f32 0.0, %v1772
      %v1774 = vpop.f32.mrb[0].mxu0
      %v1775 = vpop.f32.mrb[0].mxu0
      %v1776 = vadd.f32 0.0, %v1775
      %v1777 = vpop.f32.mrb[0].mxu0
      %1778 = vmatprep.mubr.bf16.mxu0 0
      %1779 = vmatmul.mubr.bf16.gmra.mrb[0].mxu0 %v1053
      %v1780 = vpop.f32.mrb[0].mxu0
      %v1781 = vadd.f32 0.0, %v1780
      %v1782 = vpop.f32.mrb[0].mxu0
      %v1783 = vpop.f32.mrb[0].mxu0
      %v1784 = vadd.f32 0.0, %v1783
      %v1785 = vpop.f32.mrb[0].mxu0
      %1786 = vmatprep.mubr.bf16.mxu0 0
      %1787 = vmatmul.mubr.bf16.gmra.mrb[0].mxu0 %v1056
      %v1788 = vpop.f32.mrb[0].mxu0
      %v1789 = vadd.f32 0.0, %v1788
      %v1790 = vpop.f32.mrb[0].mxu0
      %v1791 = vpop.f32.mrb[0].mxu0
      %v1792 = vadd.f32 0.0, %v1791
      %v1793 = vpop.f32.mrb[0].mxu0
      %1794 = vmatprep.mubr.bf16.mxu0 0
      %1795 = vmatmul.mubr.bf16.gmra.mrb[0].mxu0 %v1059
      %v1796 = vpop.f32.mrb[0].mxu0
      %v1797 = vadd.f32 0.0, %v1796
      %v1798 = vpop.f32.mrb[0].mxu0
      %v1799 = vpop.f32.mrb[0].mxu0
      %v1800 = vadd.f32 0.0, %v1799
      %v1801 = vpop.f32.mrb[0].mxu0
      %1802 = vmatprep.mubr.bf16.mxu0 0
      %1803 = vmatmul.mubr.bf16.gmra.mrb[0].mxu0 %v1062
      %v1804 = vpop.f32.mrb[0].mxu0
      %v1805 = vadd.f32 0.0, %v1804
      %v1806 = vpop.f32.mrb[0].mxu0
      %v1807 = vpop.f32.mrb[0].mxu0
      %v1808 = vadd.f32 0.0, %v1807
      %v1809 = vpop.f32.mrb[0].mxu0
      %1810 = vmatprep.mubr.bf16.mxu0 0
      %1811 = vmatmul.mubr.bf16.gmra.mrb[0].mxu0 %v1065
      %v1812 = vpop.f32.mrb[0].mxu0
      %v1813 = vadd.f32 0.0, %v1812
      %v1814 = vpop.f32.mrb[0].mxu0
      %v1815 = vpop.f32.mrb[0].mxu0
      %v1816 = vadd.f32 0.0, %v1815
      %v1817 = vpop.f32.mrb[0].mxu0
      %1818 = vmatprep.mubr.bf16.mxu0 0
      %1819 = vmatmul.mubr.bf16.gmra.mrb[0].mxu0 %v1068
      %v1820 = vpop.f32.mrb[0].mxu0
      %v1821 = vadd.f32 0.0, %v1820
      %v1822 = vpop.f32.mrb[0].mxu0
      %v1823 = vpop.f32.mrb[0].mxu0
      %v1824 = vadd.f32 0.0, %v1823
      %v1825 = vpop.f32.mrb[0].mxu0
      %1826 = vmatprep.mubr.bf16.mxu0 0
      %1827 = vmatmul.mubr.bf16.gmra.mrb[0].mxu0 %v1071
      %v1828 = vpop.f32.mrb[0].mxu0
      %v1829 = vadd.f32 0.0, %v1828
      %v1830 = vpop.f32.mrb[0].mxu0
      %v1831 = vpop.f32.mrb[0].mxu0
      %v1832 = vadd.f32 0.0, %v1831
      %v1833 = vpop.f32.mrb[0].mxu0
      %1834 = vmatprep.mubr.bf16.mxu0 0
      %1835 = vmatmul.mubr.bf16.gmra.mrb[0].mxu0 %v1677
      %v1836 = vpop.f32.mrb[0].mxu0
      %v1837 = vadd.f32 0.0, %v1836
      %v1838 = vpop.f32.mrb[0].mxu0
      %v1839 = vpop.f32.mrb[0].mxu0
      %v1840 = vadd.f32 0.0, %v1839
      %v1841 = vpop.f32.mrb[0].mxu0
      %1842 = vdwg.mxu0
      %v1843 = vadd.f32 %v1641, %v1717
      %v1844 = vadd.f32 %v1642, %v1720
      %v1845 = vadd.f32 %v1643, %v1725
      %v1846 = vadd.f32 %v1644, %v1728
      %v1847 = vadd.f32 %v1645, %v1733
      %v1848 = vadd.f32 %v1646, %v1736
      %v1849 = vadd.f32 %v1647, %v1741
      %v1850 = vadd.f32 %v1648, %v1744
      %v1851 = vadd.f32 %v1649, %v1749
      %v1852 = vadd.f32 %v1650, %v1752
      %v1853 = vadd.f32 %v1651, %v1757
      %v1854 = vadd.f32 %v1652, %v1760
      %v1855 = vadd.f32 %v1653, %v1765
      %v1856 = vadd.f32 %v1654, %v1768
      %v1857 = vadd.f32 %v1655, %v1773
      %v1858 = vadd.f32 %v1656, %v1776
      %v1859 = vadd.f32 %v1657, %v1781
      %v1860 = vadd.f32 %v1658, %v1784
      %v1861 = vadd.f32 %v1659, %v1789
      %v1862 = vadd.f32 %v1660, %v1792
      %v1863 = vadd.f32 %v1661, %v1797
      %v1864 = vadd.f32 %v1662, %v1800
      %v1865 = vadd.f32 %v1663, %v1805
      %v1866 = vadd.f32 %v1664, %v1808
      %v1867 = vadd.f32 %v1665, %v1813
      %v1868 = vadd.f32 %v1666, %v1816
      %v1869 = vadd.f32 %v1667, %v1821
      %v1870 = vadd.f32 %v1668, %v1824
      %v1871 = vadd.f32 %v1669, %v1829
      %v1872 = vadd.f32 %v1670, %v1832
      %v1873 = vadd.f32 %v1671, %v1837
      %v1874 = vadd.f32 %v1672, %v1840
      %s1875 = scalar_lea.vmem %s1, 24
      %v1876 = vld [vmem:[%s1875] sm:$0xf]
      %v1878 = vsel %vm540, %v1876, 0
      %1880 = vmatprep.subr.bf16.mxu0 0
      %1881 = vmatpush1.bf16.msra.mxu0 %v1878
      %1882 = vmatprep.subr.bf16.mxu0 0
      %1883 = vmatpush1.bf16.msra.mxu0 0
      %1884 = vmatprep.subr.bf16.mxu0 0
      %1885 = vmatpush1.bf16.msra.mxu0 0
      %1886 = vmatprep.subr.bf16.mxu0 0
      %1887 = vmatpush1.bf16.msra.mxu0 0
      %1888 = vmatprep.subr.bf16.mxu0 0
      %1889 = vmatpush1.bf16.msra.mxu0 0
      %1890 = vmatprep.subr.bf16.mxu0 0
      %1891 = vmatpush1.bf16.msra.mxu0 0
      %1892 = vmatprep.subr.bf16.mxu0 0
      %1893 = vmatpush1.bf16.msra.mxu0 0
      %1894 = vmatprep.subr.bf16.mxu0 0
      %1895 = vmatpush1.bf16.msra.mxu0 0
      %1896 = vmatprep.subr.bf16.mxu0 0
      %1897 = vmatpush1.bf16.msra.mxu0 0
      %1898 = vmatprep.subr.bf16.mxu0 0
      %1899 = vmatpush1.bf16.msra.mxu0 0
      %1900 = vmatprep.subr.bf16.mxu0 0
      %1901 = vmatpush1.bf16.msra.mxu0 0
      %1902 = vmatprep.subr.bf16.mxu0 0
      %1903 = vmatpush1.bf16.msra.mxu0 0
      %1904 = vmatprep.subr.bf16.mxu0 0
      %1905 = vmatpush1.bf16.msra.mxu0 0
      %1906 = vmatprep.subr.bf16.mxu0 0
      %1907 = vmatpush1.bf16.msra.mxu0 0
      %1908 = vmatprep.subr.bf16.mxu0 0
      %1909 = vmatpush1.bf16.msra.mxu0 0
      %1910 = vmatprep.subr.bf16.mxu0 0
      %1911 = vmatpush1.bf16.msra.mxu0 0
      %1912 = vmatprep.mubr.bf16.mxu0 0
      %1913 = vmatmul.mubr.bf16.gmra.mrb[0].mxu0 %v709
      %v1914 = vpop.f32.mrb[0].mxu0
      %v1915 = vadd.f32 0.0, %v1914
      %v1916 = vpop.f32.mrb[0].mxu0
      %v1917 = vpop.f32.mrb[0].mxu0
      %v1918 = vadd.f32 0.0, %v1917
      %v1919 = vpop.f32.mrb[0].mxu0
      %1920 = vmatprep.mubr.bf16.mxu0 0
      %1921 = vmatmul.mubr.bf16.gmra.mrb[0].mxu0 %v712
      %v1922 = vpop.f32.mrb[0].mxu0
      %v1923 = vadd.f32 0.0, %v1922
      %v1924 = vpop.f32.mrb[0].mxu0
      %v1925 = vpop.f32.mrb[0].mxu0
      %v1926 = vadd.f32 0.0, %v1925
      %v1927 = vpop.f32.mrb[0].mxu0
      %1928 = vmatprep.mubr.bf16.mxu0 0
      %1929 = vmatmul.mubr.bf16.gmra.mrb[0].mxu0 %v715
      %v1930 = vpop.f32.mrb[0].mxu0
      %v1931 = vadd.f32 0.0, %v1930
      %v1932 = vpop.f32.mrb[0].mxu0
      %v1933 = vpop.f32.mrb[0].mxu0
      %v1934 = vadd.f32 0.0, %v1933
      %v1935 = vpop.f32.mrb[0].mxu0
      %1936 = vmatprep.mubr.bf16.mxu0 0
      %1937 = vmatmul.mubr.bf16.gmra.mrb[0].mxu0 %v718
      %v1938 = vpop.f32.mrb[0].mxu0
      %v1939 = vadd.f32 0.0, %v1938
      %v1940 = vpop.f32.mrb[0].mxu0
      %v1941 = vpop.f32.mrb[0].mxu0
      %v1942 = vadd.f32 0.0, %v1941
      %v1943 = vpop.f32.mrb[0].mxu0
      %1944 = vmatprep.mubr.bf16.mxu0 0
      %1945 = vmatmul.mubr.bf16.gmra.mrb[0].mxu0 %v721
      %v1946 = vpop.f32.mrb[0].mxu0
      %v1947 = vadd.f32 0.0, %v1946
      %v1948 = vpop.f32.mrb[0].mxu0
      %v1949 = vpop.f32.mrb[0].mxu0
      %v1950 = vadd.f32 0.0, %v1949
      %v1951 = vpop.f32.mrb[0].mxu0
      %1952 = vmatprep.mubr.bf16.mxu0 0
      %1953 = vmatmul.mubr.bf16.gmra.mrb[0].mxu0 %v724
      %v1954 = vpop.f32.mrb[0].mxu0
      %v1955 = vadd.f32 0.0, %v1954
      %v1956 = vpop.f32.mrb[0].mxu0
      %v1957 = vpop.f32.mrb[0].mxu0
      %v1958 = vadd.f32 0.0, %v1957
      %v1959 = vpop.f32.mrb[0].mxu0
      %1960 = vmatprep.mubr.bf16.mxu0 0
      %1961 = vmatmul.mubr.bf16.gmra.mrb[0].mxu0 %v727
      %v1962 = vpop.f32.mrb[0].mxu0
      %v1963 = vadd.f32 0.0, %v1962
      %v1964 = vpop.f32.mrb[0].mxu0
      %v1965 = vpop.f32.mrb[0].mxu0
      %v1966 = vadd.f32 0.0, %v1965
      %v1967 = vpop.f32.mrb[0].mxu0
      %1968 = vmatprep.mubr.bf16.mxu0 0
      %1969 = vmatmul.mubr.bf16.gmra.mrb[0].mxu0 %v730
      %v1970 = vpop.f32.mrb[0].mxu0
      %v1971 = vadd.f32 0.0, %v1970
      %v1972 = vpop.f32.mrb[0].mxu0
      %v1973 = vpop.f32.mrb[0].mxu0
      %v1974 = vadd.f32 0.0, %v1973
      %v1975 = vpop.f32.mrb[0].mxu0
      %1976 = vmatprep.mubr.bf16.mxu0 0
      %1977 = vmatmul.mubr.bf16.gmra.mrb[0].mxu0 %v733
      %v1978 = vpop.f32.mrb[0].mxu0
      %v1979 = vadd.f32 0.0, %v1978
      %v1980 = vpop.f32.mrb[0].mxu0
      %v1981 = vpop.f32.mrb[0].mxu0
      %v1982 = vadd.f32 0.0, %v1981
      %v1983 = vpop.f32.mrb[0].mxu0
      %1984 = vmatprep.mubr.bf16.mxu0 0
      %1985 = vmatmul.mubr.bf16.gmra.mrb[0].mxu0 %v736
      %v1986 = vpop.f32.mrb[0].mxu0
      %v1987 = vadd.f32 0.0, %v1986
      %v1988 = vpop.f32.mrb[0].mxu0
      %v1989 = vpop.f32.mrb[0].mxu0
      %v1990 = vadd.f32 0.0, %v1989
      %v1991 = vpop.f32.mrb[0].mxu0
      %1992 = vmatprep.mubr.bf16.mxu0 0
      %1993 = vmatmul.mubr.bf16.gmra.mrb[0].mxu0 %v739
      %v1994 = vpop.f32.mrb[0].mxu0
      %v1995 = vadd.f32 0.0, %v1994
      %v1996 = vpop.f32.mrb[0].mxu0
      %v1997 = vpop.f32.mrb[0].mxu0
      %v1998 = vadd.f32 0.0, %v1997
      %v1999 = vpop.f32.mrb[0].mxu0
      %2000 = vmatprep.mubr.bf16.mxu0 0
      %2001 = vmatmul.mubr.bf16.gmra.mrb[0].mxu0 %v742
      %v2002 = vpop.f32.mrb[0].mxu0
      %v2003 = vadd.f32 0.0, %v2002
      %v2004 = vpop.f32.mrb[0].mxu0
      %v2005 = vpop.f32.mrb[0].mxu0
      %v2006 = vadd.f32 0.0, %v2005
      %v2007 = vpop.f32.mrb[0].mxu0
      %2008 = vmatprep.mubr.bf16.mxu0 0
      %2009 = vmatmul.mubr.bf16.gmra.mrb[0].mxu0 %v745
      %v2010 = vpop.f32.mrb[0].mxu0
      %v2011 = vadd.f32 0.0, %v2010
      %v2012 = vpop.f32.mrb[0].mxu0
      %v2013 = vpop.f32.mrb[0].mxu0
      %v2014 = vadd.f32 0.0, %v2013
      %v2015 = vpop.f32.mrb[0].mxu0
      %2016 = vmatprep.mubr.bf16.mxu0 0
      %2017 = vmatmul.mubr.bf16.gmra.mrb[0].mxu0 %v748
      %v2018 = vpop.f32.mrb[0].mxu0
      %v2019 = vadd.f32 0.0, %v2018
      %v2020 = vpop.f32.mrb[0].mxu0
      %v2021 = vpop.f32.mrb[0].mxu0
      %v2022 = vadd.f32 0.0, %v2021
      %v2023 = vpop.f32.mrb[0].mxu0
      %2024 = vmatprep.mubr.bf16.mxu0 0
      %2025 = vmatmul.mubr.bf16.gmra.mrb[0].mxu0 %v1273
      %v2026 = vpop.f32.mrb[0].mxu0
      %v2027 = vadd.f32 0.0, %v2026
      %v2028 = vpop.f32.mrb[0].mxu0
      %v2029 = vpop.f32.mrb[0].mxu0
      %v2030 = vadd.f32 0.0, %v2029
      %v2031 = vpop.f32.mrb[0].mxu0
      %2032 = vmatprep.mubr.bf16.mxu0 0
      %2033 = vmatmul.mubr.bf16.gmra.mrb[0].mxu0 %v493
      %v2034 = vpop.f32.mrb[0].mxu0
      %v2035 = vadd.f32 0.0, %v2034
      %v2036 = vpop.f32.mrb[0].mxu0
      %v2037 = vpop.f32.mrb[0].mxu0
      %v2038 = vadd.f32 0.0, %v2037
      %v2039 = vpop.f32.mrb[0].mxu0
      %2040 = vdwg.mxu0
      %v2041 = vadd.f32 %v1843, %v1915
      %v2042 = vadd.f32 %v1844, %v1918
      %v2043 = vadd.f32 %v1845, %v1923
      %v2044 = vadd.f32 %v1846, %v1926
      %v2045 = vadd.f32 %v1847, %v1931
      %v2046 = vadd.f32 %v1848, %v1934
      %v2047 = vadd.f32 %v1849, %v1939
      %v2048 = vadd.f32 %v1850, %v1942
      %v2049 = vadd.f32 %v1851, %v1947
      %v2050 = vadd.f32 %v1852, %v1950
      %v2051 = vadd.f32 %v1853, %v1955
      %v2052 = vadd.f32 %v1854, %v1958
      %v2053 = vadd.f32 %v1855, %v1963
      %v2054 = vadd.f32 %v1856, %v1966
      %v2055 = vadd.f32 %v1857, %v1971
      %v2056 = vadd.f32 %v1858, %v1974
      %v2057 = vadd.f32 %v1859, %v1979
      %v2058 = vadd.f32 %v1860, %v1982
      %v2059 = vadd.f32 %v1861, %v1987
      %v2060 = vadd.f32 %v1862, %v1990
      %v2061 = vadd.f32 %v1863, %v1995
      %v2062 = vadd.f32 %v1864, %v1998
      %v2063 = vadd.f32 %v1865, %v2003
      %v2064 = vadd.f32 %v1866, %v2006
      %v2065 = vadd.f32 %v1867, %v2011
      %v2066 = vadd.f32 %v1868, %v2014
      %v2067 = vadd.f32 %v1869, %v2019
      %v2068 = vadd.f32 %v1870, %v2022
      %v2069 = vadd.f32 %v1871, %v2027
      %v2070 = vadd.f32 %v1872, %v2030
      %v2071 = vadd.f32 %v1873, %v2035
      %v2072 = vadd.f32 %v1874, %v2038
      %s2073 = scalar_lea.vmem %s1, 28
      %v2074 = vld [vmem:[%s2073] sm:$0xf]
      %v2076 = vsel %vm540, %v2074, 0
      %2078 = vmatprep.subr.bf16.mxu0 0
      %2079 = vmatpush1.bf16.msra.mxu0 %v2076
      %2080 = vmatprep.subr.bf16.mxu0 0
      %2081 = vmatpush1.bf16.msra.mxu0 0
      %2082 = vmatprep.subr.bf16.mxu0 0
      %2083 = vmatpush1.bf16.msra.mxu0 0
      %2084 = vmatprep.subr.bf16.mxu0 0
      %2085 = vmatpush1.bf16.msra.mxu0 0
      %2086 = vmatprep.subr.bf16.mxu0 0
      %2087 = vmatpush1.bf16.msra.mxu0 0
      %2088 = vmatprep.subr.bf16.mxu0 0
      %2089 = vmatpush1.bf16.msra.mxu0 0
      %2090 = vmatprep.subr.bf16.mxu0 0
      %2091 = vmatpush1.bf16.msra.mxu0 0
      %2092 = vmatprep.subr.bf16.mxu0 0
      %2093 = vmatpush1.bf16.msra.mxu0 0
      %2094 = vmatprep.subr.bf16.mxu0 0
      %2095 = vmatpush1.bf16.msra.mxu0 0
      %2096 = vmatprep.subr.bf16.mxu0 0
      %2097 = vmatpush1.bf16.msra.mxu0 0
      %2098 = vmatprep.subr.bf16.mxu0 0
      %2099 = vmatpush1.bf16.msra.mxu0 0
      %2100 = vmatprep.subr.bf16.mxu0 0
      %2101 = vmatpush1.bf16.msra.mxu0 0
      %2102 = vmatprep.subr.bf16.mxu0 0
      %2103 = vmatpush1.bf16.msra.mxu0 0
      %2104 = vmatprep.subr.bf16.mxu0 0
      %2105 = vmatpush1.bf16.msra.mxu0 0
      %2106 = vmatprep.subr.bf16.mxu0 0
      %2107 = vmatpush1.bf16.msra.mxu0 0
      %2108 = vmatprep.subr.bf16.mxu0 0
      %2109 = vmatpush1.bf16.msra.mxu0 0
      %2110 = vmatprep.mubr.bf16.mxu0 0
      %2111 = vmatmul.mubr.bf16.gmra.mrb[0].mxu0 %v499
      %v2112 = vpop.f32.mrb[0].mxu0
      %v2113 = vadd.f32 0.0, %v2112
      %v2114 = vpop.f32.mrb[0].mxu0
      %v2115 = vpop.f32.mrb[0].mxu0
      %v2116 = vadd.f32 0.0, %v2115
      %v2117 = vpop.f32.mrb[0].mxu0
      %2118 = vmatprep.mubr.bf16.mxu0 0
      %2119 = vmatmul.mubr.bf16.gmra.mrb[0].mxu0 %v502
      %v2120 = vpop.f32.mrb[0].mxu0
      %v2121 = vadd.f32 0.0, %v2120
      %v2122 = vpop.f32.mrb[0].mxu0
      %v2123 = vpop.f32.mrb[0].mxu0
      %v2124 = vadd.f32 0.0, %v2123
      %v2125 = vpop.f32.mrb[0].mxu0
      %2126 = vmatprep.mubr.bf16.mxu0 0
      %2127 = vmatmul.mubr.bf16.gmra.mrb[0].mxu0 %v505
      %v2128 = vpop.f32.mrb[0].mxu0
      %v2129 = vadd.f32 0.0, %v2128
      %v2130 = vpop.f32.mrb[0].mxu0
      %v2131 = vpop.f32.mrb[0].mxu0
      %v2132 = vadd.f32 0.0, %v2131
      %v2133 = vpop.f32.mrb[0].mxu0
      %2134 = vmatprep.mubr.bf16.mxu0 0
      %2135 = vmatmul.mubr.bf16.gmra.mrb[0].mxu0 %v508
      %v2136 = vpop.f32.mrb[0].mxu0
      %v2137 = vadd.f32 0.0, %v2136
      %v2138 = vpop.f32.mrb[0].mxu0
      %v2139 = vpop.f32.mrb[0].mxu0
      %v2140 = vadd.f32 0.0, %v2139
      %v2141 = vpop.f32.mrb[0].mxu0
      %2142 = vmatprep.mubr.bf16.mxu0 0
      %2143 = vmatmul.mubr.bf16.gmra.mrb[0].mxu0 %v511
      %v2144 = vpop.f32.mrb[0].mxu0
      %v2145 = vadd.f32 0.0, %v2144
      %v2146 = vpop.f32.mrb[0].mxu0
      %v2147 = vpop.f32.mrb[0].mxu0
      %v2148 = vadd.f32 0.0, %v2147
      %v2149 = vpop.f32.mrb[0].mxu0
      %2150 = vmatprep.mubr.bf16.mxu0 0
      %2151 = vmatmul.mubr.bf16.gmra.mrb[0].mxu0 %v514
      %v2152 = vpop.f32.mrb[0].mxu0
      %v2153 = vadd.f32 0.0, %v2152
      %v2154 = vpop.f32.mrb[0].mxu0
      %v2155 = vpop.f32.mrb[0].mxu0
      %v2156 = vadd.f32 0.0, %v2155
      %v2157 = vpop.f32.mrb[0].mxu0
      %2158 = vmatprep.mubr.bf16.mxu0 0
      %2159 = vmatmul.mubr.bf16.gmra.mrb[0].mxu0 %v517
      %v2160 = vpop.f32.mrb[0].mxu0
      %v2161 = vadd.f32 0.0, %v2160
      %v2162 = vpop.f32.mrb[0].mxu0
      %v2163 = vpop.f32.mrb[0].mxu0
      %v2164 = vadd.f32 0.0, %v2163
      %v2165 = vpop.f32.mrb[0].mxu0
      %2166 = vmatprep.mubr.bf16.mxu0 0
      %2167 = vmatmul.mubr.bf16.gmra.mrb[0].mxu0 %v520
      %v2168 = vpop.f32.mrb[0].mxu0
      %v2169 = vadd.f32 0.0, %v2168
      %v2170 = vpop.f32.mrb[0].mxu0
      %v2171 = vpop.f32.mrb[0].mxu0
      %v2172 = vadd.f32 0.0, %v2171
      %v2173 = vpop.f32.mrb[0].mxu0
      %2174 = vmatprep.mubr.bf16.mxu0 0
      %2175 = vmatmul.mubr.bf16.gmra.mrb[0].mxu0 %v523
      %v2176 = vpop.f32.mrb[0].mxu0
      %v2177 = vadd.f32 0.0, %v2176
      %v2178 = vpop.f32.mrb[0].mxu0
      %v2179 = vpop.f32.mrb[0].mxu0
      %v2180 = vadd.f32 0.0, %v2179
      %v2181 = vpop.f32.mrb[0].mxu0
      %2182 = vmatprep.mubr.bf16.mxu0 0
      %2183 = vmatmul.mubr.bf16.gmra.mrb[0].mxu0 %v526
      %v2184 = vpop.f32.mrb[0].mxu0
      %v2185 = vadd.f32 0.0, %v2184
      %v2186 = vpop.f32.mrb[0].mxu0
      %v2187 = vpop.f32.mrb[0].mxu0
      %v2188 = vadd.f32 0.0, %v2187
      %v2189 = vpop.f32.mrb[0].mxu0
      %2190 = vmatprep.mubr.bf16.mxu0 0
      %2191 = vmatmul.mubr.bf16.gmra.mrb[0].mxu0 %v529
      %v2192 = vpop.f32.mrb[0].mxu0
      %v2193 = vadd.f32 0.0, %v2192
      %v2194 = vpop.f32.mrb[0].mxu0
      %v2195 = vpop.f32.mrb[0].mxu0
      %v2196 = vadd.f32 0.0, %v2195
      %v2197 = vpop.f32.mrb[0].mxu0
      %2198 = vmatprep.mubr.bf16.mxu0 0
      %2199 = vmatmul.mubr.bf16.gmra.mrb[0].mxu0 %v532
      %v2200 = vpop.f32.mrb[0].mxu0
      %v2201 = vadd.f32 0.0, %v2200
      %v2202 = vpop.f32.mrb[0].mxu0
      %v2203 = vpop.f32.mrb[0].mxu0
      %v2204 = vadd.f32 0.0, %v2203
      %v2205 = vpop.f32.mrb[0].mxu0
      %2206 = vmatprep.mubr.bf16.mxu0 0
      %2207 = vmatmul.mubr.bf16.gmra.mrb[0].mxu0 %v535
      %v2208 = vpop.f32.mrb[0].mxu0
      %v2209 = vadd.f32 0.0, %v2208
      %v2210 = vpop.f32.mrb[0].mxu0
      %v2211 = vpop.f32.mrb[0].mxu0
      %v2212 = vadd.f32 0.0, %v2211
      %v2213 = vpop.f32.mrb[0].mxu0
      %2214 = vmatprep.mubr.bf16.mxu0 0
      %2215 = vmatmul.mubr.bf16.gmra.mrb[0].mxu0 %v538
      %v2216 = vpop.f32.mrb[0].mxu0
      %v2217 = vadd.f32 0.0, %v2216
      %v2218 = vpop.f32.mrb[0].mxu0
      %v2219 = vpop.f32.mrb[0].mxu0
      %v2220 = vadd.f32 0.0, %v2219
      %v2221 = vpop.f32.mrb[0].mxu0
      %2222 = vmatprep.mubr.bf16.mxu0 0
      %2223 = vmatmul.mubr.bf16.gmra.mrb[0].mxu0 %v1475
      %v2224 = vpop.f32.mrb[0].mxu0
      %v2225 = vadd.f32 0.0, %v2224
      %v2226 = vpop.f32.mrb[0].mxu0
      %v2227 = vpop.f32.mrb[0].mxu0
      %v2228 = vadd.f32 0.0, %v2227
      %v2229 = vpop.f32.mrb[0].mxu0
      %2230 = vmatprep.mubr.bf16.mxu0 0
      %2231 = vmatmul.mubr.bf16.gmra.mrb[0].mxu0 %v493
      %v2232 = vpop.f32.mrb[0].mxu0
      %v2233 = vadd.f32 0.0, %v2232
      %v2234 = vpop.f32.mrb[0].mxu0
      %v2235 = vpop.f32.mrb[0].mxu0
      %v2236 = vadd.f32 0.0, %v2235
      %v2237 = vpop.f32.mrb[0].mxu0
      %2238 = vdwg.mxu0
      %v2239 = vadd.f32 %v2041, %v2113
      %v2240 = vadd.f32 %v2042, %v2116
      %v2241 = vadd.f32 %v2043, %v2121
      %v2242 = vadd.f32 %v2044, %v2124
      %v2243 = vadd.f32 %v2045, %v2129
      %v2244 = vadd.f32 %v2046, %v2132
      %v2245 = vadd.f32 %v2047, %v2137
      %v2246 = vadd.f32 %v2048, %v2140
      %v2247 = vadd.f32 %v2049, %v2145
      %v2248 = vadd.f32 %v2050, %v2148
      %v2249 = vadd.f32 %v2051, %v2153
      %v2250 = vadd.f32 %v2052, %v2156
      %v2251 = vadd.f32 %v2053, %v2161
      %v2252 = vadd.f32 %v2054, %v2164
      %v2253 = vadd.f32 %v2055, %v2169
      %v2254 = vadd.f32 %v2056, %v2172
      %v2255 = vadd.f32 %v2057, %v2177
      %v2256 = vadd.f32 %v2058, %v2180
      %v2257 = vadd.f32 %v2059, %v2185
      %v2258 = vadd.f32 %v2060, %v2188
      %v2259 = vadd.f32 %v2061, %v2193
      %v2260 = vadd.f32 %v2062, %v2196
      %v2261 = vadd.f32 %v2063, %v2201
      %v2262 = vadd.f32 %v2064, %v2204
      %v2263 = vadd.f32 %v2065, %v2209
      %v2264 = vadd.f32 %v2066, %v2212
      %v2265 = vadd.f32 %v2067, %v2217
      %v2266 = vadd.f32 %v2068, %v2220
      %v2267 = vadd.f32 %v2069, %v2225
      %v2268 = vadd.f32 %v2070, %v2228
      %v2269 = vadd.f32 %v2071, %v2233
      %v2270 = vadd.f32 %v2072, %v2236
      %s2271 = scalar_lea.vmem %s1, 32
      %v2272 = vld [vmem:[%s2271] sm:$0xf]
      %v2274 = vsel %vm540, %v2272, 0
      %2276 = vmatprep.subr.bf16.mxu0 0
      %2277 = vmatpush1.bf16.msra.mxu0 %v2274
      %2278 = vmatprep.subr.bf16.mxu0 0
      %2279 = vmatpush1.bf16.msra.mxu0 0
      %2280 = vmatprep.subr.bf16.mxu0 0
      %2281 = vmatpush1.bf16.msra.mxu0 0
      %2282 = vmatprep.subr.bf16.mxu0 0
      %2283 = vmatpush1.bf16.msra.mxu0 0
      %2284 = vmatprep.subr.bf16.mxu0 0
      %2285 = vmatpush1.bf16.msra.mxu0 0
      %2286 = vmatprep.subr.bf16.mxu0 0
      %2287 = vmatpush1.bf16.msra.mxu0 0
      %2288 = vmatprep.subr.bf16.mxu0 0
      %2289 = vmatpush1.bf16.msra.mxu0 0
      %2290 = vmatprep.subr.bf16.mxu0 0
      %2291 = vmatpush1.bf16.msra.mxu0 0
      %2292 = vmatprep.subr.bf16.mxu0 0
      %2293 = vmatpush1.bf16.msra.mxu0 0
      %2294 = vmatprep.subr.bf16.mxu0 0
      %2295 = vmatpush1.bf16.msra.mxu0 0
      %2296 = vmatprep.subr.bf16.mxu0 0
      %2297 = vmatpush1.bf16.msra.mxu0 0
      %2298 = vmatprep.subr.bf16.mxu0 0
      %2299 = vmatpush1.bf16.msra.mxu0 0
      %2300 = vmatprep.subr.bf16.mxu0 0
      %2301 = vmatpush1.bf16.msra.mxu0 0
      %2302 = vmatprep.subr.bf16.mxu0 0
      %2303 = vmatpush1.bf16.msra.mxu0 0
      %2304 = vmatprep.subr.bf16.mxu0 0
      %2305 = vmatpush1.bf16.msra.mxu0 0
      %2306 = vmatprep.subr.bf16.mxu0 0
      %2307 = vmatpush1.bf16.msra.mxu0 0
      %2308 = vmatprep.mubr.bf16.mxu0 0
      %2309 = vmatmul.mubr.bf16.gmra.mrb[0].mxu0 %v1032
      %v2310 = vpop.f32.mrb[0].mxu0
      %v2311 = vadd.f32 0.0, %v2310
      %v2312 = vpop.f32.mrb[0].mxu0
      %v2313 = vpop.f32.mrb[0].mxu0
      %v2314 = vadd.f32 0.0, %v2313
      %v2315 = vpop.f32.mrb[0].mxu0
      %2316 = vmatprep.mubr.bf16.mxu0 0
      %2317 = vmatmul.mubr.bf16.gmra.mrb[0].mxu0 %v1035
      %v2318 = vpop.f32.mrb[0].mxu0
      %v2319 = vadd.f32 0.0, %v2318
      %v2320 = vpop.f32.mrb[0].mxu0
      %v2321 = vpop.f32.mrb[0].mxu0
      %v2322 = vadd.f32 0.0, %v2321
      %v2323 = vpop.f32.mrb[0].mxu0
      %2324 = vmatprep.mubr.bf16.mxu0 0
      %2325 = vmatmul.mubr.bf16.gmra.mrb[0].mxu0 %v1038
      %v2326 = vpop.f32.mrb[0].mxu0
      %v2327 = vadd.f32 0.0, %v2326
      %v2328 = vpop.f32.mrb[0].mxu0
      %v2329 = vpop.f32.mrb[0].mxu0
      %v2330 = vadd.f32 0.0, %v2329
      %v2331 = vpop.f32.mrb[0].mxu0
      %2332 = vmatprep.mubr.bf16.mxu0 0
      %2333 = vmatmul.mubr.bf16.gmra.mrb[0].mxu0 %v1041
      %v2334 = vpop.f32.mrb[0].mxu0
      %v2335 = vadd.f32 0.0, %v2334
      %v2336 = vpop.f32.mrb[0].mxu0
      %v2337 = vpop.f32.mrb[0].mxu0
      %v2338 = vadd.f32 0.0, %v2337
      %v2339 = vpop.f32.mrb[0].mxu0
      %2340 = vmatprep.mubr.bf16.mxu0 0
      %2341 = vmatmul.mubr.bf16.gmra.mrb[0].mxu0 %v1044
      %v2342 = vpop.f32.mrb[0].mxu0
      %v2343 = vadd.f32 0.0, %v2342
      %v2344 = vpop.f32.mrb[0].mxu0
      %v2345 = vpop.f32.mrb[0].mxu0
      %v2346 = vadd.f32 0.0, %v2345
      %v2347 = vpop.f32.mrb[0].mxu0
      %2348 = vmatprep.mubr.bf16.mxu0 0
      %2349 = vmatmul.mubr.bf16.gmra.mrb[0].mxu0 %v1047
      %v2350 = vpop.f32.mrb[0].mxu0
      %v2351 = vadd.f32 0.0, %v2350
      %v2352 = vpop.f32.mrb[0].mxu0
      %v2353 = vpop.f32.mrb[0].mxu0
      %v2354 = vadd.f32 0.0, %v2353
      %v2355 = vpop.f32.mrb[0].mxu0
      %2356 = vmatprep.mubr.bf16.mxu0 0
      %2357 = vmatmul.mubr.bf16.gmra.mrb[0].mxu0 %v1050
      %v2358 = vpop.f32.mrb[0].mxu0
      %v2359 = vadd.f32 0.0, %v2358
      %v2360 = vpop.f32.mrb[0].mxu0
      %v2361 = vpop.f32.mrb[0].mxu0
      %v2362 = vadd.f32 0.0, %v2361
      %v2363 = vpop.f32.mrb[0].mxu0
      %2364 = vmatprep.mubr.bf16.mxu0 0
      %2365 = vmatmul.mubr.bf16.gmra.mrb[0].mxu0 %v1053
      %v2366 = vpop.f32.mrb[0].mxu0
      %v2367 = vadd.f32 0.0, %v2366
      %v2368 = vpop.f32.mrb[0].mxu0
      %v2369 = vpop.f32.mrb[0].mxu0
      %v2370 = vadd.f32 0.0, %v2369
      %v2371 = vpop.f32.mrb[0].mxu0
      %2372 = vmatprep.mubr.bf16.mxu0 0
      %2373 = vmatmul.mubr.bf16.gmra.mrb[0].mxu0 %v1056
      %v2374 = vpop.f32.mrb[0].mxu0
      %v2375 = vadd.f32 0.0, %v2374
      %v2376 = vpop.f32.mrb[0].mxu0
      %v2377 = vpop.f32.mrb[0].mxu0
      %v2378 = vadd.f32 0.0, %v2377
      %v2379 = vpop.f32.mrb[0].mxu0
      %2380 = vmatprep.mubr.bf16.mxu0 0
      %2381 = vmatmul.mubr.bf16.gmra.mrb[0].mxu0 %v1059
      %v2382 = vpop.f32.mrb[0].mxu0
      %v2383 = vadd.f32 0.0, %v2382
      %v2384 = vpop.f32.mrb[0].mxu0
      %v2385 = vpop.f32.mrb[0].mxu0
      %v2386 = vadd.f32 0.0, %v2385
      %v2387 = vpop.f32.mrb[0].mxu0
      %2388 = vmatprep.mubr.bf16.mxu0 0
      %2389 = vmatmul.mubr.bf16.gmra.mrb[0].mxu0 %v1062
      %v2390 = vpop.f32.mrb[0].mxu0
      %v2391 = vadd.f32 0.0, %v2390
      %v2392 = vpop.f32.mrb[0].mxu0
      %v2393 = vpop.f32.mrb[0].mxu0
      %v2394 = vadd.f32 0.0, %v2393
      %v2395 = vpop.f32.mrb[0].mxu0
      %2396 = vmatprep.mubr.bf16.mxu0 0
      %2397 = vmatmul.mubr.bf16.gmra.mrb[0].mxu0 %v1065
      %v2398 = vpop.f32.mrb[0].mxu0
      %v2399 = vadd.f32 0.0, %v2398
      %v2400 = vpop.f32.mrb[0].mxu0
      %v2401 = vpop.f32.mrb[0].mxu0
      %v2402 = vadd.f32 0.0, %v2401
      %v2403 = vpop.f32.mrb[0].mxu0
      %2404 = vmatprep.mubr.bf16.mxu0 0
      %2405 = vmatmul.mubr.bf16.gmra.mrb[0].mxu0 %v1068
      %v2406 = vpop.f32.mrb[0].mxu0
      %v2407 = vadd.f32 0.0, %v2406
      %v2408 = vpop.f32.mrb[0].mxu0
      %v2409 = vpop.f32.mrb[0].mxu0
      %v2410 = vadd.f32 0.0, %v2409
      %v2411 = vpop.f32.mrb[0].mxu0
      %2412 = vmatprep.mubr.bf16.mxu0 0
      %2413 = vmatmul.mubr.bf16.gmra.mrb[0].mxu0 %v1071
      %v2414 = vpop.f32.mrb[0].mxu0
      %v2415 = vadd.f32 0.0, %v2414
      %v2416 = vpop.f32.mrb[0].mxu0
      %v2417 = vpop.f32.mrb[0].mxu0
      %v2418 = vadd.f32 0.0, %v2417
      %v2419 = vpop.f32.mrb[0].mxu0
      %2420 = vmatprep.mubr.bf16.mxu0 0
      %2421 = vmatmul.mubr.bf16.gmra.mrb[0].mxu0 %v1677
      %v2422 = vpop.f32.mrb[0].mxu0
      %v2423 = vadd.f32 0.0, %v2422
      %v2424 = vpop.f32.mrb[0].mxu0
      %v2425 = vpop.f32.mrb[0].mxu0
      %v2426 = vadd.f32 0.0, %v2425
      %v2427 = vpop.f32.mrb[0].mxu0
      %2428 = vmatprep.mubr.bf16.mxu0 0
      %2429 = vmatmul.mubr.bf16.gmra.mrb[0].mxu0 %v493
      %v2430 = vpop.f32.mrb[0].mxu0
      %v2431 = vadd.f32 0.0, %v2430
      %v2432 = vpop.f32.mrb[0].mxu0
      %v2433 = vpop.f32.mrb[0].mxu0
      %v2434 = vadd.f32 0.0, %v2433
      %v2435 = vpop.f32.mrb[0].mxu0
      %2436 = vdwg.mxu0
      %v2437 = vadd.f32 %v2239, %v2311
      %v2438 = vadd.f32 %v2240, %v2314
      %v2439 = vadd.f32 %v2241, %v2319
      %v2440 = vadd.f32 %v2242, %v2322
      %v2441 = vadd.f32 %v2243, %v2327
      %v2442 = vadd.f32 %v2244, %v2330
      %v2443 = vadd.f32 %v2245, %v2335
      %v2444 = vadd.f32 %v2246, %v2338
      %v2445 = vadd.f32 %v2247, %v2343
      %v2446 = vadd.f32 %v2248, %v2346
      %v2447 = vadd.f32 %v2249, %v2351
      %v2448 = vadd.f32 %v2250, %v2354
      %v2449 = vadd.f32 %v2251, %v2359
      %v2450 = vadd.f32 %v2252, %v2362
      %v2451 = vadd.f32 %v2253, %v2367
      %v2452 = vadd.f32 %v2254, %v2370
      %v2453 = vadd.f32 %v2255, %v2375
      %v2454 = vadd.f32 %v2256, %v2378
      %v2455 = vadd.f32 %v2257, %v2383
      %v2456 = vadd.f32 %v2258, %v2386
      %v2457 = vadd.f32 %v2259, %v2391
      %v2458 = vadd.f32 %v2260, %v2394
      %v2459 = vadd.f32 %v2261, %v2399
      %v2460 = vadd.f32 %v2262, %v2402
      %v2461 = vadd.f32 %v2263, %v2407
      %v2462 = vadd.f32 %v2264, %v2410
      %v2463 = vadd.f32 %v2265, %v2415
      %v2464 = vadd.f32 %v2266, %v2418
      %v2465 = vadd.f32 %v2267, %v2423
      %v2466 = vadd.f32 %v2268, %v2426
      %v2467 = vadd.f32 %v2269, %v2431
      %v2468 = vadd.f32 %v2270, %v2434
      %v2469 = vld [vmem:[%s2] sm:$0x1]
      %v2471 = vlaneseq
      %v2472 = vshrl.u32 %v2471, 7
      %v2473 = vsub.s32 0, %v2472
      %v2474 = vrot.slane %v2469, %v2473
      %v2476 = vadd.f32 %v2437, %v2474
      %v2477 = vadd.f32 %v2438, %v2474
      %v2478 = vadd.f32 %v2439, %v2474
      %v2479 = vadd.f32 %v2440, %v2474
      %v2480 = vadd.f32 %v2441, %v2474
      %v2481 = vadd.f32 %v2442, %v2474
      %v2482 = vadd.f32 %v2443, %v2474
      %v2483 = vadd.f32 %v2444, %v2474
      %v2484 = vadd.f32 %v2445, %v2474
      %v2485 = vadd.f32 %v2446, %v2474
      %v2486 = vadd.f32 %v2447, %v2474
      %v2487 = vadd.f32 %v2448, %v2474
      %v2488 = vadd.f32 %v2449, %v2474
      %v2489 = vadd.f32 %v2450, %v2474
      %v2490 = vadd.f32 %v2451, %v2474
      %v2491 = vadd.f32 %v2452, %v2474
      %v2492 = vadd.f32 %v2453, %v2474
      %v2493 = vadd.f32 %v2454, %v2474
      %v2494 = vadd.f32 %v2455, %v2474
      %v2495 = vadd.f32 %v2456, %v2474
      %v2496 = vadd.f32 %v2457, %v2474
      %v2497 = vadd.f32 %v2458, %v2474
      %v2498 = vadd.f32 %v2459, %v2474
      %v2499 = vadd.f32 %v2460, %v2474
      %v2500 = vadd.f32 %v2461, %v2474
      %v2501 = vadd.f32 %v2462, %v2474
      %v2502 = vadd.f32 %v2463, %v2474
      %v2503 = vadd.f32 %v2464, %v2474
      %v2504 = vadd.f32 %v2465, %v2474
      %v2505 = vadd.f32 %v2466, %v2474
      %v2506 = vadd.f32 %v2467, %v2474
      %v2507 = vadd.f32 %v2468, %v2474
      %v2508 = vmax.f32 %v2476, 0.0
      %v2509 = vmax.f32 %v2477, 0.0
      %v2510 = vmax.f32 %v2478, 0.0
      %v2511 = vmax.f32 %v2479, 0.0
      %v2512 = vmax.f32 %v2480, 0.0
      %v2513 = vmax.f32 %v2481, 0.0
      %v2514 = vmax.f32 %v2482, 0.0
      %v2515 = vmax.f32 %v2483, 0.0
      %v2516 = vmax.f32 %v2484, 0.0
      %v2517 = vmax.f32 %v2485, 0.0
      %v2518 = vmax.f32 %v2486, 0.0
      %v2519 = vmax.f32 %v2487, 0.0
      %v2520 = vmax.f32 %v2488, 0.0
      %v2521 = vmax.f32 %v2489, 0.0
      %v2522 = vmax.f32 %v2490, 0.0
      %v2523 = vmax.f32 %v2491, 0.0
      %v2524 = vmax.f32 %v2492, 0.0
      %v2525 = vmax.f32 %v2493, 0.0
      %v2526 = vmax.f32 %v2494, 0.0
      %v2527 = vmax.f32 %v2495, 0.0
      %v2528 = vmax.f32 %v2496, 0.0
      %v2529 = vmax.f32 %v2497, 0.0
      %v2530 = vmax.f32 %v2498, 0.0
      %v2531 = vmax.f32 %v2499, 0.0
      %v2532 = vmax.f32 %v2500, 0.0
      %v2533 = vmax.f32 %v2501, 0.0
      %v2534 = vmax.f32 %v2502, 0.0
      %v2535 = vmax.f32 %v2503, 0.0
      %v2536 = vmax.f32 %v2504, 0.0
      %v2537 = vmax.f32 %v2505, 0.0
      %v2538 = vmax.f32 %v2506, 0.0
      %v2539 = vmax.f32 %v2507, 0.0
      %v2572 = vrot.slane %v2508, 7
      %v2573 = vrot.slane %v2509, 7
      %v2574 = vsel %vm360, %v2572, %v2573
      %v2575 = vrot.slane %v2510, 7
      %v2576 = vrot.slane %v2511, 7
      %v2577 = vsel %vm360, %v2575, %v2576
      %v2578 = vrot.slane %v2512, 7
      %v2579 = vrot.slane %v2513, 7
      %v2580 = vsel %vm360, %v2578, %v2579
      %v2581 = vrot.slane %v2514, 7
      %v2582 = vrot.slane %v2515, 7
      %v2583 = vsel %vm360, %v2581, %v2582
      %v2584 = vrot.slane %v2516, 7
      %v2585 = vrot.slane %v2517, 7
      %v2586 = vsel %vm360, %v2584, %v2585
      %v2587 = vrot.slane %v2518, 7
      %v2588 = vrot.slane %v2519, 7
      %v2589 = vsel %vm360, %v2587, %v2588
      %v2590 = vrot.slane %v2520, 7
      %v2591 = vrot.slane %v2521, 7
      %v2592 = vsel %vm360, %v2590, %v2591
      %v2593 = vrot.slane %v2522, 7
      %v2594 = vrot.slane %v2523, 7
      %v2595 = vsel %vm360, %v2593, %v2594
      %v2596 = vrot.slane %v2524, 7
      %v2597 = vrot.slane %v2525, 7
      %v2598 = vsel %vm360, %v2596, %v2597
      %v2599 = vrot.slane %v2526, 7
      %v2600 = vrot.slane %v2527, 7
      %v2601 = vsel %vm360, %v2599, %v2600
      %v2602 = vrot.slane %v2528, 7
      %v2603 = vrot.slane %v2529, 7
      %v2604 = vsel %vm360, %v2602, %v2603
      %v2605 = vrot.slane %v2530, 7
      %v2606 = vrot.slane %v2531, 7
      %v2607 = vsel %vm360, %v2605, %v2606
      %v2608 = vrot.slane %v2532, 7
      %v2609 = vrot.slane %v2533, 7
      %v2610 = vsel %vm360, %v2608, %v2609
      %v2611 = vrot.slane %v2534, 7
      %v2612 = vrot.slane %v2535, 7
      %v2613 = vsel %vm360, %v2611, %v2612
      %v2614 = vrot.slane %v2536, 7
      %v2615 = vrot.slane %v2537, 7
      %v2616 = vsel %vm360, %v2614, %v2615
      %v2617 = vrot.slane %v2538, 7
      %v2618 = vrot.slane %v2539, 7
      %v2619 = vsel %vm360, %v2617, %v2618
      %v2652 = vsel %vm360, 0.0, %v2572
      %v2653 = vsel %vm360, 0.0, %v2575
      %v2654 = vsel %vm360, 0.0, %v2578
      %v2655 = vsel %vm360, 0.0, %v2581
      %v2656 = vsel %vm360, 0.0, %v2584
      %v2657 = vsel %vm360, 0.0, %v2587
      %v2658 = vsel %vm360, 0.0, %v2590
      %v2659 = vsel %vm360, 0.0, %v2593
      %v2660 = vsel %vm360, 0.0, %v2596
      %v2661 = vsel %vm360, 0.0, %v2599
      %v2662 = vsel %vm360, 0.0, %v2602
      %v2663 = vsel %vm360, 0.0, %v2605
      %v2664 = vsel %vm360, 0.0, %v2608
      %v2665 = vsel %vm360, 0.0, %v2611
      %v2666 = vsel %vm360, 0.0, %v2614
      %v2667 = vsel %vm360, 0.0, %v2617
      %v2668 = vpack.c.bf16 %v2574, %v2652
      %v2669 = vpack.c.bf16 %v2577, %v2653
      %v2670 = vpack.c.bf16 %v2580, %v2654
      %v2671 = vpack.c.bf16 %v2583, %v2655
      %v2672 = vpack.c.bf16 %v2586, %v2656
      %v2673 = vpack.c.bf16 %v2589, %v2657
      %v2674 = vpack.c.bf16 %v2592, %v2658
      %v2675 = vpack.c.bf16 %v2595, %v2659
      %v2676 = vpack.c.bf16 %v2598, %v2660
      %v2677 = vpack.c.bf16 %v2601, %v2661
      %v2678 = vpack.c.bf16 %v2604, %v2662
      %v2679 = vpack.c.bf16 %v2607, %v2663
      %v2680 = vpack.c.bf16 %v2610, %v2664
      %v2681 = vpack.c.bf16 %v2613, %v2665
      %v2682 = vpack.c.bf16 %v2616, %v2666
      %v2683 = vld [vmem:[%s3] sm:$0xf]
      %v2684 = vpack.c.bf16 %v2509, %v2508
      %v2685 = vpack.c.bf16 %v2511, %v2510
      %v2686 = vpack.c.bf16 %v2513, %v2512
      %v2687 = vpack.c.bf16 %v2515, %v2514
      %v2688 = vpack.c.bf16 %v2517, %v2516
      %v2689 = vpack.c.bf16 %v2519, %v2518
      %v2690 = vpack.c.bf16 %v2521, %v2520
      %v2691 = vpack.c.bf16 %v2523, %v2522
      %v2692 = vpack.c.bf16 %v2525, %v2524
      %v2693 = vpack.c.bf16 %v2527, %v2526
      %v2694 = vpack.c.bf16 %v2529, %v2528
      %v2695 = vpack.c.bf16 %v2531, %v2530
      %v2696 = vpack.c.bf16 %v2533, %v2532
      %v2697 = vpack.c.bf16 %v2535, %v2534
      %v2698 = vpack.c.bf16 %v2537, %v2536
      %s2699 = scalar_lea.vmem %s3, 4
      %v2700 = vld [vmem:[%s2699] sm:$0xf]
      %v2702 = vsel %vm491, %v2684, 0
      %v2705 = vsel %vm491, %v2685, 0
      %v2708 = vsel %vm491, %v2686, 0
      %v2711 = vsel %vm491, %v2687, 0
      %v2714 = vsel %vm491, %v2688, 0
      %v2717 = vsel %vm491, %v2689, 0
      %v2720 = vsel %vm491, %v2690, 0
      %v2723 = vsel %vm491, %v2691, 0
      %v2726 = vsel %vm491, %v2692, 0
      %v2729 = vsel %vm491, %v2693, 0
      %v2732 = vsel %vm491, %v2694, 0
      %v2735 = vsel %vm491, %v2695, 0
      %v2738 = vsel %vm491, %v2696, 0
      %v2741 = vsel %vm491, %v2697, 0
      %v2744 = vsel %vm491, %v2698, 0
      %v2747 = vsel %vm540, %v2700, 0
      %2749 = vmatprep.subr.bf16.mxu0 0
      %2750 = vmatpush1.bf16.msra.mxu0 %v2747
      %2751 = vmatprep.subr.bf16.mxu0 0
      %2752 = vmatpush1.bf16.msra.mxu0 0
      %2753 = vmatprep.subr.bf16.mxu0 0
      %2754 = vmatpush1.bf16.msra.mxu0 0
      %2755 = vmatprep.subr.bf16.mxu0 0
      %2756 = vmatpush1.bf16.msra.mxu0 0
      %2757 = vmatprep.subr.bf16.mxu0 0
      %2758 = vmatpush1.bf16.msra.mxu0 0
      %2759 = vmatprep.subr.bf16.mxu0 0
      %2760 = vmatpush1.bf16.msra.mxu0 0
      %2761 = vmatprep.subr.bf16.mxu0 0
      %2762 = vmatpush1.bf16.msra.mxu0 0
      %2763 = vmatprep.subr.bf16.mxu0 0
      %2764 = vmatpush1.bf16.msra.mxu0 0
      %2765 = vmatprep.subr.bf16.mxu0 0
      %2766 = vmatpush1.bf16.msra.mxu0 0
      %2767 = vmatprep.subr.bf16.mxu0 0
      %2768 = vmatpush1.bf16.msra.mxu0 0
      %2769 = vmatprep.subr.bf16.mxu0 0
      %2770 = vmatpush1.bf16.msra.mxu0 0
      %2771 = vmatprep.subr.bf16.mxu0 0
      %2772 = vmatpush1.bf16.msra.mxu0 0
      %2773 = vmatprep.subr.bf16.mxu0 0
      %2774 = vmatpush1.bf16.msra.mxu0 0
      %2775 = vmatprep.subr.bf16.mxu0 0
      %2776 = vmatpush1.bf16.msra.mxu0 0
      %2777 = vmatprep.subr.bf16.mxu0 0
      %2778 = vmatpush1.bf16.msra.mxu0 0
      %2779 = vmatprep.subr.bf16.mxu0 0
      %2780 = vmatpush1.bf16.msra.mxu0 0
      %2781 = vmatprep.mubr.bf16.mxu0 0
      %2782 = vmatmul.mubr.bf16.gmra.mrb[0].mxu0 %v493
      %v2783 = vpop.f32.mrb[0].mxu0
      %v2784 = vadd.f32 0.0, %v2783
      %v2785 = vpop.f32.mrb[0].mxu0
      %v2786 = vpop.f32.mrb[0].mxu0
      %v2787 = vadd.f32 0.0, %v2786
      %v2788 = vpop.f32.mrb[0].mxu0
      %2789 = vmatprep.mubr.bf16.mxu0 0
      %2790 = vmatmul.mubr.bf16.gmra.mrb[0].mxu0 %v2702
      %v2791 = vpop.f32.mrb[0].mxu0
      %v2792 = vadd.f32 0.0, %v2791
      %v2793 = vpop.f32.mrb[0].mxu0
      %v2794 = vpop.f32.mrb[0].mxu0
      %v2795 = vadd.f32 0.0, %v2794
      %v2796 = vpop.f32.mrb[0].mxu0
      %2797 = vmatprep.mubr.bf16.mxu0 0
      %2798 = vmatmul.mubr.bf16.gmra.mrb[0].mxu0 %v2705
      %v2799 = vpop.f32.mrb[0].mxu0
      %v2800 = vadd.f32 0.0, %v2799
      %v2801 = vpop.f32.mrb[0].mxu0
      %v2802 = vpop.f32.mrb[0].mxu0
      %v2803 = vadd.f32 0.0, %v2802
      %v2804 = vpop.f32.mrb[0].mxu0
      %2805 = vmatprep.mubr.bf16.mxu0 0
      %2806 = vmatmul.mubr.bf16.gmra.mrb[0].mxu0 %v2708
      %v2807 = vpop.f32.mrb[0].mxu0
      %v2808 = vadd.f32 0.0, %v2807
      %v2809 = vpop.f32.mrb[0].mxu0
      %v2810 = vpop.f32.mrb[0].mxu0
      %v2811 = vadd.f32 0.0, %v2810
      %v2812 = vpop.f32.mrb[0].mxu0
      %2813 = vmatprep.mubr.bf16.mxu0 0
      %2814 = vmatmul.mubr.bf16.gmra.mrb[0].mxu0 %v2711
      %v2815 = vpop.f32.mrb[0].mxu0
      %v2816 = vadd.f32 0.0, %v2815
      %v2817 = vpop.f32.mrb[0].mxu0
      %v2818 = vpop.f32.mrb[0].mxu0
      %v2819 = vadd.f32 0.0, %v2818
      %v2820 = vpop.f32.mrb[0].mxu0
      %2821 = vmatprep.mubr.bf16.mxu0 0
      %2822 = vmatmul.mubr.bf16.gmra.mrb[0].mxu0 %v2714
      %v2823 = vpop.f32.mrb[0].mxu0
      %v2824 = vadd.f32 0.0, %v2823
      %v2825 = vpop.f32.mrb[0].mxu0
      %v2826 = vpop.f32.mrb[0].mxu0
      %v2827 = vadd.f32 0.0, %v2826
      %v2828 = vpop.f32.mrb[0].mxu0
      %2829 = vmatprep.mubr.bf16.mxu0 0
      %2830 = vmatmul.mubr.bf16.gmra.mrb[0].mxu0 %v2717
      %v2831 = vpop.f32.mrb[0].mxu0
      %v2832 = vadd.f32 0.0, %v2831
      %v2833 = vpop.f32.mrb[0].mxu0
      %v2834 = vpop.f32.mrb[0].mxu0
      %v2835 = vadd.f32 0.0, %v2834
      %v2836 = vpop.f32.mrb[0].mxu0
      %2837 = vmatprep.mubr.bf16.mxu0 0
      %2838 = vmatmul.mubr.bf16.gmra.mrb[0].mxu0 %v2720
      %v2839 = vpop.f32.mrb[0].mxu0
      %v2840 = vadd.f32 0.0, %v2839
      %v2841 = vpop.f32.mrb[0].mxu0
      %v2842 = vpop.f32.mrb[0].mxu0
      %v2843 = vadd.f32 0.0, %v2842
      %v2844 = vpop.f32.mrb[0].mxu0
      %2845 = vmatprep.mubr.bf16.mxu0 0
      %2846 = vmatmul.mubr.bf16.gmra.mrb[0].mxu0 %v2723
      %v2847 = vpop.f32.mrb[0].mxu0
      %v2848 = vadd.f32 0.0, %v2847
      %v2849 = vpop.f32.mrb[0].mxu0
      %v2850 = vpop.f32.mrb[0].mxu0
      %v2851 = vadd.f32 0.0, %v2850
      %v2852 = vpop.f32.mrb[0].mxu0
      %2853 = vmatprep.mubr.bf16.mxu0 0
      %2854 = vmatmul.mubr.bf16.gmra.mrb[0].mxu0 %v2726
      %v2855 = vpop.f32.mrb[0].mxu0
      %v2856 = vadd.f32 0.0, %v2855
      %v2857 = vpop.f32.mrb[0].mxu0
      %v2858 = vpop.f32.mrb[0].mxu0
      %v2859 = vadd.f32 0.0, %v2858
      %v2860 = vpop.f32.mrb[0].mxu0
      %2861 = vmatprep.mubr.bf16.mxu0 0
      %2862 = vmatmul.mubr.bf16.gmra.mrb[0].mxu0 %v2729
      %v2863 = vpop.f32.mrb[0].mxu0
      %v2864 = vadd.f32 0.0, %v2863
      %v2865 = vpop.f32.mrb[0].mxu0
      %v2866 = vpop.f32.mrb[0].mxu0
      %v2867 = vadd.f32 0.0, %v2866
      %v2868 = vpop.f32.mrb[0].mxu0
      %2869 = vmatprep.mubr.bf16.mxu0 0
      %2870 = vmatmul.mubr.bf16.gmra.mrb[0].mxu0 %v2732
      %v2871 = vpop.f32.mrb[0].mxu0
      %v2872 = vadd.f32 0.0, %v2871
      %v2873 = vpop.f32.mrb[0].mxu0
      %v2874 = vpop.f32.mrb[0].mxu0
      %v2875 = vadd.f32 0.0, %v2874
      %v2876 = vpop.f32.mrb[0].mxu0
      %2877 = vmatprep.mubr.bf16.mxu0 0
      %2878 = vmatmul.mubr.bf16.gmra.mrb[0].mxu0 %v2735
      %v2879 = vpop.f32.mrb[0].mxu0
      %v2880 = vadd.f32 0.0, %v2879
      %v2881 = vpop.f32.mrb[0].mxu0
      %v2882 = vpop.f32.mrb[0].mxu0
      %v2883 = vadd.f32 0.0, %v2882
      %v2884 = vpop.f32.mrb[0].mxu0
      %2885 = vmatprep.mubr.bf16.mxu0 0
      %2886 = vmatmul.mubr.bf16.gmra.mrb[0].mxu0 %v2738
      %v2887 = vpop.f32.mrb[0].mxu0
      %v2888 = vadd.f32 0.0, %v2887
      %v2889 = vpop.f32.mrb[0].mxu0
      %v2890 = vpop.f32.mrb[0].mxu0
      %v2891 = vadd.f32 0.0, %v2890
      %v2892 = vpop.f32.mrb[0].mxu0
      %2893 = vmatprep.mubr.bf16.mxu0 0
      %2894 = vmatmul.mubr.bf16.gmra.mrb[0].mxu0 %v2741
      %v2895 = vpop.f32.mrb[0].mxu0
      %v2896 = vadd.f32 0.0, %v2895
      %v2897 = vpop.f32.mrb[0].mxu0
      %v2898 = vpop.f32.mrb[0].mxu0
      %v2899 = vadd.f32 0.0, %v2898
      %v2900 = vpop.f32.mrb[0].mxu0
      %2901 = vmatprep.mubr.bf16.mxu0 0
      %2902 = vmatmul.mubr.bf16.gmra.mrb[0].mxu0 %v2744
      %v2903 = vpop.f32.mrb[0].mxu0
      %v2904 = vadd.f32 0.0, %v2903
      %v2905 = vpop.f32.mrb[0].mxu0
      %v2906 = vpop.f32.mrb[0].mxu0
      %v2907 = vadd.f32 0.0, %v2906
      %v2908 = vpop.f32.mrb[0].mxu0
      %2909 = vdwg.mxu0
      %v2911 = vsel %vm491, %v2668, 0
      %v2914 = vsel %vm491, %v2669, 0
      %v2917 = vsel %vm491, %v2670, 0
      %v2920 = vsel %vm491, %v2671, 0
      %v2923 = vsel %vm491, %v2672, 0
      %v2926 = vsel %vm491, %v2673, 0
      %v2929 = vsel %vm491, %v2674, 0
      %v2932 = vsel %vm491, %v2675, 0
      %v2935 = vsel %vm491, %v2676, 0
      %v2938 = vsel %vm491, %v2677, 0
      %v2941 = vsel %vm491, %v2678, 0
      %v2944 = vsel %vm491, %v2679, 0
      %v2947 = vsel %vm491, %v2680, 0
      %v2950 = vsel %vm491, %v2681, 0
      %v2953 = vsel %vm491, %v2682, 0
      %v2956 = vsel %vm540, %v2683, 0
      %2958 = vmatprep.subr.bf16.mxu0 0
      %2959 = vmatpush1.bf16.msra.mxu0 %v2956
      %2960 = vmatprep.subr.bf16.mxu0 0
      %2961 = vmatpush1.bf16.msra.mxu0 0
      %2962 = vmatprep.subr.bf16.mxu0 0
      %2963 = vmatpush1.bf16.msra.mxu0 0
      %2964 = vmatprep.subr.bf16.mxu0 0
      %2965 = vmatpush1.bf16.msra.mxu0 0
      %2966 = vmatprep.subr.bf16.mxu0 0
      %2967 = vmatpush1.bf16.msra.mxu0 0
      %2968 = vmatprep.subr.bf16.mxu0 0
      %2969 = vmatpush1.bf16.msra.mxu0 0
      %2970 = vmatprep.subr.bf16.mxu0 0
      %2971 = vmatpush1.bf16.msra.mxu0 0
      %2972 = vmatprep.subr.bf16.mxu0 0
      %2973 = vmatpush1.bf16.msra.mxu0 0
      %2974 = vmatprep.subr.bf16.mxu0 0
      %2975 = vmatpush1.bf16.msra.mxu0 0
      %2976 = vmatprep.subr.bf16.mxu0 0
      %2977 = vmatpush1.bf16.msra.mxu0 0
      %2978 = vmatprep.subr.bf16.mxu0 0
      %2979 = vmatpush1.bf16.msra.mxu0 0
      %2980 = vmatprep.subr.bf16.mxu0 0
      %2981 = vmatpush1.bf16.msra.mxu0 0
      %2982 = vmatprep.subr.bf16.mxu0 0
      %2983 = vmatpush1.bf16.msra.mxu0 0
      %2984 = vmatprep.subr.bf16.mxu0 0
      %2985 = vmatpush1.bf16.msra.mxu0 0
      %2986 = vmatprep.subr.bf16.mxu0 0
      %2987 = vmatpush1.bf16.msra.mxu0 0
      %2988 = vmatprep.subr.bf16.mxu0 0
      %2989 = vmatpush1.bf16.msra.mxu0 0
      %2990 = vmatprep.mubr.bf16.mxu0 0
      %2991 = vmatmul.mubr.bf16.gmra.mrb[0].mxu0 %v493
      %v2992 = vpop.f32.mrb[0].mxu0
      %v2993 = vadd.f32 %v2784, %v2992
      %v2994 = vpop.f32.mrb[0].mxu0
      %v2995 = vpop.f32.mrb[0].mxu0
      %v2996 = vadd.f32 %v2787, %v2995
      %v2997 = vpop.f32.mrb[0].mxu0
      %2998 = vmatprep.mubr.bf16.mxu0 0
      %2999 = vmatmul.mubr.bf16.gmra.mrb[0].mxu0 %v2911
      %v3000 = vpop.f32.mrb[0].mxu0
      %v3001 = vadd.f32 %v2792, %v3000
      %v3002 = vpop.f32.mrb[0].mxu0
      %v3003 = vpop.f32.mrb[0].mxu0
      %v3004 = vadd.f32 %v2795, %v3003
      %v3005 = vpop.f32.mrb[0].mxu0
      %3006 = vmatprep.mubr.bf16.mxu0 0
      %3007 = vmatmul.mubr.bf16.gmra.mrb[0].mxu0 %v2914
      %v3008 = vpop.f32.mrb[0].mxu0
      %v3009 = vadd.f32 %v2800, %v3008
      %v3010 = vpop.f32.mrb[0].mxu0
      %v3011 = vpop.f32.mrb[0].mxu0
      %v3012 = vadd.f32 %v2803, %v3011
      %v3013 = vpop.f32.mrb[0].mxu0
      %3014 = vmatprep.mubr.bf16.mxu0 0
      %3015 = vmatmul.mubr.bf16.gmra.mrb[0].mxu0 %v2917
      %v3016 = vpop.f32.mrb[0].mxu0
      %v3017 = vadd.f32 %v2808, %v3016
      %v3018 = vpop.f32.mrb[0].mxu0
      %v3019 = vpop.f32.mrb[0].mxu0
      %v3020 = vadd.f32 %v2811, %v3019
      %v3021 = vpop.f32.mrb[0].mxu0
      %3022 = vmatprep.mubr.bf16.mxu0 0
      %3023 = vmatmul.mubr.bf16.gmra.mrb[0].mxu0 %v2920
      %v3024 = vpop.f32.mrb[0].mxu0
      %v3025 = vadd.f32 %v2816, %v3024
      %v3026 = vpop.f32.mrb[0].mxu0
      %v3027 = vpop.f32.mrb[0].mxu0
      %v3028 = vadd.f32 %v2819, %v3027
      %v3029 = vpop.f32.mrb[0].mxu0
      %3030 = vmatprep.mubr.bf16.mxu0 0
      %3031 = vmatmul.mubr.bf16.gmra.mrb[0].mxu0 %v2923
      %v3032 = vpop.f32.mrb[0].mxu0
      %v3033 = vadd.f32 %v2824, %v3032
      %v3034 = vpop.f32.mrb[0].mxu0
      %v3035 = vpop.f32.mrb[0].mxu0
      %v3036 = vadd.f32 %v2827, %v3035
      %v3037 = vpop.f32.mrb[0].mxu0
      %3038 = vmatprep.mubr.bf16.mxu0 0
      %3039 = vmatmul.mubr.bf16.gmra.mrb[0].mxu0 %v2926
      %v3040 = vpop.f32.mrb[0].mxu0
      %v3041 = vadd.f32 %v2832, %v3040
      %v3042 = vpop.f32.mrb[0].mxu0
      %v3043 = vpop.f32.mrb[0].mxu0
      %v3044 = vadd.f32 %v2835, %v3043
      %v3045 = vpop.f32.mrb[0].mxu0
      %3046 = vmatprep.mubr.bf16.mxu0 0
      %3047 = vmatmul.mubr.bf16.gmra.mrb[0].mxu0 %v2929
      %v3048 = vpop.f32.mrb[0].mxu0
      %v3049 = vadd.f32 %v2840, %v3048
      %v3050 = vpop.f32.mrb[0].mxu0
      %v3051 = vpop.f32.mrb[0].mxu0
      %v3052 = vadd.f32 %v2843, %v3051
      %v3053 = vpop.f32.mrb[0].mxu0
      %3054 = vmatprep.mubr.bf16.mxu0 0
      %3055 = vmatmul.mubr.bf16.gmra.mrb[0].mxu0 %v2932
      %v3056 = vpop.f32.mrb[0].mxu0
      %v3057 = vadd.f32 %v2848, %v3056
      %v3058 = vpop.f32.mrb[0].mxu0
      %v3059 = vpop.f32.mrb[0].mxu0
      %v3060 = vadd.f32 %v2851, %v3059
      %v3061 = vpop.f32.mrb[0].mxu0
      %3062 = vmatprep.mubr.bf16.mxu0 0
      %3063 = vmatmul.mubr.bf16.gmra.mrb[0].mxu0 %v2935
      %v3064 = vpop.f32.mrb[0].mxu0
      %v3065 = vadd.f32 %v2856, %v3064
      %v3066 = vpop.f32.mrb[0].mxu0
      %v3067 = vpop.f32.mrb[0].mxu0
      %v3068 = vadd.f32 %v2859, %v3067
      %v3069 = vpop.f32.mrb[0].mxu0
      %3070 = vmatprep.mubr.bf16.mxu0 0
      %3071 = vmatmul.mubr.bf16.gmra.mrb[0].mxu0 %v2938
      %v3072 = vpop.f32.mrb[0].mxu0
      %v3073 = vadd.f32 %v2864, %v3072
      %v3074 = vpop.f32.mrb[0].mxu0
      %v3075 = vpop.f32.mrb[0].mxu0
      %v3076 = vadd.f32 %v2867, %v3075
      %v3077 = vpop.f32.mrb[0].mxu0
      %3078 = vmatprep.mubr.bf16.mxu0 0
      %3079 = vmatmul.mubr.bf16.gmra.mrb[0].mxu0 %v2941
      %v3080 = vpop.f32.mrb[0].mxu0
      %v3081 = vadd.f32 %v2872, %v3080
      %v3082 = vpop.f32.mrb[0].mxu0
      %v3083 = vpop.f32.mrb[0].mxu0
      %v3084 = vadd.f32 %v2875, %v3083
      %v3085 = vpop.f32.mrb[0].mxu0
      %3086 = vmatprep.mubr.bf16.mxu0 0
      %3087 = vmatmul.mubr.bf16.gmra.mrb[0].mxu0 %v2944
      %v3088 = vpop.f32.mrb[0].mxu0
      %v3089 = vadd.f32 %v2880, %v3088
      %v3090 = vpop.f32.mrb[0].mxu0
      %v3091 = vpop.f32.mrb[0].mxu0
      %v3092 = vadd.f32 %v2883, %v3091
      %v3093 = vpop.f32.mrb[0].mxu0
      %3094 = vmatprep.mubr.bf16.mxu0 0
      %3095 = vmatmul.mubr.bf16.gmra.mrb[0].mxu0 %v2947
      %v3096 = vpop.f32.mrb[0].mxu0
      %v3097 = vadd.f32 %v2888, %v3096
      %v3098 = vpop.f32.mrb[0].mxu0
      %v3099 = vpop.f32.mrb[0].mxu0
      %v3100 = vadd.f32 %v2891, %v3099
      %v3101 = vpop.f32.mrb[0].mxu0
      %3102 = vmatprep.mubr.bf16.mxu0 0
      %3103 = vmatmul.mubr.bf16.gmra.mrb[0].mxu0 %v2950
      %v3104 = vpop.f32.mrb[0].mxu0
      %v3105 = vadd.f32 %v2896, %v3104
      %v3106 = vpop.f32.mrb[0].mxu0
      %v3107 = vpop.f32.mrb[0].mxu0
      %v3108 = vadd.f32 %v2899, %v3107
      %v3109 = vpop.f32.mrb[0].mxu0
      %3110 = vmatprep.mubr.bf16.mxu0 0
      %3111 = vmatmul.mubr.bf16.gmra.mrb[0].mxu0 %v2953
      %v3112 = vpop.f32.mrb[0].mxu0
      %v3113 = vadd.f32 %v2904, %v3112
      %v3114 = vpop.f32.mrb[0].mxu0
      %v3115 = vpop.f32.mrb[0].mxu0
      %v3116 = vadd.f32 %v2907, %v3115
      %v3117 = vpop.f32.mrb[0].mxu0
      %3118 = vdwg.mxu0
      %v3119 = vrot.slane %v2508, 1
      %v3120 = vrot.slane %v2509, 1
      %v3121 = vsel %vm914, %v3119, %v3120
      %v3122 = vrot.slane %v2510, 1
      %v3123 = vrot.slane %v2511, 1
      %v3124 = vsel %vm914, %v3122, %v3123
      %v3125 = vrot.slane %v2512, 1
      %v3126 = vrot.slane %v2513, 1
      %v3127 = vsel %vm914, %v3125, %v3126
      %v3128 = vrot.slane %v2514, 1
      %v3129 = vrot.slane %v2515, 1
      %v3130 = vsel %vm914, %v3128, %v3129
      %v3131 = vrot.slane %v2516, 1
      %v3132 = vrot.slane %v2517, 1
      %v3133 = vsel %vm914, %v3131, %v3132
      %v3134 = vrot.slane %v2518, 1
      %v3135 = vrot.slane %v2519, 1
      %v3136 = vsel %vm914, %v3134, %v3135
      %v3137 = vrot.slane %v2520, 1
      %v3138 = vrot.slane %v2521, 1
      %v3139 = vsel %vm914, %v3137, %v3138
      %v3140 = vrot.slane %v2522, 1
      %v3141 = vrot.slane %v2523, 1
      %v3142 = vsel %vm914, %v3140, %v3141
      %v3143 = vrot.slane %v2524, 1
      %v3144 = vrot.slane %v2525, 1
      %v3145 = vsel %vm914, %v3143, %v3144
      %v3146 = vrot.slane %v2526, 1
      %v3147 = vrot.slane %v2527, 1
      %v3148 = vsel %vm914, %v3146, %v3147
      %v3149 = vrot.slane %v2528, 1
      %v3150 = vrot.slane %v2529, 1
      %v3151 = vsel %vm914, %v3149, %v3150
      %v3152 = vrot.slane %v2530, 1
      %v3153 = vrot.slane %v2531, 1
      %v3154 = vsel %vm914, %v3152, %v3153
      %v3155 = vrot.slane %v2532, 1
      %v3156 = vrot.slane %v2533, 1
      %v3157 = vsel %vm914, %v3155, %v3156
      %v3158 = vrot.slane %v2534, 1
      %v3159 = vrot.slane %v2535, 1
      %v3160 = vsel %vm914, %v3158, %v3159
      %v3161 = vrot.slane %v2536, 1
      %v3162 = vrot.slane %v2537, 1
      %v3163 = vsel %vm914, %v3161, %v3162
      %v3164 = vrot.slane %v2538, 1
      %v3165 = vrot.slane %v2539, 1
      %v3166 = vsel %vm914, %v3164, %v3165
      %v3199 = vsel %vm914, %v3120, 0.0
      %v3200 = vsel %vm914, %v3123, 0.0
      %v3201 = vsel %vm914, %v3126, 0.0
      %v3202 = vsel %vm914, %v3129, 0.0
      %v3203 = vsel %vm914, %v3132, 0.0
      %v3204 = vsel %vm914, %v3135, 0.0
      %v3205 = vsel %vm914, %v3138, 0.0
      %v3206 = vsel %vm914, %v3141, 0.0
      %v3207 = vsel %vm914, %v3144, 0.0
      %v3208 = vsel %vm914, %v3147, 0.0
      %v3209 = vsel %vm914, %v3150, 0.0
      %v3210 = vsel %vm914, %v3153, 0.0
      %v3211 = vsel %vm914, %v3156, 0.0
      %v3212 = vsel %vm914, %v3159, 0.0
      %v3213 = vsel %vm914, %v3162, 0.0
      %v3214 = vsel %vm914, %v3165, 0.0
      %v3215 = vpack.c.bf16 %v3199, %v3121
      %v3216 = vpack.c.bf16 %v3200, %v3124
      %v3217 = vpack.c.bf16 %v3201, %v3127
      %v3218 = vpack.c.bf16 %v3202, %v3130
      %v3219 = vpack.c.bf16 %v3203, %v3133
      %v3220 = vpack.c.bf16 %v3204, %v3136
      %v3221 = vpack.c.bf16 %v3205, %v3139
      %v3222 = vpack.c.bf16 %v3206, %v3142
      %v3223 = vpack.c.bf16 %v3207, %v3145
      %v3224 = vpack.c.bf16 %v3208, %v3148
      %v3225 = vpack.c.bf16 %v3209, %v3151
      %v3226 = vpack.c.bf16 %v3210, %v3154
      %v3227 = vpack.c.bf16 %v3211, %v3157
      %v3228 = vpack.c.bf16 %v3212, %v3160
      %v3229 = vpack.c.bf16 %v3213, %v3163
      %s3230 = scalar_lea.vmem %s3, 8
      %v3231 = vld [vmem:[%s3230] sm:$0xf]
      %v3233 = vsel %vm491, %v3215, 0
      %v3236 = vsel %vm491, %v3216, 0
      %v3239 = vsel %vm491, %v3217, 0
      %v3242 = vsel %vm491, %v3218, 0
      %v3245 = vsel %vm491, %v3219, 0
      %v3248 = vsel %vm491, %v3220, 0
      %v3251 = vsel %vm491, %v3221, 0
      %v3254 = vsel %vm491, %v3222, 0
      %v3257 = vsel %vm491, %v3223, 0
      %v3260 = vsel %vm491, %v3224, 0
      %v3263 = vsel %vm491, %v3225, 0
      %v3266 = vsel %vm491, %v3226, 0
      %v3269 = vsel %vm491, %v3227, 0
      %v3272 = vsel %vm491, %v3228, 0
      %v3275 = vsel %vm491, %v3229, 0
      %v3278 = vsel %vm540, %v3231, 0
      %3280 = vmatprep.subr.bf16.mxu0 0
      %3281 = vmatpush1.bf16.msra.mxu0 %v3278
      %3282 = vmatprep.subr.bf16.mxu0 0
      %3283 = vmatpush1.bf16.msra.mxu0 0
      %3284 = vmatprep.subr.bf16.mxu0 0
      %3285 = vmatpush1.bf16.msra.mxu0 0
      %3286 = vmatprep.subr.bf16.mxu0 0
      %3287 = vmatpush1.bf16.msra.mxu0 0
      %3288 = vmatprep.subr.bf16.mxu0 0
      %3289 = vmatpush1.bf16.msra.mxu0 0
      %3290 = vmatprep.subr.bf16.mxu0 0
      %3291 = vmatpush1.bf16.msra.mxu0 0
      %3292 = vmatprep.subr.bf16.mxu0 0
      %3293 = vmatpush1.bf16.msra.mxu0 0
      %3294 = vmatprep.subr.bf16.mxu0 0
      %3295 = vmatpush1.bf16.msra.mxu0 0
      %3296 = vmatprep.subr.bf16.mxu0 0
      %3297 = vmatpush1.bf16.msra.mxu0 0
      %3298 = vmatprep.subr.bf16.mxu0 0
      %3299 = vmatpush1.bf16.msra.mxu0 0
      %3300 = vmatprep.subr.bf16.mxu0 0
      %3301 = vmatpush1.bf16.msra.mxu0 0
      %3302 = vmatprep.subr.bf16.mxu0 0
      %3303 = vmatpush1.bf16.msra.mxu0 0
      %3304 = vmatprep.subr.bf16.mxu0 0
      %3305 = vmatpush1.bf16.msra.mxu0 0
      %3306 = vmatprep.subr.bf16.mxu0 0
      %3307 = vmatpush1.bf16.msra.mxu0 0
      %3308 = vmatprep.subr.bf16.mxu0 0
      %3309 = vmatpush1.bf16.msra.mxu0 0
      %3310 = vmatprep.subr.bf16.mxu0 0
      %3311 = vmatpush1.bf16.msra.mxu0 0
      %3312 = vmatprep.mubr.bf16.mxu0 0
      %3313 = vmatmul.mubr.bf16.gmra.mrb[0].mxu0 %v493
      %v3314 = vpop.f32.mrb[0].mxu0
      %v3315 = vadd.f32 0.0, %v3314
      %v3316 = vpop.f32.mrb[0].mxu0
      %v3317 = vpop.f32.mrb[0].mxu0
      %v3318 = vadd.f32 0.0, %v3317
      %v3319 = vpop.f32.mrb[0].mxu0
      %3320 = vmatprep.mubr.bf16.mxu0 0
      %3321 = vmatmul.mubr.bf16.gmra.mrb[0].mxu0 %v3233
      %v3322 = vpop.f32.mrb[0].mxu0
      %v3323 = vadd.f32 0.0, %v3322
      %v3324 = vpop.f32.mrb[0].mxu0
      %v3325 = vpop.f32.mrb[0].mxu0
      %v3326 = vadd.f32 0.0, %v3325
      %v3327 = vpop.f32.mrb[0].mxu0
      %3328 = vmatprep.mubr.bf16.mxu0 0
      %3329 = vmatmul.mubr.bf16.gmra.mrb[0].mxu0 %v3236
      %v3330 = vpop.f32.mrb[0].mxu0
      %v3331 = vadd.f32 0.0, %v3330
      %v3332 = vpop.f32.mrb[0].mxu0
      %v3333 = vpop.f32.mrb[0].mxu0
      %v3334 = vadd.f32 0.0, %v3333
      %v3335 = vpop.f32.mrb[0].mxu0
      %3336 = vmatprep.mubr.bf16.mxu0 0
      %3337 = vmatmul.mubr.bf16.gmra.mrb[0].mxu0 %v3239
      %v3338 = vpop.f32.mrb[0].mxu0
      %v3339 = vadd.f32 0.0, %v3338
      %v3340 = vpop.f32.mrb[0].mxu0
      %v3341 = vpop.f32.mrb[0].mxu0
      %v3342 = vadd.f32 0.0, %v3341
      %v3343 = vpop.f32.mrb[0].mxu0
      %3344 = vmatprep.mubr.bf16.mxu0 0
      %3345 = vmatmul.mubr.bf16.gmra.mrb[0].mxu0 %v3242
      %v3346 = vpop.f32.mrb[0].mxu0
      %v3347 = vadd.f32 0.0, %v3346
      %v3348 = vpop.f32.mrb[0].mxu0
      %v3349 = vpop.f32.mrb[0].mxu0
      %v3350 = vadd.f32 0.0, %v3349
      %v3351 = vpop.f32.mrb[0].mxu0
      %3352 = vmatprep.mubr.bf16.mxu0 0
      %3353 = vmatmul.mubr.bf16.gmra.mrb[0].mxu0 %v3245
      %v3354 = vpop.f32.mrb[0].mxu0
      %v3355 = vadd.f32 0.0, %v3354
      %v3356 = vpop.f32.mrb[0].mxu0
      %v3357 = vpop.f32.mrb[0].mxu0
      %v3358 = vadd.f32 0.0, %v3357
      %v3359 = vpop.f32.mrb[0].mxu0
      %3360 = vmatprep.mubr.bf16.mxu0 0
      %3361 = vmatmul.mubr.bf16.gmra.mrb[0].mxu0 %v3248
      %v3362 = vpop.f32.mrb[0].mxu0
      %v3363 = vadd.f32 0.0, %v3362
      %v3364 = vpop.f32.mrb[0].mxu0
      %v3365 = vpop.f32.mrb[0].mxu0
      %v3366 = vadd.f32 0.0, %v3365
      %v3367 = vpop.f32.mrb[0].mxu0
      %3368 = vmatprep.mubr.bf16.mxu0 0
      %3369 = vmatmul.mubr.bf16.gmra.mrb[0].mxu0 %v3251
      %v3370 = vpop.f32.mrb[0].mxu0
      %v3371 = vadd.f32 0.0, %v3370
      %v3372 = vpop.f32.mrb[0].mxu0
      %v3373 = vpop.f32.mrb[0].mxu0
      %v3374 = vadd.f32 0.0, %v3373
      %v3375 = vpop.f32.mrb[0].mxu0
      %3376 = vmatprep.mubr.bf16.mxu0 0
      %3377 = vmatmul.mubr.bf16.gmra.mrb[0].mxu0 %v3254
      %v3378 = vpop.f32.mrb[0].mxu0
      %v3379 = vadd.f32 0.0, %v3378
      %v3380 = vpop.f32.mrb[0].mxu0
      %v3381 = vpop.f32.mrb[0].mxu0
      %v3382 = vadd.f32 0.0, %v3381
      %v3383 = vpop.f32.mrb[0].mxu0
      %3384 = vmatprep.mubr.bf16.mxu0 0
      %3385 = vmatmul.mubr.bf16.gmra.mrb[0].mxu0 %v3257
      %v3386 = vpop.f32.mrb[0].mxu0
      %v3387 = vadd.f32 0.0, %v3386
      %v3388 = vpop.f32.mrb[0].mxu0
      %v3389 = vpop.f32.mrb[0].mxu0
      %v3390 = vadd.f32 0.0, %v3389
      %v3391 = vpop.f32.mrb[0].mxu0
      %3392 = vmatprep.mubr.bf16.mxu0 0
      %3393 = vmatmul.mubr.bf16.gmra.mrb[0].mxu0 %v3260
      %v3394 = vpop.f32.mrb[0].mxu0
      %v3395 = vadd.f32 0.0, %v3394
      %v3396 = vpop.f32.mrb[0].mxu0
      %v3397 = vpop.f32.mrb[0].mxu0
      %v3398 = vadd.f32 0.0, %v3397
      %v3399 = vpop.f32.mrb[0].mxu0
      %3400 = vmatprep.mubr.bf16.mxu0 0
      %3401 = vmatmul.mubr.bf16.gmra.mrb[0].mxu0 %v3263
      %v3402 = vpop.f32.mrb[0].mxu0
      %v3403 = vadd.f32 0.0, %v3402
      %v3404 = vpop.f32.mrb[0].mxu0
      %v3405 = vpop.f32.mrb[0].mxu0
      %v3406 = vadd.f32 0.0, %v3405
      %v3407 = vpop.f32.mrb[0].mxu0
      %3408 = vmatprep.mubr.bf16.mxu0 0
      %3409 = vmatmul.mubr.bf16.gmra.mrb[0].mxu0 %v3266
      %v3410 = vpop.f32.mrb[0].mxu0
      %v3411 = vadd.f32 0.0, %v3410
      %v3412 = vpop.f32.mrb[0].mxu0
      %v3413 = vpop.f32.mrb[0].mxu0
      %v3414 = vadd.f32 0.0, %v3413
      %v3415 = vpop.f32.mrb[0].mxu0
      %3416 = vmatprep.mubr.bf16.mxu0 0
      %3417 = vmatmul.mubr.bf16.gmra.mrb[0].mxu0 %v3269
      %v3418 = vpop.f32.mrb[0].mxu0
      %v3419 = vadd.f32 0.0, %v3418
      %v3420 = vpop.f32.mrb[0].mxu0
      %v3421 = vpop.f32.mrb[0].mxu0
      %v3422 = vadd.f32 0.0, %v3421
      %v3423 = vpop.f32.mrb[0].mxu0
      %3424 = vmatprep.mubr.bf16.mxu0 0
      %3425 = vmatmul.mubr.bf16.gmra.mrb[0].mxu0 %v3272
      %v3426 = vpop.f32.mrb[0].mxu0
      %v3427 = vadd.f32 0.0, %v3426
      %v3428 = vpop.f32.mrb[0].mxu0
      %v3429 = vpop.f32.mrb[0].mxu0
      %v3430 = vadd.f32 0.0, %v3429
      %v3431 = vpop.f32.mrb[0].mxu0
      %3432 = vmatprep.mubr.bf16.mxu0 0
      %3433 = vmatmul.mubr.bf16.gmra.mrb[0].mxu0 %v3275
      %v3434 = vpop.f32.mrb[0].mxu0
      %v3435 = vadd.f32 0.0, %v3434
      %v3436 = vpop.f32.mrb[0].mxu0
      %v3437 = vpop.f32.mrb[0].mxu0
      %v3438 = vadd.f32 0.0, %v3437
      %v3439 = vpop.f32.mrb[0].mxu0
      %3440 = vdwg.mxu0
      %v3441 = vadd.f32 %v2993, %v3315
      %v3442 = vadd.f32 %v2996, %v3318
      %v3443 = vadd.f32 %v3001, %v3323
      %v3444 = vadd.f32 %v3004, %v3326
      %v3445 = vadd.f32 %v3009, %v3331
      %v3446 = vadd.f32 %v3012, %v3334
      %v3447 = vadd.f32 %v3017, %v3339
      %v3448 = vadd.f32 %v3020, %v3342
      %v3449 = vadd.f32 %v3025, %v3347
      %v3450 = vadd.f32 %v3028, %v3350
      %v3451 = vadd.f32 %v3033, %v3355
      %v3452 = vadd.f32 %v3036, %v3358
      %v3453 = vadd.f32 %v3041, %v3363
      %v3454 = vadd.f32 %v3044, %v3366
      %v3455 = vadd.f32 %v3049, %v3371
      %v3456 = vadd.f32 %v3052, %v3374
      %v3457 = vadd.f32 %v3057, %v3379
      %v3458 = vadd.f32 %v3060, %v3382
      %v3459 = vadd.f32 %v3065, %v3387
      %v3460 = vadd.f32 %v3068, %v3390
      %v3461 = vadd.f32 %v3073, %v3395
      %v3462 = vadd.f32 %v3076, %v3398
      %v3463 = vadd.f32 %v3081, %v3403
      %v3464 = vadd.f32 %v3084, %v3406
      %v3465 = vadd.f32 %v3089, %v3411
      %v3466 = vadd.f32 %v3092, %v3414
      %v3467 = vadd.f32 %v3097, %v3419
      %v3468 = vadd.f32 %v3100, %v3422
      %v3469 = vadd.f32 %v3105, %v3427
      %v3470 = vadd.f32 %v3108, %v3430
      %v3471 = vadd.f32 %v3113, %v3435
      %v3472 = vadd.f32 %v3116, %v3438
      %v3473 = vpack.c.bf16 %v2619, %v2667
      %s3474 = scalar_lea.vmem %s3, 12
      %v3475 = vld [vmem:[%s3474] sm:$0xf]
      %v3477 = vsel %vm491, %v3473, 0
      %v3480 = vsel %vm540, %v3475, 0
      %3482 = vmatprep.subr.bf16.mxu0 0
      %3483 = vmatpush1.bf16.msra.mxu0 %v3480
      %3484 = vmatprep.subr.bf16.mxu0 0
      %3485 = vmatpush1.bf16.msra.mxu0 0
      %3486 = vmatprep.subr.bf16.mxu0 0
      %3487 = vmatpush1.bf16.msra.mxu0 0
      %3488 = vmatprep.subr.bf16.mxu0 0
      %3489 = vmatpush1.bf16.msra.mxu0 0
      %3490 = vmatprep.subr.bf16.mxu0 0
      %3491 = vmatpush1.bf16.msra.mxu0 0
      %3492 = vmatprep.subr.bf16.mxu0 0
      %3493 = vmatpush1.bf16.msra.mxu0 0
      %3494 = vmatprep.subr.bf16.mxu0 0
      %3495 = vmatpush1.bf16.msra.mxu0 0
      %3496 = vmatprep.subr.bf16.mxu0 0
      %3497 = vmatpush1.bf16.msra.mxu0 0
      %3498 = vmatprep.subr.bf16.mxu0 0
      %3499 = vmatpush1.bf16.msra.mxu0 0
      %3500 = vmatprep.subr.bf16.mxu0 0
      %3501 = vmatpush1.bf16.msra.mxu0 0
      %3502 = vmatprep.subr.bf16.mxu0 0
      %3503 = vmatpush1.bf16.msra.mxu0 0
      %3504 = vmatprep.subr.bf16.mxu0 0
      %3505 = vmatpush1.bf16.msra.mxu0 0
      %3506 = vmatprep.subr.bf16.mxu0 0
      %3507 = vmatpush1.bf16.msra.mxu0 0
      %3508 = vmatprep.subr.bf16.mxu0 0
      %3509 = vmatpush1.bf16.msra.mxu0 0
      %3510 = vmatprep.subr.bf16.mxu0 0
      %3511 = vmatpush1.bf16.msra.mxu0 0
      %3512 = vmatprep.subr.bf16.mxu0 0
      %3513 = vmatpush1.bf16.msra.mxu0 0
      %3514 = vmatprep.mubr.bf16.mxu0 0
      %3515 = vmatmul.mubr.bf16.gmra.mrb[0].mxu0 %v2911
      %v3516 = vpop.f32.mrb[0].mxu0
      %v3517 = vadd.f32 0.0, %v3516
      %v3518 = vpop.f32.mrb[0].mxu0
      %v3519 = vpop.f32.mrb[0].mxu0
      %v3520 = vadd.f32 0.0, %v3519
      %v3521 = vpop.f32.mrb[0].mxu0
      %3522 = vmatprep.mubr.bf16.mxu0 0
      %3523 = vmatmul.mubr.bf16.gmra.mrb[0].mxu0 %v2914
      %v3524 = vpop.f32.mrb[0].mxu0
      %v3525 = vadd.f32 0.0, %v3524
      %v3526 = vpop.f32.mrb[0].mxu0
      %v3527 = vpop.f32.mrb[0].mxu0
      %v3528 = vadd.f32 0.0, %v3527
      %v3529 = vpop.f32.mrb[0].mxu0
      %3530 = vmatprep.mubr.bf16.mxu0 0
      %3531 = vmatmul.mubr.bf16.gmra.mrb[0].mxu0 %v2917
      %v3532 = vpop.f32.mrb[0].mxu0
      %v3533 = vadd.f32 0.0, %v3532
      %v3534 = vpop.f32.mrb[0].mxu0
      %v3535 = vpop.f32.mrb[0].mxu0
      %v3536 = vadd.f32 0.0, %v3535
      %v3537 = vpop.f32.mrb[0].mxu0
      %3538 = vmatprep.mubr.bf16.mxu0 0
      %3539 = vmatmul.mubr.bf16.gmra.mrb[0].mxu0 %v2920
      %v3540 = vpop.f32.mrb[0].mxu0
      %v3541 = vadd.f32 0.0, %v3540
      %v3542 = vpop.f32.mrb[0].mxu0
      %v3543 = vpop.f32.mrb[0].mxu0
      %v3544 = vadd.f32 0.0, %v3543
      %v3545 = vpop.f32.mrb[0].mxu0
      %3546 = vmatprep.mubr.bf16.mxu0 0
      %3547 = vmatmul.mubr.bf16.gmra.mrb[0].mxu0 %v2923
      %v3548 = vpop.f32.mrb[0].mxu0
      %v3549 = vadd.f32 0.0, %v3548
      %v3550 = vpop.f32.mrb[0].mxu0
      %v3551 = vpop.f32.mrb[0].mxu0
      %v3552 = vadd.f32 0.0, %v3551
      %v3553 = vpop.f32.mrb[0].mxu0
      %3554 = vmatprep.mubr.bf16.mxu0 0
      %3555 = vmatmul.mubr.bf16.gmra.mrb[0].mxu0 %v2926
      %v3556 = vpop.f32.mrb[0].mxu0
      %v3557 = vadd.f32 0.0, %v3556
      %v3558 = vpop.f32.mrb[0].mxu0
      %v3559 = vpop.f32.mrb[0].mxu0
      %v3560 = vadd.f32 0.0, %v3559
      %v3561 = vpop.f32.mrb[0].mxu0
      %3562 = vmatprep.mubr.bf16.mxu0 0
      %3563 = vmatmul.mubr.bf16.gmra.mrb[0].mxu0 %v2929
      %v3564 = vpop.f32.mrb[0].mxu0
      %v3565 = vadd.f32 0.0, %v3564
      %v3566 = vpop.f32.mrb[0].mxu0
      %v3567 = vpop.f32.mrb[0].mxu0
      %v3568 = vadd.f32 0.0, %v3567
      %v3569 = vpop.f32.mrb[0].mxu0
      %3570 = vmatprep.mubr.bf16.mxu0 0
      %3571 = vmatmul.mubr.bf16.gmra.mrb[0].mxu0 %v2932
      %v3572 = vpop.f32.mrb[0].mxu0
      %v3573 = vadd.f32 0.0, %v3572
      %v3574 = vpop.f32.mrb[0].mxu0
      %v3575 = vpop.f32.mrb[0].mxu0
      %v3576 = vadd.f32 0.0, %v3575
      %v3577 = vpop.f32.mrb[0].mxu0
      %3578 = vmatprep.mubr.bf16.mxu0 0
      %3579 = vmatmul.mubr.bf16.gmra.mrb[0].mxu0 %v2935
      %v3580 = vpop.f32.mrb[0].mxu0
      %v3581 = vadd.f32 0.0, %v3580
      %v3582 = vpop.f32.mrb[0].mxu0
      %v3583 = vpop.f32.mrb[0].mxu0
      %v3584 = vadd.f32 0.0, %v3583
      %v3585 = vpop.f32.mrb[0].mxu0
      %3586 = vmatprep.mubr.bf16.mxu0 0
      %3587 = vmatmul.mubr.bf16.gmra.mrb[0].mxu0 %v2938
      %v3588 = vpop.f32.mrb[0].mxu0
      %v3589 = vadd.f32 0.0, %v3588
      %v3590 = vpop.f32.mrb[0].mxu0
      %v3591 = vpop.f32.mrb[0].mxu0
      %v3592 = vadd.f32 0.0, %v3591
      %v3593 = vpop.f32.mrb[0].mxu0
      %3594 = vmatprep.mubr.bf16.mxu0 0
      %3595 = vmatmul.mubr.bf16.gmra.mrb[0].mxu0 %v2941
      %v3596 = vpop.f32.mrb[0].mxu0
      %v3597 = vadd.f32 0.0, %v3596
      %v3598 = vpop.f32.mrb[0].mxu0
      %v3599 = vpop.f32.mrb[0].mxu0
      %v3600 = vadd.f32 0.0, %v3599
      %v3601 = vpop.f32.mrb[0].mxu0
      %3602 = vmatprep.mubr.bf16.mxu0 0
      %3603 = vmatmul.mubr.bf16.gmra.mrb[0].mxu0 %v2944
      %v3604 = vpop.f32.mrb[0].mxu0
      %v3605 = vadd.f32 0.0, %v3604
      %v3606 = vpop.f32.mrb[0].mxu0
      %v3607 = vpop.f32.mrb[0].mxu0
      %v3608 = vadd.f32 0.0, %v3607
      %v3609 = vpop.f32.mrb[0].mxu0
      %3610 = vmatprep.mubr.bf16.mxu0 0
      %3611 = vmatmul.mubr.bf16.gmra.mrb[0].mxu0 %v2947
      %v3612 = vpop.f32.mrb[0].mxu0
      %v3613 = vadd.f32 0.0, %v3612
      %v3614 = vpop.f32.mrb[0].mxu0
      %v3615 = vpop.f32.mrb[0].mxu0
      %v3616 = vadd.f32 0.0, %v3615
      %v3617 = vpop.f32.mrb[0].mxu0
      %3618 = vmatprep.mubr.bf16.mxu0 0
      %3619 = vmatmul.mubr.bf16.gmra.mrb[0].mxu0 %v2950
      %v3620 = vpop.f32.mrb[0].mxu0
      %v3621 = vadd.f32 0.0, %v3620
      %v3622 = vpop.f32.mrb[0].mxu0
      %v3623 = vpop.f32.mrb[0].mxu0
      %v3624 = vadd.f32 0.0, %v3623
      %v3625 = vpop.f32.mrb[0].mxu0
      %3626 = vmatprep.mubr.bf16.mxu0 0
      %3627 = vmatmul.mubr.bf16.gmra.mrb[0].mxu0 %v2953
      %v3628 = vpop.f32.mrb[0].mxu0
      %v3629 = vadd.f32 0.0, %v3628
      %v3630 = vpop.f32.mrb[0].mxu0
      %v3631 = vpop.f32.mrb[0].mxu0
      %v3632 = vadd.f32 0.0, %v3631
      %v3633 = vpop.f32.mrb[0].mxu0
      %3634 = vmatprep.mubr.bf16.mxu0 0
      %3635 = vmatmul.mubr.bf16.gmra.mrb[0].mxu0 %v3477
      %v3636 = vpop.f32.mrb[0].mxu0
      %v3637 = vadd.f32 0.0, %v3636
      %v3638 = vpop.f32.mrb[0].mxu0
      %v3639 = vpop.f32.mrb[0].mxu0
      %v3640 = vadd.f32 0.0, %v3639
      %v3641 = vpop.f32.mrb[0].mxu0
      %3642 = vdwg.mxu0
      %v3643 = vadd.f32 %v3441, %v3517
      %v3644 = vadd.f32 %v3442, %v3520
      %v3645 = vadd.f32 %v3443, %v3525
      %v3646 = vadd.f32 %v3444, %v3528
      %v3647 = vadd.f32 %v3445, %v3533
      %v3648 = vadd.f32 %v3446, %v3536
      %v3649 = vadd.f32 %v3447, %v3541
      %v3650 = vadd.f32 %v3448, %v3544
      %v3651 = vadd.f32 %v3449, %v3549
      %v3652 = vadd.f32 %v3450, %v3552
      %v3653 = vadd.f32 %v3451, %v3557
      %v3654 = vadd.f32 %v3452, %v3560
      %v3655 = vadd.f32 %v3453, %v3565
      %v3656 = vadd.f32 %v3454, %v3568
      %v3657 = vadd.f32 %v3455, %v3573
      %v3658 = vadd.f32 %v3456, %v3576
      %v3659 = vadd.f32 %v3457, %v3581
      %v3660 = vadd.f32 %v3458, %v3584
      %v3661 = vadd.f32 %v3459, %v3589
      %v3662 = vadd.f32 %v3460, %v3592
      %v3663 = vadd.f32 %v3461, %v3597
      %v3664 = vadd.f32 %v3462, %v3600
      %v3665 = vadd.f32 %v3463, %v3605
      %v3666 = vadd.f32 %v3464, %v3608
      %v3667 = vadd.f32 %v3465, %v3613
      %v3668 = vadd.f32 %v3466, %v3616
      %v3669 = vadd.f32 %v3467, %v3621
      %v3670 = vadd.f32 %v3468, %v3624
      %v3671 = vadd.f32 %v3469, %v3629
      %v3672 = vadd.f32 %v3470, %v3632
      %v3673 = vadd.f32 %v3471, %v3637
      %v3674 = vadd.f32 %v3472, %v3640
      %v3675 = vpack.c.bf16 %v2539, %v2538
      %s3676 = scalar_lea.vmem %s3, 16
      %v3677 = vld [vmem:[%s3676] sm:$0xf]
      %v3679 = vsel %vm491, %v3675, 0
      %v3682 = vsel %vm540, %v3677, 0
      %3684 = vmatprep.subr.bf16.mxu0 0
      %3685 = vmatpush1.bf16.msra.mxu0 %v3682
      %3686 = vmatprep.subr.bf16.mxu0 0
      %3687 = vmatpush1.bf16.msra.mxu0 0
      %3688 = vmatprep.subr.bf16.mxu0 0
      %3689 = vmatpush1.bf16.msra.mxu0 0
      %3690 = vmatprep.subr.bf16.mxu0 0
      %3691 = vmatpush1.bf16.msra.mxu0 0
      %3692 = vmatprep.subr.bf16.mxu0 0
      %3693 = vmatpush1.bf16.msra.mxu0 0
      %3694 = vmatprep.subr.bf16.mxu0 0
      %3695 = vmatpush1.bf16.msra.mxu0 0
      %3696 = vmatprep.subr.bf16.mxu0 0
      %3697 = vmatpush1.bf16.msra.mxu0 0
      %3698 = vmatprep.subr.bf16.mxu0 0
      %3699 = vmatpush1.bf16.msra.mxu0 0
      %3700 = vmatprep.subr.bf16.mxu0 0
      %3701 = vmatpush1.bf16.msra.mxu0 0
      %3702 = vmatprep.subr.bf16.mxu0 0
      %3703 = vmatpush1.bf16.msra.mxu0 0
      %3704 = vmatprep.subr.bf16.mxu0 0
      %3705 = vmatpush1.bf16.msra.mxu0 0
      %3706 = vmatprep.subr.bf16.mxu0 0
      %3707 = vmatpush1.bf16.msra.mxu0 0
      %3708 = vmatprep.subr.bf16.mxu0 0
      %3709 = vmatpush1.bf16.msra.mxu0 0
      %3710 = vmatprep.subr.bf16.mxu0 0
      %3711 = vmatpush1.bf16.msra.mxu0 0
      %3712 = vmatprep.subr.bf16.mxu0 0
      %3713 = vmatpush1.bf16.msra.mxu0 0
      %3714 = vmatprep.subr.bf16.mxu0 0
      %3715 = vmatpush1.bf16.msra.mxu0 0
      %3716 = vmatprep.mubr.bf16.mxu0 0
      %3717 = vmatmul.mubr.bf16.gmra.mrb[0].mxu0 %v2702
      %v3718 = vpop.f32.mrb[0].mxu0
      %v3719 = vadd.f32 0.0, %v3718
      %v3720 = vpop.f32.mrb[0].mxu0
      %v3721 = vpop.f32.mrb[0].mxu0
      %v3722 = vadd.f32 0.0, %v3721
      %v3723 = vpop.f32.mrb[0].mxu0
      %3724 = vmatprep.mubr.bf16.mxu0 0
      %3725 = vmatmul.mubr.bf16.gmra.mrb[0].mxu0 %v2705
      %v3726 = vpop.f32.mrb[0].mxu0
      %v3727 = vadd.f32 0.0, %v3726
      %v3728 = vpop.f32.mrb[0].mxu0
      %v3729 = vpop.f32.mrb[0].mxu0
      %v3730 = vadd.f32 0.0, %v3729
      %v3731 = vpop.f32.mrb[0].mxu0
      %3732 = vmatprep.mubr.bf16.mxu0 0
      %3733 = vmatmul.mubr.bf16.gmra.mrb[0].mxu0 %v2708
      %v3734 = vpop.f32.mrb[0].mxu0
      %v3735 = vadd.f32 0.0, %v3734
      %v3736 = vpop.f32.mrb[0].mxu0
      %v3737 = vpop.f32.mrb[0].mxu0
      %v3738 = vadd.f32 0.0, %v3737
      %v3739 = vpop.f32.mrb[0].mxu0
      %3740 = vmatprep.mubr.bf16.mxu0 0
      %3741 = vmatmul.mubr.bf16.gmra.mrb[0].mxu0 %v2711
      %v3742 = vpop.f32.mrb[0].mxu0
      %v3743 = vadd.f32 0.0, %v3742
      %v3744 = vpop.f32.mrb[0].mxu0
      %v3745 = vpop.f32.mrb[0].mxu0
      %v3746 = vadd.f32 0.0, %v3745
      %v3747 = vpop.f32.mrb[0].mxu0
      %3748 = vmatprep.mubr.bf16.mxu0 0
      %3749 = vmatmul.mubr.bf16.gmra.mrb[0].mxu0 %v2714
      %v3750 = vpop.f32.mrb[0].mxu0
      %v3751 = vadd.f32 0.0, %v3750
      %v3752 = vpop.f32.mrb[0].mxu0
      %v3753 = vpop.f32.mrb[0].mxu0
      %v3754 = vadd.f32 0.0, %v3753
      %v3755 = vpop.f32.mrb[0].mxu0
      %3756 = vmatprep.mubr.bf16.mxu0 0
      %3757 = vmatmul.mubr.bf16.gmra.mrb[0].mxu0 %v2717
      %v3758 = vpop.f32.mrb[0].mxu0
      %v3759 = vadd.f32 0.0, %v3758
      %v3760 = vpop.f32.mrb[0].mxu0
      %v3761 = vpop.f32.mrb[0].mxu0
      %v3762 = vadd.f32 0.0, %v3761
      %v3763 = vpop.f32.mrb[0].mxu0
      %3764 = vmatprep.mubr.bf16.mxu0 0
      %3765 = vmatmul.mubr.bf16.gmra.mrb[0].mxu0 %v2720
      %v3766 = vpop.f32.mrb[0].mxu0
      %v3767 = vadd.f32 0.0, %v3766
      %v3768 = vpop.f32.mrb[0].mxu0
      %v3769 = vpop.f32.mrb[0].mxu0
      %v3770 = vadd.f32 0.0, %v3769
      %v3771 = vpop.f32.mrb[0].mxu0
      %3772 = vmatprep.mubr.bf16.mxu0 0
      %3773 = vmatmul.mubr.bf16.gmra.mrb[0].mxu0 %v2723
      %v3774 = vpop.f32.mrb[0].mxu0
      %v3775 = vadd.f32 0.0, %v3774
      %v3776 = vpop.f32.mrb[0].mxu0
      %v3777 = vpop.f32.mrb[0].mxu0
      %v3778 = vadd.f32 0.0, %v3777
      %v3779 = vpop.f32.mrb[0].mxu0
      %3780 = vmatprep.mubr.bf16.mxu0 0
      %3781 = vmatmul.mubr.bf16.gmra.mrb[0].mxu0 %v2726
      %v3782 = vpop.f32.mrb[0].mxu0
      %v3783 = vadd.f32 0.0, %v3782
      %v3784 = vpop.f32.mrb[0].mxu0
      %v3785 = vpop.f32.mrb[0].mxu0
      %v3786 = vadd.f32 0.0, %v3785
      %v3787 = vpop.f32.mrb[0].mxu0
      %3788 = vmatprep.mubr.bf16.mxu0 0
      %3789 = vmatmul.mubr.bf16.gmra.mrb[0].mxu0 %v2729
      %v3790 = vpop.f32.mrb[0].mxu0
      %v3791 = vadd.f32 0.0, %v3790
      %v3792 = vpop.f32.mrb[0].mxu0
      %v3793 = vpop.f32.mrb[0].mxu0
      %v3794 = vadd.f32 0.0, %v3793
      %v3795 = vpop.f32.mrb[0].mxu0
      %3796 = vmatprep.mubr.bf16.mxu0 0
      %3797 = vmatmul.mubr.bf16.gmra.mrb[0].mxu0 %v2732
      %v3798 = vpop.f32.mrb[0].mxu0
      %v3799 = vadd.f32 0.0, %v3798
      %v3800 = vpop.f32.mrb[0].mxu0
      %v3801 = vpop.f32.mrb[0].mxu0
      %v3802 = vadd.f32 0.0, %v3801
      %v3803 = vpop.f32.mrb[0].mxu0
      %3804 = vmatprep.mubr.bf16.mxu0 0
      %3805 = vmatmul.mubr.bf16.gmra.mrb[0].mxu0 %v2735
      %v3806 = vpop.f32.mrb[0].mxu0
      %v3807 = vadd.f32 0.0, %v3806
      %v3808 = vpop.f32.mrb[0].mxu0
      %v3809 = vpop.f32.mrb[0].mxu0
      %v3810 = vadd.f32 0.0, %v3809
      %v3811 = vpop.f32.mrb[0].mxu0
      %3812 = vmatprep.mubr.bf16.mxu0 0
      %3813 = vmatmul.mubr.bf16.gmra.mrb[0].mxu0 %v2738
      %v3814 = vpop.f32.mrb[0].mxu0
      %v3815 = vadd.f32 0.0, %v3814
      %v3816 = vpop.f32.mrb[0].mxu0
      %v3817 = vpop.f32.mrb[0].mxu0
      %v3818 = vadd.f32 0.0, %v3817
      %v3819 = vpop.f32.mrb[0].mxu0
      %3820 = vmatprep.mubr.bf16.mxu0 0
      %3821 = vmatmul.mubr.bf16.gmra.mrb[0].mxu0 %v2741
      %v3822 = vpop.f32.mrb[0].mxu0
      %v3823 = vadd.f32 0.0, %v3822
      %v3824 = vpop.f32.mrb[0].mxu0
      %v3825 = vpop.f32.mrb[0].mxu0
      %v3826 = vadd.f32 0.0, %v3825
      %v3827 = vpop.f32.mrb[0].mxu0
      %3828 = vmatprep.mubr.bf16.mxu0 0
      %3829 = vmatmul.mubr.bf16.gmra.mrb[0].mxu0 %v2744
      %v3830 = vpop.f32.mrb[0].mxu0
      %v3831 = vadd.f32 0.0, %v3830
      %v3832 = vpop.f32.mrb[0].mxu0
      %v3833 = vpop.f32.mrb[0].mxu0
      %v3834 = vadd.f32 0.0, %v3833
      %v3835 = vpop.f32.mrb[0].mxu0
      %3836 = vmatprep.mubr.bf16.mxu0 0
      %3837 = vmatmul.mubr.bf16.gmra.mrb[0].mxu0 %v3679
      %v3838 = vpop.f32.mrb[0].mxu0
      %v3839 = vadd.f32 0.0, %v3838
      %v3840 = vpop.f32.mrb[0].mxu0
      %v3841 = vpop.f32.mrb[0].mxu0
      %v3842 = vadd.f32 0.0, %v3841
      %v3843 = vpop.f32.mrb[0].mxu0
      %3844 = vdwg.mxu0
      %v3845 = vadd.f32 %v3643, %v3719
      %v3846 = vadd.f32 %v3644, %v3722
      %v3847 = vadd.f32 %v3645, %v3727
      %v3848 = vadd.f32 %v3646, %v3730
      %v3849 = vadd.f32 %v3647, %v3735
      %v3850 = vadd.f32 %v3648, %v3738
      %v3851 = vadd.f32 %v3649, %v3743
      %v3852 = vadd.f32 %v3650, %v3746
      %v3853 = vadd.f32 %v3651, %v3751
      %v3854 = vadd.f32 %v3652, %v3754
      %v3855 = vadd.f32 %v3653, %v3759
      %v3856 = vadd.f32 %v3654, %v3762
      %v3857 = vadd.f32 %v3655, %v3767
      %v3858 = vadd.f32 %v3656, %v3770
      %v3859 = vadd.f32 %v3657, %v3775
      %v3860 = vadd.f32 %v3658, %v3778
      %v3861 = vadd.f32 %v3659, %v3783
      %v3862 = vadd.f32 %v3660, %v3786
      %v3863 = vadd.f32 %v3661, %v3791
      %v3864 = vadd.f32 %v3662, %v3794
      %v3865 = vadd.f32 %v3663, %v3799
      %v3866 = vadd.f32 %v3664, %v3802
      %v3867 = vadd.f32 %v3665, %v3807
      %v3868 = vadd.f32 %v3666, %v3810
      %v3869 = vadd.f32 %v3667, %v3815
      %v3870 = vadd.f32 %v3668, %v3818
      %v3871 = vadd.f32 %v3669, %v3823
      %v3872 = vadd.f32 %v3670, %v3826
      %v3873 = vadd.f32 %v3671, %v3831
      %v3874 = vadd.f32 %v3672, %v3834
      %v3875 = vadd.f32 %v3673, %v3839
      %v3876 = vadd.f32 %v3674, %v3842
      %v3877 = vpack.c.bf16 %v3214, %v3166
      %s3878 = scalar_lea.vmem %s3, 20
      %v3879 = vld [vmem:[%s3878] sm:$0xf]
      %v3881 = vsel %vm491, %v3877, 0
      %v3884 = vsel %vm540, %v3879, 0
      %3886 = vmatprep.subr.bf16.mxu0 0
      %3887 = vmatpush1.bf16.msra.mxu0 %v3884
      %3888 = vmatprep.subr.bf16.mxu0 0
      %3889 = vmatpush1.bf16.msra.mxu0 0
      %3890 = vmatprep.subr.bf16.mxu0 0
      %3891 = vmatpush1.bf16.msra.mxu0 0
      %3892 = vmatprep.subr.bf16.mxu0 0
      %3893 = vmatpush1.bf16.msra.mxu0 0
      %3894 = vmatprep.subr.bf16.mxu0 0
      %3895 = vmatpush1.bf16.msra.mxu0 0
      %3896 = vmatprep.subr.bf16.mxu0 0
      %3897 = vmatpush1.bf16.msra.mxu0 0
      %3898 = vmatprep.subr.bf16.mxu0 0
      %3899 = vmatpush1.bf16.msra.mxu0 0
      %3900 = vmatprep.subr.bf16.mxu0 0
      %3901 = vmatpush1.bf16.msra.mxu0 0
      %3902 = vmatprep.subr.bf16.mxu0 0
      %3903 = vmatpush1.bf16.msra.mxu0 0
      %3904 = vmatprep.subr.bf16.mxu0 0
      %3905 = vmatpush1.bf16.msra.mxu0 0
      %3906 = vmatprep.subr.bf16.mxu0 0
      %3907 = vmatpush1.bf16.msra.mxu0 0
      %3908 = vmatprep.subr.bf16.mxu0 0
      %3909 = vmatpush1.bf16.msra.mxu0 0
      %3910 = vmatprep.subr.bf16.mxu0 0
      %3911 = vmatpush1.bf16.msra.mxu0 0
      %3912 = vmatprep.subr.bf16.mxu0 0
      %3913 = vmatpush1.bf16.msra.mxu0 0
      %3914 = vmatprep.subr.bf16.mxu0 0
      %3915 = vmatpush1.bf16.msra.mxu0 0
      %3916 = vmatprep.subr.bf16.mxu0 0
      %3917 = vmatpush1.bf16.msra.mxu0 0
      %3918 = vmatprep.mubr.bf16.mxu0 0
      %3919 = vmatmul.mubr.bf16.gmra.mrb[0].mxu0 %v3233
      %v3920 = vpop.f32.mrb[0].mxu0
      %v3921 = vadd.f32 0.0, %v3920
      %v3922 = vpop.f32.mrb[0].mxu0
      %v3923 = vpop.f32.mrb[0].mxu0
      %v3924 = vadd.f32 0.0, %v3923
      %v3925 = vpop.f32.mrb[0].mxu0
      %3926 = vmatprep.mubr.bf16.mxu0 0
      %3927 = vmatmul.mubr.bf16.gmra.mrb[0].mxu0 %v3236
      %v3928 = vpop.f32.mrb[0].mxu0
      %v3929 = vadd.f32 0.0, %v3928
      %v3930 = vpop.f32.mrb[0].mxu0
      %v3931 = vpop.f32.mrb[0].mxu0
      %v3932 = vadd.f32 0.0, %v3931
      %v3933 = vpop.f32.mrb[0].mxu0
      %3934 = vmatprep.mubr.bf16.mxu0 0
      %3935 = vmatmul.mubr.bf16.gmra.mrb[0].mxu0 %v3239
      %v3936 = vpop.f32.mrb[0].mxu0
      %v3937 = vadd.f32 0.0, %v3936
      %v3938 = vpop.f32.mrb[0].mxu0
      %v3939 = vpop.f32.mrb[0].mxu0
      %v3940 = vadd.f32 0.0, %v3939
      %v3941 = vpop.f32.mrb[0].mxu0
      %3942 = vmatprep.mubr.bf16.mxu0 0
      %3943 = vmatmul.mubr.bf16.gmra.mrb[0].mxu0 %v3242
      %v3944 = vpop.f32.mrb[0].mxu0
      %v3945 = vadd.f32 0.0, %v3944
      %v3946 = vpop.f32.mrb[0].mxu0
      %v3947 = vpop.f32.mrb[0].mxu0
      %v3948 = vadd.f32 0.0, %v3947
      %v3949 = vpop.f32.mrb[0].mxu0
      %3950 = vmatprep.mubr.bf16.mxu0 0
      %3951 = vmatmul.mubr.bf16.gmra.mrb[0].mxu0 %v3245
      %v3952 = vpop.f32.mrb[0].mxu0
      %v3953 = vadd.f32 0.0, %v3952
      %v3954 = vpop.f32.mrb[0].mxu0
      %v3955 = vpop.f32.mrb[0].mxu0
      %v3956 = vadd.f32 0.0, %v3955
      %v3957 = vpop.f32.mrb[0].mxu0
      %3958 = vmatprep.mubr.bf16.mxu0 0
      %3959 = vmatmul.mubr.bf16.gmra.mrb[0].mxu0 %v3248
      %v3960 = vpop.f32.mrb[0].mxu0
      %v3961 = vadd.f32 0.0, %v3960
      %v3962 = vpop.f32.mrb[0].mxu0
      %v3963 = vpop.f32.mrb[0].mxu0
      %v3964 = vadd.f32 0.0, %v3963
      %v3965 = vpop.f32.mrb[0].mxu0
      %3966 = vmatprep.mubr.bf16.mxu0 0
      %3967 = vmatmul.mubr.bf16.gmra.mrb[0].mxu0 %v3251
      %v3968 = vpop.f32.mrb[0].mxu0
      %v3969 = vadd.f32 0.0, %v3968
      %v3970 = vpop.f32.mrb[0].mxu0
      %v3971 = vpop.f32.mrb[0].mxu0
      %v3972 = vadd.f32 0.0, %v3971
      %v3973 = vpop.f32.mrb[0].mxu0
      %3974 = vmatprep.mubr.bf16.mxu0 0
      %3975 = vmatmul.mubr.bf16.gmra.mrb[0].mxu0 %v3254
      %v3976 = vpop.f32.mrb[0].mxu0
      %v3977 = vadd.f32 0.0, %v3976
      %v3978 = vpop.f32.mrb[0].mxu0
      %v3979 = vpop.f32.mrb[0].mxu0
      %v3980 = vadd.f32 0.0, %v3979
      %v3981 = vpop.f32.mrb[0].mxu0
      %3982 = vmatprep.mubr.bf16.mxu0 0
      %3983 = vmatmul.mubr.bf16.gmra.mrb[0].mxu0 %v3257
      %v3984 = vpop.f32.mrb[0].mxu0
      %v3985 = vadd.f32 0.0, %v3984
      %v3986 = vpop.f32.mrb[0].mxu0
      %v3987 = vpop.f32.mrb[0].mxu0
      %v3988 = vadd.f32 0.0, %v3987
      %v3989 = vpop.f32.mrb[0].mxu0
      %3990 = vmatprep.mubr.bf16.mxu0 0
      %3991 = vmatmul.mubr.bf16.gmra.mrb[0].mxu0 %v3260
      %v3992 = vpop.f32.mrb[0].mxu0
      %v3993 = vadd.f32 0.0, %v3992
      %v3994 = vpop.f32.mrb[0].mxu0
      %v3995 = vpop.f32.mrb[0].mxu0
      %v3996 = vadd.f32 0.0, %v3995
      %v3997 = vpop.f32.mrb[0].mxu0
      %3998 = vmatprep.mubr.bf16.mxu0 0
      %3999 = vmatmul.mubr.bf16.gmra.mrb[0].mxu0 %v3263
      %v4000 = vpop.f32.mrb[0].mxu0
      %v4001 = vadd.f32 0.0, %v4000
      %v4002 = vpop.f32.mrb[0].mxu0
      %v4003 = vpop.f32.mrb[0].mxu0
      %v4004 = vadd.f32 0.0, %v4003
      %v4005 = vpop.f32.mrb[0].mxu0
      %4006 = vmatprep.mubr.bf16.mxu0 0
      %4007 = vmatmul.mubr.bf16.gmra.mrb[0].mxu0 %v3266
      %v4008 = vpop.f32.mrb[0].mxu0
      %v4009 = vadd.f32 0.0, %v4008
      %v4010 = vpop.f32.mrb[0].mxu0
      %v4011 = vpop.f32.mrb[0].mxu0
      %v4012 = vadd.f32 0.0, %v4011
      %v4013 = vpop.f32.mrb[0].mxu0
      %4014 = vmatprep.mubr.bf16.mxu0 0
      %4015 = vmatmul.mubr.bf16.gmra.mrb[0].mxu0 %v3269
      %v4016 = vpop.f32.mrb[0].mxu0
      %v4017 = vadd.f32 0.0, %v4016
      %v4018 = vpop.f32.mrb[0].mxu0
      %v4019 = vpop.f32.mrb[0].mxu0
      %v4020 = vadd.f32 0.0, %v4019
      %v4021 = vpop.f32.mrb[0].mxu0
      %4022 = vmatprep.mubr.bf16.mxu0 0
      %4023 = vmatmul.mubr.bf16.gmra.mrb[0].mxu0 %v3272
      %v4024 = vpop.f32.mrb[0].mxu0
      %v4025 = vadd.f32 0.0, %v4024
      %v4026 = vpop.f32.mrb[0].mxu0
      %v4027 = vpop.f32.mrb[0].mxu0
      %v4028 = vadd.f32 0.0, %v4027
      %v4029 = vpop.f32.mrb[0].mxu0
      %4030 = vmatprep.mubr.bf16.mxu0 0
      %4031 = vmatmul.mubr.bf16.gmra.mrb[0].mxu0 %v3275
      %v4032 = vpop.f32.mrb[0].mxu0
      %v4033 = vadd.f32 0.0, %v4032
      %v4034 = vpop.f32.mrb[0].mxu0
      %v4035 = vpop.f32.mrb[0].mxu0
      %v4036 = vadd.f32 0.0, %v4035
      %v4037 = vpop.f32.mrb[0].mxu0
      %4038 = vmatprep.mubr.bf16.mxu0 0
      %4039 = vmatmul.mubr.bf16.gmra.mrb[0].mxu0 %v3881
      %v4040 = vpop.f32.mrb[0].mxu0
      %v4041 = vadd.f32 0.0, %v4040
      %v4042 = vpop.f32.mrb[0].mxu0
      %v4043 = vpop.f32.mrb[0].mxu0
      %v4044 = vadd.f32 0.0, %v4043
      %v4045 = vpop.f32.mrb[0].mxu0
      %4046 = vdwg.mxu0
      %v4047 = vadd.f32 %v3845, %v3921
      %v4048 = vadd.f32 %v3846, %v3924
      %v4049 = vadd.f32 %v3847, %v3929
      %v4050 = vadd.f32 %v3848, %v3932
      %v4051 = vadd.f32 %v3849, %v3937
      %v4052 = vadd.f32 %v3850, %v3940
      %v4053 = vadd.f32 %v3851, %v3945
      %v4054 = vadd.f32 %v3852, %v3948
      %v4055 = vadd.f32 %v3853, %v3953
      %v4056 = vadd.f32 %v3854, %v3956
      %v4057 = vadd.f32 %v3855, %v3961
      %v4058 = vadd.f32 %v3856, %v3964
      %v4059 = vadd.f32 %v3857, %v3969
      %v4060 = vadd.f32 %v3858, %v3972
      %v4061 = vadd.f32 %v3859, %v3977
      %v4062 = vadd.f32 %v3860, %v3980
      %v4063 = vadd.f32 %v3861, %v3985
      %v4064 = vadd.f32 %v3862, %v3988
      %v4065 = vadd.f32 %v3863, %v3993
      %v4066 = vadd.f32 %v3864, %v3996
      %v4067 = vadd.f32 %v3865, %v4001
      %v4068 = vadd.f32 %v3866, %v4004
      %v4069 = vadd.f32 %v3867, %v4009
      %v4070 = vadd.f32 %v3868, %v4012
      %v4071 = vadd.f32 %v3869, %v4017
      %v4072 = vadd.f32 %v3870, %v4020
      %v4073 = vadd.f32 %v3871, %v4025
      %v4074 = vadd.f32 %v3872, %v4028
      %v4075 = vadd.f32 %v3873, %v4033
      %v4076 = vadd.f32 %v3874, %v4036
      %v4077 = vadd.f32 %v3875, %v4041
      %v4078 = vadd.f32 %v3876, %v4044
      %s4079 = scalar_lea.vmem %s3, 24
      %v4080 = vld [vmem:[%s4079] sm:$0xf]
      %v4082 = vsel %vm540, %v4080, 0
      %4084 = vmatprep.subr.bf16.mxu0 0
      %4085 = vmatpush1.bf16.msra.mxu0 %v4082
      %4086 = vmatprep.subr.bf16.mxu0 0
      %4087 = vmatpush1.bf16.msra.mxu0 0
      %4088 = vmatprep.subr.bf16.mxu0 0
      %4089 = vmatpush1.bf16.msra.mxu0 0
      %4090 = vmatprep.subr.bf16.mxu0 0
      %4091 = vmatpush1.bf16.msra.mxu0 0
      %4092 = vmatprep.subr.bf16.mxu0 0
      %4093 = vmatpush1.bf16.msra.mxu0 0
      %4094 = vmatprep.subr.bf16.mxu0 0
      %4095 = vmatpush1.bf16.msra.mxu0 0
      %4096 = vmatprep.subr.bf16.mxu0 0
      %4097 = vmatpush1.bf16.msra.mxu0 0
      %4098 = vmatprep.subr.bf16.mxu0 0
      %4099 = vmatpush1.bf16.msra.mxu0 0
      %4100 = vmatprep.subr.bf16.mxu0 0
      %4101 = vmatpush1.bf16.msra.mxu0 0
      %4102 = vmatprep.subr.bf16.mxu0 0
      %4103 = vmatpush1.bf16.msra.mxu0 0
      %4104 = vmatprep.subr.bf16.mxu0 0
      %4105 = vmatpush1.bf16.msra.mxu0 0
      %4106 = vmatprep.subr.bf16.mxu0 0
      %4107 = vmatpush1.bf16.msra.mxu0 0
      %4108 = vmatprep.subr.bf16.mxu0 0
      %4109 = vmatpush1.bf16.msra.mxu0 0
      %4110 = vmatprep.subr.bf16.mxu0 0
      %4111 = vmatpush1.bf16.msra.mxu0 0
      %4112 = vmatprep.subr.bf16.mxu0 0
      %4113 = vmatpush1.bf16.msra.mxu0 0
      %4114 = vmatprep.subr.bf16.mxu0 0
      %4115 = vmatpush1.bf16.msra.mxu0 0
      %4116 = vmatprep.mubr.bf16.mxu0 0
      %4117 = vmatmul.mubr.bf16.gmra.mrb[0].mxu0 %v2914
      %v4118 = vpop.f32.mrb[0].mxu0
      %v4119 = vadd.f32 0.0, %v4118
      %v4120 = vpop.f32.mrb[0].mxu0
      %v4121 = vpop.f32.mrb[0].mxu0
      %v4122 = vadd.f32 0.0, %v4121
      %v4123 = vpop.f32.mrb[0].mxu0
      %4124 = vmatprep.mubr.bf16.mxu0 0
      %4125 = vmatmul.mubr.bf16.gmra.mrb[0].mxu0 %v2917
      %v4126 = vpop.f32.mrb[0].mxu0
      %v4127 = vadd.f32 0.0, %v4126
      %v4128 = vpop.f32.mrb[0].mxu0
      %v4129 = vpop.f32.mrb[0].mxu0
      %v4130 = vadd.f32 0.0, %v4129
      %v4131 = vpop.f32.mrb[0].mxu0
      %4132 = vmatprep.mubr.bf16.mxu0 0
      %4133 = vmatmul.mubr.bf16.gmra.mrb[0].mxu0 %v2920
      %v4134 = vpop.f32.mrb[0].mxu0
      %v4135 = vadd.f32 0.0, %v4134
      %v4136 = vpop.f32.mrb[0].mxu0
      %v4137 = vpop.f32.mrb[0].mxu0
      %v4138 = vadd.f32 0.0, %v4137
      %v4139 = vpop.f32.mrb[0].mxu0
      %4140 = vmatprep.mubr.bf16.mxu0 0
      %4141 = vmatmul.mubr.bf16.gmra.mrb[0].mxu0 %v2923
      %v4142 = vpop.f32.mrb[0].mxu0
      %v4143 = vadd.f32 0.0, %v4142
      %v4144 = vpop.f32.mrb[0].mxu0
      %v4145 = vpop.f32.mrb[0].mxu0
      %v4146 = vadd.f32 0.0, %v4145
      %v4147 = vpop.f32.mrb[0].mxu0
      %4148 = vmatprep.mubr.bf16.mxu0 0
      %4149 = vmatmul.mubr.bf16.gmra.mrb[0].mxu0 %v2926
      %v4150 = vpop.f32.mrb[0].mxu0
      %v4151 = vadd.f32 0.0, %v4150
      %v4152 = vpop.f32.mrb[0].mxu0
      %v4153 = vpop.f32.mrb[0].mxu0
      %v4154 = vadd.f32 0.0, %v4153
      %v4155 = vpop.f32.mrb[0].mxu0
      %4156 = vmatprep.mubr.bf16.mxu0 0
      %4157 = vmatmul.mubr.bf16.gmra.mrb[0].mxu0 %v2929
      %v4158 = vpop.f32.mrb[0].mxu0
      %v4159 = vadd.f32 0.0, %v4158
      %v4160 = vpop.f32.mrb[0].mxu0
      %v4161 = vpop.f32.mrb[0].mxu0
      %v4162 = vadd.f32 0.0, %v4161
      %v4163 = vpop.f32.mrb[0].mxu0
      %4164 = vmatprep.mubr.bf16.mxu0 0
      %4165 = vmatmul.mubr.bf16.gmra.mrb[0].mxu0 %v2932
      %v4166 = vpop.f32.mrb[0].mxu0
      %v4167 = vadd.f32 0.0, %v4166
      %v4168 = vpop.f32.mrb[0].mxu0
      %v4169 = vpop.f32.mrb[0].mxu0
      %v4170 = vadd.f32 0.0, %v4169
      %v4171 = vpop.f32.mrb[0].mxu0
      %4172 = vmatprep.mubr.bf16.mxu0 0
      %4173 = vmatmul.mubr.bf16.gmra.mrb[0].mxu0 %v2935
      %v4174 = vpop.f32.mrb[0].mxu0
      %v4175 = vadd.f32 0.0, %v4174
      %v4176 = vpop.f32.mrb[0].mxu0
      %v4177 = vpop.f32.mrb[0].mxu0
      %v4178 = vadd.f32 0.0, %v4177
      %v4179 = vpop.f32.mrb[0].mxu0
      %4180 = vmatprep.mubr.bf16.mxu0 0
      %4181 = vmatmul.mubr.bf16.gmra.mrb[0].mxu0 %v2938
      %v4182 = vpop.f32.mrb[0].mxu0
      %v4183 = vadd.f32 0.0, %v4182
      %v4184 = vpop.f32.mrb[0].mxu0
      %v4185 = vpop.f32.mrb[0].mxu0
      %v4186 = vadd.f32 0.0, %v4185
      %v4187 = vpop.f32.mrb[0].mxu0
      %4188 = vmatprep.mubr.bf16.mxu0 0
      %4189 = vmatmul.mubr.bf16.gmra.mrb[0].mxu0 %v2941
      %v4190 = vpop.f32.mrb[0].mxu0
      %v4191 = vadd.f32 0.0, %v4190
      %v4192 = vpop.f32.mrb[0].mxu0
      %v4193 = vpop.f32.mrb[0].mxu0
      %v4194 = vadd.f32 0.0, %v4193
      %v4195 = vpop.f32.mrb[0].mxu0
      %4196 = vmatprep.mubr.bf16.mxu0 0
      %4197 = vmatmul.mubr.bf16.gmra.mrb[0].mxu0 %v2944
      %v4198 = vpop.f32.mrb[0].mxu0
      %v4199 = vadd.f32 0.0, %v4198
      %v4200 = vpop.f32.mrb[0].mxu0
      %v4201 = vpop.f32.mrb[0].mxu0
      %v4202 = vadd.f32 0.0, %v4201
      %v4203 = vpop.f32.mrb[0].mxu0
      %4204 = vmatprep.mubr.bf16.mxu0 0
      %4205 = vmatmul.mubr.bf16.gmra.mrb[0].mxu0 %v2947
      %v4206 = vpop.f32.mrb[0].mxu0
      %v4207 = vadd.f32 0.0, %v4206
      %v4208 = vpop.f32.mrb[0].mxu0
      %v4209 = vpop.f32.mrb[0].mxu0
      %v4210 = vadd.f32 0.0, %v4209
      %v4211 = vpop.f32.mrb[0].mxu0
      %4212 = vmatprep.mubr.bf16.mxu0 0
      %4213 = vmatmul.mubr.bf16.gmra.mrb[0].mxu0 %v2950
      %v4214 = vpop.f32.mrb[0].mxu0
      %v4215 = vadd.f32 0.0, %v4214
      %v4216 = vpop.f32.mrb[0].mxu0
      %v4217 = vpop.f32.mrb[0].mxu0
      %v4218 = vadd.f32 0.0, %v4217
      %v4219 = vpop.f32.mrb[0].mxu0
      %4220 = vmatprep.mubr.bf16.mxu0 0
      %4221 = vmatmul.mubr.bf16.gmra.mrb[0].mxu0 %v2953
      %v4222 = vpop.f32.mrb[0].mxu0
      %v4223 = vadd.f32 0.0, %v4222
      %v4224 = vpop.f32.mrb[0].mxu0
      %v4225 = vpop.f32.mrb[0].mxu0
      %v4226 = vadd.f32 0.0, %v4225
      %v4227 = vpop.f32.mrb[0].mxu0
      %4228 = vmatprep.mubr.bf16.mxu0 0
      %4229 = vmatmul.mubr.bf16.gmra.mrb[0].mxu0 %v3477
      %v4230 = vpop.f32.mrb[0].mxu0
      %v4231 = vadd.f32 0.0, %v4230
      %v4232 = vpop.f32.mrb[0].mxu0
      %v4233 = vpop.f32.mrb[0].mxu0
      %v4234 = vadd.f32 0.0, %v4233
      %v4235 = vpop.f32.mrb[0].mxu0
      %4236 = vmatprep.mubr.bf16.mxu0 0
      %4237 = vmatmul.mubr.bf16.gmra.mrb[0].mxu0 %v493
      %v4238 = vpop.f32.mrb[0].mxu0
      %v4239 = vadd.f32 0.0, %v4238
      %v4240 = vpop.f32.mrb[0].mxu0
      %v4241 = vpop.f32.mrb[0].mxu0
      %v4242 = vadd.f32 0.0, %v4241
      %v4243 = vpop.f32.mrb[0].mxu0
      %4244 = vdwg.mxu0
      %v4245 = vadd.f32 %v4047, %v4119
      %v4246 = vadd.f32 %v4048, %v4122
      %v4247 = vadd.f32 %v4049, %v4127
      %v4248 = vadd.f32 %v4050, %v4130
      %v4249 = vadd.f32 %v4051, %v4135
      %v4250 = vadd.f32 %v4052, %v4138
      %v4251 = vadd.f32 %v4053, %v4143
      %v4252 = vadd.f32 %v4054, %v4146
      %v4253 = vadd.f32 %v4055, %v4151
      %v4254 = vadd.f32 %v4056, %v4154
      %v4255 = vadd.f32 %v4057, %v4159
      %v4256 = vadd.f32 %v4058, %v4162
      %v4257 = vadd.f32 %v4059, %v4167
      %v4258 = vadd.f32 %v4060, %v4170
      %v4259 = vadd.f32 %v4061, %v4175
      %v4260 = vadd.f32 %v4062, %v4178
      %v4261 = vadd.f32 %v4063, %v4183
      %v4262 = vadd.f32 %v4064, %v4186
      %v4263 = vadd.f32 %v4065, %v4191
      %v4264 = vadd.f32 %v4066, %v4194
      %v4265 = vadd.f32 %v4067, %v4199
      %v4266 = vadd.f32 %v4068, %v4202
      %v4267 = vadd.f32 %v4069, %v4207
      %v4268 = vadd.f32 %v4070, %v4210
      %v4269 = vadd.f32 %v4071, %v4215
      %v4270 = vadd.f32 %v4072, %v4218
      %v4271 = vadd.f32 %v4073, %v4223
      %v4272 = vadd.f32 %v4074, %v4226
      %v4273 = vadd.f32 %v4075, %v4231
      %v4274 = vadd.f32 %v4076, %v4234
      %v4275 = vadd.f32 %v4077, %v4239
      %v4276 = vadd.f32 %v4078, %v4242
      %s4277 = scalar_lea.vmem %s3, 28
      %v4278 = vld [vmem:[%s4277] sm:$0xf]
      %v4280 = vsel %vm540, %v4278, 0
      %4282 = vmatprep.subr.bf16.mxu0 0
      %4283 = vmatpush1.bf16.msra.mxu0 %v4280
      %4284 = vmatprep.subr.bf16.mxu0 0
      %4285 = vmatpush1.bf16.msra.mxu0 0
      %4286 = vmatprep.subr.bf16.mxu0 0
      %4287 = vmatpush1.bf16.msra.mxu0 0
      %4288 = vmatprep.subr.bf16.mxu0 0
      %4289 = vmatpush1.bf16.msra.mxu0 0
      %4290 = vmatprep.subr.bf16.mxu0 0
      %4291 = vmatpush1.bf16.msra.mxu0 0
      %4292 = vmatprep.subr.bf16.mxu0 0
      %4293 = vmatpush1.bf16.msra.mxu0 0
      %4294 = vmatprep.subr.bf16.mxu0 0
      %4295 = vmatpush1.bf16.msra.mxu0 0
      %4296 = vmatprep.subr.bf16.mxu0 0
      %4297 = vmatpush1.bf16.msra.mxu0 0
      %4298 = vmatprep.subr.bf16.mxu0 0
      %4299 = vmatpush1.bf16.msra.mxu0 0
      %4300 = vmatprep.subr.bf16.mxu0 0
      %4301 = vmatpush1.bf16.msra.mxu0 0
      %4302 = vmatprep.subr.bf16.mxu0 0
      %4303 = vmatpush1.bf16.msra.mxu0 0
      %4304 = vmatprep.subr.bf16.mxu0 0
      %4305 = vmatpush1.bf16.msra.mxu0 0
      %4306 = vmatprep.subr.bf16.mxu0 0
      %4307 = vmatpush1.bf16.msra.mxu0 0
      %4308 = vmatprep.subr.bf16.mxu0 0
      %4309 = vmatpush1.bf16.msra.mxu0 0
      %4310 = vmatprep.subr.bf16.mxu0 0
      %4311 = vmatpush1.bf16.msra.mxu0 0
      %4312 = vmatprep.subr.bf16.mxu0 0
      %4313 = vmatpush1.bf16.msra.mxu0 0
      %4314 = vmatprep.mubr.bf16.mxu0 0
      %4315 = vmatmul.mubr.bf16.gmra.mrb[0].mxu0 %v2705
      %v4316 = vpop.f32.mrb[0].mxu0
      %v4317 = vadd.f32 0.0, %v4316
      %v4318 = vpop.f32.mrb[0].mxu0
      %v4319 = vpop.f32.mrb[0].mxu0
      %v4320 = vadd.f32 0.0, %v4319
      %v4321 = vpop.f32.mrb[0].mxu0
      %4322 = vmatprep.mubr.bf16.mxu0 0
      %4323 = vmatmul.mubr.bf16.gmra.mrb[0].mxu0 %v2708
      %v4324 = vpop.f32.mrb[0].mxu0
      %v4325 = vadd.f32 0.0, %v4324
      %v4326 = vpop.f32.mrb[0].mxu0
      %v4327 = vpop.f32.mrb[0].mxu0
      %v4328 = vadd.f32 0.0, %v4327
      %v4329 = vpop.f32.mrb[0].mxu0
      %4330 = vmatprep.mubr.bf16.mxu0 0
      %4331 = vmatmul.mubr.bf16.gmra.mrb[0].mxu0 %v2711
      %v4332 = vpop.f32.mrb[0].mxu0
      %v4333 = vadd.f32 0.0, %v4332
      %v4334 = vpop.f32.mrb[0].mxu0
      %v4335 = vpop.f32.mrb[0].mxu0
      %v4336 = vadd.f32 0.0, %v4335
      %v4337 = vpop.f32.mrb[0].mxu0
      %4338 = vmatprep.mubr.bf16.mxu0 0
      %4339 = vmatmul.mubr.bf16.gmra.mrb[0].mxu0 %v2714
      %v4340 = vpop.f32.mrb[0].mxu0
      %v4341 = vadd.f32 0.0, %v4340
      %v4342 = vpop.f32.mrb[0].mxu0
      %v4343 = vpop.f32.mrb[0].mxu0
      %v4344 = vadd.f32 0.0, %v4343
      %v4345 = vpop.f32.mrb[0].mxu0
      %4346 = vmatprep.mubr.bf16.mxu0 0
      %4347 = vmatmul.mubr.bf16.gmra.mrb[0].mxu0 %v2717
      %v4348 = vpop.f32.mrb[0].mxu0
      %v4349 = vadd.f32 0.0, %v4348
      %v4350 = vpop.f32.mrb[0].mxu0
      %v4351 = vpop.f32.mrb[0].mxu0
      %v4352 = vadd.f32 0.0, %v4351
      %v4353 = vpop.f32.mrb[0].mxu0
      %4354 = vmatprep.mubr.bf16.mxu0 0
      %4355 = vmatmul.mubr.bf16.gmra.mrb[0].mxu0 %v2720
      %v4356 = vpop.f32.mrb[0].mxu0
      %v4357 = vadd.f32 0.0, %v4356
      %v4358 = vpop.f32.mrb[0].mxu0
      %v4359 = vpop.f32.mrb[0].mxu0
      %v4360 = vadd.f32 0.0, %v4359
      %v4361 = vpop.f32.mrb[0].mxu0
      %4362 = vmatprep.mubr.bf16.mxu0 0
      %4363 = vmatmul.mubr.bf16.gmra.mrb[0].mxu0 %v2723
      %v4364 = vpop.f32.mrb[0].mxu0
      %v4365 = vadd.f32 0.0, %v4364
      %v4366 = vpop.f32.mrb[0].mxu0
      %v4367 = vpop.f32.mrb[0].mxu0
      %v4368 = vadd.f32 0.0, %v4367
      %v4369 = vpop.f32.mrb[0].mxu0
      %4370 = vmatprep.mubr.bf16.mxu0 0
      %4371 = vmatmul.mubr.bf16.gmra.mrb[0].mxu0 %v2726
      %v4372 = vpop.f32.mrb[0].mxu0
      %v4373 = vadd.f32 0.0, %v4372
      %v4374 = vpop.f32.mrb[0].mxu0
      %v4375 = vpop.f32.mrb[0].mxu0
      %v4376 = vadd.f32 0.0, %v4375
      %v4377 = vpop.f32.mrb[0].mxu0
      %4378 = vmatprep.mubr.bf16.mxu0 0
      %4379 = vmatmul.mubr.bf16.gmra.mrb[0].mxu0 %v2729
      %v4380 = vpop.f32.mrb[0].mxu0
      %v4381 = vadd.f32 0.0, %v4380
      %v4382 = vpop.f32.mrb[0].mxu0
      %v4383 = vpop.f32.mrb[0].mxu0
      %v4384 = vadd.f32 0.0, %v4383
      %v4385 = vpop.f32.mrb[0].mxu0
      %4386 = vmatprep.mubr.bf16.mxu0 0
      %4387 = vmatmul.mubr.bf16.gmra.mrb[0].mxu0 %v2732
      %v4388 = vpop.f32.mrb[0].mxu0
      %v4389 = vadd.f32 0.0, %v4388
      %v4390 = vpop.f32.mrb[0].mxu0
      %v4391 = vpop.f32.mrb[0].mxu0
      %v4392 = vadd.f32 0.0, %v4391
      %v4393 = vpop.f32.mrb[0].mxu0
      %4394 = vmatprep.mubr.bf16.mxu0 0
      %4395 = vmatmul.mubr.bf16.gmra.mrb[0].mxu0 %v2735
      %v4396 = vpop.f32.mrb[0].mxu0
      %v4397 = vadd.f32 0.0, %v4396
      %v4398 = vpop.f32.mrb[0].mxu0
      %v4399 = vpop.f32.mrb[0].mxu0
      %v4400 = vadd.f32 0.0, %v4399
      %v4401 = vpop.f32.mrb[0].mxu0
      %4402 = vmatprep.mubr.bf16.mxu0 0
      %4403 = vmatmul.mubr.bf16.gmra.mrb[0].mxu0 %v2738
      %v4404 = vpop.f32.mrb[0].mxu0
      %v4405 = vadd.f32 0.0, %v4404
      %v4406 = vpop.f32.mrb[0].mxu0
      %v4407 = vpop.f32.mrb[0].mxu0
      %v4408 = vadd.f32 0.0, %v4407
      %v4409 = vpop.f32.mrb[0].mxu0
      %4410 = vmatprep.mubr.bf16.mxu0 0
      %4411 = vmatmul.mubr.bf16.gmra.mrb[0].mxu0 %v2741
      %v4412 = vpop.f32.mrb[0].mxu0
      %v4413 = vadd.f32 0.0, %v4412
      %v4414 = vpop.f32.mrb[0].mxu0
      %v4415 = vpop.f32.mrb[0].mxu0
      %v4416 = vadd.f32 0.0, %v4415
      %v4417 = vpop.f32.mrb[0].mxu0
      %4418 = vmatprep.mubr.bf16.mxu0 0
      %4419 = vmatmul.mubr.bf16.gmra.mrb[0].mxu0 %v2744
      %v4420 = vpop.f32.mrb[0].mxu0
      %v4421 = vadd.f32 0.0, %v4420
      %v4422 = vpop.f32.mrb[0].mxu0
      %v4423 = vpop.f32.mrb[0].mxu0
      %v4424 = vadd.f32 0.0, %v4423
      %v4425 = vpop.f32.mrb[0].mxu0
      %4426 = vmatprep.mubr.bf16.mxu0 0
      %4427 = vmatmul.mubr.bf16.gmra.mrb[0].mxu0 %v3679
      %v4428 = vpop.f32.mrb[0].mxu0
      %v4429 = vadd.f32 0.0, %v4428
      %v4430 = vpop.f32.mrb[0].mxu0
      %v4431 = vpop.f32.mrb[0].mxu0
      %v4432 = vadd.f32 0.0, %v4431
      %v4433 = vpop.f32.mrb[0].mxu0
      %4434 = vmatprep.mubr.bf16.mxu0 0
      %4435 = vmatmul.mubr.bf16.gmra.mrb[0].mxu0 %v493
      %v4436 = vpop.f32.mrb[0].mxu0
      %v4437 = vadd.f32 0.0, %v4436
      %v4438 = vpop.f32.mrb[0].mxu0
      %v4439 = vpop.f32.mrb[0].mxu0
      %v4440 = vadd.f32 0.0, %v4439
      %v4441 = vpop.f32.mrb[0].mxu0
      %4442 = vdwg.mxu0
      %v4443 = vadd.f32 %v4245, %v4317
      %v4444 = vadd.f32 %v4246, %v4320
      %v4445 = vadd.f32 %v4247, %v4325
      %v4446 = vadd.f32 %v4248, %v4328
      %v4447 = vadd.f32 %v4249, %v4333
      %v4448 = vadd.f32 %v4250, %v4336
      %v4449 = vadd.f32 %v4251, %v4341
      %v4450 = vadd.f32 %v4252, %v4344
      %v4451 = vadd.f32 %v4253, %v4349
      %v4452 = vadd.f32 %v4254, %v4352
      %v4453 = vadd.f32 %v4255, %v4357
      %v4454 = vadd.f32 %v4256, %v4360
      %v4455 = vadd.f32 %v4257, %v4365
      %v4456 = vadd.f32 %v4258, %v4368
      %v4457 = vadd.f32 %v4259, %v4373
      %v4458 = vadd.f32 %v4260, %v4376
      %v4459 = vadd.f32 %v4261, %v4381
      %v4460 = vadd.f32 %v4262, %v4384
      %v4461 = vadd.f32 %v4263, %v4389
      %v4462 = vadd.f32 %v4264, %v4392
      %v4463 = vadd.f32 %v4265, %v4397
      %v4464 = vadd.f32 %v4266, %v4400
      %v4465 = vadd.f32 %v4267, %v4405
      %v4466 = vadd.f32 %v4268, %v4408
      %v4467 = vadd.f32 %v4269, %v4413
      %v4468 = vadd.f32 %v4270, %v4416
      %v4469 = vadd.f32 %v4271, %v4421
      %v4470 = vadd.f32 %v4272, %v4424
      %v4471 = vadd.f32 %v4273, %v4429
      %v4472 = vadd.f32 %v4274, %v4432
      %v4473 = vadd.f32 %v4275, %v4437
      %v4474 = vadd.f32 %v4276, %v4440
      %s4475 = scalar_lea.vmem %s3, 32
      %v4476 = vld [vmem:[%s4475] sm:$0xf]
      %v4478 = vsel %vm540, %v4476, 0
      %4480 = vmatprep.subr.bf16.mxu0 0
      %4481 = vmatpush1.bf16.msra.mxu0 %v4478
      %4482 = vmatprep.subr.bf16.mxu0 0
      %4483 = vmatpush1.bf16.msra.mxu0 0
      %4484 = vmatprep.subr.bf16.mxu0 0
      %4485 = vmatpush1.bf16.msra.mxu0 0
      %4486 = vmatprep.subr.bf16.mxu0 0
      %4487 = vmatpush1.bf16.msra.mxu0 0
      %4488 = vmatprep.subr.bf16.mxu0 0
      %4489 = vmatpush1.bf16.msra.mxu0 0
      %4490 = vmatprep.subr.bf16.mxu0 0
      %4491 = vmatpush1.bf16.msra.mxu0 0
      %4492 = vmatprep.subr.bf16.mxu0 0
      %4493 = vmatpush1.bf16.msra.mxu0 0
      %4494 = vmatprep.subr.bf16.mxu0 0
      %4495 = vmatpush1.bf16.msra.mxu0 0
      %4496 = vmatprep.subr.bf16.mxu0 0
      %4497 = vmatpush1.bf16.msra.mxu0 0
      %4498 = vmatprep.subr.bf16.mxu0 0
      %4499 = vmatpush1.bf16.msra.mxu0 0
      %4500 = vmatprep.subr.bf16.mxu0 0
      %4501 = vmatpush1.bf16.msra.mxu0 0
      %4502 = vmatprep.subr.bf16.mxu0 0
      %4503 = vmatpush1.bf16.msra.mxu0 0
      %4504 = vmatprep.subr.bf16.mxu0 0
      %4505 = vmatpush1.bf16.msra.mxu0 0
      %4506 = vmatprep.subr.bf16.mxu0 0
      %4507 = vmatpush1.bf16.msra.mxu0 0
      %4508 = vmatprep.subr.bf16.mxu0 0
      %4509 = vmatpush1.bf16.msra.mxu0 0
      %4510 = vmatprep.subr.bf16.mxu0 0
      %4511 = vmatpush1.bf16.msra.mxu0 0
      %4512 = vmatprep.mubr.bf16.mxu0 0
      %4513 = vmatmul.mubr.bf16.gmra.mrb[0].mxu0 %v3236
      %v4514 = vpop.f32.mrb[0].mxu0
      %v4515 = vadd.f32 0.0, %v4514
      %v4516 = vpop.f32.mrb[0].mxu0
      %v4517 = vpop.f32.mrb[0].mxu0
      %v4518 = vadd.f32 0.0, %v4517
      %v4519 = vpop.f32.mrb[0].mxu0
      %4520 = vmatprep.mubr.bf16.mxu0 0
      %4521 = vmatmul.mubr.bf16.gmra.mrb[0].mxu0 %v3239
      %v4522 = vpop.f32.mrb[0].mxu0
      %v4523 = vadd.f32 0.0, %v4522
      %v4524 = vpop.f32.mrb[0].mxu0
      %v4525 = vpop.f32.mrb[0].mxu0
      %v4526 = vadd.f32 0.0, %v4525
      %v4527 = vpop.f32.mrb[0].mxu0
      %4528 = vmatprep.mubr.bf16.mxu0 0
      %4529 = vmatmul.mubr.bf16.gmra.mrb[0].mxu0 %v3242
      %v4530 = vpop.f32.mrb[0].mxu0
      %v4531 = vadd.f32 0.0, %v4530
      %v4532 = vpop.f32.mrb[0].mxu0
      %v4533 = vpop.f32.mrb[0].mxu0
      %v4534 = vadd.f32 0.0, %v4533
      %v4535 = vpop.f32.mrb[0].mxu0
      %4536 = vmatprep.mubr.bf16.mxu0 0
      %4537 = vmatmul.mubr.bf16.gmra.mrb[0].mxu0 %v3245
      %v4538 = vpop.f32.mrb[0].mxu0
      %v4539 = vadd.f32 0.0, %v4538
      %v4540 = vpop.f32.mrb[0].mxu0
      %v4541 = vpop.f32.mrb[0].mxu0
      %v4542 = vadd.f32 0.0, %v4541
      %v4543 = vpop.f32.mrb[0].mxu0
      %4544 = vmatprep.mubr.bf16.mxu0 0
      %4545 = vmatmul.mubr.bf16.gmra.mrb[0].mxu0 %v3248
      %v4546 = vpop.f32.mrb[0].mxu0
      %v4547 = vadd.f32 0.0, %v4546
      %v4548 = vpop.f32.mrb[0].mxu0
      %v4549 = vpop.f32.mrb[0].mxu0
      %v4550 = vadd.f32 0.0, %v4549
      %v4551 = vpop.f32.mrb[0].mxu0
      %4552 = vmatprep.mubr.bf16.mxu0 0
      %4553 = vmatmul.mubr.bf16.gmra.mrb[0].mxu0 %v3251
      %v4554 = vpop.f32.mrb[0].mxu0
      %v4555 = vadd.f32 0.0, %v4554
      %v4556 = vpop.f32.mrb[0].mxu0
      %v4557 = vpop.f32.mrb[0].mxu0
      %v4558 = vadd.f32 0.0, %v4557
      %v4559 = vpop.f32.mrb[0].mxu0
      %4560 = vmatprep.mubr.bf16.mxu0 0
      %4561 = vmatmul.mubr.bf16.gmra.mrb[0].mxu0 %v3254
      %v4562 = vpop.f32.mrb[0].mxu0
      %v4563 = vadd.f32 0.0, %v4562
      %v4564 = vpop.f32.mrb[0].mxu0
      %v4565 = vpop.f32.mrb[0].mxu0
      %v4566 = vadd.f32 0.0, %v4565
      %v4567 = vpop.f32.mrb[0].mxu0
      %4568 = vmatprep.mubr.bf16.mxu0 0
      %4569 = vmatmul.mubr.bf16.gmra.mrb[0].mxu0 %v3257
      %v4570 = vpop.f32.mrb[0].mxu0
      %v4571 = vadd.f32 0.0, %v4570
      %v4572 = vpop.f32.mrb[0].mxu0
      %v4573 = vpop.f32.mrb[0].mxu0
      %v4574 = vadd.f32 0.0, %v4573
      %v4575 = vpop.f32.mrb[0].mxu0
      %4576 = vmatprep.mubr.bf16.mxu0 0
      %4577 = vmatmul.mubr.bf16.gmra.mrb[0].mxu0 %v3260
      %v4578 = vpop.f32.mrb[0].mxu0
      %v4579 = vadd.f32 0.0, %v4578
      %v4580 = vpop.f32.mrb[0].mxu0
      %v4581 = vpop.f32.mrb[0].mxu0
      %v4582 = vadd.f32 0.0, %v4581
      %v4583 = vpop.f32.mrb[0].mxu0
      %4584 = vmatprep.mubr.bf16.mxu0 0
      %4585 = vmatmul.mubr.bf16.gmra.mrb[0].mxu0 %v3263
      %v4586 = vpop.f32.mrb[0].mxu0
      %v4587 = vadd.f32 0.0, %v4586
      %v4588 = vpop.f32.mrb[0].mxu0
      %v4589 = vpop.f32.mrb[0].mxu0
      %v4590 = vadd.f32 0.0, %v4589
      %v4591 = vpop.f32.mrb[0].mxu0
      %4592 = vmatprep.mubr.bf16.mxu0 0
      %4593 = vmatmul.mubr.bf16.gmra.mrb[0].mxu0 %v3266
      %v4594 = vpop.f32.mrb[0].mxu0
      %v4595 = vadd.f32 0.0, %v4594
      %v4596 = vpop.f32.mrb[0].mxu0
      %v4597 = vpop.f32.mrb[0].mxu0
      %v4598 = vadd.f32 0.0, %v4597
      %v4599 = vpop.f32.mrb[0].mxu0
      %4600 = vmatprep.mubr.bf16.mxu0 0
      %4601 = vmatmul.mubr.bf16.gmra.mrb[0].mxu0 %v3269
      %v4602 = vpop.f32.mrb[0].mxu0
      %v4603 = vadd.f32 0.0, %v4602
      %v4604 = vpop.f32.mrb[0].mxu0
      %v4605 = vpop.f32.mrb[0].mxu0
      %v4606 = vadd.f32 0.0, %v4605
      %v4607 = vpop.f32.mrb[0].mxu0
      %4608 = vmatprep.mubr.bf16.mxu0 0
      %4609 = vmatmul.mubr.bf16.gmra.mrb[0].mxu0 %v3272
      %v4610 = vpop.f32.mrb[0].mxu0
      %v4611 = vadd.f32 0.0, %v4610
      %v4612 = vpop.f32.mrb[0].mxu0
      %v4613 = vpop.f32.mrb[0].mxu0
      %v4614 = vadd.f32 0.0, %v4613
      %v4615 = vpop.f32.mrb[0].mxu0
      %4616 = vmatprep.mubr.bf16.mxu0 0
      %4617 = vmatmul.mubr.bf16.gmra.mrb[0].mxu0 %v3275
      %v4618 = vpop.f32.mrb[0].mxu0
      %v4619 = vadd.f32 0.0, %v4618
      %v4620 = vpop.f32.mrb[0].mxu0
      %v4621 = vpop.f32.mrb[0].mxu0
      %v4622 = vadd.f32 0.0, %v4621
      %v4623 = vpop.f32.mrb[0].mxu0
      %4624 = vmatprep.mubr.bf16.mxu0 0
      %4625 = vmatmul.mubr.bf16.gmra.mrb[0].mxu0 %v3881
      %v4626 = vpop.f32.mrb[0].mxu0
      %v4627 = vadd.f32 0.0, %v4626
      %v4628 = vpop.f32.mrb[0].mxu0
      %v4629 = vpop.f32.mrb[0].mxu0
      %v4630 = vadd.f32 0.0, %v4629
      %v4631 = vpop.f32.mrb[0].mxu0
      %4632 = vmatprep.mubr.bf16.mxu0 0
      %4633 = vmatmul.mubr.bf16.gmra.mrb[0].mxu0 %v493
      %v4634 = vpop.f32.mrb[0].mxu0
      %v4635 = vadd.f32 0.0, %v4634
      %v4636 = vpop.f32.mrb[0].mxu0
      %v4637 = vpop.f32.mrb[0].mxu0
      %v4638 = vadd.f32 0.0, %v4637
      %v4639 = vpop.f32.mrb[0].mxu0
      %4640 = vdwg.mxu0
      %v4641 = vadd.f32 %v4443, %v4515
      %v4642 = vadd.f32 %v4444, %v4518
      %v4643 = vadd.f32 %v4445, %v4523
      %v4644 = vadd.f32 %v4446, %v4526
      %v4645 = vadd.f32 %v4447, %v4531
      %v4646 = vadd.f32 %v4448, %v4534
      %v4647 = vadd.f32 %v4449, %v4539
      %v4648 = vadd.f32 %v4450, %v4542
      %v4649 = vadd.f32 %v4451, %v4547
      %v4650 = vadd.f32 %v4452, %v4550
      %v4651 = vadd.f32 %v4453, %v4555
      %v4652 = vadd.f32 %v4454, %v4558
      %v4653 = vadd.f32 %v4455, %v4563
      %v4654 = vadd.f32 %v4456, %v4566
      %v4655 = vadd.f32 %v4457, %v4571
      %v4656 = vadd.f32 %v4458, %v4574
      %v4657 = vadd.f32 %v4459, %v4579
      %v4658 = vadd.f32 %v4460, %v4582
      %v4659 = vadd.f32 %v4461, %v4587
      %v4660 = vadd.f32 %v4462, %v4590
      %v4661 = vadd.f32 %v4463, %v4595
      %v4662 = vadd.f32 %v4464, %v4598
      %v4663 = vadd.f32 %v4465, %v4603
      %v4664 = vadd.f32 %v4466, %v4606
      %v4665 = vadd.f32 %v4467, %v4611
      %v4666 = vadd.f32 %v4468, %v4614
      %v4667 = vadd.f32 %v4469, %v4619
      %v4668 = vadd.f32 %v4470, %v4622
      %v4669 = vadd.f32 %v4471, %v4627
      %v4670 = vadd.f32 %v4472, %v4630
      %v4671 = vadd.f32 %v4473, %v4635
      %v4672 = vadd.f32 %v4474, %v4638
      %v4673 = vld [vmem:[%s4] sm:$0x1]
      %v4675 = vlaneseq
      %v4676 = vshrl.u32 %v4675, 7
      %v4677 = vsub.s32 0, %v4676
      %v4678 = vrot.slane %v4673, %v4677
      %v4680 = vadd.f32 %v4641, %v4678
      %v4681 = vadd.f32 %v4642, %v4678
      %v4682 = vadd.f32 %v4643, %v4678
      %v4683 = vadd.f32 %v4644, %v4678
      %v4684 = vadd.f32 %v4645, %v4678
      %v4685 = vadd.f32 %v4646, %v4678
      %v4686 = vadd.f32 %v4647, %v4678
      %v4687 = vadd.f32 %v4648, %v4678
      %v4688 = vadd.f32 %v4649, %v4678
      %v4689 = vadd.f32 %v4650, %v4678
      %v4690 = vadd.f32 %v4651, %v4678
      %v4691 = vadd.f32 %v4652, %v4678
      %v4692 = vadd.f32 %v4653, %v4678
      %v4693 = vadd.f32 %v4654, %v4678
      %v4694 = vadd.f32 %v4655, %v4678
      %v4695 = vadd.f32 %v4656, %v4678
      %v4696 = vadd.f32 %v4657, %v4678
      %v4697 = vadd.f32 %v4658, %v4678
      %v4698 = vadd.f32 %v4659, %v4678
      %v4699 = vadd.f32 %v4660, %v4678
      %v4700 = vadd.f32 %v4661, %v4678
      %v4701 = vadd.f32 %v4662, %v4678
      %v4702 = vadd.f32 %v4663, %v4678
      %v4703 = vadd.f32 %v4664, %v4678
      %v4704 = vadd.f32 %v4665, %v4678
      %v4705 = vadd.f32 %v4666, %v4678
      %v4706 = vadd.f32 %v4667, %v4678
      %v4707 = vadd.f32 %v4668, %v4678
      %v4708 = vadd.f32 %v4669, %v4678
      %v4709 = vadd.f32 %v4670, %v4678
      %v4710 = vadd.f32 %v4671, %v4678
      %v4711 = vadd.f32 %v4672, %v4678
      %v4712 = vmax.f32 %v4680, 0.0
      %v4713 = vmax.f32 %v4681, 0.0
      %v4714 = vmax.f32 %v4682, 0.0
      %v4715 = vmax.f32 %v4683, 0.0
      %v4716 = vmax.f32 %v4684, 0.0
      %v4717 = vmax.f32 %v4685, 0.0
      %v4718 = vmax.f32 %v4686, 0.0
      %v4719 = vmax.f32 %v4687, 0.0
      %v4720 = vmax.f32 %v4688, 0.0
      %v4721 = vmax.f32 %v4689, 0.0
      %v4722 = vmax.f32 %v4690, 0.0
      %v4723 = vmax.f32 %v4691, 0.0
      %v4724 = vmax.f32 %v4692, 0.0
      %v4725 = vmax.f32 %v4693, 0.0
      %v4726 = vmax.f32 %v4694, 0.0
      %v4727 = vmax.f32 %v4695, 0.0
      %v4728 = vmax.f32 %v4696, 0.0
      %v4729 = vmax.f32 %v4697, 0.0
      %v4730 = vmax.f32 %v4698, 0.0
      %v4731 = vmax.f32 %v4699, 0.0
      %v4732 = vmax.f32 %v4700, 0.0
      %v4733 = vmax.f32 %v4701, 0.0
      %v4734 = vmax.f32 %v4702, 0.0
      %v4735 = vmax.f32 %v4703, 0.0
      %v4736 = vmax.f32 %v4704, 0.0
      %v4737 = vmax.f32 %v4705, 0.0
      %v4738 = vmax.f32 %v4706, 0.0
      %v4739 = vmax.f32 %v4707, 0.0
      %v4740 = vmax.f32 %v4708, 0.0
      %v4741 = vmax.f32 %v4709, 0.0
      %v4742 = vmax.f32 %v4710, 0.0
      %v4743 = vmax.f32 %v4711, 0.0
      %v4760 = vrot.slane %v4714, 7
      %vm4761 = vcmask 1041409
      %v4762 = vsel %vm4761, %v4760, %v4712
      %v4763 = vrot.slane %v4716, 6
      %vm4764 = vcmask 1042434
      %v4765 = vsel %vm4764, %v4763, %v4762
      %v4766 = vrot.slane %v4718, 5
      %vm4767 = vcmask 1043459
      %v4768 = vsel %vm4767, %v4766, %v4765
      %v4769 = vrot.slane %v4720, 4
      %vm4770 = vcmask 1044484
      %v4771 = vsel %vm4770, %v4769, %v4768
      %v4772 = vrot.slane %v4722, 3
      %vm4773 = vcmask 1045509
      %v4774 = vsel %vm4773, %v4772, %v4771
      %v4775 = vrot.slane %v4724, 2
      %vm4776 = vcmask 1046534
      %v4777 = vsel %vm4776, %v4775, %v4774
      %v4778 = vrot.slane %v4726, 1
      %vm4779 = vcmask 1047559
      %v4780 = vsel %vm4779, %v4778, %v4777
      %v4781 = vrot.slane %v4730, 7
      %v4782 = vsel %vm4761, %v4781, %v4728
      %v4783 = vrot.slane %v4732, 6
      %v4784 = vsel %vm4764, %v4783, %v4782
      %v4785 = vrot.slane %v4734, 5
      %v4786 = vsel %vm4767, %v4785, %v4784
      %v4787 = vrot.slane %v4736, 4
      %v4788 = vsel %vm4770, %v4787, %v4786
      %v4789 = vrot.slane %v4738, 3
      %v4790 = vsel %vm4773, %v4789, %v4788
      %v4791 = vrot.slane %v4740, 2
      %v4792 = vsel %vm4776, %v4791, %v4790
      %v4793 = vrot.slane %v4742, 1
      %v4794 = vsel %vm4779, %v4793, %v4792
      %v4797 = vrot.slane %v4712, 1
      %v4798 = vsel %vm4761, %v4714, %v4797
      %v4799 = vrot.slane %v4716, 7
      %v4800 = vsel %vm4764, %v4799, %v4798
      %v4801 = vrot.slane %v4718, 6
      %v4802 = vsel %vm4767, %v4801, %v4800
      %v4803 = vrot.slane %v4720, 5
      %v4804 = vsel %vm4770, %v4803, %v4802
      %v4805 = vrot.slane %v4722, 4
      %v4806 = vsel %vm4773, %v4805, %v4804
      %v4807 = vrot.slane %v4724, 3
      %v4808 = vsel %vm4776, %v4807, %v4806
      %v4809 = vrot.slane %v4726, 2
      %v4810 = vsel %vm4779, %v4809, %v4808
      %v4811 = vrot.slane %v4728, 1
      %v4812 = vsel %vm4761, %v4730, %v4811
      %v4813 = vrot.slane %v4732, 7
      %v4814 = vsel %vm4764, %v4813, %v4812
      %v4815 = vrot.slane %v4734, 6
      %v4816 = vsel %vm4767, %v4815, %v4814
      %v4817 = vrot.slane %v4736, 5
      %v4818 = vsel %vm4770, %v4817, %v4816
      %v4819 = vrot.slane %v4738, 4
      %v4820 = vsel %vm4773, %v4819, %v4818
      %v4821 = vrot.slane %v4740, 3
      %v4822 = vsel %vm4776, %v4821, %v4820
      %v4823 = vrot.slane %v4742, 2
      %v4824 = vsel %vm4779, %v4823, %v4822
      %4825 = vrot.lane.b32.xlu0 %v4810, 8
      %v4826 = vpop.permute.xlu0 %4825
      %4827 = vrot.lane.b32.xlu0 %v4824, 8
      %v4828 = vpop.permute.xlu0 %4827
      %v4831 = vrot.slane %v4712, 2
      %v4832 = vrot.slane %v4714, 1
      %v4833 = vsel %vm4761, %v4832, %v4831
      %v4834 = vsel %vm4764, %v4716, %v4833
      %v4835 = vrot.slane %v4718, 7
      %v4836 = vsel %vm4767, %v4835, %v4834
      %v4837 = vrot.slane %v4720, 6
      %v4838 = vsel %vm4770, %v4837, %v4836
      %v4839 = vrot.slane %v4722, 5
      %v4840 = vsel %vm4773, %v4839, %v4838
      %v4841 = vrot.slane %v4724, 4
      %v4842 = vsel %vm4776, %v4841, %v4840
      %v4843 = vrot.slane %v4726, 3
      %v4844 = vsel %vm4779, %v4843, %v4842
      %v4845 = vrot.slane %v4728, 2
      %v4846 = vrot.slane %v4730, 1
      %v4847 = vsel %vm4761, %v4846, %v4845
      %v4848 = vsel %vm4764, %v4732, %v4847
      %v4849 = vrot.slane %v4734, 7
      %v4850 = vsel %vm4767, %v4849, %v4848
      %v4851 = vrot.slane %v4736, 6
      %v4852 = vsel %vm4770, %v4851, %v4850
      %v4853 = vrot.slane %v4738, 5
      %v4854 = vsel %vm4773, %v4853, %v4852
      %v4855 = vrot.slane %v4740, 4
      %v4856 = vsel %vm4776, %v4855, %v4854
      %v4857 = vrot.slane %v4742, 3
      %v4858 = vsel %vm4779, %v4857, %v4856
      %4859 = vrot.lane.b32.xlu0 %v4844, 16
      %v4860 = vpop.permute.xlu0 %4859
      %4861 = vrot.lane.b32.xlu0 %v4858, 16
      %v4862 = vpop.permute.xlu0 %4861
      %v4865 = vrot.slane %v4712, 3
      %v4866 = vrot.slane %v4714, 2
      %v4867 = vsel %vm4761, %v4866, %v4865
      %v4868 = vrot.slane %v4716, 1
      %v4869 = vsel %vm4764, %v4868, %v4867
      %v4870 = vsel %vm4767, %v4718, %v4869
      %v4871 = vrot.slane %v4720, 7
      %v4872 = vsel %vm4770, %v4871, %v4870
      %v4873 = vrot.slane %v4722, 6
      %v4874 = vsel %vm4773, %v4873, %v4872
      %v4875 = vrot.slane %v4724, 5
      %v4876 = vsel %vm4776, %v4875, %v4874
      %v4877 = vrot.slane %v4726, 4
      %v4878 = vsel %vm4779, %v4877, %v4876
      %v4879 = vrot.slane %v4728, 3
      %v4880 = vrot.slane %v4730, 2
      %v4881 = vsel %vm4761, %v4880, %v4879
      %v4882 = vrot.slane %v4732, 1
      %v4883 = vsel %vm4764, %v4882, %v4881
      %v4884 = vsel %vm4767, %v4734, %v4883
      %v4885 = vrot.slane %v4736, 7
      %v4886 = vsel %vm4770, %v4885, %v4884
      %v4887 = vrot.slane %v4738, 6
      %v4888 = vsel %vm4773, %v4887, %v4886
      %v4889 = vrot.slane %v4740, 5
      %v4890 = vsel %vm4776, %v4889, %v4888
      %v4891 = vrot.slane %v4742, 4
      %v4892 = vsel %vm4779, %v4891, %v4890
      %4893 = vrot.lane.b32.xlu0 %v4878, 24
      %v4894 = vpop.permute.xlu0 %4893
      %4895 = vrot.lane.b32.xlu0 %v4892, 24
      %v4896 = vpop.permute.xlu0 %4895
      %v4899 = vrot.slane %v4712, 4
      %v4900 = vrot.slane %v4714, 3
      %v4901 = vsel %vm4761, %v4900, %v4899
      %v4902 = vrot.slane %v4716, 2
      %v4903 = vsel %vm4764, %v4902, %v4901
      %v4904 = vrot.slane %v4718, 1
      %v4905 = vsel %vm4767, %v4904, %v4903
      %v4906 = vsel %vm4770, %v4720, %v4905
      %v4907 = vrot.slane %v4722, 7
      %v4908 = vsel %vm4773, %v4907, %v4906
      %v4909 = vrot.slane %v4724, 6
      %v4910 = vsel %vm4776, %v4909, %v4908
      %v4911 = vrot.slane %v4726, 5
      %v4912 = vsel %vm4779, %v4911, %v4910
      %v4913 = vrot.slane %v4728, 4
      %v4914 = vrot.slane %v4730, 3
      %v4915 = vsel %vm4761, %v4914, %v4913
      %v4916 = vrot.slane %v4732, 2
      %v4917 = vsel %vm4764, %v4916, %v4915
      %v4918 = vrot.slane %v4734, 1
      %v4919 = vsel %vm4767, %v4918, %v4917
      %v4920 = vsel %vm4770, %v4736, %v4919
      %v4921 = vrot.slane %v4738, 7
      %v4922 = vsel %vm4773, %v4921, %v4920
      %v4923 = vrot.slane %v4740, 6
      %v4924 = vsel %vm4776, %v4923, %v4922
      %v4925 = vrot.slane %v4742, 5
      %v4926 = vsel %vm4779, %v4925, %v4924
      %4927 = vrot.lane.b32.xlu0 %v4912, 32
      %v4928 = vpop.permute.xlu0 %4927
      %4929 = vrot.lane.b32.xlu0 %v4926, 32
      %v4930 = vpop.permute.xlu0 %4929
      %v4933 = vrot.slane %v4712, 5
      %v4934 = vrot.slane %v4714, 4
      %v4935 = vsel %vm4761, %v4934, %v4933
      %v4936 = vrot.slane %v4716, 3
      %v4937 = vsel %vm4764, %v4936, %v4935
      %v4938 = vrot.slane %v4718, 2
      %v4939 = vsel %vm4767, %v4938, %v4937
      %v4940 = vrot.slane %v4720, 1
      %v4941 = vsel %vm4770, %v4940, %v4939
      %v4942 = vsel %vm4773, %v4722, %v4941
      %v4943 = vrot.slane %v4724, 7
      %v4944 = vsel %vm4776, %v4943, %v4942
      %v4945 = vrot.slane %v4726, 6
      %v4946 = vsel %vm4779, %v4945, %v4944
      %v4947 = vrot.slane %v4728, 5
      %v4948 = vrot.slane %v4730, 4
      %v4949 = vsel %vm4761, %v4948, %v4947
      %v4950 = vrot.slane %v4732, 3
      %v4951 = vsel %vm4764, %v4950, %v4949
      %v4952 = vrot.slane %v4734, 2
      %v4953 = vsel %vm4767, %v4952, %v4951
      %v4954 = vrot.slane %v4736, 1
      %v4955 = vsel %vm4770, %v4954, %v4953
      %v4956 = vsel %vm4773, %v4738, %v4955
      %v4957 = vrot.slane %v4740, 7
      %v4958 = vsel %vm4776, %v4957, %v4956
      %v4959 = vrot.slane %v4742, 6
      %v4960 = vsel %vm4779, %v4959, %v4958
      %4961 = vrot.lane.b32.xlu0 %v4946, 40
      %v4962 = vpop.permute.xlu0 %4961
      %4963 = vrot.lane.b32.xlu0 %v4960, 40
      %v4964 = vpop.permute.xlu0 %4963
      %v4967 = vrot.slane %v4712, 6
      %v4968 = vrot.slane %v4714, 5
      %v4969 = vsel %vm4761, %v4968, %v4967
      %v4970 = vrot.slane %v4716, 4
      %v4971 = vsel %vm4764, %v4970, %v4969
      %v4972 = vrot.slane %v4718, 3
      %v4973 = vsel %vm4767, %v4972, %v4971
      %v4974 = vrot.slane %v4720, 2
      %v4975 = vsel %vm4770, %v4974, %v4973
      %v4976 = vrot.slane %v4722, 1
      %v4977 = vsel %vm4773, %v4976, %v4975
      %v4978 = vsel %vm4776, %v4724, %v4977
      %v4979 = vrot.slane %v4726, 7
      %v4980 = vsel %vm4779, %v4979, %v4978
      %v4981 = vrot.slane %v4728, 6
      %v4982 = vrot.slane %v4730, 5
      %v4983 = vsel %vm4761, %v4982, %v4981
      %v4984 = vrot.slane %v4732, 4
      %v4985 = vsel %vm4764, %v4984, %v4983
      %v4986 = vrot.slane %v4734, 3
      %v4987 = vsel %vm4767, %v4986, %v4985
      %v4988 = vrot.slane %v4736, 2
      %v4989 = vsel %vm4770, %v4988, %v4987
      %v4990 = vrot.slane %v4738, 1
      %v4991 = vsel %vm4773, %v4990, %v4989
      %v4992 = vsel %vm4776, %v4740, %v4991
      %v4993 = vrot.slane %v4742, 7
      %v4994 = vsel %vm4779, %v4993, %v4992
      %4995 = vrot.lane.b32.xlu0 %v4980, 48
      %v4996 = vpop.permute.xlu0 %4995
      %4997 = vrot.lane.b32.xlu0 %v4994, 48
      %v4998 = vpop.permute.xlu0 %4997
      %v5001 = vrot.slane %v4712, 7
      %v5002 = vrot.slane %v4714, 6
      %v5003 = vsel %vm4761, %v5002, %v5001
      %v5004 = vrot.slane %v4716, 5
      %v5005 = vsel %vm4764, %v5004, %v5003
      %v5006 = vrot.slane %v4718, 4
      %v5007 = vsel %vm4767, %v5006, %v5005
      %v5008 = vrot.slane %v4720, 3
      %v5009 = vsel %vm4770, %v5008, %v5007
      %v5010 = vrot.slane %v4722, 2
      %v5011 = vsel %vm4773, %v5010, %v5009
      %v5012 = vrot.slane %v4724, 1
      %v5013 = vsel %vm4776, %v5012, %v5011
      %v5014 = vsel %vm4779, %v4726, %v5013
      %v5015 = vrot.slane %v4728, 7
      %v5016 = vrot.slane %v4730, 6
      %v5017 = vsel %vm4761, %v5016, %v5015
      %v5018 = vrot.slane %v4732, 5
      %v5019 = vsel %vm4764, %v5018, %v5017
      %v5020 = vrot.slane %v4734, 4
      %v5021 = vsel %vm4767, %v5020, %v5019
      %v5022 = vrot.slane %v4736, 3
      %v5023 = vsel %vm4770, %v5022, %v5021
      %v5024 = vrot.slane %v4738, 2
      %v5025 = vsel %vm4773, %v5024, %v5023
      %v5026 = vrot.slane %v4740, 1
      %v5027 = vsel %vm4776, %v5026, %v5025
      %v5028 = vsel %vm4779, %v4742, %v5027
      %5029 = vrot.lane.b32.xlu0 %v5014, 56
      %v5030 = vpop.permute.xlu0 %5029
      %5031 = vrot.lane.b32.xlu0 %v5028, 56
      %v5032 = vpop.permute.xlu0 %5031
      %v5051 = vrot.slane %v4715, 7
      %v5052 = vsel %vm4761, %v5051, %v4713
      %v5053 = vrot.slane %v4717, 6
      %v5054 = vsel %vm4764, %v5053, %v5052
      %v5055 = vrot.slane %v4719, 5
      %v5056 = vsel %vm4767, %v5055, %v5054
      %v5057 = vrot.slane %v4721, 4
      %v5058 = vsel %vm4770, %v5057, %v5056
      %v5059 = vrot.slane %v4723, 3
      %v5060 = vsel %vm4773, %v5059, %v5058
      %v5061 = vrot.slane %v4725, 2
      %v5062 = vsel %vm4776, %v5061, %v5060
      %v5063 = vrot.slane %v4727, 1
      %v5064 = vsel %vm4779, %v5063, %v5062
      %v5065 = vrot.slane %v4731, 7
      %v5066 = vsel %vm4761, %v5065, %v4729
      %v5067 = vrot.slane %v4733, 6
      %v5068 = vsel %vm4764, %v5067, %v5066
      %v5069 = vrot.slane %v4735, 5
      %v5070 = vsel %vm4767, %v5069, %v5068
      %v5071 = vrot.slane %v4737, 4
      %v5072 = vsel %vm4770, %v5071, %v5070
      %v5073 = vrot.slane %v4739, 3
      %v5074 = vsel %vm4773, %v5073, %v5072
      %v5075 = vrot.slane %v4741, 2
      %v5076 = vsel %vm4776, %v5075, %v5074
      %v5077 = vrot.slane %v4743, 1
      %v5078 = vsel %vm4779, %v5077, %v5076
      %5079 = vrot.lane.b32.xlu0 %v5064, 64
      %v5080 = vpop.permute.xlu0 %5079
      %5081 = vrot.lane.b32.xlu0 %v5078, 64
      %v5082 = vpop.permute.xlu0 %5081
      %v5085 = vrot.slane %v4713, 1
      %v5086 = vsel %vm4761, %v4715, %v5085
      %v5087 = vrot.slane %v4717, 7
      %v5088 = vsel %vm4764, %v5087, %v5086
      %v5089 = vrot.slane %v4719, 6
      %v5090 = vsel %vm4767, %v5089, %v5088
      %v5091 = vrot.slane %v4721, 5
      %v5092 = vsel %vm4770, %v5091, %v5090
      %v5093 = vrot.slane %v4723, 4
      %v5094 = vsel %vm4773, %v5093, %v5092
      %v5095 = vrot.slane %v4725, 3
      %v5096 = vsel %vm4776, %v5095, %v5094
      %v5097 = vrot.slane %v4727, 2
      %v5098 = vsel %vm4779, %v5097, %v5096
      %v5099 = vrot.slane %v4729, 1
      %v5100 = vsel %vm4761, %v4731, %v5099
      %v5101 = vrot.slane %v4733, 7
      %v5102 = vsel %vm4764, %v5101, %v5100
      %v5103 = vrot.slane %v4735, 6
      %v5104 = vsel %vm4767, %v5103, %v5102
      %v5105 = vrot.slane %v4737, 5
      %v5106 = vsel %vm4770, %v5105, %v5104
      %v5107 = vrot.slane %v4739, 4
      %v5108 = vsel %vm4773, %v5107, %v5106
      %v5109 = vrot.slane %v4741, 3
      %v5110 = vsel %vm4776, %v5109, %v5108
      %v5111 = vrot.slane %v4743, 2
      %v5112 = vsel %vm4779, %v5111, %v5110
      %5113 = vrot.lane.b32.xlu0 %v5098, 72
      %v5114 = vpop.permute.xlu0 %5113
      %5115 = vrot.lane.b32.xlu0 %v5112, 72
      %v5116 = vpop.permute.xlu0 %5115
      %v5119 = vrot.slane %v4713, 2
      %v5120 = vrot.slane %v4715, 1
      %v5121 = vsel %vm4761, %v5120, %v5119
      %v5122 = vsel %vm4764, %v4717, %v5121
      %v5123 = vrot.slane %v4719, 7
      %v5124 = vsel %vm4767, %v5123, %v5122
      %v5125 = vrot.slane %v4721, 6
      %v5126 = vsel %vm4770, %v5125, %v5124
      %v5127 = vrot.slane %v4723, 5
      %v5128 = vsel %vm4773, %v5127, %v5126
      %v5129 = vrot.slane %v4725, 4
      %v5130 = vsel %vm4776, %v5129, %v5128
      %v5131 = vrot.slane %v4727, 3
      %v5132 = vsel %vm4779, %v5131, %v5130
      %v5133 = vrot.slane %v4729, 2
      %v5134 = vrot.slane %v4731, 1
      %v5135 = vsel %vm4761, %v5134, %v5133
      %v5136 = vsel %vm4764, %v4733, %v5135
      %v5137 = vrot.slane %v4735, 7
      %v5138 = vsel %vm4767, %v5137, %v5136
      %v5139 = vrot.slane %v4737, 6
      %v5140 = vsel %vm4770, %v5139, %v5138
      %v5141 = vrot.slane %v4739, 5
      %v5142 = vsel %vm4773, %v5141, %v5140
      %v5143 = vrot.slane %v4741, 4
      %v5144 = vsel %vm4776, %v5143, %v5142
      %v5145 = vrot.slane %v4743, 3
      %v5146 = vsel %vm4779, %v5145, %v5144
      %5147 = vrot.lane.b32.xlu0 %v5132, 80
      %v5148 = vpop.permute.xlu0 %5147
      %5149 = vrot.lane.b32.xlu0 %v5146, 80
      %v5150 = vpop.permute.xlu0 %5149
      %v5153 = vrot.slane %v4713, 3
      %v5154 = vrot.slane %v4715, 2
      %v5155 = vsel %vm4761, %v5154, %v5153
      %v5156 = vrot.slane %v4717, 1
      %v5157 = vsel %vm4764, %v5156, %v5155
      %v5158 = vsel %vm4767, %v4719, %v5157
      %v5159 = vrot.slane %v4721, 7
      %v5160 = vsel %vm4770, %v5159, %v5158
      %v5161 = vrot.slane %v4723, 6
      %v5162 = vsel %vm4773, %v5161, %v5160
      %v5163 = vrot.slane %v4725, 5
      %v5164 = vsel %vm4776, %v5163, %v5162
      %v5165 = vrot.slane %v4727, 4
      %v5166 = vsel %vm4779, %v5165, %v5164
      %v5167 = vrot.slane %v4729, 3
      %v5168 = vrot.slane %v4731, 2
      %v5169 = vsel %vm4761, %v5168, %v5167
      %v5170 = vrot.slane %v4733, 1
      %v5171 = vsel %vm4764, %v5170, %v5169
      %v5172 = vsel %vm4767, %v4735, %v5171
      %v5173 = vrot.slane %v4737, 7
      %v5174 = vsel %vm4770, %v5173, %v5172
      %v5175 = vrot.slane %v4739, 6
      %v5176 = vsel %vm4773, %v5175, %v5174
      %v5177 = vrot.slane %v4741, 5
      %v5178 = vsel %vm4776, %v5177, %v5176
      %v5179 = vrot.slane %v4743, 4
      %v5180 = vsel %vm4779, %v5179, %v5178
      %5181 = vrot.lane.b32.xlu0 %v5166, 88
      %v5182 = vpop.permute.xlu0 %5181
      %5183 = vrot.lane.b32.xlu0 %v5180, 88
      %v5184 = vpop.permute.xlu0 %5183
      %v5187 = vrot.slane %v4713, 4
      %v5188 = vrot.slane %v4715, 3
      %v5189 = vsel %vm4761, %v5188, %v5187
      %v5190 = vrot.slane %v4717, 2
      %v5191 = vsel %vm4764, %v5190, %v5189
      %v5192 = vrot.slane %v4719, 1
      %v5193 = vsel %vm4767, %v5192, %v5191
      %v5194 = vsel %vm4770, %v4721, %v5193
      %v5195 = vrot.slane %v4723, 7
      %v5196 = vsel %vm4773, %v5195, %v5194
      %v5197 = vrot.slane %v4725, 6
      %v5198 = vsel %vm4776, %v5197, %v5196
      %v5199 = vrot.slane %v4727, 5
      %v5200 = vsel %vm4779, %v5199, %v5198
      %v5201 = vrot.slane %v4729, 4
      %v5202 = vrot.slane %v4731, 3
      %v5203 = vsel %vm4761, %v5202, %v5201
      %v5204 = vrot.slane %v4733, 2
      %v5205 = vsel %vm4764, %v5204, %v5203
      %v5206 = vrot.slane %v4735, 1
      %v5207 = vsel %vm4767, %v5206, %v5205
      %v5208 = vsel %vm4770, %v4737, %v5207
      %v5209 = vrot.slane %v4739, 7
      %v5210 = vsel %vm4773, %v5209, %v5208
      %v5211 = vrot.slane %v4741, 6
      %v5212 = vsel %vm4776, %v5211, %v5210
      %v5213 = vrot.slane %v4743, 5
      %v5214 = vsel %vm4779, %v5213, %v5212
      %5215 = vrot.lane.b32.xlu0 %v5200, 96
      %v5216 = vpop.permute.xlu0 %5215
      %5217 = vrot.lane.b32.xlu0 %v5214, 96
      %v5218 = vpop.permute.xlu0 %5217
      %v5221 = vrot.slane %v4713, 5
      %v5222 = vrot.slane %v4715, 4
      %v5223 = vsel %vm4761, %v5222, %v5221
      %v5224 = vrot.slane %v4717, 3
      %v5225 = vsel %vm4764, %v5224, %v5223
      %v5226 = vrot.slane %v4719, 2
      %v5227 = vsel %vm4767, %v5226, %v5225
      %v5228 = vrot.slane %v4721, 1
      %v5229 = vsel %vm4770, %v5228, %v5227
      %v5230 = vsel %vm4773, %v4723, %v5229
      %v5231 = vrot.slane %v4725, 7
      %v5232 = vsel %vm4776, %v5231, %v5230
      %v5233 = vrot.slane %v4727, 6
      %v5234 = vsel %vm4779, %v5233, %v5232
      %v5235 = vrot.slane %v4729, 5
      %v5236 = vrot.slane %v4731, 4
      %v5237 = vsel %vm4761, %v5236, %v5235
      %v5238 = vrot.slane %v4733, 3
      %v5239 = vsel %vm4764, %v5238, %v5237
      %v5240 = vrot.slane %v4735, 2
      %v5241 = vsel %vm4767, %v5240, %v5239
      %v5242 = vrot.slane %v4737, 1
      %v5243 = vsel %vm4770, %v5242, %v5241
      %v5244 = vsel %vm4773, %v4739, %v5243
      %v5245 = vrot.slane %v4741, 7
      %v5246 = vsel %vm4776, %v5245, %v5244
      %v5247 = vrot.slane %v4743, 6
      %v5248 = vsel %vm4779, %v5247, %v5246
      %5249 = vrot.lane.b32.xlu0 %v5234, 104
      %v5250 = vpop.permute.xlu0 %5249
      %5251 = vrot.lane.b32.xlu0 %v5248, 104
      %v5252 = vpop.permute.xlu0 %5251
      %v5255 = vrot.slane %v4713, 6
      %v5256 = vrot.slane %v4715, 5
      %v5257 = vsel %vm4761, %v5256, %v5255
      %v5258 = vrot.slane %v4717, 4
      %v5259 = vsel %vm4764, %v5258, %v5257
      %v5260 = vrot.slane %v4719, 3
      %v5261 = vsel %vm4767, %v5260, %v5259
      %v5262 = vrot.slane %v4721, 2
      %v5263 = vsel %vm4770, %v5262, %v5261
      %v5264 = vrot.slane %v4723, 1
      %v5265 = vsel %vm4773, %v5264, %v5263
      %v5266 = vsel %vm4776, %v4725, %v5265
      %v5267 = vrot.slane %v4727, 7
      %v5268 = vsel %vm4779, %v5267, %v5266
      %v5269 = vrot.slane %v4729, 6
      %v5270 = vrot.slane %v4731, 5
      %v5271 = vsel %vm4761, %v5270, %v5269
      %v5272 = vrot.slane %v4733, 4
      %v5273 = vsel %vm4764, %v5272, %v5271
      %v5274 = vrot.slane %v4735, 3
      %v5275 = vsel %vm4767, %v5274, %v5273
      %v5276 = vrot.slane %v4737, 2
      %v5277 = vsel %vm4770, %v5276, %v5275
      %v5278 = vrot.slane %v4739, 1
      %v5279 = vsel %vm4773, %v5278, %v5277
      %v5280 = vsel %vm4776, %v4741, %v5279
      %v5281 = vrot.slane %v4743, 7
      %v5282 = vsel %vm4779, %v5281, %v5280
      %5283 = vrot.lane.b32.xlu0 %v5268, 112
      %v5284 = vpop.permute.xlu0 %5283
      %5285 = vrot.lane.b32.xlu0 %v5282, 112
      %v5286 = vpop.permute.xlu0 %5285
      %v5289 = vrot.slane %v4713, 7
      %v5290 = vrot.slane %v4715, 6
      %v5291 = vsel %vm4761, %v5290, %v5289
      %v5292 = vrot.slane %v4717, 5
      %v5293 = vsel %vm4764, %v5292, %v5291
      %v5294 = vrot.slane %v4719, 4
      %v5295 = vsel %vm4767, %v5294, %v5293
      %v5296 = vrot.slane %v4721, 3
      %v5297 = vsel %vm4770, %v5296, %v5295
      %v5298 = vrot.slane %v4723, 2
      %v5299 = vsel %vm4773, %v5298, %v5297
      %v5300 = vrot.slane %v4725, 1
      %v5301 = vsel %vm4776, %v5300, %v5299
      %v5302 = vsel %vm4779, %v4727, %v5301
      %v5303 = vrot.slane %v4729, 7
      %v5304 = vrot.slane %v4731, 6
      %v5305 = vsel %vm4761, %v5304, %v5303
      %v5306 = vrot.slane %v4733, 5
      %v5307 = vsel %vm4764, %v5306, %v5305
      %v5308 = vrot.slane %v4735, 4
      %v5309 = vsel %vm4767, %v5308, %v5307
      %v5310 = vrot.slane %v4737, 3
      %v5311 = vsel %vm4770, %v5310, %v5309
      %v5312 = vrot.slane %v4739, 2
      %v5313 = vsel %vm4773, %v5312, %v5311
      %v5314 = vrot.slane %v4741, 1
      %v5315 = vsel %vm4776, %v5314, %v5313
      %v5316 = vsel %vm4779, %v4743, %v5315
      %5317 = vrot.lane.b32.xlu0 %v5302, 120
      %v5318 = vpop.permute.xlu0 %5317
      %5319 = vrot.lane.b32.xlu0 %v5316, 120
      %v5320 = vpop.permute.xlu0 %5319
      %v5323 = vsel %vm491, %v4780, %v4826
      %v5324 = vsel %vm491, %v4794, %v4828
      %vm5325 = vcmask 130048
      %v5326 = vsel %vm5325, %v5323, %v4860
      %v5327 = vsel %vm5325, %v5324, %v4862
      %vm5328 = vcmask 195584
      %v5329 = vsel %vm5328, %v5326, %v4894
      %v5330 = vsel %vm5328, %v5327, %v4896
      %vm5331 = vcmask 261120
      %v5332 = vsel %vm5331, %v5329, %v4928
      %v5333 = vsel %vm5331, %v5330, %v4930
      %vm5334 = vcmask 326656
      %v5335 = vsel %vm5334, %v5332, %v4962
      %v5336 = vsel %vm5334, %v5333, %v4964
      %vm5337 = vcmask 392192
      %v5338 = vsel %vm5337, %v5335, %v4996
      %v5339 = vsel %vm5337, %v5336, %v4998
      %vm5340 = vcmask 457728
      %v5341 = vsel %vm5340, %v5338, %v5030
      %v5342 = vsel %vm5340, %v5339, %v5032
      %vm5343 = vcmask 523264
      %v5344 = vsel %vm5343, %v5341, %v5080
      %v5345 = vsel %vm5343, %v5342, %v5082
      %vm5346 = vcmask 588800
      %v5347 = vsel %vm5346, %v5344, %v5114
      %v5348 = vsel %vm5346, %v5345, %v5116
      %vm5349 = vcmask 654336
      %v5350 = vsel %vm5349, %v5347, %v5148
      %v5351 = vsel %vm5349, %v5348, %v5150
      %vm5352 = vcmask 719872
      %v5353 = vsel %vm5352, %v5350, %v5182
      %v5354 = vsel %vm5352, %v5351, %v5184
      %vm5355 = vcmask 785408
      %v5356 = vsel %vm5355, %v5353, %v5216
      %v5357 = vsel %vm5355, %v5354, %v5218
      %vm5358 = vcmask 850944
      %v5359 = vsel %vm5358, %v5356, %v5250
      %v5360 = vsel %vm5358, %v5357, %v5252
      %vm5361 = vcmask 916480
      %v5362 = vsel %vm5361, %v5359, %v5284
      %v5363 = vsel %vm5361, %v5360, %v5286
      %vm5364 = vcmask 982016
      %v5365 = vsel %vm5364, %v5362, %v5318
      %v5366 = vsel %vm5364, %v5363, %v5320
      %v5367 = vpack.c.bf16 %v5366, %v5365
      %v5369 = vunpack.c.l.b16 %v5367
      %v5370 = vunpack.c.h.b16 %v5367
      %v5371 = vpack.c.b16 %v5369, %v5369
      %v5372 = vpack.c.b16 %v5370, %v5370
      %5375 = vst [vmem:[%s258] sm:$0xf] %v5371
      %5376 = vst [vmem:[%s258 + $0x4] sm:$0xf] %v5372
      %v5377 = vcombine.high %v4712, %v4712
      %v5379 = vunpack.c.l.s4 1983009808
      %v5380 = vunpack.c.0.s8 %v5379
      %v5381 = vlaneseq
      %v5382 = vshrl.u32 %v5381, 7
      %v5383 = vsub.s32 %v5380, %v5382
      %v5384 = vrot.slane %v4712, %v5383
      %v5386 = vunpack.c.l.s4 1983009808
      %v5387 = vunpack.c.0.s8 %v5386
      %v5388 = vlaneseq
      %v5389 = vshrl.u32 %v5388, 7
      %v5390 = vsub.s32 %v5387, %v5389
      %v5391 = vrot.slane %v5377, %v5390
      %v5392 = vcombine.high %v5384, %v5384
      %v5393 = vcombine.high %v5391, %v5391
      %v5394 = vcombine.high %v4713, %v4713
      %v5396 = vunpack.c.l.s4 1983009808
      %v5397 = vunpack.c.0.s8 %v5396
      %v5398 = vlaneseq
      %v5399 = vshrl.u32 %v5398, 7
      %v5400 = vsub.s32 %v5397, %v5399
      %v5401 = vrot.slane %v4713, %v5400
      %v5403 = vunpack.c.l.s4 1983009808
      %v5404 = vunpack.c.0.s8 %v5403
      %v5405 = vlaneseq
      %v5406 = vshrl.u32 %v5405, 7
      %v5407 = vsub.s32 %v5404, %v5406
      %v5408 = vrot.slane %v5394, %v5407
      %v5409 = vcombine.high %v5401, %v5401
      %v5410 = vcombine.high %v5408, %v5408
      %v5411 = vcombine.high %v4714, %v4714
      %v5413 = vunpack.c.l.s4 1983009808
      %v5414 = vunpack.c.0.s8 %v5413
      %v5415 = vlaneseq
      %v5416 = vshrl.u32 %v5415, 7
      %v5417 = vsub.s32 %v5414, %v5416
      %v5418 = vrot.slane %v4714, %v5417
      %v5420 = vunpack.c.l.s4 1983009808
      %v5421 = vunpack.c.0.s8 %v5420
      %v5422 = vlaneseq
      %v5423 = vshrl.u32 %v5422, 7
      %v5424 = vsub.s32 %v5421, %v5423
      %v5425 = vrot.slane %v5411, %v5424
      %v5426 = vcombine.high %v5418, %v5418
      %v5427 = vcombine.high %v5425, %v5425
      %v5428 = vcombine.high %v4715, %v4715
      %v5430 = vunpack.c.l.s4 1983009808
      %v5431 = vunpack.c.0.s8 %v5430
      %v5432 = vlaneseq
      %v5433 = vshrl.u32 %v5432, 7
      %v5434 = vsub.s32 %v5431, %v5433
      %v5435 = vrot.slane %v4715, %v5434
      %v5437 = vunpack.c.l.s4 1983009808
      %v5438 = vunpack.c.0.s8 %v5437
      %v5439 = vlaneseq
      %v5440 = vshrl.u32 %v5439, 7
      %v5441 = vsub.s32 %v5438, %v5440
      %v5442 = vrot.slane %v5428, %v5441
      %v5443 = vcombine.high %v5435, %v5435
      %v5444 = vcombine.high %v5442, %v5442
      %v5445 = vcombine.high %v4716, %v4716
      %v5447 = vunpack.c.l.s4 1983009808
      %v5448 = vunpack.c.0.s8 %v5447
      %v5449 = vlaneseq
      %v5450 = vshrl.u32 %v5449, 7
      %v5451 = vsub.s32 %v5448, %v5450
      %v5452 = vrot.slane %v4716, %v5451
      %v5454 = vunpack.c.l.s4 1983009808
      %v5455 = vunpack.c.0.s8 %v5454
      %v5456 = vlaneseq
      %v5457 = vshrl.u32 %v5456, 7
      %v5458 = vsub.s32 %v5455, %v5457
      %v5459 = vrot.slane %v5445, %v5458
      %v5460 = vcombine.high %v5452, %v5452
      %v5461 = vcombine.high %v5459, %v5459
      %v5462 = vcombine.high %v4717, %v4717
      %v5464 = vunpack.c.l.s4 1983009808
      %v5465 = vunpack.c.0.s8 %v5464
      %v5466 = vlaneseq
      %v5467 = vshrl.u32 %v5466, 7
      %v5468 = vsub.s32 %v5465, %v5467
      %v5469 = vrot.slane %v4717, %v5468
      %v5471 = vunpack.c.l.s4 1983009808
      %v5472 = vunpack.c.0.s8 %v5471
      %v5473 = vlaneseq
      %v5474 = vshrl.u32 %v5473, 7
      %v5475 = vsub.s32 %v5472, %v5474
      %v5476 = vrot.slane %v5462, %v5475
      %v5477 = vcombine.high %v5469, %v5469
      %v5478 = vcombine.high %v5476, %v5476
      %v5479 = vcombine.high %v4718, %v4718
      %v5481 = vunpack.c.l.s4 1983009808
      %v5482 = vunpack.c.0.s8 %v5481
      %v5483 = vlaneseq
      %v5484 = vshrl.u32 %v5483, 7
      %v5485 = vsub.s32 %v5482, %v5484
      %v5486 = vrot.slane %v4718, %v5485
      %v5488 = vunpack.c.l.s4 1983009808
      %v5489 = vunpack.c.0.s8 %v5488
      %v5490 = vlaneseq
      %v5491 = vshrl.u32 %v5490, 7
      %v5492 = vsub.s32 %v5489, %v5491
      %v5493 = vrot.slane %v5479, %v5492
      %v5494 = vcombine.high %v5486, %v5486
      %v5495 = vcombine.high %v5493, %v5493
      %v5496 = vcombine.high %v4719, %v4719
      %v5498 = vunpack.c.l.s4 1983009808
      %v5499 = vunpack.c.0.s8 %v5498
      %v5500 = vlaneseq
      %v5501 = vshrl.u32 %v5500, 7
      %v5502 = vsub.s32 %v5499, %v5501
      %v5503 = vrot.slane %v4719, %v5502
      %v5505 = vunpack.c.l.s4 1983009808
      %v5506 = vunpack.c.0.s8 %v5505
      %v5507 = vlaneseq
      %v5508 = vshrl.u32 %v5507, 7
      %v5509 = vsub.s32 %v5506, %v5508
      %v5510 = vrot.slane %v5496, %v5509
      %v5511 = vcombine.high %v5503, %v5503
      %v5512 = vcombine.high %v5510, %v5510
      %v5513 = vcombine.high %v4720, %v4720
      %v5515 = vunpack.c.l.s4 1983009808
      %v5516 = vunpack.c.0.s8 %v5515
      %v5517 = vlaneseq
      %v5518 = vshrl.u32 %v5517, 7
      %v5519 = vsub.s32 %v5516, %v5518
      %v5520 = vrot.slane %v4720, %v5519
      %v5522 = vunpack.c.l.s4 1983009808
      %v5523 = vunpack.c.0.s8 %v5522
      %v5524 = vlaneseq
      %v5525 = vshrl.u32 %v5524, 7
      %v5526 = vsub.s32 %v5523, %v5525
      %v5527 = vrot.slane %v5513, %v5526
      %v5528 = vcombine.high %v5520, %v5520
      %v5529 = vcombine.high %v5527, %v5527
      %v5530 = vcombine.high %v4721, %v4721
      %v5532 = vunpack.c.l.s4 1983009808
      %v5533 = vunpack.c.0.s8 %v5532
      %v5534 = vlaneseq
      %v5535 = vshrl.u32 %v5534, 7
      %v5536 = vsub.s32 %v5533, %v5535
      %v5537 = vrot.slane %v4721, %v5536
      %v5539 = vunpack.c.l.s4 1983009808
      %v5540 = vunpack.c.0.s8 %v5539
      %v5541 = vlaneseq
      %v5542 = vshrl.u32 %v5541, 7
      %v5543 = vsub.s32 %v5540, %v5542
      %v5544 = vrot.slane %v5530, %v5543
      %v5545 = vcombine.high %v5537, %v5537
      %v5546 = vcombine.high %v5544, %v5544
      %v5547 = vcombine.high %v4722, %v4722
      %v5549 = vunpack.c.l.s4 1983009808
      %v5550 = vunpack.c.0.s8 %v5549
      %v5551 = vlaneseq
      %v5552 = vshrl.u32 %v5551, 7
      %v5553 = vsub.s32 %v5550, %v5552
      %v5554 = vrot.slane %v4722, %v5553
      %v5556 = vunpack.c.l.s4 1983009808
      %v5557 = vunpack.c.0.s8 %v5556
      %v5558 = vlaneseq
      %v5559 = vshrl.u32 %v5558, 7
      %v5560 = vsub.s32 %v5557, %v5559
      %v5561 = vrot.slane %v5547, %v5560
      %v5562 = vcombine.high %v5554, %v5554
      %v5563 = vcombine.high %v5561, %v5561
      %v5564 = vcombine.high %v4723, %v4723
      %v5566 = vunpack.c.l.s4 1983009808
      %v5567 = vunpack.c.0.s8 %v5566
      %v5568 = vlaneseq
      %v5569 = vshrl.u32 %v5568, 7
      %v5570 = vsub.s32 %v5567, %v5569
      %v5571 = vrot.slane %v4723, %v5570
      %v5573 = vunpack.c.l.s4 1983009808
      %v5574 = vunpack.c.0.s8 %v5573
      %v5575 = vlaneseq
      %v5576 = vshrl.u32 %v5575, 7
      %v5577 = vsub.s32 %v5574, %v5576
      %v5578 = vrot.slane %v5564, %v5577
      %v5579 = vcombine.high %v5571, %v5571
      %v5580 = vcombine.high %v5578, %v5578
      %v5581 = vcombine.high %v4724, %v4724
      %v5583 = vunpack.c.l.s4 1983009808
      %v5584 = vunpack.c.0.s8 %v5583
      %v5585 = vlaneseq
      %v5586 = vshrl.u32 %v5585, 7
      %v5587 = vsub.s32 %v5584, %v5586
      %v5588 = vrot.slane %v4724, %v5587
      %v5590 = vunpack.c.l.s4 1983009808
      %v5591 = vunpack.c.0.s8 %v5590
      %v5592 = vlaneseq
      %v5593 = vshrl.u32 %v5592, 7
      %v5594 = vsub.s32 %v5591, %v5593
      %v5595 = vrot.slane %v5581, %v5594
      %v5596 = vcombine.high %v5588, %v5588
      %v5597 = vcombine.high %v5595, %v5595
      %v5598 = vcombine.high %v4725, %v4725
      %v5600 = vunpack.c.l.s4 1983009808
      %v5601 = vunpack.c.0.s8 %v5600
      %v5602 = vlaneseq
      %v5603 = vshrl.u32 %v5602, 7
      %v5604 = vsub.s32 %v5601, %v5603
      %v5605 = vrot.slane %v4725, %v5604
      %v5607 = vunpack.c.l.s4 1983009808
      %v5608 = vunpack.c.0.s8 %v5607
      %v5609 = vlaneseq
      %v5610 = vshrl.u32 %v5609, 7
      %v5611 = vsub.s32 %v5608, %v5610
      %v5612 = vrot.slane %v5598, %v5611
      %v5613 = vcombine.high %v5605, %v5605
      %v5614 = vcombine.high %v5612, %v5612
      %v5615 = vcombine.high %v4726, %v4726
      %v5617 = vunpack.c.l.s4 1983009808
      %v5618 = vunpack.c.0.s8 %v5617
      %v5619 = vlaneseq
      %v5620 = vshrl.u32 %v5619, 7
      %v5621 = vsub.s32 %v5618, %v5620
      %v5622 = vrot.slane %v4726, %v5621
      %v5624 = vunpack.c.l.s4 1983009808
      %v5625 = vunpack.c.0.s8 %v5624
      %v5626 = vlaneseq
      %v5627 = vshrl.u32 %v5626, 7
      %v5628 = vsub.s32 %v5625, %v5627
      %v5629 = vrot.slane %v5615, %v5628
      %v5630 = vcombine.high %v5622, %v5622
      %v5631 = vcombine.high %v5629, %v5629
      %v5632 = vcombine.high %v4727, %v4727
      %v5634 = vunpack.c.l.s4 1983009808
      %v5635 = vunpack.c.0.s8 %v5634
      %v5636 = vlaneseq
      %v5637 = vshrl.u32 %v5636, 7
      %v5638 = vsub.s32 %v5635, %v5637
      %v5639 = vrot.slane %v4727, %v5638
      %v5641 = vunpack.c.l.s4 1983009808
      %v5642 = vunpack.c.0.s8 %v5641
      %v5643 = vlaneseq
      %v5644 = vshrl.u32 %v5643, 7
      %v5645 = vsub.s32 %v5642, %v5644
      %v5646 = vrot.slane %v5632, %v5645
      %v5647 = vcombine.high %v5639, %v5639
      %v5648 = vcombine.high %v5646, %v5646
      %v5649 = vcombine.high %v4728, %v4728
      %v5651 = vunpack.c.l.s4 1983009808
      %v5652 = vunpack.c.0.s8 %v5651
      %v5653 = vlaneseq
      %v5654 = vshrl.u32 %v5653, 7
      %v5655 = vsub.s32 %v5652, %v5654
      %v5656 = vrot.slane %v4728, %v5655
      %v5658 = vunpack.c.l.s4 1983009808
      %v5659 = vunpack.c.0.s8 %v5658
      %v5660 = vlaneseq
      %v5661 = vshrl.u32 %v5660, 7
      %v5662 = vsub.s32 %v5659, %v5661
      %v5663 = vrot.slane %v5649, %v5662
      %v5664 = vcombine.high %v5656, %v5656
      %v5665 = vcombine.high %v5663, %v5663
      %v5666 = vcombine.high %v4729, %v4729
      %v5668 = vunpack.c.l.s4 1983009808
      %v5669 = vunpack.c.0.s8 %v5668
      %v5670 = vlaneseq
      %v5671 = vshrl.u32 %v5670, 7
      %v5672 = vsub.s32 %v5669, %v5671
      %v5673 = vrot.slane %v4729, %v5672
      %v5675 = vunpack.c.l.s4 1983009808
      %v5676 = vunpack.c.0.s8 %v5675
      %v5677 = vlaneseq
      %v5678 = vshrl.u32 %v5677, 7
      %v5679 = vsub.s32 %v5676, %v5678
      %v5680 = vrot.slane %v5666, %v5679
      %v5681 = vcombine.high %v5673, %v5673
      %v5682 = vcombine.high %v5680, %v5680
      %v5683 = vcombine.high %v4730, %v4730
      %v5685 = vunpack.c.l.s4 1983009808
      %v5686 = vunpack.c.0.s8 %v5685
      %v5687 = vlaneseq
      %v5688 = vshrl.u32 %v5687, 7
      %v5689 = vsub.s32 %v5686, %v5688
      %v5690 = vrot.slane %v4730, %v5689
      %v5692 = vunpack.c.l.s4 1983009808
      %v5693 = vunpack.c.0.s8 %v5692
      %v5694 = vlaneseq
      %v5695 = vshrl.u32 %v5694, 7
      %v5696 = vsub.s32 %v5693, %v5695
      %v5697 = vrot.slane %v5683, %v5696
      %v5698 = vcombine.high %v5690, %v5690
      %v5699 = vcombine.high %v5697, %v5697
      %v5700 = vcombine.high %v4731, %v4731
      %v5702 = vunpack.c.l.s4 1983009808
      %v5703 = vunpack.c.0.s8 %v5702
      %v5704 = vlaneseq
      %v5705 = vshrl.u32 %v5704, 7
      %v5706 = vsub.s32 %v5703, %v5705
      %v5707 = vrot.slane %v4731, %v5706
      %v5709 = vunpack.c.l.s4 1983009808
      %v5710 = vunpack.c.0.s8 %v5709
      %v5711 = vlaneseq
      %v5712 = vshrl.u32 %v5711, 7
      %v5713 = vsub.s32 %v5710, %v5712
      %v5714 = vrot.slane %v5700, %v5713
      %v5715 = vcombine.high %v5707, %v5707
      %v5716 = vcombine.high %v5714, %v5714
      %v5717 = vcombine.high %v4732, %v4732
      %v5719 = vunpack.c.l.s4 1983009808
      %v5720 = vunpack.c.0.s8 %v5719
      %v5721 = vlaneseq
      %v5722 = vshrl.u32 %v5721, 7
      %v5723 = vsub.s32 %v5720, %v5722
      %v5724 = vrot.slane %v4732, %v5723
      %v5726 = vunpack.c.l.s4 1983009808
      %v5727 = vunpack.c.0.s8 %v5726
      %v5728 = vlaneseq
      %v5729 = vshrl.u32 %v5728, 7
      %v5730 = vsub.s32 %v5727, %v5729
      %v5731 = vrot.slane %v5717, %v5730
      %v5732 = vcombine.high %v5724, %v5724
      %v5733 = vcombine.high %v5731, %v5731
      %v5734 = vcombine.high %v4733, %v4733
      %v5736 = vunpack.c.l.s4 1983009808
      %v5737 = vunpack.c.0.s8 %v5736
      %v5738 = vlaneseq
      %v5739 = vshrl.u32 %v5738, 7
      %v5740 = vsub.s32 %v5737, %v5739
      %v5741 = vrot.slane %v4733, %v5740
      %v5743 = vunpack.c.l.s4 1983009808
      %v5744 = vunpack.c.0.s8 %v5743
      %v5745 = vlaneseq
      %v5746 = vshrl.u32 %v5745, 7
      %v5747 = vsub.s32 %v5744, %v5746
      %v5748 = vrot.slane %v5734, %v5747
      %v5749 = vcombine.high %v5741, %v5741
      %v5750 = vcombine.high %v5748, %v5748
      %v5751 = vcombine.high %v4734, %v4734
      %v5753 = vunpack.c.l.s4 1983009808
      %v5754 = vunpack.c.0.s8 %v5753
      %v5755 = vlaneseq
      %v5756 = vshrl.u32 %v5755, 7
      %v5757 = vsub.s32 %v5754, %v5756
      %v5758 = vrot.slane %v4734, %v5757
      %v5760 = vunpack.c.l.s4 1983009808
      %v5761 = vunpack.c.0.s8 %v5760
      %v5762 = vlaneseq
      %v5763 = vshrl.u32 %v5762, 7
      %v5764 = vsub.s32 %v5761, %v5763
      %v5765 = vrot.slane %v5751, %v5764
      %v5766 = vcombine.high %v5758, %v5758
      %v5767 = vcombine.high %v5765, %v5765
      %v5768 = vcombine.high %v4735, %v4735
      %v5770 = vunpack.c.l.s4 1983009808
      %v5771 = vunpack.c.0.s8 %v5770
      %v5772 = vlaneseq
      %v5773 = vshrl.u32 %v5772, 7
      %v5774 = vsub.s32 %v5771, %v5773
      %v5775 = vrot.slane %v4735, %v5774
      %v5777 = vunpack.c.l.s4 1983009808
      %v5778 = vunpack.c.0.s8 %v5777
      %v5779 = vlaneseq
      %v5780 = vshrl.u32 %v5779, 7
      %v5781 = vsub.s32 %v5778, %v5780
      %v5782 = vrot.slane %v5768, %v5781
      %v5783 = vcombine.high %v5775, %v5775
      %v5784 = vcombine.high %v5782, %v5782
      %v5785 = vcombine.high %v4736, %v4736
      %v5787 = vunpack.c.l.s4 1983009808
      %v5788 = vunpack.c.0.s8 %v5787
      %v5789 = vlaneseq
      %v5790 = vshrl.u32 %v5789, 7
      %v5791 = vsub.s32 %v5788, %v5790
      %v5792 = vrot.slane %v4736, %v5791
      %v5794 = vunpack.c.l.s4 1983009808
      %v5795 = vunpack.c.0.s8 %v5794
      %v5796 = vlaneseq
      %v5797 = vshrl.u32 %v5796, 7
      %v5798 = vsub.s32 %v5795, %v5797
      %v5799 = vrot.slane %v5785, %v5798
      %v5800 = vcombine.high %v5792, %v5792
      %v5801 = vcombine.high %v5799, %v5799
      %v5802 = vcombine.high %v4737, %v4737
      %v5804 = vunpack.c.l.s4 1983009808
      %v5805 = vunpack.c.0.s8 %v5804
      %v5806 = vlaneseq
      %v5807 = vshrl.u32 %v5806, 7
      %v5808 = vsub.s32 %v5805, %v5807
      %v5809 = vrot.slane %v4737, %v5808
      %v5811 = vunpack.c.l.s4 1983009808
      %v5812 = vunpack.c.0.s8 %v5811
      %v5813 = vlaneseq
      %v5814 = vshrl.u32 %v5813, 7
      %v5815 = vsub.s32 %v5812, %v5814
      %v5816 = vrot.slane %v5802, %v5815
      %v5817 = vcombine.high %v5809, %v5809
      %v5818 = vcombine.high %v5816, %v5816
      %v5819 = vcombine.high %v4738, %v4738
      %v5821 = vunpack.c.l.s4 1983009808
      %v5822 = vunpack.c.0.s8 %v5821
      %v5823 = vlaneseq
      %v5824 = vshrl.u32 %v5823, 7
      %v5825 = vsub.s32 %v5822, %v5824
      %v5826 = vrot.slane %v4738, %v5825
      %v5828 = vunpack.c.l.s4 1983009808
      %v5829 = vunpack.c.0.s8 %v5828
      %v5830 = vlaneseq
      %v5831 = vshrl.u32 %v5830, 7
      %v5832 = vsub.s32 %v5829, %v5831
      %v5833 = vrot.slane %v5819, %v5832
      %v5834 = vcombine.high %v5826, %v5826
      %v5835 = vcombine.high %v5833, %v5833
      %v5836 = vcombine.high %v4739, %v4739
      %v5838 = vunpack.c.l.s4 1983009808
      %v5839 = vunpack.c.0.s8 %v5838
      %v5840 = vlaneseq
      %v5841 = vshrl.u32 %v5840, 7
      %v5842 = vsub.s32 %v5839, %v5841
      %v5843 = vrot.slane %v4739, %v5842
      %v5845 = vunpack.c.l.s4 1983009808
      %v5846 = vunpack.c.0.s8 %v5845
      %v5847 = vlaneseq
      %v5848 = vshrl.u32 %v5847, 7
      %v5849 = vsub.s32 %v5846, %v5848
      %v5850 = vrot.slane %v5836, %v5849
      %v5851 = vcombine.high %v5843, %v5843
      %v5852 = vcombine.high %v5850, %v5850
      %v5853 = vcombine.high %v4740, %v4740
      %v5855 = vunpack.c.l.s4 1983009808
      %v5856 = vunpack.c.0.s8 %v5855
      %v5857 = vlaneseq
      %v5858 = vshrl.u32 %v5857, 7
      %v5859 = vsub.s32 %v5856, %v5858
      %v5860 = vrot.slane %v4740, %v5859
      %v5862 = vunpack.c.l.s4 1983009808
      %v5863 = vunpack.c.0.s8 %v5862
      %v5864 = vlaneseq
      %v5865 = vshrl.u32 %v5864, 7
      %v5866 = vsub.s32 %v5863, %v5865
      %v5867 = vrot.slane %v5853, %v5866
      %v5868 = vcombine.high %v5860, %v5860
      %v5869 = vcombine.high %v5867, %v5867
      %v5870 = vcombine.high %v4741, %v4741
      %v5872 = vunpack.c.l.s4 1983009808
      %v5873 = vunpack.c.0.s8 %v5872
      %v5874 = vlaneseq
      %v5875 = vshrl.u32 %v5874, 7
      %v5876 = vsub.s32 %v5873, %v5875
      %v5877 = vrot.slane %v4741, %v5876
      %v5879 = vunpack.c.l.s4 1983009808
      %v5880 = vunpack.c.0.s8 %v5879
      %v5881 = vlaneseq
      %v5882 = vshrl.u32 %v5881, 7
      %v5883 = vsub.s32 %v5880, %v5882
      %v5884 = vrot.slane %v5870, %v5883
      %v5885 = vcombine.high %v5877, %v5877
      %v5886 = vcombine.high %v5884, %v5884
      %v5887 = vcombine.high %v4742, %v4742
      %v5889 = vunpack.c.l.s4 1983009808
      %v5890 = vunpack.c.0.s8 %v5889
      %v5891 = vlaneseq
      %v5892 = vshrl.u32 %v5891, 7
      %v5893 = vsub.s32 %v5890, %v5892
      %v5894 = vrot.slane %v4742, %v5893
      %v5896 = vunpack.c.l.s4 1983009808
      %v5897 = vunpack.c.0.s8 %v5896
      %v5898 = vlaneseq
      %v5899 = vshrl.u32 %v5898, 7
      %v5900 = vsub.s32 %v5897, %v5899
      %v5901 = vrot.slane %v5887, %v5900
      %v5902 = vcombine.high %v5894, %v5894
      %v5903 = vcombine.high %v5901, %v5901
      %v5904 = vcombine.high %v4743, %v4743
      %v5906 = vunpack.c.l.s4 1983009808
      %v5907 = vunpack.c.0.s8 %v5906
      %v5908 = vlaneseq
      %v5909 = vshrl.u32 %v5908, 7
      %v5910 = vsub.s32 %v5907, %v5909
      %v5911 = vrot.slane %v4743, %v5910
      %v5913 = vunpack.c.l.s4 1983009808
      %v5914 = vunpack.c.0.s8 %v5913
      %v5915 = vlaneseq
      %v5916 = vshrl.u32 %v5915, 7
      %v5917 = vsub.s32 %v5914, %v5916
      %v5918 = vrot.slane %v5904, %v5917
      %v5919 = vcombine.high %v5911, %v5911
      %v5920 = vcombine.high %v5918, %v5918
      %v6049 = vrot.slane %v5384, 7
      %v6050 = vrot.slane %v6049, 2
      %v6051 = vrot.slane %v5392, 7
      %v6052 = vrot.slane %v6051, 2
      %v6053 = vrot.slane %v5391, 7
      %v6054 = vrot.slane %v6053, 2
      %v6055 = vrot.slane %v5393, 7
      %v6056 = vrot.slane %v6055, 2
      %v6057 = vrot.slane %v5401, 7
      %v6058 = vrot.slane %v6057, 2
      %v6059 = vrot.slane %v5409, 7
      %v6060 = vrot.slane %v6059, 2
      %v6061 = vrot.slane %v5408, 7
      %v6062 = vrot.slane %v6061, 2
      %v6063 = vrot.slane %v5410, 7
      %v6064 = vrot.slane %v6063, 2
      %v6065 = vrot.slane %v5418, 7
      %v6066 = vrot.slane %v6065, 2
      %v6067 = vrot.slane %v5426, 7
      %v6068 = vrot.slane %v6067, 2
      %v6069 = vrot.slane %v5425, 7
      %v6070 = vrot.slane %v6069, 2
      %v6071 = vrot.slane %v5427, 7
      %v6072 = vrot.slane %v6071, 2
      %v6073 = vrot.slane %v5435, 7
      %v6074 = vrot.slane %v6073, 2
      %v6075 = vrot.slane %v5443, 7
      %v6076 = vrot.slane %v6075, 2
      %v6077 = vrot.slane %v5442, 7
      %v6078 = vrot.slane %v6077, 2
      %v6079 = vrot.slane %v5444, 7
      %v6080 = vrot.slane %v6079, 2
      %v6081 = vrot.slane %v5452, 7
      %v6082 = vrot.slane %v6081, 2
      %v6083 = vrot.slane %v5460, 7
      %v6084 = vrot.slane %v6083, 2
      %v6085 = vrot.slane %v5459, 7
      %v6086 = vrot.slane %v6085, 2
      %v6087 = vrot.slane %v5461, 7
      %v6088 = vrot.slane %v6087, 2
      %v6089 = vrot.slane %v5469, 7
      %v6090 = vrot.slane %v6089, 2
      %v6091 = vrot.slane %v5477, 7
      %v6092 = vrot.slane %v6091, 2
      %v6093 = vrot.slane %v5476, 7
      %v6094 = vrot.slane %v6093, 2
      %v6095 = vrot.slane %v5478, 7
      %v6096 = vrot.slane %v6095, 2
      %v6097 = vrot.slane %v5486, 7
      %v6098 = vrot.slane %v6097, 2
      %v6099 = vrot.slane %v5494, 7
      %v6100 = vrot.slane %v6099, 2
      %v6101 = vrot.slane %v5493, 7
      %v6102 = vrot.slane %v6101, 2
      %v6103 = vrot.slane %v5495, 7
      %v6104 = vrot.slane %v6103, 2
      %v6105 = vrot.slane %v5503, 7
      %v6106 = vrot.slane %v6105, 2
      %v6107 = vrot.slane %v5511, 7
      %v6108 = vrot.slane %v6107, 2
      %v6109 = vrot.slane %v5510, 7
      %v6110 = vrot.slane %v6109, 2
      %v6111 = vrot.slane %v5512, 7
      %v6112 = vrot.slane %v6111, 2
      %v6113 = vrot.slane %v5520, 7
      %v6114 = vrot.slane %v6113, 2
      %v6115 = vrot.slane %v5528, 7
      %v6116 = vrot.slane %v6115, 2
      %v6117 = vrot.slane %v5527, 7
      %v6118 = vrot.slane %v6117, 2
      %v6119 = vrot.slane %v5529, 7
      %v6120 = vrot.slane %v6119, 2
      %v6121 = vrot.slane %v5537, 7
      %v6122 = vrot.slane %v6121, 2
      %v6123 = vrot.slane %v5545, 7
      %v6124 = vrot.slane %v6123, 2
      %v6125 = vrot.slane %v5544, 7
      %v6126 = vrot.slane %v6125, 2
      %v6127 = vrot.slane %v5546, 7
      %v6128 = vrot.slane %v6127, 2
      %v6129 = vrot.slane %v5554, 7
      %v6130 = vrot.slane %v6129, 2
      %v6131 = vrot.slane %v5562, 7
      %v6132 = vrot.slane %v6131, 2
      %v6133 = vrot.slane %v5561, 7
      %v6134 = vrot.slane %v6133, 2
      %v6135 = vrot.slane %v5563, 7
      %v6136 = vrot.slane %v6135, 2
      %v6137 = vrot.slane %v5571, 7
      %v6138 = vrot.slane %v6137, 2
      %v6139 = vrot.slane %v5579, 7
      %v6140 = vrot.slane %v6139, 2
      %v6141 = vrot.slane %v5578, 7
      %v6142 = vrot.slane %v6141, 2
      %v6143 = vrot.slane %v5580, 7
      %v6144 = vrot.slane %v6143, 2
      %v6145 = vrot.slane %v5588, 7
      %v6146 = vrot.slane %v6145, 2
      %v6147 = vrot.slane %v5596, 7
      %v6148 = vrot.slane %v6147, 2
      %v6149 = vrot.slane %v5595, 7
      %v6150 = vrot.slane %v6149, 2
      %v6151 = vrot.slane %v5597, 7
      %v6152 = vrot.slane %v6151, 2
      %v6153 = vrot.slane %v5605, 7
      %v6154 = vrot.slane %v6153, 2
      %v6155 = vrot.slane %v5613, 7
      %v6156 = vrot.slane %v6155, 2
      %v6157 = vrot.slane %v5612, 7
      %v6158 = vrot.slane %v6157, 2
      %v6159 = vrot.slane %v5614, 7
      %v6160 = vrot.slane %v6159, 2
      %v6161 = vrot.slane %v5622, 7
      %v6162 = vrot.slane %v6161, 2
      %v6163 = vrot.slane %v5630, 7
      %v6164 = vrot.slane %v6163, 2
      %v6165 = vrot.slane %v5629, 7
      %v6166 = vrot.slane %v6165, 2
      %v6167 = vrot.slane %v5631, 7
      %v6168 = vrot.slane %v6167, 2
      %v6169 = vrot.slane %v5639, 7
      %v6170 = vrot.slane %v6169, 2
      %v6171 = vrot.slane %v5647, 7
      %v6172 = vrot.slane %v6171, 2
      %v6173 = vrot.slane %v5646, 7
      %v6174 = vrot.slane %v6173, 2
      %v6175 = vrot.slane %v5648, 7
      %v6176 = vrot.slane %v6175, 2
      %v6177 = vrot.slane %v5656, 7
      %v6178 = vrot.slane %v6177, 2
      %v6179 = vrot.slane %v5664, 7
      %v6180 = vrot.slane %v6179, 2
      %v6181 = vrot.slane %v5663, 7
      %v6182 = vrot.slane %v6181, 2
      %v6183 = vrot.slane %v5665, 7
      %v6184 = vrot.slane %v6183, 2
      %v6185 = vrot.slane %v5673, 7
      %v6186 = vrot.slane %v6185, 2
      %v6187 = vrot.slane %v5681, 7
      %v6188 = vrot.slane %v6187, 2
      %v6189 = vrot.slane %v5680, 7
      %v6190 = vrot.slane %v6189, 2
      %v6191 = vrot.slane %v5682, 7
      %v6192 = vrot.slane %v6191, 2
      %v6193 = vrot.slane %v5690, 7
      %v6194 = vrot.slane %v6193, 2
      %v6195 = vrot.slane %v5698, 7
      %v6196 = vrot.slane %v6195, 2
      %v6197 = vrot.slane %v5697, 7
      %v6198 = vrot.slane %v6197, 2
      %v6199 = vrot.slane %v5699, 7
      %v6200 = vrot.slane %v6199, 2
      %v6201 = vrot.slane %v5707, 7
      %v6202 = vrot.slane %v6201, 2
      %v6203 = vrot.slane %v5715, 7
      %v6204 = vrot.slane %v6203, 2
      %v6205 = vrot.slane %v5714, 7
      %v6206 = vrot.slane %v6205, 2
      %v6207 = vrot.slane %v5716, 7
      %v6208 = vrot.slane %v6207, 2
      %v6209 = vrot.slane %v5724, 7
      %v6210 = vrot.slane %v6209, 2
      %v6211 = vrot.slane %v5732, 7
      %v6212 = vrot.slane %v6211, 2
      %v6213 = vrot.slane %v5731, 7
      %v6214 = vrot.slane %v6213, 2
      %v6215 = vrot.slane %v5733, 7
      %v6216 = vrot.slane %v6215, 2
      %v6217 = vrot.slane %v5741, 7
      %v6218 = vrot.slane %v6217, 2
      %v6219 = vrot.slane %v5749, 7
      %v6220 = vrot.slane %v6219, 2
      %v6221 = vrot.slane %v5748, 7
      %v6222 = vrot.slane %v6221, 2
      %v6223 = vrot.slane %v5750, 7
      %v6224 = vrot.slane %v6223, 2
      %v6225 = vrot.slane %v5758, 7
      %v6226 = vrot.slane %v6225, 2
      %v6227 = vrot.slane %v5766, 7
      %v6228 = vrot.slane %v6227, 2
      %v6229 = vrot.slane %v5765, 7
      %v6230 = vrot.slane %v6229, 2
      %v6231 = vrot.slane %v5767, 7
      %v6232 = vrot.slane %v6231, 2
      %v6233 = vrot.slane %v5775, 7
      %v6234 = vrot.slane %v6233, 2
      %v6235 = vrot.slane %v5783, 7
      %v6236 = vrot.slane %v6235, 2
      %v6237 = vrot.slane %v5782, 7
      %v6238 = vrot.slane %v6237, 2
      %v6239 = vrot.slane %v5784, 7
      %v6240 = vrot.slane %v6239, 2
      %v6241 = vrot.slane %v5792, 7
      %v6242 = vrot.slane %v6241, 2
      %v6243 = vrot.slane %v5800, 7
      %v6244 = vrot.slane %v6243, 2
      %v6245 = vrot.slane %v5799, 7
      %v6246 = vrot.slane %v6245, 2
      %v6247 = vrot.slane %v5801, 7
      %v6248 = vrot.slane %v6247, 2
      %v6249 = vrot.slane %v5809, 7
      %v6250 = vrot.slane %v6249, 2
      %v6251 = vrot.slane %v5817, 7
      %v6252 = vrot.slane %v6251, 2
      %v6253 = vrot.slane %v5816, 7
      %v6254 = vrot.slane %v6253, 2
      %v6255 = vrot.slane %v5818, 7
      %v6256 = vrot.slane %v6255, 2
      %v6257 = vrot.slane %v5826, 7
      %v6258 = vrot.slane %v6257, 2
      %v6259 = vrot.slane %v5834, 7
      %v6260 = vrot.slane %v6259, 2
      %v6261 = vrot.slane %v5833, 7
      %v6262 = vrot.slane %v6261, 2
      %v6263 = vrot.slane %v5835, 7
      %v6264 = vrot.slane %v6263, 2
      %v6265 = vrot.slane %v5843, 7
      %v6266 = vrot.slane %v6265, 2
      %v6267 = vrot.slane %v5851, 7
      %v6268 = vrot.slane %v6267, 2
      %v6269 = vrot.slane %v5850, 7
      %v6270 = vrot.slane %v6269, 2
      %v6271 = vrot.slane %v5852, 7
      %v6272 = vrot.slane %v6271, 2
      %v6273 = vrot.slane %v5860, 7
      %v6274 = vrot.slane %v6273, 2
      %v6275 = vrot.slane %v5868, 7
      %v6276 = vrot.slane %v6275, 2
      %v6277 = vrot.slane %v5867, 7
      %v6278 = vrot.slane %v6277, 2
      %v6279 = vrot.slane %v5869, 7
      %v6280 = vrot.slane %v6279, 2
      %v6281 = vrot.slane %v5877, 7
      %v6282 = vrot.slane %v6281, 2
      %v6283 = vrot.slane %v5885, 7
      %v6284 = vrot.slane %v6283, 2
      %v6285 = vrot.slane %v5884, 7
      %v6286 = vrot.slane %v6285, 2
      %v6287 = vrot.slane %v5886, 7
      %v6288 = vrot.slane %v6287, 2
      %v6289 = vrot.slane %v5894, 7
      %v6290 = vrot.slane %v6289, 2
      %v6291 = vrot.slane %v5902, 7
      %v6292 = vrot.slane %v6291, 2
      %v6293 = vrot.slane %v5901, 7
      %v6294 = vrot.slane %v6293, 2
      %v6295 = vrot.slane %v5903, 7
      %v6296 = vrot.slane %v6295, 2
      %v6297 = vrot.slane %v5911, 7
      %v6298 = vrot.slane %v6297, 2
      %v6299 = vrot.slane %v5919, 7
      %v6300 = vrot.slane %v6299, 2
      %v6301 = vrot.slane %v5918, 7
      %v6302 = vrot.slane %v6301, 2
      %v6303 = vrot.slane %v5920, 7
      %v6304 = vrot.slane %v6303, 2
      %v6433 = vmax.f32 %v5384, %v6050
      %v6434 = vmax.f32 %v5392, %v6052
      %v6435 = vmax.f32 %v5391, %v6054
      %v6436 = vmax.f32 %v5393, %v6056
      %v6437 = vmax.f32 %v5401, %v6058
      %v6438 = vmax.f32 %v5409, %v6060
      %v6439 = vmax.f32 %v5408, %v6062
      %v6440 = vmax.f32 %v5410, %v6064
      %v6441 = vmax.f32 %v5418, %v6066
      %v6442 = vmax.f32 %v5426, %v6068
      %v6443 = vmax.f32 %v5425, %v6070
      %v6444 = vmax.f32 %v5427, %v6072
      %v6445 = vmax.f32 %v5435, %v6074
      %v6446 = vmax.f32 %v5443, %v6076
      %v6447 = vmax.f32 %v5442, %v6078
      %v6448 = vmax.f32 %v5444, %v6080
      %v6449 = vmax.f32 %v5452, %v6082
      %v6450 = vmax.f32 %v5460, %v6084
      %v6451 = vmax.f32 %v5459, %v6086
      %v6452 = vmax.f32 %v5461, %v6088
      %v6453 = vmax.f32 %v5469, %v6090
      %v6454 = vmax.f32 %v5477, %v6092
      %v6455 = vmax.f32 %v5476, %v6094
      %v6456 = vmax.f32 %v5478, %v6096
      %v6457 = vmax.f32 %v5486, %v6098
      %v6458 = vmax.f32 %v5494, %v6100
      %v6459 = vmax.f32 %v5493, %v6102
      %v6460 = vmax.f32 %v5495, %v6104
      %v6461 = vmax.f32 %v5503, %v6106
      %v6462 = vmax.f32 %v5511, %v6108
      %v6463 = vmax.f32 %v5510, %v6110
      %v6464 = vmax.f32 %v5512, %v6112
      %v6465 = vmax.f32 %v5520, %v6114
      %v6466 = vmax.f32 %v5528, %v6116
      %v6467 = vmax.f32 %v5527, %v6118
      %v6468 = vmax.f32 %v5529, %v6120
      %v6469 = vmax.f32 %v5537, %v6122
      %v6470 = vmax.f32 %v5545, %v6124
      %v6471 = vmax.f32 %v5544, %v6126
      %v6472 = vmax.f32 %v5546, %v6128
      %v6473 = vmax.f32 %v5554, %v6130
      %v6474 = vmax.f32 %v5562, %v6132
      %v6475 = vmax.f32 %v5561, %v6134
      %v6476 = vmax.f32 %v5563, %v6136
      %v6477 = vmax.f32 %v5571, %v6138
      %v6478 = vmax.f32 %v5579, %v6140
      %v6479 = vmax.f32 %v5578, %v6142
      %v6480 = vmax.f32 %v5580, %v6144
      %v6481 = vmax.f32 %v5588, %v6146
      %v6482 = vmax.f32 %v5596, %v6148
      %v6483 = vmax.f32 %v5595, %v6150
      %v6484 = vmax.f32 %v5597, %v6152
      %v6485 = vmax.f32 %v5605, %v6154
      %v6486 = vmax.f32 %v5613, %v6156
      %v6487 = vmax.f32 %v5612, %v6158
      %v6488 = vmax.f32 %v5614, %v6160
      %v6489 = vmax.f32 %v5622, %v6162
      %v6490 = vmax.f32 %v5630, %v6164
      %v6491 = vmax.f32 %v5629, %v6166
      %v6492 = vmax.f32 %v5631, %v6168
      %v6493 = vmax.f32 %v5639, %v6170
      %v6494 = vmax.f32 %v5647, %v6172
      %v6495 = vmax.f32 %v5646, %v6174
      %v6496 = vmax.f32 %v5648, %v6176
      %v6497 = vmax.f32 %v5656, %v6178
      %v6498 = vmax.f32 %v5664, %v6180
      %v6499 = vmax.f32 %v5663, %v6182
      %v6500 = vmax.f32 %v5665, %v6184
      %v6501 = vmax.f32 %v5673, %v6186
      %v6502 = vmax.f32 %v5681, %v6188
      %v6503 = vmax.f32 %v5680, %v6190
      %v6504 = vmax.f32 %v5682, %v6192
      %v6505 = vmax.f32 %v5690, %v6194
      %v6506 = vmax.f32 %v5698, %v6196
      %v6507 = vmax.f32 %v5697, %v6198
      %v6508 = vmax.f32 %v5699, %v6200
      %v6509 = vmax.f32 %v5707, %v6202
      %v6510 = vmax.f32 %v5715, %v6204
      %v6511 = vmax.f32 %v5714, %v6206
      %v6512 = vmax.f32 %v5716, %v6208
      %v6513 = vmax.f32 %v5724, %v6210
      %v6514 = vmax.f32 %v5732, %v6212
      %v6515 = vmax.f32 %v5731, %v6214
      %v6516 = vmax.f32 %v5733, %v6216
      %v6517 = vmax.f32 %v5741, %v6218
      %v6518 = vmax.f32 %v5749, %v6220
      %v6519 = vmax.f32 %v5748, %v6222
      %v6520 = vmax.f32 %v5750, %v6224
      %v6521 = vmax.f32 %v5758, %v6226
      %v6522 = vmax.f32 %v5766, %v6228
      %v6523 = vmax.f32 %v5765, %v6230
      %v6524 = vmax.f32 %v5767, %v6232
      %v6525 = vmax.f32 %v5775, %v6234
      %v6526 = vmax.f32 %v5783, %v6236
      %v6527 = vmax.f32 %v5782, %v6238
      %v6528 = vmax.f32 %v5784, %v6240
      %v6529 = vmax.f32 %v5792, %v6242
      %v6530 = vmax.f32 %v5800, %v6244
      %v6531 = vmax.f32 %v5799, %v6246
      %v6532 = vmax.f32 %v5801, %v6248
      %v6533 = vmax.f32 %v5809, %v6250
      %v6534 = vmax.f32 %v5817, %v6252
      %v6535 = vmax.f32 %v5816, %v6254
      %v6536 = vmax.f32 %v5818, %v6256
      %v6537 = vmax.f32 %v5826, %v6258
      %v6538 = vmax.f32 %v5834, %v6260
      %v6539 = vmax.f32 %v5833, %v6262
      %v6540 = vmax.f32 %v5835, %v6264
      %v6541 = vmax.f32 %v5843, %v6266
      %v6542 = vmax.f32 %v5851, %v6268
      %v6543 = vmax.f32 %v5850, %v6270
      %v6544 = vmax.f32 %v5852, %v6272
      %v6545 = vmax.f32 %v5860, %v6274
      %v6546 = vmax.f32 %v5868, %v6276
      %v6547 = vmax.f32 %v5867, %v6278
      %v6548 = vmax.f32 %v5869, %v6280
      %v6549 = vmax.f32 %v5877, %v6282
      %v6550 = vmax.f32 %v5885, %v6284
      %v6551 = vmax.f32 %v5884, %v6286
      %v6552 = vmax.f32 %v5886, %v6288
      %v6553 = vmax.f32 %v5894, %v6290
      %v6554 = vmax.f32 %v5902, %v6292
      %v6555 = vmax.f32 %v5901, %v6294
      %v6556 = vmax.f32 %v5903, %v6296
      %v6557 = vmax.f32 %v5911, %v6298
      %v6558 = vmax.f32 %v5919, %v6300
      %v6559 = vmax.f32 %v5918, %v6302
      %v6560 = vmax.f32 %v5920, %v6304
      %v6561 = vmax.f32 %v6433, %v6441
      %v6562 = vmax.f32 %v6434, %v6442
      %v6563 = vmax.f32 %v6435, %v6443
      %v6564 = vmax.f32 %v6436, %v6444
      %v6565 = vmax.f32 %v6437, %v6445
      %v6566 = vmax.f32 %v6438, %v6446
      %v6567 = vmax.f32 %v6439, %v6447
      %v6568 = vmax.f32 %v6440, %v6448
      %v6569 = vmax.f32 %v6449, %v6457
      %v6570 = vmax.f32 %v6450, %v6458
      %v6571 = vmax.f32 %v6451, %v6459
      %v6572 = vmax.f32 %v6452, %v6460
      %v6573 = vmax.f32 %v6453, %v6461
      %v6574 = vmax.f32 %v6454, %v6462
      %v6575 = vmax.f32 %v6455, %v6463
      %v6576 = vmax.f32 %v6456, %v6464
      %v6577 = vmax.f32 %v6465, %v6473
      %v6578 = vmax.f32 %v6466, %v6474
      %v6579 = vmax.f32 %v6467, %v6475
      %v6580 = vmax.f32 %v6468, %v6476
      %v6581 = vmax.f32 %v6469, %v6477
      %v6582 = vmax.f32 %v6470, %v6478
      %v6583 = vmax.f32 %v6471, %v6479
      %v6584 = vmax.f32 %v6472, %v6480
      %v6585 = vmax.f32 %v6481, %v6489
      %v6586 = vmax.f32 %v6482, %v6490
      %v6587 = vmax.f32 %v6483, %v6491
      %v6588 = vmax.f32 %v6484, %v6492
      %v6589 = vmax.f32 %v6485, %v6493
      %v6590 = vmax.f32 %v6486, %v6494
      %v6591 = vmax.f32 %v6487, %v6495
      %v6592 = vmax.f32 %v6488, %v6496
      %v6593 = vmax.f32 %v6497, %v6505
      %v6594 = vmax.f32 %v6498, %v6506
      %v6595 = vmax.f32 %v6499, %v6507
      %v6596 = vmax.f32 %v6500, %v6508
      %v6597 = vmax.f32 %v6501, %v6509
      %v6598 = vmax.f32 %v6502, %v6510
      %v6599 = vmax.f32 %v6503, %v6511
      %v6600 = vmax.f32 %v6504, %v6512
      %v6601 = vmax.f32 %v6513, %v6521
      %v6602 = vmax.f32 %v6514, %v6522
      %v6603 = vmax.f32 %v6515, %v6523
      %v6604 = vmax.f32 %v6516, %v6524
      %v6605 = vmax.f32 %v6517, %v6525
      %v6606 = vmax.f32 %v6518, %v6526
      %v6607 = vmax.f32 %v6519, %v6527
      %v6608 = vmax.f32 %v6520, %v6528
      %v6609 = vmax.f32 %v6529, %v6537
      %v6610 = vmax.f32 %v6530, %v6538
      %v6611 = vmax.f32 %v6531, %v6539
      %v6612 = vmax.f32 %v6532, %v6540
      %v6613 = vmax.f32 %v6533, %v6541
      %v6614 = vmax.f32 %v6534, %v6542
      %v6615 = vmax.f32 %v6535, %v6543
      %v6616 = vmax.f32 %v6536, %v6544
      %v6617 = vmax.f32 %v6545, %v6553
      %v6618 = vmax.f32 %v6546, %v6554
      %v6619 = vmax.f32 %v6547, %v6555
      %v6620 = vmax.f32 %v6548, %v6556
      %v6621 = vmax.f32 %v6549, %v6557
      %v6622 = vmax.f32 %v6550, %v6558
      %v6623 = vmax.f32 %v6551, %v6559
      %v6624 = vmax.f32 %v6552, %v6560
      %v6633 = vlaneseq
      %v6634 = vshrl.u32 %v6633, 7
      %v6635 = vsub.s32 0, %v6634
      %v6636 = vrot.slane %v6561, %v6635
      %v6637 = vlaneseq
      %v6638 = vshrl.u32 %v6637, 7
      %v6639 = vsub.s32 0, %v6638
      %v6640 = vrot.slane %v6569, %v6639
      %v6641 = vlaneseq
      %v6642 = vshrl.u32 %v6641, 7
      %v6643 = vsub.s32 0, %v6642
      %v6644 = vrot.slane %v6577, %v6643
      %v6645 = vlaneseq
      %v6646 = vshrl.u32 %v6645, 7
      %v6647 = vsub.s32 0, %v6646
      %v6648 = vrot.slane %v6585, %v6647
      %v6649 = vlaneseq
      %v6650 = vshrl.u32 %v6649, 7
      %v6651 = vsub.s32 0, %v6650
      %v6652 = vrot.slane %v6593, %v6651
      %v6653 = vlaneseq
      %v6654 = vshrl.u32 %v6653, 7
      %v6655 = vsub.s32 0, %v6654
      %v6656 = vrot.slane %v6601, %v6655
      %v6657 = vlaneseq
      %v6658 = vshrl.u32 %v6657, 7
      %v6659 = vsub.s32 0, %v6658
      %v6660 = vrot.slane %v6609, %v6659
      %v6661 = vlaneseq
      %v6662 = vshrl.u32 %v6661, 7
      %v6663 = vsub.s32 0, %v6662
      %v6664 = vrot.slane %v6617, %v6663
      %v6665 = vsel %vm4761, %v6640, %v6636
      %v6666 = vsel %vm4764, %v6644, %v6665
      %v6667 = vsel %vm4767, %v6648, %v6666
      %v6668 = vsel %vm4770, %v6652, %v6667
      %v6669 = vsel %vm4773, %v6656, %v6668
      %v6670 = vsel %vm4776, %v6660, %v6669
      %v6671 = vsel %vm4779, %v6664, %v6670
      %v6681 = vlaneseq
      %v6682 = vshrl.u32 %v6681, 7
      %v6683 = vsub.s32 0, %v6682
      %v6684 = vrot.slane %v6562, %v6683
      %v6685 = vlaneseq
      %v6686 = vshrl.u32 %v6685, 7
      %v6687 = vsub.s32 0, %v6686
      %v6688 = vrot.slane %v6570, %v6687
      %v6689 = vlaneseq
      %v6690 = vshrl.u32 %v6689, 7
      %v6691 = vsub.s32 0, %v6690
      %v6692 = vrot.slane %v6578, %v6691
      %v6693 = vlaneseq
      %v6694 = vshrl.u32 %v6693, 7
      %v6695 = vsub.s32 0, %v6694
      %v6696 = vrot.slane %v6586, %v6695
      %v6697 = vlaneseq
      %v6698 = vshrl.u32 %v6697, 7
      %v6699 = vsub.s32 0, %v6698
      %v6700 = vrot.slane %v6594, %v6699
      %v6701 = vlaneseq
      %v6702 = vshrl.u32 %v6701, 7
      %v6703 = vsub.s32 0, %v6702
      %v6704 = vrot.slane %v6602, %v6703
      %v6705 = vlaneseq
      %v6706 = vshrl.u32 %v6705, 7
      %v6707 = vsub.s32 0, %v6706
      %v6708 = vrot.slane %v6610, %v6707
      %v6709 = vlaneseq
      %v6710 = vshrl.u32 %v6709, 7
      %v6711 = vsub.s32 0, %v6710
      %v6712 = vrot.slane %v6618, %v6711
      %v6713 = vsel %vm4761, %v6688, %v6684
      %v6714 = vsel %vm4764, %v6692, %v6713
      %v6715 = vsel %vm4767, %v6696, %v6714
      %v6716 = vsel %vm4770, %v6700, %v6715
      %v6717 = vsel %vm4773, %v6704, %v6716
      %v6718 = vsel %vm4776, %v6708, %v6717
      %v6719 = vsel %vm4779, %v6712, %v6718
      %6720 = vrot.lane.b32.xlu0 %v6719, 8
      %v6721 = vpop.permute.xlu0 %6720
      %v6731 = vlaneseq
      %v6732 = vshrl.u32 %v6731, 7
      %v6733 = vsub.s32 0, %v6732
      %v6734 = vrot.slane %v6563, %v6733
      %v6735 = vlaneseq
      %v6736 = vshrl.u32 %v6735, 7
      %v6737 = vsub.s32 0, %v6736
      %v6738 = vrot.slane %v6571, %v6737
      %v6739 = vlaneseq
      %v6740 = vshrl.u32 %v6739, 7
      %v6741 = vsub.s32 0, %v6740
      %v6742 = vrot.slane %v6579, %v6741
      %v6743 = vlaneseq
      %v6744 = vshrl.u32 %v6743, 7
      %v6745 = vsub.s32 0, %v6744
      %v6746 = vrot.slane %v6587, %v6745
      %v6747 = vlaneseq
      %v6748 = vshrl.u32 %v6747, 7
      %v6749 = vsub.s32 0, %v6748
      %v6750 = vrot.slane %v6595, %v6749
      %v6751 = vlaneseq
      %v6752 = vshrl.u32 %v6751, 7
      %v6753 = vsub.s32 0, %v6752
      %v6754 = vrot.slane %v6603, %v6753
      %v6755 = vlaneseq
      %v6756 = vshrl.u32 %v6755, 7
      %v6757 = vsub.s32 0, %v6756
      %v6758 = vrot.slane %v6611, %v6757
      %v6759 = vlaneseq
      %v6760 = vshrl.u32 %v6759, 7
      %v6761 = vsub.s32 0, %v6760
      %v6762 = vrot.slane %v6619, %v6761
      %v6763 = vsel %vm4761, %v6738, %v6734
      %v6764 = vsel %vm4764, %v6742, %v6763
      %v6765 = vsel %vm4767, %v6746, %v6764
      %v6766 = vsel %vm4770, %v6750, %v6765
      %v6767 = vsel %vm4773, %v6754, %v6766
      %v6768 = vsel %vm4776, %v6758, %v6767
      %v6769 = vsel %vm4779, %v6762, %v6768
      %6770 = vrot.lane.b32.xlu0 %v6769, 16
      %v6771 = vpop.permute.xlu0 %6770
      %v6781 = vlaneseq
      %v6782 = vshrl.u32 %v6781, 7
      %v6783 = vsub.s32 0, %v6782
      %v6784 = vrot.slane %v6564, %v6783
      %v6785 = vlaneseq
      %v6786 = vshrl.u32 %v6785, 7
      %v6787 = vsub.s32 0, %v6786
      %v6788 = vrot.slane %v6572, %v6787
      %v6789 = vlaneseq
      %v6790 = vshrl.u32 %v6789, 7
      %v6791 = vsub.s32 0, %v6790
      %v6792 = vrot.slane %v6580, %v6791
      %v6793 = vlaneseq
      %v6794 = vshrl.u32 %v6793, 7
      %v6795 = vsub.s32 0, %v6794
      %v6796 = vrot.slane %v6588, %v6795
      %v6797 = vlaneseq
      %v6798 = vshrl.u32 %v6797, 7
      %v6799 = vsub.s32 0, %v6798
      %v6800 = vrot.slane %v6596, %v6799
      %v6801 = vlaneseq
      %v6802 = vshrl.u32 %v6801, 7
      %v6803 = vsub.s32 0, %v6802
      %v6804 = vrot.slane %v6604, %v6803
      %v6805 = vlaneseq
      %v6806 = vshrl.u32 %v6805, 7
      %v6807 = vsub.s32 0, %v6806
      %v6808 = vrot.slane %v6612, %v6807
      %v6809 = vlaneseq
      %v6810 = vshrl.u32 %v6809, 7
      %v6811 = vsub.s32 0, %v6810
      %v6812 = vrot.slane %v6620, %v6811
      %v6813 = vsel %vm4761, %v6788, %v6784
      %v6814 = vsel %vm4764, %v6792, %v6813
      %v6815 = vsel %vm4767, %v6796, %v6814
      %v6816 = vsel %vm4770, %v6800, %v6815
      %v6817 = vsel %vm4773, %v6804, %v6816
      %v6818 = vsel %vm4776, %v6808, %v6817
      %v6819 = vsel %vm4779, %v6812, %v6818
      %6820 = vrot.lane.b32.xlu0 %v6819, 24
      %v6821 = vpop.permute.xlu0 %6820
      %v6831 = vlaneseq
      %v6832 = vshrl.u32 %v6831, 7
      %v6833 = vsub.s32 0, %v6832
      %v6834 = vrot.slane %v6565, %v6833
      %v6835 = vlaneseq
      %v6836 = vshrl.u32 %v6835, 7
      %v6837 = vsub.s32 0, %v6836
      %v6838 = vrot.slane %v6573, %v6837
      %v6839 = vlaneseq
      %v6840 = vshrl.u32 %v6839, 7
      %v6841 = vsub.s32 0, %v6840
      %v6842 = vrot.slane %v6581, %v6841
      %v6843 = vlaneseq
      %v6844 = vshrl.u32 %v6843, 7
      %v6845 = vsub.s32 0, %v6844
      %v6846 = vrot.slane %v6589, %v6845
      %v6847 = vlaneseq
      %v6848 = vshrl.u32 %v6847, 7
      %v6849 = vsub.s32 0, %v6848
      %v6850 = vrot.slane %v6597, %v6849
      %v6851 = vlaneseq
      %v6852 = vshrl.u32 %v6851, 7
      %v6853 = vsub.s32 0, %v6852
      %v6854 = vrot.slane %v6605, %v6853
      %v6855 = vlaneseq
      %v6856 = vshrl.u32 %v6855, 7
      %v6857 = vsub.s32 0, %v6856
      %v6858 = vrot.slane %v6613, %v6857
      %v6859 = vlaneseq
      %v6860 = vshrl.u32 %v6859, 7
      %v6861 = vsub.s32 0, %v6860
      %v6862 = vrot.slane %v6621, %v6861
      %v6863 = vsel %vm4761, %v6838, %v6834
      %v6864 = vsel %vm4764, %v6842, %v6863
      %v6865 = vsel %vm4767, %v6846, %v6864
      %v6866 = vsel %vm4770, %v6850, %v6865
      %v6867 = vsel %vm4773, %v6854, %v6866
      %v6868 = vsel %vm4776, %v6858, %v6867
      %v6869 = vsel %vm4779, %v6862, %v6868
      %6870 = vrot.lane.b32.xlu0 %v6869, 32
      %v6871 = vpop.permute.xlu0 %6870
      %v6881 = vlaneseq
      %v6882 = vshrl.u32 %v6881, 7
      %v6883 = vsub.s32 0, %v6882
      %v6884 = vrot.slane %v6566, %v6883
      %v6885 = vlaneseq
      %v6886 = vshrl.u32 %v6885, 7
      %v6887 = vsub.s32 0, %v6886
      %v6888 = vrot.slane %v6574, %v6887
      %v6889 = vlaneseq
      %v6890 = vshrl.u32 %v6889, 7
      %v6891 = vsub.s32 0, %v6890
      %v6892 = vrot.slane %v6582, %v6891
      %v6893 = vlaneseq
      %v6894 = vshrl.u32 %v6893, 7
      %v6895 = vsub.s32 0, %v6894
      %v6896 = vrot.slane %v6590, %v6895
      %v6897 = vlaneseq
      %v6898 = vshrl.u32 %v6897, 7
      %v6899 = vsub.s32 0, %v6898
      %v6900 = vrot.slane %v6598, %v6899
      %v6901 = vlaneseq
      %v6902 = vshrl.u32 %v6901, 7
      %v6903 = vsub.s32 0, %v6902
      %v6904 = vrot.slane %v6606, %v6903
      %v6905 = vlaneseq
      %v6906 = vshrl.u32 %v6905, 7
      %v6907 = vsub.s32 0, %v6906
      %v6908 = vrot.slane %v6614, %v6907
      %v6909 = vlaneseq
      %v6910 = vshrl.u32 %v6909, 7
      %v6911 = vsub.s32 0, %v6910
      %v6912 = vrot.slane %v6622, %v6911
      %v6913 = vsel %vm4761, %v6888, %v6884
      %v6914 = vsel %vm4764, %v6892, %v6913
      %v6915 = vsel %vm4767, %v6896, %v6914
      %v6916 = vsel %vm4770, %v6900, %v6915
      %v6917 = vsel %vm4773, %v6904, %v6916
      %v6918 = vsel %vm4776, %v6908, %v6917
      %v6919 = vsel %vm4779, %v6912, %v6918
      %6920 = vrot.lane.b32.xlu0 %v6919, 40
      %v6921 = vpop.permute.xlu0 %6920
      %v6931 = vlaneseq
      %v6932 = vshrl.u32 %v6931, 7
      %v6933 = vsub.s32 0, %v6932
      %v6934 = vrot.slane %v6567, %v6933
      %v6935 = vlaneseq
      %v6936 = vshrl.u32 %v6935, 7
      %v6937 = vsub.s32 0, %v6936
      %v6938 = vrot.slane %v6575, %v6937
      %v6939 = vlaneseq
      %v6940 = vshrl.u32 %v6939, 7
      %v6941 = vsub.s32 0, %v6940
      %v6942 = vrot.slane %v6583, %v6941
      %v6943 = vlaneseq
      %v6944 = vshrl.u32 %v6943, 7
      %v6945 = vsub.s32 0, %v6944
      %v6946 = vrot.slane %v6591, %v6945
      %v6947 = vlaneseq
      %v6948 = vshrl.u32 %v6947, 7
      %v6949 = vsub.s32 0, %v6948
      %v6950 = vrot.slane %v6599, %v6949
      %v6951 = vlaneseq
      %v6952 = vshrl.u32 %v6951, 7
      %v6953 = vsub.s32 0, %v6952
      %v6954 = vrot.slane %v6607, %v6953
      %v6955 = vlaneseq
      %v6956 = vshrl.u32 %v6955, 7
      %v6957 = vsub.s32 0, %v6956
      %v6958 = vrot.slane %v6615, %v6957
      %v6959 = vlaneseq
      %v6960 = vshrl.u32 %v6959, 7
      %v6961 = vsub.s32 0, %v6960
      %v6962 = vrot.slane %v6623, %v6961
      %v6963 = vsel %vm4761, %v6938, %v6934
      %v6964 = vsel %vm4764, %v6942, %v6963
      %v6965 = vsel %vm4767, %v6946, %v6964
      %v6966 = vsel %vm4770, %v6950, %v6965
      %v6967 = vsel %vm4773, %v6954, %v6966
      %v6968 = vsel %vm4776, %v6958, %v6967
      %v6969 = vsel %vm4779, %v6962, %v6968
      %6970 = vrot.lane.b32.xlu0 %v6969, 48
      %v6971 = vpop.permute.xlu0 %6970
      %v6981 = vlaneseq
      %v6982 = vshrl.u32 %v6981, 7
      %v6983 = vsub.s32 0, %v6982
      %v6984 = vrot.slane %v6568, %v6983
      %v6985 = vlaneseq
      %v6986 = vshrl.u32 %v6985, 7
      %v6987 = vsub.s32 0, %v6986
      %v6988 = vrot.slane %v6576, %v6987
      %v6989 = vlaneseq
      %v6990 = vshrl.u32 %v6989, 7
      %v6991 = vsub.s32 0, %v6990
      %v6992 = vrot.slane %v6584, %v6991
      %v6993 = vlaneseq
      %v6994 = vshrl.u32 %v6993, 7
      %v6995 = vsub.s32 0, %v6994
      %v6996 = vrot.slane %v6592, %v6995
      %v6997 = vlaneseq
      %v6998 = vshrl.u32 %v6997, 7
      %v6999 = vsub.s32 0, %v6998
      %v7000 = vrot.slane %v6600, %v6999
      %v7001 = vlaneseq
      %v7002 = vshrl.u32 %v7001, 7
      %v7003 = vsub.s32 0, %v7002
      %v7004 = vrot.slane %v6608, %v7003
      %v7005 = vlaneseq
      %v7006 = vshrl.u32 %v7005, 7
      %v7007 = vsub.s32 0, %v7006
      %v7008 = vrot.slane %v6616, %v7007
      %v7009 = vlaneseq
      %v7010 = vshrl.u32 %v7009, 7
      %v7011 = vsub.s32 0, %v7010
      %v7012 = vrot.slane %v6624, %v7011
      %v7013 = vsel %vm4761, %v6988, %v6984
      %v7014 = vsel %vm4764, %v6992, %v7013
      %v7015 = vsel %vm4767, %v6996, %v7014
      %v7016 = vsel %vm4770, %v7000, %v7015
      %v7017 = vsel %vm4773, %v7004, %v7016
      %v7018 = vsel %vm4776, %v7008, %v7017
      %v7019 = vsel %vm4779, %v7012, %v7018
      %7020 = vrot.lane.b32.xlu0 %v7019, 56
      %v7021 = vpop.permute.xlu0 %7020
      %v7023 = vsel %vm491, %v6671, %v6721
      %v7024 = vsel %vm5325, %v7023, %v6771
      %v7025 = vsel %vm5328, %v7024, %v6821
      %v7026 = vsel %vm5331, %v7025, %v6871
      %v7027 = vsel %vm5334, %v7026, %v6921
      %v7028 = vsel %vm5337, %v7027, %v6971
      %v7029 = vsel %vm5340, %v7028, %v7021
      %7030 = vst.msk [vmem:[%s262] sm:$0xff] %vm5343, %v7029
      %p7031 = scmp.lt.s32.totalorder %s18, 1
      %s7032 = scalar_select %p7031, %s18, 1
      %s7033 = smul.addr %s7032, 2
      %s7034 = smul.addr %s7033, 4
      %s7035 = scalar_lea.vmem %s5, %s7034
      %p7036 = scmp.lt.s32.totalorder %s18, 1
      %s7037 = scalar_select %p7036, %s18, 1
      %s7038 = smul.addr %s7037, 8
      %s7039 = scalar_lea.vmem %s6, %s7038
      // Predicated region
      $region41: #{_lambda_.1} parent=39 // pred_check
        %p7040 = pneg %p146
      $region42: #{_lambda_.1} parent=39 // pred_check_branch
        %7042 = sbr.rel (%p7040) target = $region44
      $region43: #{_lambda_.1} parent=39 // pred_region
        _
      $region44: #{_lambda_.1} parent=39 // pred_fallthru
        _
      // Predicated region
      $region45: #{_lambda_.1} parent=39 // pred_check
        %p7043 = pneg %p172
      $region46: #{_lambda_.1} parent=39 // pred_check_branch
        %7045 = sbr.rel (%p7043) target = $region48
      $region47: #{_lambda_.1} parent=39 // pred_region
        _
      $region48: #{_lambda_.1} parent=39 // pred_fallthru
        _
    $region40: #{_lambda_.1} parent=5 // pred_fallthru
      _
    %p7046 = scmp.le.s32.totalorder 2, %s13
    // Predicated region
    $region49: #{_lambda_.1} parent=5 // pred_check
      %p7047 = pneg %p7046
    $region50: #{_lambda_.1} parent=5 // pred_check_branch
      %7049 = sbr.rel (%p7047) target = $region52
    $region51: #{_lambda_.1} parent=5 // pred_region
      %s7050 = ssub.s32 %s13, 2
      // Predicated region
      $region53: #{_lambda_.1} parent=51 // pred_check
        %p7051 = pneg %p152
      $region54: #{_lambda_.1} parent=51 // pred_check_branch
        %7053 = sbr.rel (%p7051) target = $region56
      $region55: #{_lambda_.1} parent=51 // pred_region
        %p7054 = scmp.lt.s32.totalorder %s19, 1
        %s7055 = scalar_select %p7054, %s19, 1
        %s7056 = smul.addr %s7055, 2
        %s7057 = smul.addr %s7056, 4
        %s7058 = scalar_lea.vmem %s5, %s7057
      $region56: #{_lambda_.1} parent=51 // pred_fallthru
        _
      // Predicated region
      $region57: #{_lambda_.1} parent=51 // pred_check
        %p7059 = pneg %p178
      $region58: #{_lambda_.1} parent=51 // pred_check_branch
        %7061 = sbr.rel (%p7059) target = $region60
      $region59: #{_lambda_.1} parent=51 // pred_region
        %p7062 = scmp.lt.s32.totalorder %s19, 1
        %s7063 = scalar_select %p7062, %s19, 1
        %s7064 = smul.addr %s7063, 8
        %s7065 = scalar_lea.vmem %s6, %s7064
      $region60: #{_lambda_.1} parent=51 // pred_fallthru
        _
    $region52: #{_lambda_.1} parent=5 // pred_fallthru
      _
  $region6: #{_lambda_.1} parent=0 // loop_footer
    %s17 = sadd.s32 1, %s13
  $region7: #{_lambda_.1} parent=0 // loop_footer_branch
    %12 = sbr.rel target = $region3
  $region8: #{_lambda_.1} parent=0 // loop_exit
    _

</llo_original>
